<compile_context>
chip_gen: v6e
topology: v6e:2x2x1
jax: 0.10.0
libtpu: 0.0.40
codegen_flags: <defaults>
</compile_context>

<pallas_src>
import functools

import numpy as np
import jax
import jax.numpy as jnp
from jax.experimental import pallas as pl
from jax.experimental.pallas import tpu as pltpu

BN_EPS = 1e-5

ORDER = ("b0_0", "b0_1", "b1_0", "b1_1", "b1_2", "b1_3",
         "b2_0", "b2_1", "b2_2", "b2_3", "convlinear", "shortcut")


def _pair(v):
    return (v, v) if isinstance(v, int) else tuple(v)


def _ceil8(c):
    return -(-c // 8) * 8


# ----------------------------------------------------------------------------
# The single fused Pallas kernel (one batch element per grid step)
# ----------------------------------------------------------------------------
def dsfem_kernel(*args, meta, scale, H, slab, n_layers):
    """args = (x_ref, p_0 .. p_{4*n_layers-1}, o_ref, acc_ref).

    Per layer (4 refs):
      1x1 layer     : a (1, W*Ci), b1 (1, W*Ci), bd (W*Ci, W*Co), b2 (1, W*Co)
      spatial layer : m (KH, W*Ci, W*Ci), b1, bd, b2
    ConvLinear (idx 10) holds the three per-branch slabs concatenated.
    All activations use the fused-lane layout (H, W*Cpad).
    """
    x_ref = args[0]
    o_ref = args[-2]
    acc_ref = args[-1]
    prefs = args[1:-2]
    layers = [prefs[4 * i:4 * i + 4] for i in range(n_layers)]

    x = x_ref[0]                                     # (H, W*Cin_pad), lane-dense

    def _pointwise(y, bd_ref, b2_ref):
        z = jnp.dot(y, bd_ref[...], preferred_element_type=jnp.float32)
        return jnp.maximum(z + b2_ref[...], 0.0)

    def run_layer(v, idx):
        p0, b1_ref, bd_ref, b2_ref = layers[idx]
        m = meta[idx]
        if m is None:
            # 1x1 depthwise (folded BN1) == per-channel affine, then ReLU, then pointwise.
            y = jnp.maximum(v * p0[...] + b1_ref[...], 0.0)
            return _pointwise(y, bd_ref, b2_ref)
        # Spatial depthwise: per-kh, all kw taps are baked into a (Wc, Wc) matrix (MXU).
        KH, dh, ph = m
        wc = p0.shape[-1]
        acc_ref[:, :wc] = jnp.zeros((H, wc), jnp.float32)
        for kh in range(KH):
            oh = kh * dh - ph
            i0, i1 = max(0, -oh), min(H, H - oh)
            if i0 < i1:
                acc_ref[i0:i1, :wc] += jnp.dot(
                    v[i0 + oh:i1 + oh, :], p0[kh],
                    preferred_element_type=jnp.float32)
        y = jnp.maximum(acc_ref[:, :wc] + b1_ref[...], 0.0)
        return _pointwise(y, bd_ref, b2_ref)

    # Three branches (all intermediates stay on-chip).
    v0 = x
    for idx in (0, 1):
        v0 = run_layer(v0, idx)
    v1 = x
    for idx in (2, 3, 4, 5):
        v1 = run_layer(v1, idx)
    v2 = x
    for idx in (6, 7, 8, 9):
        v2 = run_layer(v2, idx)

    # ConvLinear: 1x1 DSC over channel-concat(v0, v1, v2); weights pre-split per branch,
    # so the concat disappears and three partial matmuls are summed (exact).
    a_ref, b1_ref, bd_ref, b2_ref = layers[10]
    zsum = None
    for i, v in enumerate((v0, v1, v2)):
        lo, hi = i * slab, (i + 1) * slab
        y = jnp.maximum(v * a_ref[:, lo:hi] + b1_ref[:, lo:hi], 0.0)
        d = jnp.dot(y, bd_ref[lo:hi, :], preferred_element_type=jnp.float32)
        zsum = d if zsum is None else zsum + d
    out_cl = jnp.maximum(zsum + b2_ref[...], 0.0)

    # Shortcut 1x1 DSC + residual combine + final ReLU, fused.
    short = run_layer(x, 11)
    o_ref[0] = jnp.maximum(out_cl * scale + short, 0.0)   # lane-dense store (W*Cout >= 128)


# ----------------------------------------------------------------------------
# Parameter fusion (fold BN, pad channels, build fused-lane weight slabs)
# ----------------------------------------------------------------------------
def _fold_bn(g, b, m, v):
    s = g / jnp.sqrt(v + BN_EPS)
    return s, b - m * s


def _build_dw_matrices(wdw_folded, W, pw, dw):
    """(KH, W*cp, W*cp) matrices: W-direction depthwise taps (+ zero pad at W edges)
    expressed as a matmul in the fused (H, W*cp) layout."""
    KH, KW, cp = wdw_folded.shape
    wnp = np.asarray(wdw_folded, dtype=np.float32)
    m = np.zeros((KH, W * cp, W * cp), np.float32)
    for kh in range(KH):
        for kw in range(KW):
            ow = kw * dw - pw
            for j in range(W):
                jj = j + ow
                if 0 <= jj < W:
                    m[kh, jj * cp:(jj + 1) * cp, j * cp:(j + 1) * cp] += np.diag(wnp[kh, kw])
    return jnp.asarray(m)


def _fuse_layer(r, W):
    """One DSC layer -> (first, b1t, bd, b2t) in fused-lane layout + static meta."""
    KH, KW = r["ksize"]
    ph, pw = r["padding"]
    dh, dw = r["dilation"]
    Cin, Cout = r["wdw"].shape[-1], r["wpw"].shape[-1]
    cpi, cpo = _ceil8(Cin), _ceil8(Cout)

    s1, b1 = _fold_bn(r["g1"], r["be1"], r["m1"], r["v1"])
    s2, b2 = _fold_bn(r["g2"], r["be2"], r["m2"], r["v2"])
    wdw = jnp.pad(r["wdw"] * s1, ((0, 0), (0, 0), (0, cpi - Cin)))
    b1p = jnp.pad(b1, (0, cpi - Cin))
    wpw = jnp.pad(r["wpw"] * s2[None, :], ((0, cpi - Cin), (0, cpo - Cout)))
    b2p = jnp.pad(b2, (0, cpo - Cout))

    b1t = jnp.tile(b1p, W).reshape(1, W * cpi)
    b2t = jnp.tile(b2p, W).reshape(1, W * cpo)
    bd = jnp.kron(jnp.eye(W, dtype=jnp.float32), wpw)          # (W*cpi, W*cpo)

    if (KH, KW) == (1, 1):
        a = jnp.tile(wdw[0, 0], W).reshape(1, W * cpi)
        return (a, b1t, bd, b2t), None
    m = _build_dw_matrices(wdw, W, pw, dw)
    return (m, b1t, bd, b2t), (KH, dh, ph)


def _fuse_convlinear(r, W, cb, cp_b):
    """ConvLinear (1x1 DSC on 3*cb channels) split into three per-branch slabs of width cp_b."""
    Cout = r["wpw"].shape[-1]
    cpo = _ceil8(Cout)
    s1, b1 = _fold_bn(r["g1"], r["be1"], r["m1"], r["v1"])
    s2, b2 = _fold_bn(r["g2"], r["be2"], r["m2"], r["v2"])
    a_full = r["wdw"][0, 0] * s1                     # (3*cb,)
    wpw = r["wpw"] * s2[None, :]                     # (3*cb, Cout)

    a_parts, b1_parts, bd_parts = [], [], []
    for i in range(3):
        ai = jnp.pad(a_full[i * cb:(i + 1) * cb], (0, cp_b - cb))
        b1i = jnp.pad(b1[i * cb:(i + 1) * cb], (0, cp_b - cb))
        wi = jnp.pad(wpw[i * cb:(i + 1) * cb], ((0, cp_b - cb), (0, cpo - Cout)))
        a_parts.append(jnp.tile(ai, W))
        b1_parts.append(jnp.tile(b1i, W))
        bd_parts.append(jnp.kron(jnp.eye(W, dtype=jnp.float32), wi))
    a_cat = jnp.concatenate(a_parts).reshape(1, 3 * W * cp_b)
    b1_cat = jnp.concatenate(b1_parts).reshape(1, 3 * W * cp_b)
    bd_cat = jnp.concatenate(bd_parts, axis=0)                   # (3*W*cp_b, W*cpo)
    b2t = jnp.tile(jnp.pad(b2, (0, cpo - Cout)), W).reshape(1, W * cpo)
    return (a_cat, b1_cat, bd_cat, b2t), None


# ----------------------------------------------------------------------------
# DSFEM forward (single pallas_call)
# ----------------------------------------------------------------------------
def dsfem_forward(x_nchw, raw_params, scale=0.1):
    N, Cin, H, W = x_nchw.shape
    cin_p = _ceil8(Cin)
    out_planes = raw_params["shortcut"]["wpw"].shape[-1]
    cpo_final = _ceil8(out_planes)
    branch_out = raw_params["b0_1"]["wpw"].shape[-1]    # 2*inter_planes
    cp_b = _ceil8(branch_out)

    fused, meta = [], []
    for name in ORDER:
        r = raw_params[name]
        if name == "convlinear":
            f, m = _fuse_convlinear(r, W, branch_out, cp_b)
        else:
            f, m = _fuse_layer(r, W)
        fused.append(f)
        meta.append(m)
    flat = [a for grp in fused for a in grp]
    acc_w = max(grp[0].shape[-1] for grp, m in zip(fused, meta) if m is not None)

    # NCHW -> NHWC -> fused-lane (N, H, W*Cin_pad) (pure layout plumbing, done once).
    x = jnp.transpose(x_nchw, (0, 2, 3, 1)).astype(jnp.float32)
    if cin_p != Cin:
        x = jnp.pad(x, ((0, 0), (0, 0), (0, 0), (0, cin_p - Cin)))
    xf = x.reshape(N, H, W * cin_p)

    kernel = functools.partial(
        dsfem_kernel, meta=tuple(meta), scale=float(scale), H=H,
        slab=W * cp_b, n_layers=len(ORDER))

    in_specs = [pl.BlockSpec((1, H, W * cin_p), lambda n: (n, 0, 0))]
    for a in flat:
        if a.ndim == 2:
            in_specs.append(pl.BlockSpec(a.shape, lambda n: (0, 0)))
        else:
            in_specs.append(pl.BlockSpec(a.shape, lambda n: (0, 0, 0)))

    out_f = pl.pallas_call(
        kernel,
        out_shape=jax.ShapeDtypeStruct((N, H, W * cpo_final), jnp.float32),
        grid=(N,),
        in_specs=in_specs,
        out_specs=pl.BlockSpec((1, H, W * cpo_final), lambda n: (n, 0, 0)),
        scratch_shapes=[pltpu.VMEM((H, acc_w), jnp.float32)],
        compiler_params=pltpu.CompilerParams(dimension_semantics=("parallel",)),
    )(xf, *flat)

    out = out_f.reshape(N, H, W, cpo_final)[..., :out_planes]
    return jnp.transpose(out, (0, 3, 1, 2))            # back to NCHW


# ----------------------------------------------------------------------------
# Deterministic parameter construction (inference-mode BN stats)
# ----------------------------------------------------------------------------
def make_dsc_params(key, cin, cout, ksize, padding=0, dilation=1):
    KH, KW = _pair(ksize)
    ks = jax.random.split(key, 10)
    return dict(
        wdw=0.1 * jax.random.normal(ks[0], (KH, KW, cin), jnp.float32),
        wpw=0.1 * jax.random.normal(ks[1], (cin, cout), jnp.float32),
        g1=1.0 + 0.1 * jax.random.normal(ks[2], (cin,), jnp.float32),
        be1=0.1 * jax.random.normal(ks[3], (cin,), jnp.float32),
        m1=0.1 * jax.random.normal(ks[4], (cin,), jnp.float32),
        v1=jax.random.uniform(ks[5], (cin,), jnp.float32, 0.5, 1.5),
        g2=1.0 + 0.1 * jax.random.normal(ks[6], (cout,), jnp.float32),
        be2=0.1 * jax.random.normal(ks[7], (cout,), jnp.float32),
        m2=0.1 * jax.random.normal(ks[8], (cout,), jnp.float32),
        v2=jax.random.uniform(ks[9], (cout,), jnp.float32, 0.5, 1.5),
        ksize=(KH, KW), padding=_pair(padding), dilation=_pair(dilation),
    )


def make_dsfem_params(key, in_planes, out_planes, map_reduce=8):
    inter = in_planes // map_reduce
    cfgs = {
        # name: (cin, cout, kernel_size, padding, dilation)
        "b0_0": (in_planes, 2 * inter, 1, 0, 1),
        "b0_1": (2 * inter, 2 * inter, 3, 1, 1),
        "b1_0": (in_planes, inter, 1, 0, 1),
        "b1_1": (inter, inter // 2 * 3, (1, 3), (0, 1), 1),
        "b1_2": (inter // 2 * 3, 2 * inter, (3, 1), (1, 0), 1),
        "b1_3": (2 * inter, 2 * inter, 3, 5, 5),
        "b2_0": (in_planes, inter, 1, 0, 1),
        "b2_1": (inter, inter // 2 * 3, (3, 1), (1, 0), 1),
        "b2_2": (inter // 2 * 3, 2 * inter, (1, 3), (0, 1), 1),
        "b2_3": (2 * inter, 2 * inter, 3, 5, 5),
        "convlinear": (6 * inter, out_planes, 1, 0, 1),
        "shortcut": (in_planes, out_planes, 1, 0, 1),
    }
    keys = jax.random.split(key, len(cfgs))
    return {name: make_dsc_params(k, *cfg) for k, (name, cfg) in zip(keys, cfgs.items())}


# ----------------------------------------------------------------------------
# Pure-JAX reference (independent of the kernel) for a correctness check
# ----------------------------------------------------------------------------
def _dsc_ref(x, r):                                   # x: NHWC
    KH, KW = r["ksize"]
    ph, pw = r["padding"]
    dh, dw = r["dilation"]
    Cin = x.shape[-1]
    y = jax.lax.conv_general_dilated(
        x, r["wdw"].reshape(KH, KW, 1, Cin),
        window_strides=(1, 1), padding=((ph, ph), (pw, pw)), rhs_dilation=(dh, dw),
        dimension_numbers=("NHWC", "HWIO", "NHWC"),
        feature_group_count=Cin, precision=jax.lax.Precision.HIGHEST)
    s1 = r["g1"] / jnp.sqrt(r["v1"] + BN_EPS)
    y = jnp.maximum(y * s1 + (r["be1"] - r["m1"] * s1), 0.0)
    z = jnp.einsum("nhwc,cd->nhwd", y, r["wpw"], precision=jax.lax.Precision.HIGHEST)
    s2 = r["g2"] / jnp.sqrt(r["v2"] + BN_EPS)
    return jnp.maximum(z * s2 + (r["be2"] - r["m2"] * s2), 0.0)


def dsfem_reference(x_nchw, raw, scale=0.1):
    x = jnp.transpose(x_nchw, (0, 2, 3, 1)).astype(jnp.float32)
    v0 = x
    for n in ("b0_0", "b0_1"):
        v0 = _dsc_ref(v0, raw[n])
    v1 = x
    for n in ("b1_0", "b1_1", "b1_2", "b1_3"):
        v1 = _dsc_ref(v1, raw[n])
    v2 = x
    for n in ("b2_0", "b2_1", "b2_2", "b2_3"):
        v2 = _dsc_ref(v2, raw[n])
    cat = jnp.concatenate([v0, v1, v2], axis=-1)
    out = _dsc_ref(cat, raw["convlinear"])
    short = _dsc_ref(x, raw["shortcut"])
    out = jnp.maximum(out * scale + short, 0.0)
    return jnp.transpose(out, (0, 3, 1, 2))


if __name__ == "__main__":
    key = jax.random.PRNGKey(0)
    kx, kp = jax.random.split(key)

    in_planes, out_planes = 32, 32     # map_reduce=8 -> inter_planes = 4
    N, H, W = 2, 16, 16

    x = jax.random.normal(kx, (N, in_planes, H, W), jnp.float32)   # PyTorch NCHW
    params = make_dsfem_params(kp, in_planes, out_planes, map_reduce=8)

    out = dsfem_forward(x, params, scale=0.1)
    jax.block_until_ready(out)

    ref = dsfem_reference(x, params, scale=0.1)
    max_err = float(jnp.max(jnp.abs(out - ref)))
    tol = 1e-2 * (1.0 + float(jnp.max(jnp.abs(ref))))

    assert out.shape == (N, out_planes, H, W), out.shape
    assert bool(jnp.all(jnp.isfinite(out)))
    assert bool(jnp.all(out >= 0.0))               # final ReLU
    assert max_err < tol, (max_err, tol)
    print("KERNEL_OK")
</pallas_src>

<mosaic_0001>
module attributes {stable_mosaic.version = 11 : i64} {
  func.func @dsfem_kernel(%arg0: i32, %arg1: memref<1x16x512xf32, #tpu.memory_space<vmem>>, %arg2: memref<1x512xf32, #tpu.memory_space<vmem>>, %arg3: memref<1x512xf32, #tpu.memory_space<vmem>>, %arg4: memref<512x128xf32, #tpu.memory_space<vmem>>, %arg5: memref<1x128xf32, #tpu.memory_space<vmem>>, %arg6: memref<3x128x128xf32, #tpu.memory_space<vmem>>, %arg7: memref<1x128xf32, #tpu.memory_space<vmem>>, %arg8: memref<128x128xf32, #tpu.memory_space<vmem>>, %arg9: memref<1x128xf32, #tpu.memory_space<vmem>>, %arg10: memref<1x512xf32, #tpu.memory_space<vmem>>, %arg11: memref<1x512xf32, #tpu.memory_space<vmem>>, %arg12: memref<512x128xf32, #tpu.memory_space<vmem>>, %arg13: memref<1x128xf32, #tpu.memory_space<vmem>>, %arg14: memref<1x128x128xf32, #tpu.memory_space<vmem>>, %arg15: memref<1x128xf32, #tpu.memory_space<vmem>>, %arg16: memref<128x128xf32, #tpu.memory_space<vmem>>, %arg17: memref<1x128xf32, #tpu.memory_space<vmem>>, %arg18: memref<3x128x128xf32, #tpu.memory_space<vmem>>, %arg19: memref<1x128xf32, #tpu.memory_space<vmem>>, %arg20: memref<128x128xf32, #tpu.memory_space<vmem>>, %arg21: memref<1x128xf32, #tpu.memory_space<vmem>>, %arg22: memref<3x128x128xf32, #tpu.memory_space<vmem>>, %arg23: memref<1x128xf32, #tpu.memory_space<vmem>>, %arg24: memref<128x128xf32, #tpu.memory_space<vmem>>, %arg25: memref<1x128xf32, #tpu.memory_space<vmem>>, %arg26: memref<1x512xf32, #tpu.memory_space<vmem>>, %arg27: memref<1x512xf32, #tpu.memory_space<vmem>>, %arg28: memref<512x128xf32, #tpu.memory_space<vmem>>, %arg29: memref<1x128xf32, #tpu.memory_space<vmem>>, %arg30: memref<3x128x128xf32, #tpu.memory_space<vmem>>, %arg31: memref<1x128xf32, #tpu.memory_space<vmem>>, %arg32: memref<128x128xf32, #tpu.memory_space<vmem>>, %arg33: memref<1x128xf32, #tpu.memory_space<vmem>>, %arg34: memref<1x128x128xf32, #tpu.memory_space<vmem>>, %arg35: memref<1x128xf32, #tpu.memory_space<vmem>>, %arg36: memref<128x128xf32, #tpu.memory_space<vmem>>, %arg37: memref<1x128xf32, #tpu.memory_space<vmem>>, %arg38: memref<3x128x128xf32, #tpu.memory_space<vmem>>, %arg39: memref<1x128xf32, #tpu.memory_space<vmem>>, %arg40: memref<128x128xf32, #tpu.memory_space<vmem>>, %arg41: memref<1x128xf32, #tpu.memory_space<vmem>>, %arg42: memref<1x384xf32, #tpu.memory_space<vmem>>, %arg43: memref<1x384xf32, #tpu.memory_space<vmem>>, %arg44: memref<384x512xf32, #tpu.memory_space<vmem>>, %arg45: memref<1x512xf32, #tpu.memory_space<vmem>>, %arg46: memref<1x512xf32, #tpu.memory_space<vmem>>, %arg47: memref<1x512xf32, #tpu.memory_space<vmem>>, %arg48: memref<512x512xf32, #tpu.memory_space<vmem>>, %arg49: memref<1x512xf32, #tpu.memory_space<vmem>>, %arg50: memref<1x16x512xf32, #tpu.memory_space<vmem>>, %arg51: memref<16x128xf32, #tpu.memory_space<vmem>>) attributes {dimension_semantics = [#tpu.dimension_semantics<parallel>], iteration_bounds = array<i64: 2>, scalar_prefetch = 0 : i64, scratch_operands = 1 : i64, tpu.core_type = #tpu.core_type<tc>, window_params = [{transform_indices = @transform_0, window_bounds = array<i64: 1, 16, 512>}, {pipeline_mode = #tpu.pipeline_mode<synchronous>, transform_indices = @transform_1, window_bounds = array<i64: 1, 512>}, {pipeline_mode = #tpu.pipeline_mode<synchronous>, transform_indices = @transform_2, window_bounds = array<i64: 1, 512>}, {pipeline_mode = #tpu.pipeline_mode<synchronous>, transform_indices = @transform_3, window_bounds = array<i64: 512, 128>}, {pipeline_mode = #tpu.pipeline_mode<synchronous>, transform_indices = @transform_4, window_bounds = array<i64: 1, 128>}, {pipeline_mode = #tpu.pipeline_mode<synchronous>, transform_indices = @transform_5, window_bounds = array<i64: 3, 128, 128>}, {pipeline_mode = #tpu.pipeline_mode<synchronous>, transform_indices = @transform_6, window_bounds = array<i64: 1, 128>}, {pipeline_mode = #tpu.pipeline_mode<synchronous>, transform_indices = @transform_7, window_bounds = array<i64: 128, 128>}, {pipeline_mode = #tpu.pipeline_mode<synchronous>, transform_indices = @transform_8, window_bounds = array<i64: 1, 128>}, {pipeline_mode = #tpu.pipeline_mode<synchronous>, transform_indices = @transform_9, window_bounds = array<i64: 1, 512>}, {pipeline_mode = #tpu.pipeline_mode<synchronous>, transform_indices = @transform_10, window_bounds = array<i64: 1, 512>}, {pipeline_mode = #tpu.pipeline_mode<synchronous>, transform_indices = @transform_11, window_bounds = array<i64: 512, 128>}, {pipeline_mode = #tpu.pipeline_mode<synchronous>, transform_indices = @transform_12, window_bounds = array<i64: 1, 128>}, {pipeline_mode = #tpu.pipeline_mode<synchronous>, transform_indices = @transform_13, window_bounds = array<i64: 1, 128, 128>}, {pipeline_mode = #tpu.pipeline_mode<synchronous>, transform_indices = @transform_14, window_bounds = array<i64: 1, 128>}, {pipeline_mode = #tpu.pipeline_mode<synchronous>, transform_indices = @transform_15, window_bounds = array<i64: 128, 128>}, {pipeline_mode = #tpu.pipeline_mode<synchronous>, transform_indices = @transform_16, window_bounds = array<i64: 1, 128>}, {pipeline_mode = #tpu.pipeline_mode<synchronous>, transform_indices = @transform_17, window_bounds = array<i64: 3, 128, 128>}, {pipeline_mode = #tpu.pipeline_mode<synchronous>, transform_indices = @transform_18, window_bounds = array<i64: 1, 128>}, {pipeline_mode = #tpu.pipeline_mode<synchronous>, transform_indices = @transform_19, window_bounds = array<i64: 128, 128>}, {pipeline_mode = #tpu.pipeline_mode<synchronous>, transform_indices = @transform_20, window_bounds = array<i64: 1, 128>}, {pipeline_mode = #tpu.pipeline_mode<synchronous>, transform_indices = @transform_21, window_bounds = array<i64: 3, 128, 128>}, {pipeline_mode = #tpu.pipeline_mode<synchronous>, transform_indices = @transform_22, window_bounds = array<i64: 1, 128>}, {pipeline_mode = #tpu.pipeline_mode<synchronous>, transform_indices = @transform_23, window_bounds = array<i64: 128, 128>}, {pipeline_mode = #tpu.pipeline_mode<synchronous>, transform_indices = @transform_24, window_bounds = array<i64: 1, 128>}, {pipeline_mode = #tpu.pipeline_mode<synchronous>, transform_indices = @transform_25, window_bounds = array<i64: 1, 512>}, {pipeline_mode = #tpu.pipeline_mode<synchronous>, transform_indices = @transform_26, window_bounds = array<i64: 1, 512>}, {pipeline_mode = #tpu.pipeline_mode<synchronous>, transform_indices = @transform_27, window_bounds = array<i64: 512, 128>}, {pipeline_mode = #tpu.pipeline_mode<synchronous>, transform_indices = @transform_28, window_bounds = array<i64: 1, 128>}, {pipeline_mode = #tpu.pipeline_mode<synchronous>, transform_indices = @transform_29, window_bounds = array<i64: 3, 128, 128>}, {pipeline_mode = #tpu.pipeline_mode<synchronous>, transform_indices = @transform_30, window_bounds = array<i64: 1, 128>}, {pipeline_mode = #tpu.pipeline_mode<synchronous>, transform_indices = @transform_31, window_bounds = array<i64: 128, 128>}, {pipeline_mode = #tpu.pipeline_mode<synchronous>, transform_indices = @transform_32, window_bounds = array<i64: 1, 128>}, {pipeline_mode = #tpu.pipeline_mode<synchronous>, transform_indices = @transform_33, window_bounds = array<i64: 1, 128, 128>}, {pipeline_mode = #tpu.pipeline_mode<synchronous>, transform_indices = @transform_34, window_bounds = array<i64: 1, 128>}, {pipeline_mode = #tpu.pipeline_mode<synchronous>, transform_indices = @transform_35, window_bounds = array<i64: 128, 128>}, {pipeline_mode = #tpu.pipeline_mode<synchronous>, transform_indices = @transform_36, window_bounds = array<i64: 1, 128>}, {pipeline_mode = #tpu.pipeline_mode<synchronous>, transform_indices = @transform_37, window_bounds = array<i64: 3, 128, 128>}, {pipeline_mode = #tpu.pipeline_mode<synchronous>, transform_indices = @transform_38, window_bounds = array<i64: 1, 128>}, {pipeline_mode = #tpu.pipeline_mode<synchronous>, transform_indices = @transform_39, window_bounds = array<i64: 128, 128>}, {pipeline_mode = #tpu.pipeline_mode<synchronous>, transform_indices = @transform_40, window_bounds = array<i64: 1, 128>}, {pipeline_mode = #tpu.pipeline_mode<synchronous>, transform_indices = @transform_41, window_bounds = array<i64: 1, 384>}, {pipeline_mode = #tpu.pipeline_mode<synchronous>, transform_indices = @transform_42, window_bounds = array<i64: 1, 384>}, {pipeline_mode = #tpu.pipeline_mode<synchronous>, transform_indices = @transform_43, window_bounds = array<i64: 384, 512>}, {pipeline_mode = #tpu.pipeline_mode<synchronous>, transform_indices = @transform_44, window_bounds = array<i64: 1, 512>}, {pipeline_mode = #tpu.pipeline_mode<synchronous>, transform_indices = @transform_45, window_bounds = array<i64: 1, 512>}, {pipeline_mode = #tpu.pipeline_mode<synchronous>, transform_indices = @transform_46, window_bounds = array<i64: 1, 512>}, {pipeline_mode = #tpu.pipeline_mode<synchronous>, transform_indices = @transform_47, window_bounds = array<i64: 512, 512>}, {pipeline_mode = #tpu.pipeline_mode<synchronous>, transform_indices = @transform_48, window_bounds = array<i64: 1, 512>}, {transform_indices = @transform_49, window_bounds = array<i64: 1, 16, 512>}]} {
    %c0 = arith.constant 0 : index
    %c0_0 = arith.constant 0 : index
    %c0_1 = arith.constant 0 : index
    %0 = vector.load %arg1[%c0, %c0_0, %c0_1] : memref<1x16x512xf32, #tpu.memory_space<vmem>>, vector<1x16x512xf32>
    %1 = vector.shape_cast %0 : vector<1x16x512xf32> to vector<16x512xf32>
    %c0_2 = arith.constant 0 : index
    %c0_3 = arith.constant 0 : index
    %2 = vector.load %arg2[%c0_2, %c0_3] : memref<1x512xf32, #tpu.memory_space<vmem>>, vector<1x512xf32>
    %3 = vector.broadcast %2 : vector<1x512xf32> to vector<16x512xf32>
    %4 = arith.mulf %1, %3 : vector<16x512xf32>
    %c0_4 = arith.constant 0 : index
    %c0_5 = arith.constant 0 : index
    %5 = vector.load %arg3[%c0_4, %c0_5] : memref<1x512xf32, #tpu.memory_space<vmem>>, vector<1x512xf32>
    %6 = vector.broadcast %5 : vector<1x512xf32> to vector<16x512xf32>
    %7 = arith.addf %4, %6 : vector<16x512xf32>
    %cst = arith.constant 0.000000e+00 : f32
    %8 = vector.broadcast %cst : f32 to vector<16x512xf32>
    %9 = arith.maximumf %7, %8 : vector<16x512xf32>
    %c0_6 = arith.constant 0 : index
    %c0_7 = arith.constant 0 : index
    %10 = vector.load %arg4[%c0_6, %c0_7] : memref<512x128xf32, #tpu.memory_space<vmem>>, vector<512x128xf32>
    %cst_8 = arith.constant dense<0.000000e+00> : vector<16x128xf32>
    %11 = tpu.matmul %9, %10, %cst_8 {dimension_numbers = #tpu.dot_dimension_numbers<[1], [0], [0], [1], [0, 0, 1, 1], [], []>} : vector<16x512xf32>, vector<512x128xf32>, vector<16x128xf32> -> vector<16x128xf32>
    %c0_9 = arith.constant 0 : index
    %c0_10 = arith.constant 0 : index
    %12 = vector.load %arg5[%c0_9, %c0_10] : memref<1x128xf32, #tpu.memory_space<vmem>>, vector<1x128xf32>
    %13 = vector.broadcast %12 : vector<1x128xf32> to vector<16x128xf32>
    %14 = arith.addf %11, %13 : vector<16x128xf32>
    %cst_11 = arith.constant 0.000000e+00 : f32
    %15 = vector.broadcast %cst_11 : f32 to vector<16x128xf32>
    %16 = arith.maximumf %14, %15 : vector<16x128xf32>
    %cst_12 = arith.constant 0.000000e+00 : f32
    %17 = vector.broadcast %cst_12 : f32 to vector<16x128xf32>
    %c0_13 = arith.constant 0 : index
    %c0_14 = arith.constant 0 : index
    %18 = vector.load %arg51[%c0_13, %c0_14] : memref<16x128xf32, #tpu.memory_space<vmem>>, vector<16x128xf32>
    tpu.vector_store %arg51[%c0_13, %c0_14], %17 {strides = array<i32>} : memref<16x128xf32, #tpu.memory_space<vmem>>, vector<16x128xf32>,
    %c1 = arith.constant 1 : index
    %c0_15 = arith.constant 0 : index
    %19 = vector.load %arg51[%c1, %c0_15] : memref<16x128xf32, #tpu.memory_space<vmem>>, vector<15x128xf32>
    %20 = vector.extract_strided_slice %16 {offsets = [0, 0], sizes = [15, 128], strides = [1, 1]} : vector<16x128xf32> to vector<15x128xf32>
    %c0_16 = arith.constant 0 : index
    %c0_17 = arith.constant 0 : index
    %c0_18 = arith.constant 0 : index
    %21 = vector.load %arg6[%c0_16, %c0_17, %c0_18] : memref<3x128x128xf32, #tpu.memory_space<vmem>>, vector<1x128x128xf32>
    %22 = vector.shape_cast %21 : vector<1x128x128xf32> to vector<128x128xf32>
    %cst_19 = arith.constant dense<0.000000e+00> : vector<15x128xf32>
    %23 = tpu.matmul %20, %22, %cst_19 {dimension_numbers = #tpu.dot_dimension_numbers<[1], [0], [0], [1], [0, 0, 1, 1], [], []>} : vector<15x128xf32>, vector<128x128xf32>, vector<15x128xf32> -> vector<15x128xf32>
    %24 = arith.addf %19, %23 : vector<15x128xf32>
    %c1_20 = arith.constant 1 : index
    %c0_21 = arith.constant 0 : index
    %25 = vector.load %arg51[%c1_20, %c0_21] : memref<16x128xf32, #tpu.memory_space<vmem>>, vector<15x128xf32>
    tpu.vector_store %arg51[%c1_20, %c0_21], %24 {strides = array<i32>} : memref<16x128xf32, #tpu.memory_space<vmem>>, vector<15x128xf32>,
    %c0_22 = arith.constant 0 : index
    %c0_23 = arith.constant 0 : index
    %26 = vector.load %arg51[%c0_22, %c0_23] : memref<16x128xf32, #tpu.memory_space<vmem>>, vector<16x128xf32>
    %c1_24 = arith.constant 1 : index
    %c0_25 = arith.constant 0 : index
    %c0_26 = arith.constant 0 : index
    %27 = vector.load %arg6[%c1_24, %c0_25, %c0_26] : memref<3x128x128xf32, #tpu.memory_space<vmem>>, vector<1x128x128xf32>
    %28 = vector.shape_cast %27 : vector<1x128x128xf32> to vector<128x128xf32>
    %cst_27 = arith.constant dense<0.000000e+00> : vector<16x128xf32>
    %29 = tpu.matmul %16, %28, %cst_27 {dimension_numbers = #tpu.dot_dimension_numbers<[1], [0], [0], [1], [0, 0, 1, 1], [], []>} : vector<16x128xf32>, vector<128x128xf32>, vector<16x128xf32> -> vector<16x128xf32>
    %30 = arith.addf %26, %29 : vector<16x128xf32>
    %c0_28 = arith.constant 0 : index
    %c0_29 = arith.constant 0 : index
    %31 = vector.load %arg51[%c0_28, %c0_29] : memref<16x128xf32, #tpu.memory_space<vmem>>, vector<16x128xf32>
    tpu.vector_store %arg51[%c0_28, %c0_29], %30 {strides = array<i32>} : memref<16x128xf32, #tpu.memory_space<vmem>>, vector<16x128xf32>,
    %c0_30 = arith.constant 0 : index
    %c0_31 = arith.constant 0 : index
    %32 = vector.load %arg51[%c0_30, %c0_31] : memref<16x128xf32, #tpu.memory_space<vmem>>, vector<15x128xf32>
    %33 = vector.extract_strided_slice %16 {offsets = [1, 0], sizes = [15, 128], strides = [1, 1]} : vector<16x128xf32> to vector<15x128xf32>
    %c2 = arith.constant 2 : index
    %c0_32 = arith.constant 0 : index
    %c0_33 = arith.constant 0 : index
    %34 = vector.load %arg6[%c2, %c0_32, %c0_33] : memref<3x128x128xf32, #tpu.memory_space<vmem>>, vector<1x128x128xf32>
    %35 = vector.shape_cast %34 : vector<1x128x128xf32> to vector<128x128xf32>
    %cst_34 = arith.constant dense<0.000000e+00> : vector<15x128xf32>
    %36 = tpu.matmul %33, %35, %cst_34 {dimension_numbers = #tpu.dot_dimension_numbers<[1], [0], [0], [1], [0, 0, 1, 1], [], []>} : vector<15x128xf32>, vector<128x128xf32>, vector<15x128xf32> -> vector<15x128xf32>
    %37 = arith.addf %32, %36 : vector<15x128xf32>
    %c0_35 = arith.constant 0 : index
    %c0_36 = arith.constant 0 : index
    %38 = vector.load %arg51[%c0_35, %c0_36] : memref<16x128xf32, #tpu.memory_space<vmem>>, vector<15x128xf32>
    tpu.vector_store %arg51[%c0_35, %c0_36], %37 {strides = array<i32>} : memref<16x128xf32, #tpu.memory_space<vmem>>, vector<15x128xf32>,
    %c0_37 = arith.constant 0 : index
    %c0_38 = arith.constant 0 : index
    %39 = vector.load %arg51[%c0_37, %c0_38] : memref<16x128xf32, #tpu.memory_space<vmem>>, vector<16x128xf32>
    %c0_39 = arith.constant 0 : index
    %c0_40 = arith.constant 0 : index
    %40 = vector.load %arg7[%c0_39, %c0_40] : memref<1x128xf32, #tpu.memory_space<vmem>>, vector<1x128xf32>
    %41 = vector.broadcast %40 : vector<1x128xf32> to vector<16x128xf32>
    %42 = arith.addf %39, %41 : vector<16x128xf32>
    %cst_41 = arith.constant 0.000000e+00 : f32
    %43 = vector.broadcast %cst_41 : f32 to vector<16x128xf32>
    %44 = arith.maximumf %42, %43 : vector<16x128xf32>
    %c0_42 = arith.constant 0 : index
    %c0_43 = arith.constant 0 : index
    %45 = vector.load %arg8[%c0_42, %c0_43] : memref<128x128xf32, #tpu.memory_space<vmem>>, vector<128x128xf32>
    %cst_44 = arith.constant dense<0.000000e+00> : vector<16x128xf32>
    %46 = tpu.matmul %44, %45, %cst_44 {dimension_numbers = #tpu.dot_dimension_numbers<[1], [0], [0], [1], [0, 0, 1, 1], [], []>} : vector<16x128xf32>, vector<128x128xf32>, vector<16x128xf32> -> vector<16x128xf32>
    %c0_45 = arith.constant 0 : index
    %c0_46 = arith.constant 0 : index
    %47 = vector.load %arg9[%c0_45, %c0_46] : memref<1x128xf32, #tpu.memory_space<vmem>>, vector<1x128xf32>
    %48 = vector.broadcast %47 : vector<1x128xf32> to vector<16x128xf32>
    %49 = arith.addf %46, %48 : vector<16x128xf32>
    %cst_47 = arith.constant 0.000000e+00 : f32
    %50 = vector.broadcast %cst_47 : f32 to vector<16x128xf32>
    %51 = arith.maximumf %49, %50 : vector<16x128xf32>
    %c0_48 = arith.constant 0 : index
    %c0_49 = arith.constant 0 : index
    %52 = vector.load %arg10[%c0_48, %c0_49] : memref<1x512xf32, #tpu.memory_space<vmem>>, vector<1x512xf32>
    %53 = vector.broadcast %52 : vector<1x512xf32> to vector<16x512xf32>
    %54 = arith.mulf %1, %53 : vector<16x512xf32>
    %c0_50 = arith.constant 0 : index
    %c0_51 = arith.constant 0 : index
    %55 = vector.load %arg11[%c0_50, %c0_51] : memref<1x512xf32, #tpu.memory_space<vmem>>, vector<1x512xf32>
    %56 = vector.broadcast %55 : vector<1x512xf32> to vector<16x512xf32>
    %57 = arith.addf %54, %56 : vector<16x512xf32>
    %cst_52 = arith.constant 0.000000e+00 : f32
    %58 = vector.broadcast %cst_52 : f32 to vector<16x512xf32>
    %59 = arith.maximumf %57, %58 : vector<16x512xf32>
    %c0_53 = arith.constant 0 : index
    %c0_54 = arith.constant 0 : index
    %60 = vector.load %arg12[%c0_53, %c0_54] : memref<512x128xf32, #tpu.memory_space<vmem>>, vector<512x128xf32>
    %cst_55 = arith.constant dense<0.000000e+00> : vector<16x128xf32>
    %61 = tpu.matmul %59, %60, %cst_55 {dimension_numbers = #tpu.dot_dimension_numbers<[1], [0], [0], [1], [0, 0, 1, 1], [], []>} : vector<16x512xf32>, vector<512x128xf32>, vector<16x128xf32> -> vector<16x128xf32>
    %c0_56 = arith.constant 0 : index
    %c0_57 = arith.constant 0 : index
    %62 = vector.load %arg13[%c0_56, %c0_57] : memref<1x128xf32, #tpu.memory_space<vmem>>, vector<1x128xf32>
    %63 = vector.broadcast %62 : vector<1x128xf32> to vector<16x128xf32>
    %64 = arith.addf %61, %63 : vector<16x128xf32>
    %cst_58 = arith.constant 0.000000e+00 : f32
    %65 = vector.broadcast %cst_58 : f32 to vector<16x128xf32>
    %66 = arith.maximumf %64, %65 : vector<16x128xf32>
    %cst_59 = arith.constant 0.000000e+00 : f32
    %67 = vector.broadcast %cst_59 : f32 to vector<16x128xf32>
    %c0_60 = arith.constant 0 : index
    %c0_61 = arith.constant 0 : index
    %68 = vector.load %arg51[%c0_60, %c0_61] : memref<16x128xf32, #tpu.memory_space<vmem>>, vector<16x128xf32>
    tpu.vector_store %arg51[%c0_60, %c0_61], %67 {strides = array<i32>} : memref<16x128xf32, #tpu.memory_space<vmem>>, vector<16x128xf32>,
    %c0_62 = arith.constant 0 : index
    %c0_63 = arith.constant 0 : index
    %69 = vector.load %arg51[%c0_62, %c0_63] : memref<16x128xf32, #tpu.memory_space<vmem>>, vector<16x128xf32>
    %c0_64 = arith.constant 0 : index
    %c0_65 = arith.constant 0 : index
    %c0_66 = arith.constant 0 : index
    %70 = vector.load %arg14[%c0_64, %c0_65, %c0_66] : memref<1x128x128xf32, #tpu.memory_space<vmem>>, vector<1x128x128xf32>
    %71 = vector.shape_cast %70 : vector<1x128x128xf32> to vector<128x128xf32>
    %cst_67 = arith.constant dense<0.000000e+00> : vector<16x128xf32>
    %72 = tpu.matmul %66, %71, %cst_67 {dimension_numbers = #tpu.dot_dimension_numbers<[1], [0], [0], [1], [0, 0, 1, 1], [], []>} : vector<16x128xf32>, vector<128x128xf32>, vector<16x128xf32> -> vector<16x128xf32>
    %73 = arith.addf %69, %72 : vector<16x128xf32>
    %c0_68 = arith.constant 0 : index
    %c0_69 = arith.constant 0 : index
    %74 = vector.load %arg51[%c0_68, %c0_69] : memref<16x128xf32, #tpu.memory_space<vmem>>, vector<16x128xf32>
    tpu.vector_store %arg51[%c0_68, %c0_69], %73 {strides = array<i32>} : memref<16x128xf32, #tpu.memory_space<vmem>>, vector<16x128xf32>,
    %c0_70 = arith.constant 0 : index
    %c0_71 = arith.constant 0 : index
    %75 = vector.load %arg51[%c0_70, %c0_71] : memref<16x128xf32, #tpu.memory_space<vmem>>, vector<16x128xf32>
    %c0_72 = arith.constant 0 : index
    %c0_73 = arith.constant 0 : index
    %76 = vector.load %arg15[%c0_72, %c0_73] : memref<1x128xf32, #tpu.memory_space<vmem>>, vector<1x128xf32>
    %77 = vector.broadcast %76 : vector<1x128xf32> to vector<16x128xf32>
    %78 = arith.addf %75, %77 : vector<16x128xf32>
    %cst_74 = arith.constant 0.000000e+00 : f32
    %79 = vector.broadcast %cst_74 : f32 to vector<16x128xf32>
    %80 = arith.maximumf %78, %79 : vector<16x128xf32>
    %c0_75 = arith.constant 0 : index
    %c0_76 = arith.constant 0 : index
    %81 = vector.load %arg16[%c0_75, %c0_76] : memref<128x128xf32, #tpu.memory_space<vmem>>, vector<128x128xf32>
    %cst_77 = arith.constant dense<0.000000e+00> : vector<16x128xf32>
    %82 = tpu.matmul %80, %81, %cst_77 {dimension_numbers = #tpu.dot_dimension_numbers<[1], [0], [0], [1], [0, 0, 1, 1], [], []>} : vector<16x128xf32>, vector<128x128xf32>, vector<16x128xf32> -> vector<16x128xf32>
    %c0_78 = arith.constant 0 : index
    %c0_79 = arith.constant 0 : index
    %83 = vector.load %arg17[%c0_78, %c0_79] : memref<1x128xf32, #tpu.memory_space<vmem>>, vector<1x128xf32>
    %84 = vector.broadcast %83 : vector<1x128xf32> to vector<16x128xf32>
    %85 = arith.addf %82, %84 : vector<16x128xf32>
    %cst_80 = arith.constant 0.000000e+00 : f32
    %86 = vector.broadcast %cst_80 : f32 to vector<16x128xf32>
    %87 = arith.maximumf %85, %86 : vector<16x128xf32>
    %cst_81 = arith.constant 0.000000e+00 : f32
    %88 = vector.broadcast %cst_81 : f32 to vector<16x128xf32>
    %c0_82 = arith.constant 0 : index
    %c0_83 = arith.constant 0 : index
    %89 = vector.load %arg51[%c0_82, %c0_83] : memref<16x128xf32, #tpu.memory_space<vmem>>, vector<16x128xf32>
    tpu.vector_store %arg51[%c0_82, %c0_83], %88 {strides = array<i32>} : memref<16x128xf32, #tpu.memory_space<vmem>>, vector<16x128xf32>,
    %c1_84 = arith.constant 1 : index
    %c0_85 = arith.constant 0 : index
    %90 = vector.load %arg51[%c1_84, %c0_85] : memref<16x128xf32, #tpu.memory_space<vmem>>, vector<15x128xf32>
    %91 = vector.extract_strided_slice %87 {offsets = [0, 0], sizes = [15, 128], strides = [1, 1]} : vector<16x128xf32> to vector<15x128xf32>
    %c0_86 = arith.constant 0 : index
    %c0_87 = arith.constant 0 : index
    %c0_88 = arith.constant 0 : index
    %92 = vector.load %arg18[%c0_86, %c0_87, %c0_88] : memref<3x128x128xf32, #tpu.memory_space<vmem>>, vector<1x128x128xf32>
    %93 = vector.shape_cast %92 : vector<1x128x128xf32> to vector<128x128xf32>
    %cst_89 = arith.constant dense<0.000000e+00> : vector<15x128xf32>
    %94 = tpu.matmul %91, %93, %cst_89 {dimension_numbers = #tpu.dot_dimension_numbers<[1], [0], [0], [1], [0, 0, 1, 1], [], []>} : vector<15x128xf32>, vector<128x128xf32>, vector<15x128xf32> -> vector<15x128xf32>
    %95 = arith.addf %90, %94 : vector<15x128xf32>
    %c1_90 = arith.constant 1 : index
    %c0_91 = arith.constant 0 : index
    %96 = vector.load %arg51[%c1_90, %c0_91] : memref<16x128xf32, #tpu.memory_space<vmem>>, vector<15x128xf32>
    tpu.vector_store %arg51[%c1_90, %c0_91], %95 {strides = array<i32>} : memref<16x128xf32, #tpu.memory_space<vmem>>, vector<15x128xf32>,
    %c0_92 = arith.constant 0 : index
    %c0_93 = arith.constant 0 : index
    %97 = vector.load %arg51[%c0_92, %c0_93] : memref<16x128xf32, #tpu.memory_space<vmem>>, vector<16x128xf32>
    %c1_94 = arith.constant 1 : index
    %c0_95 = arith.constant 0 : index
    %c0_96 = arith.constant 0 : index
    %98 = vector.load %arg18[%c1_94, %c0_95, %c0_96] : memref<3x128x128xf32, #tpu.memory_space<vmem>>, vector<1x128x128xf32>
    %99 = vector.shape_cast %98 : vector<1x128x128xf32> to vector<128x128xf32>
    %cst_97 = arith.constant dense<0.000000e+00> : vector<16x128xf32>
    %100 = tpu.matmul %87, %99, %cst_97 {dimension_numbers = #tpu.dot_dimension_numbers<[1], [0], [0], [1], [0, 0, 1, 1], [], []>} : vector<16x128xf32>, vector<128x128xf32>, vector<16x128xf32> -> vector<16x128xf32>
    %101 = arith.addf %97, %100 : vector<16x128xf32>
    %c0_98 = arith.constant 0 : index
    %c0_99 = arith.constant 0 : index
    %102 = vector.load %arg51[%c0_98, %c0_99] : memref<16x128xf32, #tpu.memory_space<vmem>>, vector<16x128xf32>
    tpu.vector_store %arg51[%c0_98, %c0_99], %101 {strides = array<i32>} : memref<16x128xf32, #tpu.memory_space<vmem>>, vector<16x128xf32>,
    %c0_100 = arith.constant 0 : index
    %c0_101 = arith.constant 0 : index
    %103 = vector.load %arg51[%c0_100, %c0_101] : memref<16x128xf32, #tpu.memory_space<vmem>>, vector<15x128xf32>
    %104 = vector.extract_strided_slice %87 {offsets = [1, 0], sizes = [15, 128], strides = [1, 1]} : vector<16x128xf32> to vector<15x128xf32>
    %c2_102 = arith.constant 2 : index
    %c0_103 = arith.constant 0 : index
    %c0_104 = arith.constant 0 : index
    %105 = vector.load %arg18[%c2_102, %c0_103, %c0_104] : memref<3x128x128xf32, #tpu.memory_space<vmem>>, vector<1x128x128xf32>
    %106 = vector.shape_cast %105 : vector<1x128x128xf32> to vector<128x128xf32>
    %cst_105 = arith.constant dense<0.000000e+00> : vector<15x128xf32>
    %107 = tpu.matmul %104, %106, %cst_105 {dimension_numbers = #tpu.dot_dimension_numbers<[1], [0], [0], [1], [0, 0, 1, 1], [], []>} : vector<15x128xf32>, vector<128x128xf32>, vector<15x128xf32> -> vector<15x128xf32>
    %108 = arith.addf %103, %107 : vector<15x128xf32>
    %c0_106 = arith.constant 0 : index
    %c0_107 = arith.constant 0 : index
    %109 = vector.load %arg51[%c0_106, %c0_107] : memref<16x128xf32, #tpu.memory_space<vmem>>, vector<15x128xf32>
    tpu.vector_store %arg51[%c0_106, %c0_107], %108 {strides = array<i32>} : memref<16x128xf32, #tpu.memory_space<vmem>>, vector<15x128xf32>,
    %c0_108 = arith.constant 0 : index
    %c0_109 = arith.constant 0 : index
    %110 = vector.load %arg51[%c0_108, %c0_109] : memref<16x128xf32, #tpu.memory_space<vmem>>, vector<16x128xf32>
    %c0_110 = arith.constant 0 : index
    %c0_111 = arith.constant 0 : index
    %111 = vector.load %arg19[%c0_110, %c0_111] : memref<1x128xf32, #tpu.memory_space<vmem>>, vector<1x128xf32>
    %112 = vector.broadcast %111 : vector<1x128xf32> to vector<16x128xf32>
    %113 = arith.addf %110, %112 : vector<16x128xf32>
    %cst_112 = arith.constant 0.000000e+00 : f32
    %114 = vector.broadcast %cst_112 : f32 to vector<16x128xf32>
    %115 = arith.maximumf %113, %114 : vector<16x128xf32>
    %c0_113 = arith.constant 0 : index
    %c0_114 = arith.constant 0 : index
    %116 = vector.load %arg20[%c0_113, %c0_114] : memref<128x128xf32, #tpu.memory_space<vmem>>, vector<128x128xf32>
    %cst_115 = arith.constant dense<0.000000e+00> : vector<16x128xf32>
    %117 = tpu.matmul %115, %116, %cst_115 {dimension_numbers = #tpu.dot_dimension_numbers<[1], [0], [0], [1], [0, 0, 1, 1], [], []>} : vector<16x128xf32>, vector<128x128xf32>, vector<16x128xf32> -> vector<16x128xf32>
    %c0_116 = arith.constant 0 : index
    %c0_117 = arith.constant 0 : index
    %118 = vector.load %arg21[%c0_116, %c0_117] : memref<1x128xf32, #tpu.memory_space<vmem>>, vector<1x128xf32>
    %119 = vector.broadcast %118 : vector<1x128xf32> to vector<16x128xf32>
    %120 = arith.addf %117, %119 : vector<16x128xf32>
    %cst_118 = arith.constant 0.000000e+00 : f32
    %121 = vector.broadcast %cst_118 : f32 to vector<16x128xf32>
    %122 = arith.maximumf %120, %121 : vector<16x128xf32>
    %cst_119 = arith.constant 0.000000e+00 : f32
    %123 = vector.broadcast %cst_119 : f32 to vector<16x128xf32>
    %c0_120 = arith.constant 0 : index
    %c0_121 = arith.constant 0 : index
    %124 = vector.load %arg51[%c0_120, %c0_121] : memref<16x128xf32, #tpu.memory_space<vmem>>, vector<16x128xf32>
    tpu.vector_store %arg51[%c0_120, %c0_121], %123 {strides = array<i32>} : memref<16x128xf32, #tpu.memory_space<vmem>>, vector<16x128xf32>,
    %c5 = arith.constant 5 : index
    %c0_122 = arith.constant 0 : index
    %125 = vector.load %arg51[%c5, %c0_122] : memref<16x128xf32, #tpu.memory_space<vmem>>, vector<11x128xf32>
    %126 = vector.extract_strided_slice %122 {offsets = [0, 0], sizes = [11, 128], strides = [1, 1]} : vector<16x128xf32> to vector<11x128xf32>
    %c0_123 = arith.constant 0 : index
    %c0_124 = arith.constant 0 : index
    %c0_125 = arith.constant 0 : index
    %127 = vector.load %arg22[%c0_123, %c0_124, %c0_125] : memref<3x128x128xf32, #tpu.memory_space<vmem>>, vector<1x128x128xf32>
    %128 = vector.shape_cast %127 : vector<1x128x128xf32> to vector<128x128xf32>
    %cst_126 = arith.constant dense<0.000000e+00> : vector<11x128xf32>
    %129 = tpu.matmul %126, %128, %cst_126 {dimension_numbers = #tpu.dot_dimension_numbers<[1], [0], [0], [1], [0, 0, 1, 1], [], []>} : vector<11x128xf32>, vector<128x128xf32>, vector<11x128xf32> -> vector<11x128xf32>
    %130 = arith.addf %125, %129 : vector<11x128xf32>
    %c5_127 = arith.constant 5 : index
    %c0_128 = arith.constant 0 : index
    %131 = vector.load %arg51[%c5_127, %c0_128] : memref<16x128xf32, #tpu.memory_space<vmem>>, vector<11x128xf32>
    tpu.vector_store %arg51[%c5_127, %c0_128], %130 {strides = array<i32>} : memref<16x128xf32, #tpu.memory_space<vmem>>, vector<11x128xf32>,
    %c0_129 = arith.constant 0 : index
    %c0_130 = arith.constant 0 : index
    %132 = vector.load %arg51[%c0_129, %c0_130] : memref<16x128xf32, #tpu.memory_space<vmem>>, vector<16x128xf32>
    %c1_131 = arith.constant 1 : index
    %c0_132 = arith.constant 0 : index
    %c0_133 = arith.constant 0 : index
    %133 = vector.load %arg22[%c1_131, %c0_132, %c0_133] : memref<3x128x128xf32, #tpu.memory_space<vmem>>, vector<1x128x128xf32>
    %134 = vector.shape_cast %133 : vector<1x128x128xf32> to vector<128x128xf32>
    %cst_134 = arith.constant dense<0.000000e+00> : vector<16x128xf32>
    %135 = tpu.matmul %122, %134, %cst_134 {dimension_numbers = #tpu.dot_dimension_numbers<[1], [0], [0], [1], [0, 0, 1, 1], [], []>} : vector<16x128xf32>, vector<128x128xf32>, vector<16x128xf32> -> vector<16x128xf32>
    %136 = arith.addf %132, %135 : vector<16x128xf32>
    %c0_135 = arith.constant 0 : index
    %c0_136 = arith.constant 0 : index
    %137 = vector.load %arg51[%c0_135, %c0_136] : memref<16x128xf32, #tpu.memory_space<vmem>>, vector<16x128xf32>
    tpu.vector_store %arg51[%c0_135, %c0_136], %136 {strides = array<i32>} : memref<16x128xf32, #tpu.memory_space<vmem>>, vector<16x128xf32>,
    %c0_137 = arith.constant 0 : index
    %c0_138 = arith.constant 0 : index
    %138 = vector.load %arg51[%c0_137, %c0_138] : memref<16x128xf32, #tpu.memory_space<vmem>>, vector<11x128xf32>
    %139 = vector.extract_strided_slice %122 {offsets = [5, 0], sizes = [11, 128], strides = [1, 1]} : vector<16x128xf32> to vector<11x128xf32>
    %c2_139 = arith.constant 2 : index
    %c0_140 = arith.constant 0 : index
    %c0_141 = arith.constant 0 : index
    %140 = vector.load %arg22[%c2_139, %c0_140, %c0_141] : memref<3x128x128xf32, #tpu.memory_space<vmem>>, vector<1x128x128xf32>
    %141 = vector.shape_cast %140 : vector<1x128x128xf32> to vector<128x128xf32>
    %cst_142 = arith.constant dense<0.000000e+00> : vector<11x128xf32>
    %142 = tpu.matmul %139, %141, %cst_142 {dimension_numbers = #tpu.dot_dimension_numbers<[1], [0], [0], [1], [0, 0, 1, 1], [], []>} : vector<11x128xf32>, vector<128x128xf32>, vector<11x128xf32> -> vector<11x128xf32>
    %143 = arith.addf %138, %142 : vector<11x128xf32>
    %c0_143 = arith.constant 0 : index
    %c0_144 = arith.constant 0 : index
    %144 = vector.load %arg51[%c0_143, %c0_144] : memref<16x128xf32, #tpu.memory_space<vmem>>, vector<11x128xf32>
    tpu.vector_store %arg51[%c0_143, %c0_144], %143 {strides = array<i32>} : memref<16x128xf32, #tpu.memory_space<vmem>>, vector<11x128xf32>,
    %c0_145 = arith.constant 0 : index
    %c0_146 = arith.constant 0 : index
    %145 = vector.load %arg51[%c0_145, %c0_146] : memref<16x128xf32, #tpu.memory_space<vmem>>, vector<16x128xf32>
    %c0_147 = arith.constant 0 : index
    %c0_148 = arith.constant 0 : index
    %146 = vector.load %arg23[%c0_147, %c0_148] : memref<1x128xf32, #tpu.memory_space<vmem>>, vector<1x128xf32>
    %147 = vector.broadcast %146 : vector<1x128xf32> to vector<16x128xf32>
    %148 = arith.addf %145, %147 : vector<16x128xf32>
    %cst_149 = arith.constant 0.000000e+00 : f32
    %149 = vector.broadcast %cst_149 : f32 to vector<16x128xf32>
    %150 = arith.maximumf %148, %149 : vector<16x128xf32>
    %c0_150 = arith.constant 0 : index
    %c0_151 = arith.constant 0 : index
    %151 = vector.load %arg24[%c0_150, %c0_151] : memref<128x128xf32, #tpu.memory_space<vmem>>, vector<128x128xf32>
    %cst_152 = arith.constant dense<0.000000e+00> : vector<16x128xf32>
    %152 = tpu.matmul %150, %151, %cst_152 {dimension_numbers = #tpu.dot_dimension_numbers<[1], [0], [0], [1], [0, 0, 1, 1], [], []>} : vector<16x128xf32>, vector<128x128xf32>, vector<16x128xf32> -> vector<16x128xf32>
    %c0_153 = arith.constant 0 : index
    %c0_154 = arith.constant 0 : index
    %153 = vector.load %arg25[%c0_153, %c0_154] : memref<1x128xf32, #tpu.memory_space<vmem>>, vector<1x128xf32>
    %154 = vector.broadcast %153 : vector<1x128xf32> to vector<16x128xf32>
    %155 = arith.addf %152, %154 : vector<16x128xf32>
    %cst_155 = arith.constant 0.000000e+00 : f32
    %156 = vector.broadcast %cst_155 : f32 to vector<16x128xf32>
    %157 = arith.maximumf %155, %156 : vector<16x128xf32>
    %c0_156 = arith.constant 0 : index
    %c0_157 = arith.constant 0 : index
    %158 = vector.load %arg26[%c0_156, %c0_157] : memref<1x512xf32, #tpu.memory_space<vmem>>, vector<1x512xf32>
    %159 = vector.broadcast %158 : vector<1x512xf32> to vector<16x512xf32>
    %160 = arith.mulf %1, %159 : vector<16x512xf32>
    %c0_158 = arith.constant 0 : index
    %c0_159 = arith.constant 0 : index
    %161 = vector.load %arg27[%c0_158, %c0_159] : memref<1x512xf32, #tpu.memory_space<vmem>>, vector<1x512xf32>
    %162 = vector.broadcast %161 : vector<1x512xf32> to vector<16x512xf32>
    %163 = arith.addf %160, %162 : vector<16x512xf32>
    %cst_160 = arith.constant 0.000000e+00 : f32
    %164 = vector.broadcast %cst_160 : f32 to vector<16x512xf32>
    %165 = arith.maximumf %163, %164 : vector<16x512xf32>
    %c0_161 = arith.constant 0 : index
    %c0_162 = arith.constant 0 : index
    %166 = vector.load %arg28[%c0_161, %c0_162] : memref<512x128xf32, #tpu.memory_space<vmem>>, vector<512x128xf32>
    %cst_163 = arith.constant dense<0.000000e+00> : vector<16x128xf32>
    %167 = tpu.matmul %165, %166, %cst_163 {dimension_numbers = #tpu.dot_dimension_numbers<[1], [0], [0], [1], [0, 0, 1, 1], [], []>} : vector<16x512xf32>, vector<512x128xf32>, vector<16x128xf32> -> vector<16x128xf32>
    %c0_164 = arith.constant 0 : index
    %c0_165 = arith.constant 0 : index
    %168 = vector.load %arg29[%c0_164, %c0_165] : memref<1x128xf32, #tpu.memory_space<vmem>>, vector<1x128xf32>
    %169 = vector.broadcast %168 : vector<1x128xf32> to vector<16x128xf32>
    %170 = arith.addf %167, %169 : vector<16x128xf32>
    %cst_166 = arith.constant 0.000000e+00 : f32
    %171 = vector.broadcast %cst_166 : f32 to vector<16x128xf32>
    %172 = arith.maximumf %170, %171 : vector<16x128xf32>
    %cst_167 = arith.constant 0.000000e+00 : f32
    %173 = vector.broadcast %cst_167 : f32 to vector<16x128xf32>
    %c0_168 = arith.constant 0 : index
    %c0_169 = arith.constant 0 : index
    %174 = vector.load %arg51[%c0_168, %c0_169] : memref<16x128xf32, #tpu.memory_space<vmem>>, vector<16x128xf32>
    tpu.vector_store %arg51[%c0_168, %c0_169], %173 {strides = array<i32>} : memref<16x128xf32, #tpu.memory_space<vmem>>, vector<16x128xf32>,
    %c1_170 = arith.constant 1 : index
    %c0_171 = arith.constant 0 : index
    %175 = vector.load %arg51[%c1_170, %c0_171] : memref<16x128xf32, #tpu.memory_space<vmem>>, vector<15x128xf32>
    %176 = vector.extract_strided_slice %172 {offsets = [0, 0], sizes = [15, 128], strides = [1, 1]} : vector<16x128xf32> to vector<15x128xf32>
    %c0_172 = arith.constant 0 : index
    %c0_173 = arith.constant 0 : index
    %c0_174 = arith.constant 0 : index
    %177 = vector.load %arg30[%c0_172, %c0_173, %c0_174] : memref<3x128x128xf32, #tpu.memory_space<vmem>>, vector<1x128x128xf32>
    %178 = vector.shape_cast %177 : vector<1x128x128xf32> to vector<128x128xf32>
    %cst_175 = arith.constant dense<0.000000e+00> : vector<15x128xf32>
    %179 = tpu.matmul %176, %178, %cst_175 {dimension_numbers = #tpu.dot_dimension_numbers<[1], [0], [0], [1], [0, 0, 1, 1], [], []>} : vector<15x128xf32>, vector<128x128xf32>, vector<15x128xf32> -> vector<15x128xf32>
    %180 = arith.addf %175, %179 : vector<15x128xf32>
    %c1_176 = arith.constant 1 : index
    %c0_177 = arith.constant 0 : index
    %181 = vector.load %arg51[%c1_176, %c0_177] : memref<16x128xf32, #tpu.memory_space<vmem>>, vector<15x128xf32>
    tpu.vector_store %arg51[%c1_176, %c0_177], %180 {strides = array<i32>} : memref<16x128xf32, #tpu.memory_space<vmem>>, vector<15x128xf32>,
    %c0_178 = arith.constant 0 : index
    %c0_179 = arith.constant 0 : index
    %182 = vector.load %arg51[%c0_178, %c0_179] : memref<16x128xf32, #tpu.memory_space<vmem>>, vector<16x128xf32>
    %c1_180 = arith.constant 1 : index
    %c0_181 = arith.constant 0 : index
    %c0_182 = arith.constant 0 : index
    %183 = vector.load %arg30[%c1_180, %c0_181, %c0_182] : memref<3x128x128xf32, #tpu.memory_space<vmem>>, vector<1x128x128xf32>
    %184 = vector.shape_cast %183 : vector<1x128x128xf32> to vector<128x128xf32>
    %cst_183 = arith.constant dense<0.000000e+00> : vector<16x128xf32>
    %185 = tpu.matmul %172, %184, %cst_183 {dimension_numbers = #tpu.dot_dimension_numbers<[1], [0], [0], [1], [0, 0, 1, 1], [], []>} : vector<16x128xf32>, vector<128x128xf32>, vector<16x128xf32> -> vector<16x128xf32>
    %186 = arith.addf %182, %185 : vector<16x128xf32>
    %c0_184 = arith.constant 0 : index
    %c0_185 = arith.constant 0 : index
    %187 = vector.load %arg51[%c0_184, %c0_185] : memref<16x128xf32, #tpu.memory_space<vmem>>, vector<16x128xf32>
    tpu.vector_store %arg51[%c0_184, %c0_185], %186 {strides = array<i32>} : memref<16x128xf32, #tpu.memory_space<vmem>>, vector<16x128xf32>,
    %c0_186 = arith.constant 0 : index
    %c0_187 = arith.constant 0 : index
    %188 = vector.load %arg51[%c0_186, %c0_187] : memref<16x128xf32, #tpu.memory_space<vmem>>, vector<15x128xf32>
    %189 = vector.extract_strided_slice %172 {offsets = [1, 0], sizes = [15, 128], strides = [1, 1]} : vector<16x128xf32> to vector<15x128xf32>
    %c2_188 = arith.constant 2 : index
    %c0_189 = arith.constant 0 : index
    %c0_190 = arith.constant 0 : index
    %190 = vector.load %arg30[%c2_188, %c0_189, %c0_190] : memref<3x128x128xf32, #tpu.memory_space<vmem>>, vector<1x128x128xf32>
    %191 = vector.shape_cast %190 : vector<1x128x128xf32> to vector<128x128xf32>
    %cst_191 = arith.constant dense<0.000000e+00> : vector<15x128xf32>
    %192 = tpu.matmul %189, %191, %cst_191 {dimension_numbers = #tpu.dot_dimension_numbers<[1], [0], [0], [1], [0, 0, 1, 1], [], []>} : vector<15x128xf32>, vector<128x128xf32>, vector<15x128xf32> -> vector<15x128xf32>
    %193 = arith.addf %188, %192 : vector<15x128xf32>
    %c0_192 = arith.constant 0 : index
    %c0_193 = arith.constant 0 : index
    %194 = vector.load %arg51[%c0_192, %c0_193] : memref<16x128xf32, #tpu.memory_space<vmem>>, vector<15x128xf32>
    tpu.vector_store %arg51[%c0_192, %c0_193], %193 {strides = array<i32>} : memref<16x128xf32, #tpu.memory_space<vmem>>, vector<15x128xf32>,
    %c0_194 = arith.constant 0 : index
    %c0_195 = arith.constant 0 : index
    %195 = vector.load %arg51[%c0_194, %c0_195] : memref<16x128xf32, #tpu.memory_space<vmem>>, vector<16x128xf32>
    %c0_196 = arith.constant 0 : index
    %c0_197 = arith.constant 0 : index
    %196 = vector.load %arg31[%c0_196, %c0_197] : memref<1x128xf32, #tpu.memory_space<vmem>>, vector<1x128xf32>
    %197 = vector.broadcast %196 : vector<1x128xf32> to vector<16x128xf32>
    %198 = arith.addf %195, %197 : vector<16x128xf32>
    %cst_198 = arith.constant 0.000000e+00 : f32
    %199 = vector.broadcast %cst_198 : f32 to vector<16x128xf32>
    %200 = arith.maximumf %198, %199 : vector<16x128xf32>
    %c0_199 = arith.constant 0 : index
    %c0_200 = arith.constant 0 : index
    %201 = vector.load %arg32[%c0_199, %c0_200] : memref<128x128xf32, #tpu.memory_space<vmem>>, vector<128x128xf32>
    %cst_201 = arith.constant dense<0.000000e+00> : vector<16x128xf32>
    %202 = tpu.matmul %200, %201, %cst_201 {dimension_numbers = #tpu.dot_dimension_numbers<[1], [0], [0], [1], [0, 0, 1, 1], [], []>} : vector<16x128xf32>, vector<128x128xf32>, vector<16x128xf32> -> vector<16x128xf32>
    %c0_202 = arith.constant 0 : index
    %c0_203 = arith.constant 0 : index
    %203 = vector.load %arg33[%c0_202, %c0_203] : memref<1x128xf32, #tpu.memory_space<vmem>>, vector<1x128xf32>
    %204 = vector.broadcast %203 : vector<1x128xf32> to vector<16x128xf32>
    %205 = arith.addf %202, %204 : vector<16x128xf32>
    %cst_204 = arith.constant 0.000000e+00 : f32
    %206 = vector.broadcast %cst_204 : f32 to vector<16x128xf32>
    %207 = arith.maximumf %205, %206 : vector<16x128xf32>
    %cst_205 = arith.constant 0.000000e+00 : f32
    %208 = vector.broadcast %cst_205 : f32 to vector<16x128xf32>
    %c0_206 = arith.constant 0 : index
    %c0_207 = arith.constant 0 : index
    %209 = vector.load %arg51[%c0_206, %c0_207] : memref<16x128xf32, #tpu.memory_space<vmem>>, vector<16x128xf32>
    tpu.vector_store %arg51[%c0_206, %c0_207], %208 {strides = array<i32>} : memref<16x128xf32, #tpu.memory_space<vmem>>, vector<16x128xf32>,
    %c0_208 = arith.constant 0 : index
    %c0_209 = arith.constant 0 : index
    %210 = vector.load %arg51[%c0_208, %c0_209] : memref<16x128xf32, #tpu.memory_space<vmem>>, vector<16x128xf32>
    %c0_210 = arith.constant 0 : index
    %c0_211 = arith.constant 0 : index
    %c0_212 = arith.constant 0 : index
    %211 = vector.load %arg34[%c0_210, %c0_211, %c0_212] : memref<1x128x128xf32, #tpu.memory_space<vmem>>, vector<1x128x128xf32>
    %212 = vector.shape_cast %211 : vector<1x128x128xf32> to vector<128x128xf32>
    %cst_213 = arith.constant dense<0.000000e+00> : vector<16x128xf32>
    %213 = tpu.matmul %207, %212, %cst_213 {dimension_numbers = #tpu.dot_dimension_numbers<[1], [0], [0], [1], [0, 0, 1, 1], [], []>} : vector<16x128xf32>, vector<128x128xf32>, vector<16x128xf32> -> vector<16x128xf32>
    %214 = arith.addf %210, %213 : vector<16x128xf32>
    %c0_214 = arith.constant 0 : index
    %c0_215 = arith.constant 0 : index
    %215 = vector.load %arg51[%c0_214, %c0_215] : memref<16x128xf32, #tpu.memory_space<vmem>>, vector<16x128xf32>
    tpu.vector_store %arg51[%c0_214, %c0_215], %214 {strides = array<i32>} : memref<16x128xf32, #tpu.memory_space<vmem>>, vector<16x128xf32>,
    %c0_216 = arith.constant 0 : index
    %c0_217 = arith.constant 0 : index
    %216 = vector.load %arg51[%c0_216, %c0_217] : memref<16x128xf32, #tpu.memory_space<vmem>>, vector<16x128xf32>
    %c0_218 = arith.constant 0 : index
    %c0_219 = arith.constant 0 : index
    %217 = vector.load %arg35[%c0_218, %c0_219] : memref<1x128xf32, #tpu.memory_space<vmem>>, vector<1x128xf32>
    %218 = vector.broadcast %217 : vector<1x128xf32> to vector<16x128xf32>
    %219 = arith.addf %216, %218 : vector<16x128xf32>
    %cst_220 = arith.constant 0.000000e+00 : f32
    %220 = vector.broadcast %cst_220 : f32 to vector<16x128xf32>
    %221 = arith.maximumf %219, %220 : vector<16x128xf32>
    %c0_221 = arith.constant 0 : index
    %c0_222 = arith.constant 0 : index
    %222 = vector.load %arg36[%c0_221, %c0_222] : memref<128x128xf32, #tpu.memory_space<vmem>>, vector<128x128xf32>
    %cst_223 = arith.constant dense<0.000000e+00> : vector<16x128xf32>
    %223 = tpu.matmul %221, %222, %cst_223 {dimension_numbers = #tpu.dot_dimension_numbers<[1], [0], [0], [1], [0, 0, 1, 1], [], []>} : vector<16x128xf32>, vector<128x128xf32>, vector<16x128xf32> -> vector<16x128xf32>
    %c0_224 = arith.constant 0 : index
    %c0_225 = arith.constant 0 : index
    %224 = vector.load %arg37[%c0_224, %c0_225] : memref<1x128xf32, #tpu.memory_space<vmem>>, vector<1x128xf32>
    %225 = vector.broadcast %224 : vector<1x128xf32> to vector<16x128xf32>
    %226 = arith.addf %223, %225 : vector<16x128xf32>
    %cst_226 = arith.constant 0.000000e+00 : f32
    %227 = vector.broadcast %cst_226 : f32 to vector<16x128xf32>
    %228 = arith.maximumf %226, %227 : vector<16x128xf32>
    %cst_227 = arith.constant 0.000000e+00 : f32
    %229 = vector.broadcast %cst_227 : f32 to vector<16x128xf32>
    %c0_228 = arith.constant 0 : index
    %c0_229 = arith.constant 0 : index
    %230 = vector.load %arg51[%c0_228, %c0_229] : memref<16x128xf32, #tpu.memory_space<vmem>>, vector<16x128xf32>
    tpu.vector_store %arg51[%c0_228, %c0_229], %229 {strides = array<i32>} : memref<16x128xf32, #tpu.memory_space<vmem>>, vector<16x128xf32>,
    %c5_230 = arith.constant 5 : index
    %c0_231 = arith.constant 0 : index
    %231 = vector.load %arg51[%c5_230, %c0_231] : memref<16x128xf32, #tpu.memory_space<vmem>>, vector<11x128xf32>
    %232 = vector.extract_strided_slice %228 {offsets = [0, 0], sizes = [11, 128], strides = [1, 1]} : vector<16x128xf32> to vector<11x128xf32>
    %c0_232 = arith.constant 0 : index
    %c0_233 = arith.constant 0 : index
    %c0_234 = arith.constant 0 : index
    %233 = vector.load %arg38[%c0_232, %c0_233, %c0_234] : memref<3x128x128xf32, #tpu.memory_space<vmem>>, vector<1x128x128xf32>
    %234 = vector.shape_cast %233 : vector<1x128x128xf32> to vector<128x128xf32>
    %cst_235 = arith.constant dense<0.000000e+00> : vector<11x128xf32>
    %235 = tpu.matmul %232, %234, %cst_235 {dimension_numbers = #tpu.dot_dimension_numbers<[1], [0], [0], [1], [0, 0, 1, 1], [], []>} : vector<11x128xf32>, vector<128x128xf32>, vector<11x128xf32> -> vector<11x128xf32>
    %236 = arith.addf %231, %235 : vector<11x128xf32>
    %c5_236 = arith.constant 5 : index
    %c0_237 = arith.constant 0 : index
    %237 = vector.load %arg51[%c5_236, %c0_237] : memref<16x128xf32, #tpu.memory_space<vmem>>, vector<11x128xf32>
    tpu.vector_store %arg51[%c5_236, %c0_237], %236 {strides = array<i32>} : memref<16x128xf32, #tpu.memory_space<vmem>>, vector<11x128xf32>,
    %c0_238 = arith.constant 0 : index
    %c0_239 = arith.constant 0 : index
    %238 = vector.load %arg51[%c0_238, %c0_239] : memref<16x128xf32, #tpu.memory_space<vmem>>, vector<16x128xf32>
    %c1_240 = arith.constant 1 : index
    %c0_241 = arith.constant 0 : index
    %c0_242 = arith.constant 0 : index
    %239 = vector.load %arg38[%c1_240, %c0_241, %c0_242] : memref<3x128x128xf32, #tpu.memory_space<vmem>>, vector<1x128x128xf32>
    %240 = vector.shape_cast %239 : vector<1x128x128xf32> to vector<128x128xf32>
    %cst_243 = arith.constant dense<0.000000e+00> : vector<16x128xf32>
    %241 = tpu.matmul %228, %240, %cst_243 {dimension_numbers = #tpu.dot_dimension_numbers<[1], [0], [0], [1], [0, 0, 1, 1], [], []>} : vector<16x128xf32>, vector<128x128xf32>, vector<16x128xf32> -> vector<16x128xf32>
    %242 = arith.addf %238, %241 : vector<16x128xf32>
    %c0_244 = arith.constant 0 : index
    %c0_245 = arith.constant 0 : index
    %243 = vector.load %arg51[%c0_244, %c0_245] : memref<16x128xf32, #tpu.memory_space<vmem>>, vector<16x128xf32>
    tpu.vector_store %arg51[%c0_244, %c0_245], %242 {strides = array<i32>} : memref<16x128xf32, #tpu.memory_space<vmem>>, vector<16x128xf32>,
    %c0_246 = arith.constant 0 : index
    %c0_247 = arith.constant 0 : index
    %244 = vector.load %arg51[%c0_246, %c0_247] : memref<16x128xf32, #tpu.memory_space<vmem>>, vector<11x128xf32>
    %245 = vector.extract_strided_slice %228 {offsets = [5, 0], sizes = [11, 128], strides = [1, 1]} : vector<16x128xf32> to vector<11x128xf32>
    %c2_248 = arith.constant 2 : index
    %c0_249 = arith.constant 0 : index
    %c0_250 = arith.constant 0 : index
    %246 = vector.load %arg38[%c2_248, %c0_249, %c0_250] : memref<3x128x128xf32, #tpu.memory_space<vmem>>, vector<1x128x128xf32>
    %247 = vector.shape_cast %246 : vector<1x128x128xf32> to vector<128x128xf32>
    %cst_251 = arith.constant dense<0.000000e+00> : vector<11x128xf32>
    %248 = tpu.matmul %245, %247, %cst_251 {dimension_numbers = #tpu.dot_dimension_numbers<[1], [0], [0], [1], [0, 0, 1, 1], [], []>} : vector<11x128xf32>, vector<128x128xf32>, vector<11x128xf32> -> vector<11x128xf32>
    %249 = arith.addf %244, %248 : vector<11x128xf32>
    %c0_252 = arith.constant 0 : index
    %c0_253 = arith.constant 0 : index
    %250 = vector.load %arg51[%c0_252, %c0_253] : memref<16x128xf32, #tpu.memory_space<vmem>>, vector<11x128xf32>
    tpu.vector_store %arg51[%c0_252, %c0_253], %249 {strides = array<i32>} : memref<16x128xf32, #tpu.memory_space<vmem>>, vector<11x128xf32>,
    %c0_254 = arith.constant 0 : index
    %c0_255 = arith.constant 0 : index
    %251 = vector.load %arg51[%c0_254, %c0_255] : memref<16x128xf32, #tpu.memory_space<vmem>>, vector<16x128xf32>
    %c0_256 = arith.constant 0 : index
    %c0_257 = arith.constant 0 : index
    %252 = vector.load %arg39[%c0_256, %c0_257] : memref<1x128xf32, #tpu.memory_space<vmem>>, vector<1x128xf32>
    %253 = vector.broadcast %252 : vector<1x128xf32> to vector<16x128xf32>
    %254 = arith.addf %251, %253 : vector<16x128xf32>
    %cst_258 = arith.constant 0.000000e+00 : f32
    %255 = vector.broadcast %cst_258 : f32 to vector<16x128xf32>
    %256 = arith.maximumf %254, %255 : vector<16x128xf32>
    %c0_259 = arith.constant 0 : index
    %c0_260 = arith.constant 0 : index
    %257 = vector.load %arg40[%c0_259, %c0_260] : memref<128x128xf32, #tpu.memory_space<vmem>>, vector<128x128xf32>
    %cst_261 = arith.constant dense<0.000000e+00> : vector<16x128xf32>
    %258 = tpu.matmul %256, %257, %cst_261 {dimension_numbers = #tpu.dot_dimension_numbers<[1], [0], [0], [1], [0, 0, 1, 1], [], []>} : vector<16x128xf32>, vector<128x128xf32>, vector<16x128xf32> -> vector<16x128xf32>
    %c0_262 = arith.constant 0 : index
    %c0_263 = arith.constant 0 : index
    %259 = vector.load %arg41[%c0_262, %c0_263] : memref<1x128xf32, #tpu.memory_space<vmem>>, vector<1x128xf32>
    %260 = vector.broadcast %259 : vector<1x128xf32> to vector<16x128xf32>
    %261 = arith.addf %258, %260 : vector<16x128xf32>
    %cst_264 = arith.constant 0.000000e+00 : f32
    %262 = vector.broadcast %cst_264 : f32 to vector<16x128xf32>
    %263 = arith.maximumf %261, %262 : vector<16x128xf32>
    %c0_265 = arith.constant 0 : index
    %c0_266 = arith.constant 0 : index
    %264 = vector.load %arg42[%c0_265, %c0_266] : memref<1x384xf32, #tpu.memory_space<vmem>>, vector<1x128xf32>
    %265 = vector.broadcast %264 : vector<1x128xf32> to vector<16x128xf32>
    %266 = arith.mulf %51, %265 : vector<16x128xf32>
    %c0_267 = arith.constant 0 : index
    %c0_268 = arith.constant 0 : index
    %267 = vector.load %arg43[%c0_267, %c0_268] : memref<1x384xf32, #tpu.memory_space<vmem>>, vector<1x128xf32>
    %268 = vector.broadcast %267 : vector<1x128xf32> to vector<16x128xf32>
    %269 = arith.addf %266, %268 : vector<16x128xf32>
    %cst_269 = arith.constant 0.000000e+00 : f32
    %270 = vector.broadcast %cst_269 : f32 to vector<16x128xf32>
    %271 = arith.maximumf %269, %270 : vector<16x128xf32>
    %c0_270 = arith.constant 0 : index
    %c0_271 = arith.constant 0 : index
    %272 = vector.load %arg44[%c0_270, %c0_271] : memref<384x512xf32, #tpu.memory_space<vmem>>, vector<128x512xf32>
    %cst_272 = arith.constant dense<0.000000e+00> : vector<16x512xf32>
    %273 = tpu.matmul %271, %272, %cst_272 {dimension_numbers = #tpu.dot_dimension_numbers<[1], [0], [0], [1], [0, 0, 1, 1], [], []>} : vector<16x128xf32>, vector<128x512xf32>, vector<16x512xf32> -> vector<16x512xf32>
    %c0_273 = arith.constant 0 : index
    %c128 = arith.constant 128 : index
    %274 = vector.load %arg42[%c0_273, %c128] : memref<1x384xf32, #tpu.memory_space<vmem>>, vector<1x128xf32>
    %275 = vector.broadcast %274 : vector<1x128xf32> to vector<16x128xf32>
    %276 = arith.mulf %157, %275 : vector<16x128xf32>
    %c0_274 = arith.constant 0 : index
    %c128_275 = arith.constant 128 : index
    %277 = vector.load %arg43[%c0_274, %c128_275] : memref<1x384xf32, #tpu.memory_space<vmem>>, vector<1x128xf32>
    %278 = vector.broadcast %277 : vector<1x128xf32> to vector<16x128xf32>
    %279 = arith.addf %276, %278 : vector<16x128xf32>
    %cst_276 = arith.constant 0.000000e+00 : f32
    %280 = vector.broadcast %cst_276 : f32 to vector<16x128xf32>
    %281 = arith.maximumf %279, %280 : vector<16x128xf32>
    %c128_277 = arith.constant 128 : index
    %c0_278 = arith.constant 0 : index
    %282 = vector.load %arg44[%c128_277, %c0_278] : memref<384x512xf32, #tpu.memory_space<vmem>>, vector<128x512xf32>
    %cst_279 = arith.constant dense<0.000000e+00> : vector<16x512xf32>
    %283 = tpu.matmul %281, %282, %cst_279 {dimension_numbers = #tpu.dot_dimension_numbers<[1], [0], [0], [1], [0, 0, 1, 1], [], []>} : vector<16x128xf32>, vector<128x512xf32>, vector<16x512xf32> -> vector<16x512xf32>
    %284 = arith.addf %273, %283 : vector<16x512xf32>
    %c0_280 = arith.constant 0 : index
    %c256 = arith.constant 256 : index
    %285 = vector.load %arg42[%c0_280, %c256] : memref<1x384xf32, #tpu.memory_space<vmem>>, vector<1x128xf32>
    %286 = vector.broadcast %285 : vector<1x128xf32> to vector<16x128xf32>
    %287 = arith.mulf %263, %286 : vector<16x128xf32>
    %c0_281 = arith.constant 0 : index
    %c256_282 = arith.constant 256 : index
    %288 = vector.load %arg43[%c0_281, %c256_282] : memref<1x384xf32, #tpu.memory_space<vmem>>, vector<1x128xf32>
    %289 = vector.broadcast %288 : vector<1x128xf32> to vector<16x128xf32>
    %290 = arith.addf %287, %289 : vector<16x128xf32>
    %cst_283 = arith.constant 0.000000e+00 : f32
    %291 = vector.broadcast %cst_283 : f32 to vector<16x128xf32>
    %292 = arith.maximumf %290, %291 : vector<16x128xf32>
    %c256_284 = arith.constant 256 : index
    %c0_285 = arith.constant 0 : index
    %293 = vector.load %arg44[%c256_284, %c0_285] : memref<384x512xf32, #tpu.memory_space<vmem>>, vector<128x512xf32>
    %cst_286 = arith.constant dense<0.000000e+00> : vector<16x512xf32>
    %294 = tpu.matmul %292, %293, %cst_286 {dimension_numbers = #tpu.dot_dimension_numbers<[1], [0], [0], [1], [0, 0, 1, 1], [], []>} : vector<16x128xf32>, vector<128x512xf32>, vector<16x512xf32> -> vector<16x512xf32>
    %295 = arith.addf %284, %294 : vector<16x512xf32>
    %c0_287 = arith.constant 0 : index
    %c0_288 = arith.constant 0 : index
    %296 = vector.load %arg45[%c0_287, %c0_288] : memref<1x512xf32, #tpu.memory_space<vmem>>, vector<1x512xf32>
    %297 = vector.broadcast %296 : vector<1x512xf32> to vector<16x512xf32>
    %298 = arith.addf %295, %297 : vector<16x512xf32>
    %cst_289 = arith.constant 0.000000e+00 : f32
    %299 = vector.broadcast %cst_289 : f32 to vector<16x512xf32>
    %300 = arith.maximumf %298, %299 : vector<16x512xf32>
    %c0_290 = arith.constant 0 : index
    %c0_291 = arith.constant 0 : index
    %301 = vector.load %arg46[%c0_290, %c0_291] : memref<1x512xf32, #tpu.memory_space<vmem>>, vector<1x512xf32>
    %302 = vector.broadcast %301 : vector<1x512xf32> to vector<16x512xf32>
    %303 = arith.mulf %1, %302 : vector<16x512xf32>
    %c0_292 = arith.constant 0 : index
    %c0_293 = arith.constant 0 : index
    %304 = vector.load %arg47[%c0_292, %c0_293] : memref<1x512xf32, #tpu.memory_space<vmem>>, vector<1x512xf32>
    %305 = vector.broadcast %304 : vector<1x512xf32> to vector<16x512xf32>
    %306 = arith.addf %303, %305 : vector<16x512xf32>
    %cst_294 = arith.constant 0.000000e+00 : f32
    %307 = vector.broadcast %cst_294 : f32 to vector<16x512xf32>
    %308 = arith.maximumf %306, %307 : vector<16x512xf32>
    %c0_295 = arith.constant 0 : index
    %c0_296 = arith.constant 0 : index
    %309 = vector.load %arg48[%c0_295, %c0_296] : memref<512x512xf32, #tpu.memory_space<vmem>>, vector<512x512xf32>
    %cst_297 = arith.constant dense<0.000000e+00> : vector<16x512xf32>
    %310 = tpu.matmul %308, %309, %cst_297 {dimension_numbers = #tpu.dot_dimension_numbers<[1], [0], [0], [1], [0, 0, 1, 1], [], []>} : vector<16x512xf32>, vector<512x512xf32>, vector<16x512xf32> -> vector<16x512xf32>
    %c0_298 = arith.constant 0 : index
    %c0_299 = arith.constant 0 : index
    %311 = vector.load %arg49[%c0_298, %c0_299] : memref<1x512xf32, #tpu.memory_space<vmem>>, vector<1x512xf32>
    %312 = vector.broadcast %311 : vector<1x512xf32> to vector<16x512xf32>
    %313 = arith.addf %310, %312 : vector<16x512xf32>
    %cst_300 = arith.constant 0.000000e+00 : f32
    %314 = vector.broadcast %cst_300 : f32 to vector<16x512xf32>
    %315 = arith.maximumf %313, %314 : vector<16x512xf32>
    %cst_301 = arith.constant 1.000000e-01 : f32
    %316 = vector.broadcast %cst_301 : f32 to vector<16x512xf32>
    %317 = arith.mulf %300, %316 : vector<16x512xf32>
    %318 = arith.addf %317, %315 : vector<16x512xf32>
    %cst_302 = arith.constant 0.000000e+00 : f32
    %319 = vector.broadcast %cst_302 : f32 to vector<16x512xf32>
    %320 = arith.maximumf %318, %319 : vector<16x512xf32>
    %c0_303 = arith.constant 0 : index
    %c0_304 = arith.constant 0 : index
    %c0_305 = arith.constant 0 : index
    %321 = vector.load %arg50[%c0_303, %c0_304, %c0_305] : memref<1x16x512xf32, #tpu.memory_space<vmem>>, vector<1x16x512xf32>
    %322 = vector.shape_cast %321 : vector<1x16x512xf32> to vector<16x512xf32>
    %323 = vector.shape_cast %320 : vector<16x512xf32> to vector<1x16x512xf32>
    tpu.vector_store %arg50[%c0_303, %c0_304, %c0_305], %323 {strides = array<i32>} : memref<1x16x512xf32, #tpu.memory_space<vmem>>, vector<1x16x512xf32>,
    return
  }
  func.func @transform_0(%arg0: i32) -> (i32, i32, i32) {
    %c0_i32 = arith.constant 0 : i32
    %c0_i32_0 = arith.constant 0 : i32
    %c0_i32_1 = arith.constant 0 : i32
    return %arg0, %c0_i32, %c0_i32_0 : i32, i32, i32
  }
  func.func @transform_1(%arg0: i32) -> (i32, i32) {
    %c0_i32 = arith.constant 0 : i32
    %c0_i32_0 = arith.constant 0 : i32
    %c0_i32_1 = arith.constant 0 : i32
    return %c0_i32, %c0_i32_0 : i32, i32
  }
  func.func @transform_2(%arg0: i32) -> (i32, i32) {
    %c0_i32 = arith.constant 0 : i32
    %c0_i32_0 = arith.constant 0 : i32
    %c0_i32_1 = arith.constant 0 : i32
    return %c0_i32, %c0_i32_0 : i32, i32
  }
  func.func @transform_3(%arg0: i32) -> (i32, i32) {
    %c0_i32 = arith.constant 0 : i32
    %c0_i32_0 = arith.constant 0 : i32
    %c0_i32_1 = arith.constant 0 : i32
    return %c0_i32, %c0_i32_0 : i32, i32
  }
  func.func @transform_4(%arg0: i32) -> (i32, i32) {
    %c0_i32 = arith.constant 0 : i32
    %c0_i32_0 = arith.constant 0 : i32
    %c0_i32_1 = arith.constant 0 : i32
    return %c0_i32, %c0_i32_0 : i32, i32
  }
  func.func @transform_5(%arg0: i32) -> (i32, i32, i32) {
    %c0_i32 = arith.constant 0 : i32
    %c0_i32_0 = arith.constant 0 : i32
    %c0_i32_1 = arith.constant 0 : i32
    %c0_i32_2 = arith.constant 0 : i32
    return %c0_i32, %c0_i32_0, %c0_i32_1 : i32, i32, i32
  }
  func.func @transform_6(%arg0: i32) -> (i32, i32) {
    %c0_i32 = arith.constant 0 : i32
    %c0_i32_0 = arith.constant 0 : i32
    %c0_i32_1 = arith.constant 0 : i32
    return %c0_i32, %c0_i32_0 : i32, i32
  }
  func.func @transform_7(%arg0: i32) -> (i32, i32) {
    %c0_i32 = arith.constant 0 : i32
    %c0_i32_0 = arith.constant 0 : i32
    %c0_i32_1 = arith.constant 0 : i32
    return %c0_i32, %c0_i32_0 : i32, i32
  }
  func.func @transform_8(%arg0: i32) -> (i32, i32) {
    %c0_i32 = arith.constant 0 : i32
    %c0_i32_0 = arith.constant 0 : i32
    %c0_i32_1 = arith.constant 0 : i32
    return %c0_i32, %c0_i32_0 : i32, i32
  }
  func.func @transform_9(%arg0: i32) -> (i32, i32) {
    %c0_i32 = arith.constant 0 : i32
    %c0_i32_0 = arith.constant 0 : i32
    %c0_i32_1 = arith.constant 0 : i32
    return %c0_i32, %c0_i32_0 : i32, i32
  }
  func.func @transform_10(%arg0: i32) -> (i32, i32) {
    %c0_i32 = arith.constant 0 : i32
    %c0_i32_0 = arith.constant 0 : i32
    %c0_i32_1 = arith.constant 0 : i32
    return %c0_i32, %c0_i32_0 : i32, i32
  }
  func.func @transform_11(%arg0: i32) -> (i32, i32) {
    %c0_i32 = arith.constant 0 : i32
    %c0_i32_0 = arith.constant 0 : i32
    %c0_i32_1 = arith.constant 0 : i32
    return %c0_i32, %c0_i32_0 : i32, i32
  }
  func.func @transform_12(%arg0: i32) -> (i32, i32) {
    %c0_i32 = arith.constant 0 : i32
    %c0_i32_0 = arith.constant 0 : i32
    %c0_i32_1 = arith.constant 0 : i32
    return %c0_i32, %c0_i32_0 : i32, i32
  }
  func.func @transform_13(%arg0: i32) -> (i32, i32, i32) {
    %c0_i32 = arith.constant 0 : i32
    %c0_i32_0 = arith.constant 0 : i32
    %c0_i32_1 = arith.constant 0 : i32
    %c0_i32_2 = arith.constant 0 : i32
    return %c0_i32, %c0_i32_0, %c0_i32_1 : i32, i32, i32
  }
  func.func @transform_14(%arg0: i32) -> (i32, i32) {
    %c0_i32 = arith.constant 0 : i32
    %c0_i32_0 = arith.constant 0 : i32
    %c0_i32_1 = arith.constant 0 : i32
    return %c0_i32, %c0_i32_0 : i32, i32
  }
  func.func @transform_15(%arg0: i32) -> (i32, i32) {
    %c0_i32 = arith.constant 0 : i32
    %c0_i32_0 = arith.constant 0 : i32
    %c0_i32_1 = arith.constant 0 : i32
    return %c0_i32, %c0_i32_0 : i32, i32
  }
  func.func @transform_16(%arg0: i32) -> (i32, i32) {
    %c0_i32 = arith.constant 0 : i32
    %c0_i32_0 = arith.constant 0 : i32
    %c0_i32_1 = arith.constant 0 : i32
    return %c0_i32, %c0_i32_0 : i32, i32
  }
  func.func @transform_17(%arg0: i32) -> (i32, i32, i32) {
    %c0_i32 = arith.constant 0 : i32
    %c0_i32_0 = arith.constant 0 : i32
    %c0_i32_1 = arith.constant 0 : i32
    %c0_i32_2 = arith.constant 0 : i32
    return %c0_i32, %c0_i32_0, %c0_i32_1 : i32, i32, i32
  }
  func.func @transform_18(%arg0: i32) -> (i32, i32) {
    %c0_i32 = arith.constant 0 : i32
    %c0_i32_0 = arith.constant 0 : i32
    %c0_i32_1 = arith.constant 0 : i32
    return %c0_i32, %c0_i32_0 : i32, i32
  }
  func.func @transform_19(%arg0: i32) -> (i32, i32) {
    %c0_i32 = arith.constant 0 : i32
    %c0_i32_0 = arith.constant 0 : i32
    %c0_i32_1 = arith.constant 0 : i32
    return %c0_i32, %c0_i32_0 : i32, i32
  }
  func.func @transform_20(%arg0: i32) -> (i32, i32) {
    %c0_i32 = arith.constant 0 : i32
    %c0_i32_0 = arith.constant 0 : i32
    %c0_i32_1 = arith.constant 0 : i32
    return %c0_i32, %c0_i32_0 : i32, i32
  }
  func.func @transform_21(%arg0: i32) -> (i32, i32, i32) {
    %c0_i32 = arith.constant 0 : i32
    %c0_i32_0 = arith.constant 0 : i32
    %c0_i32_1 = arith.constant 0 : i32
    %c0_i32_2 = arith.constant 0 : i32
    return %c0_i32, %c0_i32_0, %c0_i32_1 : i32, i32, i32
  }
  func.func @transform_22(%arg0: i32) -> (i32, i32) {
    %c0_i32 = arith.constant 0 : i32
    %c0_i32_0 = arith.constant 0 : i32
    %c0_i32_1 = arith.constant 0 : i32
    return %c0_i32, %c0_i32_0 : i32, i32
  }
  func.func @transform_23(%arg0: i32) -> (i32, i32) {
    %c0_i32 = arith.constant 0 : i32
    %c0_i32_0 = arith.constant 0 : i32
    %c0_i32_1 = arith.constant 0 : i32
    return %c0_i32, %c0_i32_0 : i32, i32
  }
  func.func @transform_24(%arg0: i32) -> (i32, i32) {
    %c0_i32 = arith.constant 0 : i32
    %c0_i32_0 = arith.constant 0 : i32
    %c0_i32_1 = arith.constant 0 : i32
    return %c0_i32, %c0_i32_0 : i32, i32
  }
  func.func @transform_25(%arg0: i32) -> (i32, i32) {
    %c0_i32 = arith.constant 0 : i32
    %c0_i32_0 = arith.constant 0 : i32
    %c0_i32_1 = arith.constant 0 : i32
    return %c0_i32, %c0_i32_0 : i32, i32
  }
  func.func @transform_26(%arg0: i32) -> (i32, i32) {
    %c0_i32 = arith.constant 0 : i32
    %c0_i32_0 = arith.constant 0 : i32
    %c0_i32_1 = arith.constant 0 : i32
    return %c0_i32, %c0_i32_0 : i32, i32
  }
  func.func @transform_27(%arg0: i32) -> (i32, i32) {
    %c0_i32 = arith.constant 0 : i32
    %c0_i32_0 = arith.constant 0 : i32
    %c0_i32_1 = arith.constant 0 : i32
    return %c0_i32, %c0_i32_0 : i32, i32
  }
  func.func @transform_28(%arg0: i32) -> (i32, i32) {
    %c0_i32 = arith.constant 0 : i32
    %c0_i32_0 = arith.constant 0 : i32
    %c0_i32_1 = arith.constant 0 : i32
    return %c0_i32, %c0_i32_0 : i32, i32
  }
  func.func @transform_29(%arg0: i32) -> (i32, i32, i32) {
    %c0_i32 = arith.constant 0 : i32
    %c0_i32_0 = arith.constant 0 : i32
    %c0_i32_1 = arith.constant 0 : i32
    %c0_i32_2 = arith.constant 0 : i32
    return %c0_i32, %c0_i32_0, %c0_i32_1 : i32, i32, i32
  }
  func.func @transform_30(%arg0: i32) -> (i32, i32) {
    %c0_i32 = arith.constant 0 : i32
    %c0_i32_0 = arith.constant 0 : i32
    %c0_i32_1 = arith.constant 0 : i32
    return %c0_i32, %c0_i32_0 : i32, i32
  }
  func.func @transform_31(%arg0: i32) -> (i32, i32) {
    %c0_i32 = arith.constant 0 : i32
    %c0_i32_0 = arith.constant 0 : i32
    %c0_i32_1 = arith.constant 0 : i32
    return %c0_i32, %c0_i32_0 : i32, i32
  }
  func.func @transform_32(%arg0: i32) -> (i32, i32) {
    %c0_i32 = arith.constant 0 : i32
    %c0_i32_0 = arith.constant 0 : i32
    %c0_i32_1 = arith.constant 0 : i32
    return %c0_i32, %c0_i32_0 : i32, i32
  }
  func.func @transform_33(%arg0: i32) -> (i32, i32, i32) {
    %c0_i32 = arith.constant 0 : i32
    %c0_i32_0 = arith.constant 0 : i32
    %c0_i32_1 = arith.constant 0 : i32
    %c0_i32_2 = arith.constant 0 : i32
    return %c0_i32, %c0_i32_0, %c0_i32_1 : i32, i32, i32
  }
  func.func @transform_34(%arg0: i32) -> (i32, i32) {
    %c0_i32 = arith.constant 0 : i32
    %c0_i32_0 = arith.constant 0 : i32
    %c0_i32_1 = arith.constant 0 : i32
    return %c0_i32, %c0_i32_0 : i32, i32
  }
  func.func @transform_35(%arg0: i32) -> (i32, i32) {
    %c0_i32 = arith.constant 0 : i32
    %c0_i32_0 = arith.constant 0 : i32
    %c0_i32_1 = arith.constant 0 : i32
    return %c0_i32, %c0_i32_0 : i32, i32
  }
  func.func @transform_36(%arg0: i32) -> (i32, i32) {
    %c0_i32 = arith.constant 0 : i32
    %c0_i32_0 = arith.constant 0 : i32
    %c0_i32_1 = arith.constant 0 : i32
    return %c0_i32, %c0_i32_0 : i32, i32
  }
  func.func @transform_37(%arg0: i32) -> (i32, i32, i32) {
    %c0_i32 = arith.constant 0 : i32
    %c0_i32_0 = arith.constant 0 : i32
    %c0_i32_1 = arith.constant 0 : i32
    %c0_i32_2 = arith.constant 0 : i32
    return %c0_i32, %c0_i32_0, %c0_i32_1 : i32, i32, i32
  }
  func.func @transform_38(%arg0: i32) -> (i32, i32) {
    %c0_i32 = arith.constant 0 : i32
    %c0_i32_0 = arith.constant 0 : i32
    %c0_i32_1 = arith.constant 0 : i32
    return %c0_i32, %c0_i32_0 : i32, i32
  }
  func.func @transform_39(%arg0: i32) -> (i32, i32) {
    %c0_i32 = arith.constant 0 : i32
    %c0_i32_0 = arith.constant 0 : i32
    %c0_i32_1 = arith.constant 0 : i32
    return %c0_i32, %c0_i32_0 : i32, i32
  }
  func.func @transform_40(%arg0: i32) -> (i32, i32) {
    %c0_i32 = arith.constant 0 : i32
    %c0_i32_0 = arith.constant 0 : i32
    %c0_i32_1 = arith.constant 0 : i32
    return %c0_i32, %c0_i32_0 : i32, i32
  }
  func.func @transform_41(%arg0: i32) -> (i32, i32) {
    %c0_i32 = arith.constant 0 : i32
    %c0_i32_0 = arith.constant 0 : i32
    %c0_i32_1 = arith.constant 0 : i32
    return %c0_i32, %c0_i32_0 : i32, i32
  }
  func.func @transform_42(%arg0: i32) -> (i32, i32) {
    %c0_i32 = arith.constant 0 : i32
    %c0_i32_0 = arith.constant 0 : i32
    %c0_i32_1 = arith.constant 0 : i32
    return %c0_i32, %c0_i32_0 : i32, i32
  }
  func.func @transform_43(%arg0: i32) -> (i32, i32) {
    %c0_i32 = arith.constant 0 : i32
    %c0_i32_0 = arith.constant 0 : i32
    %c0_i32_1 = arith.constant 0 : i32
    return %c0_i32, %c0_i32_0 : i32, i32
  }
  func.func @transform_44(%arg0: i32) -> (i32, i32) {
    %c0_i32 = arith.constant 0 : i32
    %c0_i32_0 = arith.constant 0 : i32
    %c0_i32_1 = arith.constant 0 : i32
    return %c0_i32, %c0_i32_0 : i32, i32
  }
  func.func @transform_45(%arg0: i32) -> (i32, i32) {
    %c0_i32 = arith.constant 0 : i32
    %c0_i32_0 = arith.constant 0 : i32
    %c0_i32_1 = arith.constant 0 : i32
    return %c0_i32, %c0_i32_0 : i32, i32
  }
  func.func @transform_46(%arg0: i32) -> (i32, i32) {
    %c0_i32 = arith.constant 0 : i32
    %c0_i32_0 = arith.constant 0 : i32
    %c0_i32_1 = arith.constant 0 : i32
    return %c0_i32, %c0_i32_0 : i32, i32
  }
  func.func @transform_47(%arg0: i32) -> (i32, i32) {
    %c0_i32 = arith.constant 0 : i32
    %c0_i32_0 = arith.constant 0 : i32
    %c0_i32_1 = arith.constant 0 : i32
    return %c0_i32, %c0_i32_0 : i32, i32
  }
  func.func @transform_48(%arg0: i32) -> (i32, i32) {
    %c0_i32 = arith.constant 0 : i32
    %c0_i32_0 = arith.constant 0 : i32
    %c0_i32_1 = arith.constant 0 : i32
    return %c0_i32, %c0_i32_0 : i32, i32
  }
  func.func @transform_49(%arg0: i32) -> (i32, i32, i32) {
    %c0_i32 = arith.constant 0 : i32
    %c0_i32_0 = arith.constant 0 : i32
    %c0_i32_1 = arith.constant 0 : i32
    return %arg0, %c0_i32, %c0_i32_0 : i32, i32, i32
  }
}

</mosaic_0001>

<llo_original>
// kernel: tpu_custom_call.1
$region0: #{tpu_custom_call.1}
  #allocation0 [shape = 'u32[]', space=smem, size = 0x4, offset = 0x4, fixed_abs, tag = 'smem constant byte address 0x4 - core index']
  #allocation1 [shape = 'u32[144,128]{1,0:T(1,128)}', space=vmem, size = 0x12000, scoped, tag = 'internal scratch']
  #allocation2 [shape = 'f32[16,128]{1,0:T(8,128)}', space=vmem, size = 0x2000, scoped, tag = 'scratch operand']
  %s0 = inlined_call_operand.smem [shape: u32[50], index: -1, kind: input, shape index: {}]
  %s1 = sld [smem:[%s0]]
  %s2 = scalar_lea.smem %s0, 1
  %s3 = sld [smem:[%s2]]
  %s4 = scalar_lea.smem %s0, 2
  %s5 = sld [smem:[%s4]]
  %s6 = scalar_lea.smem %s0, 3
  %s7 = sld [smem:[%s6]]
  %s8 = scalar_lea.smem %s0, 4
  %s9 = sld [smem:[%s8]]
  %s10 = scalar_lea.smem %s0, 5
  %s11 = sld [smem:[%s10]]
  %s12 = scalar_lea.smem %s0, 6
  %s13 = sld [smem:[%s12]]
  %s14 = scalar_lea.smem %s0, 7
  %s15 = sld [smem:[%s14]]
  %s16 = scalar_lea.smem %s0, 8
  %s17 = sld [smem:[%s16]]
  %s18 = scalar_lea.smem %s0, 9
  %s19 = sld [smem:[%s18]]
  %s20 = scalar_lea.smem %s0, 10
  %s21 = sld [smem:[%s20]]
  %s22 = scalar_lea.smem %s0, 11
  %s23 = sld [smem:[%s22]]
  %s24 = scalar_lea.smem %s0, 12
  %s25 = sld [smem:[%s24]]
  %s26 = scalar_lea.smem %s0, 13
  %s27 = sld [smem:[%s26]]
  %s28 = scalar_lea.smem %s0, 14
  %s29 = sld [smem:[%s28]]
  %s30 = scalar_lea.smem %s0, 15
  %s31 = sld [smem:[%s30]]
  %s32 = scalar_lea.smem %s0, 16
  %s33 = sld [smem:[%s32]]
  %s34 = scalar_lea.smem %s0, 17
  %s35 = sld [smem:[%s34]]
  %s36 = scalar_lea.smem %s0, 18
  %s37 = sld [smem:[%s36]]
  %s38 = scalar_lea.smem %s0, 19
  %s39 = sld [smem:[%s38]]
  %s40 = scalar_lea.smem %s0, 20
  %s41 = sld [smem:[%s40]]
  %s42 = scalar_lea.smem %s0, 21
  %s43 = sld [smem:[%s42]]
  %s44 = scalar_lea.smem %s0, 22
  %s45 = sld [smem:[%s44]]
  %s46 = scalar_lea.smem %s0, 23
  %s47 = sld [smem:[%s46]]
  %s48 = scalar_lea.smem %s0, 24
  %s49 = sld [smem:[%s48]]
  %s50 = scalar_lea.smem %s0, 25
  %s51 = sld [smem:[%s50]]
  %s52 = scalar_lea.smem %s0, 26
  %s53 = sld [smem:[%s52]]
  %s54 = scalar_lea.smem %s0, 27
  %s55 = sld [smem:[%s54]]
  %s56 = scalar_lea.smem %s0, 28
  %s57 = sld [smem:[%s56]]
  %s58 = scalar_lea.smem %s0, 29
  %s59 = sld [smem:[%s58]]
  %s60 = scalar_lea.smem %s0, 30
  %s61 = sld [smem:[%s60]]
  %s62 = scalar_lea.smem %s0, 31
  %s63 = sld [smem:[%s62]]
  %s64 = scalar_lea.smem %s0, 32
  %s65 = sld [smem:[%s64]]
  %s66 = scalar_lea.smem %s0, 33
  %s67 = sld [smem:[%s66]]
  %s68 = scalar_lea.smem %s0, 34
  %s69 = sld [smem:[%s68]]
  %s70 = scalar_lea.smem %s0, 35
  %s71 = sld [smem:[%s70]]
  %s72 = scalar_lea.smem %s0, 36
  %s73 = sld [smem:[%s72]]
  %s74 = scalar_lea.smem %s0, 37
  %s75 = sld [smem:[%s74]]
  %s76 = scalar_lea.smem %s0, 38
  %s77 = sld [smem:[%s76]]
  %s78 = scalar_lea.smem %s0, 39
  %s79 = sld [smem:[%s78]]
  %s80 = scalar_lea.smem %s0, 40
  %s81 = sld [smem:[%s80]]
  %s82 = scalar_lea.smem %s0, 41
  %s83 = sld [smem:[%s82]]
  %s84 = scalar_lea.smem %s0, 42
  %s85 = sld [smem:[%s84]]
  %s86 = scalar_lea.smem %s0, 43
  %s87 = sld [smem:[%s86]]
  %s88 = scalar_lea.smem %s0, 44
  %s89 = sld [smem:[%s88]]
  %s90 = scalar_lea.smem %s0, 45
  %s91 = sld [smem:[%s90]]
  %s92 = scalar_lea.smem %s0, 46
  %s93 = sld [smem:[%s92]]
  %s94 = scalar_lea.smem %s0, 47
  %s95 = sld [smem:[%s94]]
  %s96 = scalar_lea.smem %s0, 48
  %s97 = sld [smem:[%s96]]
  %s98 = scalar_lea.smem %s0, 49
  %s99 = sld [smem:[%s98]]
  %s100 = sld [smem:[#allocation0]]
  $region349: #{tpu_custom_call.1} parent=0
    _
  %s102 = ssub.s32 1, %s100
  %s103 = scalar_select 0, %s102, %s100
  $region1: #{tpu_custom_call.1} parent=0
    #allocation3 [shape = 'u8[65536]{0}', space=vmem, size = 0x10000, scoped, tag = 'input window, operand 0']
    #allocation4 [shape = 's32[2]{0}', space=sflag, size = 0x8, scoped, tag = 'scoped memory for tpu_custom_call.1']
    #allocation5 [shape = 's32[2]{0}', space=sflag, size = 0x8, scoped, tag = 'scoped memory for tpu_custom_call.1']
    #allocation6 [shape = 'u8[2048]{0}', space=vmem, size = 0x800, scoped, tag = 'input window, operand 1, single buffered']
    #allocation7 [shape = 's32[1]{0}', space=sflag, size = 0x4, scoped, tag = 'scoped memory for tpu_custom_call.1']
    #allocation8 [shape = 'u8[2048]{0}', space=vmem, size = 0x800, scoped, tag = 'input window, operand 2, single buffered']
    #allocation9 [shape = 'u8[262144]{0}', space=vmem, size = 0x40000, scoped, tag = 'input window, operand 3, single buffered']
    #allocation10 [shape = 's32[1]{0}', space=sflag, size = 0x4, scoped, tag = 'scoped memory for tpu_custom_call.1']
    #allocation11 [shape = 'u8[512]{0}', space=vmem, size = 0x400, scoped, tag = 'input window, operand 4, single buffered']
    #allocation12 [shape = 'u8[196608]{0}', space=vmem, size = 0x30000, scoped, tag = 'input window, operand 5, single buffered']
    #allocation13 [shape = 's32[1]{0}', space=sflag, size = 0x4, scoped, tag = 'scoped memory for tpu_custom_call.1']
    #allocation14 [shape = 'u8[512]{0}', space=vmem, size = 0x400, scoped, tag = 'input window, operand 6, single buffered']
    #allocation15 [shape = 'u8[65536]{0}', space=vmem, size = 0x10000, scoped, tag = 'input window, operand 7, single buffered']
    #allocation16 [shape = 's32[1]{0}', space=sflag, size = 0x4, scoped, tag = 'scoped memory for tpu_custom_call.1']
    #allocation17 [shape = 'u8[512]{0}', space=vmem, size = 0x400, scoped, tag = 'input window, operand 8, single buffered']
    #allocation18 [shape = 'u8[262144]{0}', space=vmem, size = 0x40000, scoped, tag = 'input window, operand 11, single buffered']
    #allocation19 [shape = 's32[1]{0}', space=sflag, size = 0x4, scoped, tag = 'scoped memory for tpu_custom_call.1']
    #allocation20 [shape = 'u8[512]{0}', space=vmem, size = 0x400, scoped, tag = 'input window, operand 12, single buffered']
    #allocation21 [shape = 'u8[65536]{0}', space=vmem, size = 0x10000, scoped, tag = 'input window, operand 13, single buffered']
    #allocation22 [shape = 's32[1]{0}', space=sflag, size = 0x4, scoped, tag = 'scoped memory for tpu_custom_call.1']
    #allocation23 [shape = 'u8[512]{0}', space=vmem, size = 0x400, scoped, tag = 'input window, operand 14, single buffered']
    #allocation24 [shape = 'u8[65536]{0}', space=vmem, size = 0x10000, scoped, tag = 'input window, operand 15, single buffered']
    #allocation25 [shape = 's32[1]{0}', space=sflag, size = 0x4, scoped, tag = 'scoped memory for tpu_custom_call.1']
    #allocation26 [shape = 'u8[512]{0}', space=vmem, size = 0x400, scoped, tag = 'input window, operand 16, single buffered']
    #allocation27 [shape = 'u8[196608]{0}', space=vmem, size = 0x30000, scoped, tag = 'input window, operand 17, single buffered']
    #allocation28 [shape = 's32[1]{0}', space=sflag, size = 0x4, scoped, tag = 'scoped memory for tpu_custom_call.1']
    #allocation29 [shape = 'u8[512]{0}', space=vmem, size = 0x400, scoped, tag = 'input window, operand 18, single buffered']
    #allocation30 [shape = 'u8[65536]{0}', space=vmem, size = 0x10000, scoped, tag = 'input window, operand 19, single buffered']
    #allocation31 [shape = 's32[1]{0}', space=sflag, size = 0x4, scoped, tag = 'scoped memory for tpu_custom_call.1']
    #allocation32 [shape = 'u8[512]{0}', space=vmem, size = 0x400, scoped, tag = 'input window, operand 20, single buffered']
    #allocation33 [shape = 'u8[196608]{0}', space=vmem, size = 0x30000, scoped, tag = 'input window, operand 21, single buffered']
    #allocation34 [shape = 's32[1]{0}', space=sflag, size = 0x4, scoped, tag = 'scoped memory for tpu_custom_call.1']
    #allocation35 [shape = 'u8[65536]{0}', space=vmem, size = 0x10000, scoped, tag = 'input window, operand 23, single buffered']
    #allocation36 [shape = 'u8[262144]{0}', space=vmem, size = 0x40000, scoped, tag = 'input window, operand 27, single buffered']
    #allocation37 [shape = 's32[1]{0}', space=sflag, size = 0x4, scoped, tag = 'scoped memory for tpu_custom_call.1']
    #allocation38 [shape = 'u8[196608]{0}', space=vmem, size = 0x30000, scoped, tag = 'input window, operand 29, single buffered']
    #allocation39 [shape = 'u8[65536]{0}', space=vmem, size = 0x10000, scoped, tag = 'input window, operand 31, single buffered']
    #allocation40 [shape = 's32[1]{0}', space=sflag, size = 0x4, scoped, tag = 'scoped memory for tpu_custom_call.1']
    #allocation41 [shape = 'u8[65536]{0}', space=vmem, size = 0x10000, scoped, tag = 'input window, operand 33, single buffered']
    #allocation42 [shape = 'u8[65536]{0}', space=vmem, size = 0x10000, scoped, tag = 'input window, operand 35, single buffered']
    #allocation43 [shape = 's32[1]{0}', space=sflag, size = 0x4, scoped, tag = 'scoped memory for tpu_custom_call.1']
    #allocation44 [shape = 'u8[196608]{0}', space=vmem, size = 0x30000, scoped, tag = 'input window, operand 37, single buffered']
    #allocation45 [shape = 'u8[65536]{0}', space=vmem, size = 0x10000, scoped, tag = 'input window, operand 39, single buffered']
    #allocation46 [shape = 's32[1]{0}', space=sflag, size = 0x4, scoped, tag = 'scoped memory for tpu_custom_call.1']
    #allocation47 [shape = 'u8[786432]{0}', space=vmem, size = 0xc0000, scoped, tag = 'input window, operand 43, single buffered']
    #allocation48 [shape = 'u8[1048576]{0}', space=vmem, size = 0x100000, scoped, tag = 'input window, operand 47, single buffered']
    #allocation49 [shape = 's32[1]{0}', space=sflag, size = 0x4, scoped, tag = 'scoped memory for tpu_custom_call.1']
    #allocation50 [shape = 'u8[65536]{0}', space=vmem, size = 0x10000, scoped, tag = 'output window, operand 0']
    %104 = vsyncpa [#allocation4], 0
    %s105 = scalar_lea.sflag [#allocation4], 1
    %106 = vsyncpa %s105, 0
    %107 = vsyncpa [#allocation7], 0
    %108 = vsyncpa [#allocation10], 0
    %109 = vsyncpa [#allocation13], 0
    %110 = vsyncpa [#allocation16], 0
    %111 = vsyncpa [#allocation19], 0
    %112 = vsyncpa [#allocation22], 0
    %113 = vsyncpa [#allocation25], 0
    %114 = vsyncpa [#allocation28], 0
    %115 = vsyncpa [#allocation31], 0
    %116 = vsyncpa [#allocation34], 0
    %117 = vsyncpa [#allocation37], 0
    %118 = vsyncpa [#allocation40], 0
    %119 = vsyncpa [#allocation43], 0
    %120 = vsyncpa [#allocation46], 0
    %121 = vsyncpa [#allocation49], 0
    %122 = vsyncpa [#allocation5], 0
    %s123 = scalar_lea.sflag [#allocation5], 1
    %124 = vsyncpa %s123, 0
    loop: start=0, step=1, limit=4
    $region2: #{tpu_custom_call.1} parent=1 // loop_pre_header
      _
    $region3: #{tpu_custom_call.1} parent=1 // loop_header
      %s126 = sphi 0, %s130
      %p127 = scmp.ge.s32.totalorder %s126, 4
      %s136 = sphi 0, %s138
      %s139 = sphi 0, %s136
      %s140 = sphi 0, %s139
      %s156 = sphi 0, %s140
      %s160 = sphi 0, %s160
      %s162 = sphi 0, %s160
      %s163 = sphi 0, %s162
      %s177 = sphi 0, %s163
      %s181 = sphi 0, %s181
      %s183 = sphi 0, %s181
      %s184 = sphi 0, %s183
      %s198 = sphi 0, %s184
      %s202 = sphi 0, %s202
      %s204 = sphi 0, %s202
      %s205 = sphi 0, %s204
      %s219 = sphi 0, %s205
      %s223 = sphi 0, %s223
      %s225 = sphi 0, %s223
      %s226 = sphi 0, %s225
      %s240 = sphi 0, %s226
      %s244 = sphi 0, %s244
      %s246 = sphi 0, %s244
      %s247 = sphi 0, %s246
      %s261 = sphi 0, %s247
      %s265 = sphi 0, %s265
      %s267 = sphi 0, %s265
      %s268 = sphi 0, %s267
      %s282 = sphi 0, %s268
      %s286 = sphi 0, %s286
      %s288 = sphi 0, %s286
      %s289 = sphi 0, %s288
      %s303 = sphi 0, %s289
      %s307 = sphi 0, %s307
      %s309 = sphi 0, %s307
      %s310 = sphi 0, %s309
      %s324 = sphi 0, %s310
      %s328 = sphi 0, %s328
      %s330 = sphi 0, %s328
      %s331 = sphi 0, %s330
      %s345 = sphi 0, %s331
      %s349 = sphi 0, %s349
      %s351 = sphi 0, %s349
      %s352 = sphi 0, %s351
      %s366 = sphi 0, %s352
      %s370 = sphi 0, %s370
      %s372 = sphi 0, %s370
      %s373 = sphi 0, %s372
      %s387 = sphi 0, %s373
      %s391 = sphi 0, %s391
      %s393 = sphi 0, %s391
      %s394 = sphi 0, %s393
      %s408 = sphi 0, %s394
      %s412 = sphi 0, %s412
      %s414 = sphi 0, %s412
      %s415 = sphi 0, %s414
      %s429 = sphi 0, %s415
      %s433 = sphi 0, %s433
      %s435 = sphi 0, %s433
      %s436 = sphi 0, %s435
      %s450 = sphi 0, %s436
      %s454 = sphi 0, %s454
      %s456 = sphi 0, %s454
      %s457 = sphi 0, %s456
      %s471 = sphi 0, %s457
      %s475 = sphi 0, %s475
      %s477 = sphi 0, %s475
      %s478 = sphi 0, %s477
      %s492 = sphi 0, %s478
      %s496 = sphi 0, %s496
      %s498 = sphi 0, %s496
      %s499 = sphi 0, %s498
      %s513 = sphi 0, %s499
      %s517 = sphi 0, %s517
      %s519 = sphi 0, %s517
      %s520 = sphi 0, %s519
      %s534 = sphi 0, %s520
      %s538 = sphi 0, %s538
      %s540 = sphi 0, %s538
      %s541 = sphi 0, %s540
      %s555 = sphi 0, %s541
      %s559 = sphi 0, %s559
      %s561 = sphi 0, %s559
      %s562 = sphi 0, %s561
      %s576 = sphi 0, %s562
      %s580 = sphi 0, %s580
      %s582 = sphi 0, %s580
      %s583 = sphi 0, %s582
      %s597 = sphi 0, %s583
      %s601 = sphi 0, %s601
      %s603 = sphi 0, %s601
      %s604 = sphi 0, %s603
      %s618 = sphi 0, %s604
      %s622 = sphi 0, %s622
      %s624 = sphi 0, %s622
      %s625 = sphi 0, %s624
      %s639 = sphi 0, %s625
      %s643 = sphi 0, %s643
      %s645 = sphi 0, %s643
      %s646 = sphi 0, %s645
      %s660 = sphi 0, %s646
      %s664 = sphi 0, %s664
      %s666 = sphi 0, %s664
      %s667 = sphi 0, %s666
      %s681 = sphi 0, %s667
      %s685 = sphi 0, %s685
      %s687 = sphi 0, %s685
      %s688 = sphi 0, %s687
      %s702 = sphi 0, %s688
      %s706 = sphi 0, %s706
      %s708 = sphi 0, %s706
      %s709 = sphi 0, %s708
      %s723 = sphi 0, %s709
      %s727 = sphi 0, %s727
      %s729 = sphi 0, %s727
      %s730 = sphi 0, %s729
      %s744 = sphi 0, %s730
      %s748 = sphi 0, %s748
      %s750 = sphi 0, %s748
      %s751 = sphi 0, %s750
      %s765 = sphi 0, %s751
      %s769 = sphi 0, %s769
      %s771 = sphi 0, %s769
      %s772 = sphi 0, %s771
      %s786 = sphi 0, %s772
      %s790 = sphi 0, %s790
      %s792 = sphi 0, %s790
      %s793 = sphi 0, %s792
      %s807 = sphi 0, %s793
      %s811 = sphi 0, %s811
      %s813 = sphi 0, %s811
      %s814 = sphi 0, %s813
      %s828 = sphi 0, %s814
      %s832 = sphi 0, %s832
      %s834 = sphi 0, %s832
      %s835 = sphi 0, %s834
      %s849 = sphi 0, %s835
      %s853 = sphi 0, %s853
      %s855 = sphi 0, %s853
      %s856 = sphi 0, %s855
      %s870 = sphi 0, %s856
      %s874 = sphi 0, %s874
      %s876 = sphi 0, %s874
      %s877 = sphi 0, %s876
      %s891 = sphi 0, %s877
      %s895 = sphi 0, %s895
      %s897 = sphi 0, %s895
      %s898 = sphi 0, %s897
      %s912 = sphi 0, %s898
      %s916 = sphi 0, %s916
      %s918 = sphi 0, %s916
      %s919 = sphi 0, %s918
      %s933 = sphi 0, %s919
      %s937 = sphi 0, %s937
      %s939 = sphi 0, %s937
      %s940 = sphi 0, %s939
      %s954 = sphi 0, %s940
      %s958 = sphi 0, %s958
      %s960 = sphi 0, %s958
      %s961 = sphi 0, %s960
      %s975 = sphi 0, %s961
      %s979 = sphi 0, %s979
      %s981 = sphi 0, %s979
      %s982 = sphi 0, %s981
      %s996 = sphi 0, %s982
      %s1000 = sphi 0, %s1000
      %s1002 = sphi 0, %s1000
      %s1003 = sphi 0, %s1002
      %s1017 = sphi 0, %s1003
      %s1021 = sphi 0, %s1021
      %s1023 = sphi 0, %s1021
      %s1024 = sphi 0, %s1023
      %s1038 = sphi 0, %s1024
      %s1042 = sphi 0, %s1042
      %s1044 = sphi 0, %s1042
      %s1045 = sphi 0, %s1044
      %s1059 = sphi 0, %s1045
      %s1063 = sphi 0, %s1063
      %s1065 = sphi 0, %s1063
      %s1066 = sphi 0, %s1065
      %s1080 = sphi 0, %s1066
      %s1084 = sphi 0, %s1084
      %s1086 = sphi 0, %s1084
      %s1087 = sphi 0, %s1086
      %s1101 = sphi 0, %s1087
      %s1105 = sphi 0, %s1105
      %s1107 = sphi 0, %s1105
      %s1108 = sphi 0, %s1107
      %s1122 = sphi 0, %s1108
      %s1126 = sphi 0, %s1126
      %s1128 = sphi 0, %s1126
      %s1129 = sphi 0, %s1128
      %s1143 = sphi 0, %s1129
      %s1147 = sphi 0, %s1147
      %s1149 = sphi 0, %s1147
      %s1150 = sphi 0, %s1149
      %s1164 = sphi 0, %s1150
      %s1170 = sphi 0, %s1172
      %s1173 = sphi 0, %s1170
      %s1174 = sphi 0, %s1173
      %s1190 = sphi 0, %s1174
    $region4: #{tpu_custom_call.1} parent=1 // loop_header_branch
      %129 = sbr.rel (%p127) target = $region8
    $region5: #{tpu_custom_call.1} parent=1 // loop_body
      %s131 = ssub.s32 %s126, 1
      %s132 = ssub.s32 %s126, 2
      %s133 = sadd.s32 %s126, 1
      %s134 = ssub.s32 %s126, %s133
      %p135 = scmp.eq.s32.totalorder %s134, 0
      %s137 = sadd.s32 %s136, 1
      %s138 = scalar_select %p135, %s136, %s137
      %p141 = pneg %p135
      %p142 = scmp.eq.s32.totalorder %s126, 1
      %p143 = por %p141, %p142
      %p144 = scmp.ne.s32.totalorder %s136, %s139
      %p145 = scmp.eq.s32.totalorder %s126, 0
      %p146 = por %p144, %p145
      %p147 = scmp.ne.s32.totalorder %s136, %s139
      %p148 = scmp.eq.s32.totalorder %s131, 1
      %p149 = por %p147, %p148
      %p150 = scmp.ne.s32.totalorder %s139, %s140
      %p151 = scmp.eq.s32.totalorder %s131, 0
      %p152 = por %p150, %p151
      %p153 = scmp.ne.s32.totalorder %s139, %s140
      %p154 = scmp.eq.s32.totalorder %s132, 1
      %p155 = por %p153, %p154
      %p157 = scmp.ne.s32.totalorder %s140, %s156
      %p158 = scmp.eq.s32.totalorder %s132, 0
      %p159 = por %p157, %p158
      %s161 = sadd.s32 %s160, 1
      %p164 = scmp.eq.s32.totalorder %s126, 1
      %p165 = scmp.ne.s32.totalorder %s160, %s162
      %p166 = scmp.eq.s32.totalorder %s126, 0
      %p167 = por %p165, %p166
      %p168 = scmp.ne.s32.totalorder %s160, %s162
      %p169 = scmp.eq.s32.totalorder %s131, 1
      %p170 = por %p168, %p169
      %p171 = scmp.ne.s32.totalorder %s162, %s163
      %p172 = scmp.eq.s32.totalorder %s131, 0
      %p173 = por %p171, %p172
      %p174 = scmp.ne.s32.totalorder %s162, %s163
      %p175 = scmp.eq.s32.totalorder %s132, 1
      %p176 = por %p174, %p175
      %p178 = scmp.ne.s32.totalorder %s163, %s177
      %p179 = scmp.eq.s32.totalorder %s132, 0
      %p180 = por %p178, %p179
      %s182 = sadd.s32 %s181, 1
      %p185 = scmp.eq.s32.totalorder %s126, 1
      %p186 = scmp.ne.s32.totalorder %s181, %s183
      %p187 = scmp.eq.s32.totalorder %s126, 0
      %p188 = por %p186, %p187
      %p189 = scmp.ne.s32.totalorder %s181, %s183
      %p190 = scmp.eq.s32.totalorder %s131, 1
      %p191 = por %p189, %p190
      %p192 = scmp.ne.s32.totalorder %s183, %s184
      %p193 = scmp.eq.s32.totalorder %s131, 0
      %p194 = por %p192, %p193
      %p195 = scmp.ne.s32.totalorder %s183, %s184
      %p196 = scmp.eq.s32.totalorder %s132, 1
      %p197 = por %p195, %p196
      %p199 = scmp.ne.s32.totalorder %s184, %s198
      %p200 = scmp.eq.s32.totalorder %s132, 0
      %p201 = por %p199, %p200
      %s203 = sadd.s32 %s202, 1
      %p206 = scmp.eq.s32.totalorder %s126, 1
      %p207 = scmp.ne.s32.totalorder %s202, %s204
      %p208 = scmp.eq.s32.totalorder %s126, 0
      %p209 = por %p207, %p208
      %p210 = scmp.ne.s32.totalorder %s202, %s204
      %p211 = scmp.eq.s32.totalorder %s131, 1
      %p212 = por %p210, %p211
      %p213 = scmp.ne.s32.totalorder %s204, %s205
      %p214 = scmp.eq.s32.totalorder %s131, 0
      %p215 = por %p213, %p214
      %p216 = scmp.ne.s32.totalorder %s204, %s205
      %p217 = scmp.eq.s32.totalorder %s132, 1
      %p218 = por %p216, %p217
      %p220 = scmp.ne.s32.totalorder %s205, %s219
      %p221 = scmp.eq.s32.totalorder %s132, 0
      %p222 = por %p220, %p221
      %s224 = sadd.s32 %s223, 1
      %p227 = scmp.eq.s32.totalorder %s126, 1
      %p228 = scmp.ne.s32.totalorder %s223, %s225
      %p229 = scmp.eq.s32.totalorder %s126, 0
      %p230 = por %p228, %p229
      %p231 = scmp.ne.s32.totalorder %s223, %s225
      %p232 = scmp.eq.s32.totalorder %s131, 1
      %p233 = por %p231, %p232
      %p234 = scmp.ne.s32.totalorder %s225, %s226
      %p235 = scmp.eq.s32.totalorder %s131, 0
      %p236 = por %p234, %p235
      %p237 = scmp.ne.s32.totalorder %s225, %s226
      %p238 = scmp.eq.s32.totalorder %s132, 1
      %p239 = por %p237, %p238
      %p241 = scmp.ne.s32.totalorder %s226, %s240
      %p242 = scmp.eq.s32.totalorder %s132, 0
      %p243 = por %p241, %p242
      %s245 = sadd.s32 %s244, 1
      %p248 = scmp.eq.s32.totalorder %s126, 1
      %p249 = scmp.ne.s32.totalorder %s244, %s246
      %p250 = scmp.eq.s32.totalorder %s126, 0
      %p251 = por %p249, %p250
      %p252 = scmp.ne.s32.totalorder %s244, %s246
      %p253 = scmp.eq.s32.totalorder %s131, 1
      %p254 = por %p252, %p253
      %p255 = scmp.ne.s32.totalorder %s246, %s247
      %p256 = scmp.eq.s32.totalorder %s131, 0
      %p257 = por %p255, %p256
      %p258 = scmp.ne.s32.totalorder %s246, %s247
      %p259 = scmp.eq.s32.totalorder %s132, 1
      %p260 = por %p258, %p259
      %p262 = scmp.ne.s32.totalorder %s247, %s261
      %p263 = scmp.eq.s32.totalorder %s132, 0
      %p264 = por %p262, %p263
      %s266 = sadd.s32 %s265, 1
      %p269 = scmp.eq.s32.totalorder %s126, 1
      %p270 = scmp.ne.s32.totalorder %s265, %s267
      %p271 = scmp.eq.s32.totalorder %s126, 0
      %p272 = por %p270, %p271
      %p273 = scmp.ne.s32.totalorder %s265, %s267
      %p274 = scmp.eq.s32.totalorder %s131, 1
      %p275 = por %p273, %p274
      %p276 = scmp.ne.s32.totalorder %s267, %s268
      %p277 = scmp.eq.s32.totalorder %s131, 0
      %p278 = por %p276, %p277
      %p279 = scmp.ne.s32.totalorder %s267, %s268
      %p280 = scmp.eq.s32.totalorder %s132, 1
      %p281 = por %p279, %p280
      %p283 = scmp.ne.s32.totalorder %s268, %s282
      %p284 = scmp.eq.s32.totalorder %s132, 0
      %p285 = por %p283, %p284
      %s287 = sadd.s32 %s286, 1
      %p290 = scmp.eq.s32.totalorder %s126, 1
      %p291 = scmp.ne.s32.totalorder %s286, %s288
      %p292 = scmp.eq.s32.totalorder %s126, 0
      %p293 = por %p291, %p292
      %p294 = scmp.ne.s32.totalorder %s286, %s288
      %p295 = scmp.eq.s32.totalorder %s131, 1
      %p296 = por %p294, %p295
      %p297 = scmp.ne.s32.totalorder %s288, %s289
      %p298 = scmp.eq.s32.totalorder %s131, 0
      %p299 = por %p297, %p298
      %p300 = scmp.ne.s32.totalorder %s288, %s289
      %p301 = scmp.eq.s32.totalorder %s132, 1
      %p302 = por %p300, %p301
      %p304 = scmp.ne.s32.totalorder %s289, %s303
      %p305 = scmp.eq.s32.totalorder %s132, 0
      %p306 = por %p304, %p305
      %s308 = sadd.s32 %s307, 1
      %p311 = scmp.eq.s32.totalorder %s126, 1
      %p312 = scmp.ne.s32.totalorder %s307, %s309
      %p313 = scmp.eq.s32.totalorder %s126, 0
      %p314 = por %p312, %p313
      %p315 = scmp.ne.s32.totalorder %s307, %s309
      %p316 = scmp.eq.s32.totalorder %s131, 1
      %p317 = por %p315, %p316
      %p318 = scmp.ne.s32.totalorder %s309, %s310
      %p319 = scmp.eq.s32.totalorder %s131, 0
      %p320 = por %p318, %p319
      %p321 = scmp.ne.s32.totalorder %s309, %s310
      %p322 = scmp.eq.s32.totalorder %s132, 1
      %p323 = por %p321, %p322
      %p325 = scmp.ne.s32.totalorder %s310, %s324
      %p326 = scmp.eq.s32.totalorder %s132, 0
      %p327 = por %p325, %p326
      %s329 = sadd.s32 %s328, 1
      %p332 = scmp.eq.s32.totalorder %s126, 1
      %p333 = scmp.ne.s32.totalorder %s328, %s330
      %p334 = scmp.eq.s32.totalorder %s126, 0
      %p335 = por %p333, %p334
      %p336 = scmp.ne.s32.totalorder %s328, %s330
      %p337 = scmp.eq.s32.totalorder %s131, 1
      %p338 = por %p336, %p337
      %p339 = scmp.ne.s32.totalorder %s330, %s331
      %p340 = scmp.eq.s32.totalorder %s131, 0
      %p341 = por %p339, %p340
      %p342 = scmp.ne.s32.totalorder %s330, %s331
      %p343 = scmp.eq.s32.totalorder %s132, 1
      %p344 = por %p342, %p343
      %p346 = scmp.ne.s32.totalorder %s331, %s345
      %p347 = scmp.eq.s32.totalorder %s132, 0
      %p348 = por %p346, %p347
      %s350 = sadd.s32 %s349, 1
      %p353 = scmp.eq.s32.totalorder %s126, 1
      %p354 = scmp.ne.s32.totalorder %s349, %s351
      %p355 = scmp.eq.s32.totalorder %s126, 0
      %p356 = por %p354, %p355
      %p357 = scmp.ne.s32.totalorder %s349, %s351
      %p358 = scmp.eq.s32.totalorder %s131, 1
      %p359 = por %p357, %p358
      %p360 = scmp.ne.s32.totalorder %s351, %s352
      %p361 = scmp.eq.s32.totalorder %s131, 0
      %p362 = por %p360, %p361
      %p363 = scmp.ne.s32.totalorder %s351, %s352
      %p364 = scmp.eq.s32.totalorder %s132, 1
      %p365 = por %p363, %p364
      %p367 = scmp.ne.s32.totalorder %s352, %s366
      %p368 = scmp.eq.s32.totalorder %s132, 0
      %p369 = por %p367, %p368
      %s371 = sadd.s32 %s370, 1
      %p374 = scmp.eq.s32.totalorder %s126, 1
      %p375 = scmp.ne.s32.totalorder %s370, %s372
      %p376 = scmp.eq.s32.totalorder %s126, 0
      %p377 = por %p375, %p376
      %p378 = scmp.ne.s32.totalorder %s370, %s372
      %p379 = scmp.eq.s32.totalorder %s131, 1
      %p380 = por %p378, %p379
      %p381 = scmp.ne.s32.totalorder %s372, %s373
      %p382 = scmp.eq.s32.totalorder %s131, 0
      %p383 = por %p381, %p382
      %p384 = scmp.ne.s32.totalorder %s372, %s373
      %p385 = scmp.eq.s32.totalorder %s132, 1
      %p386 = por %p384, %p385
      %p388 = scmp.ne.s32.totalorder %s373, %s387
      %p389 = scmp.eq.s32.totalorder %s132, 0
      %p390 = por %p388, %p389
      %s392 = sadd.s32 %s391, 1
      %p395 = scmp.eq.s32.totalorder %s126, 1
      %p396 = scmp.ne.s32.totalorder %s391, %s393
      %p397 = scmp.eq.s32.totalorder %s126, 0
      %p398 = por %p396, %p397
      %p399 = scmp.ne.s32.totalorder %s391, %s393
      %p400 = scmp.eq.s32.totalorder %s131, 1
      %p401 = por %p399, %p400
      %p402 = scmp.ne.s32.totalorder %s393, %s394
      %p403 = scmp.eq.s32.totalorder %s131, 0
      %p404 = por %p402, %p403
      %p405 = scmp.ne.s32.totalorder %s393, %s394
      %p406 = scmp.eq.s32.totalorder %s132, 1
      %p407 = por %p405, %p406
      %p409 = scmp.ne.s32.totalorder %s394, %s408
      %p410 = scmp.eq.s32.totalorder %s132, 0
      %p411 = por %p409, %p410
      %s413 = sadd.s32 %s412, 1
      %p416 = scmp.eq.s32.totalorder %s126, 1
      %p417 = scmp.ne.s32.totalorder %s412, %s414
      %p418 = scmp.eq.s32.totalorder %s126, 0
      %p419 = por %p417, %p418
      %p420 = scmp.ne.s32.totalorder %s412, %s414
      %p421 = scmp.eq.s32.totalorder %s131, 1
      %p422 = por %p420, %p421
      %p423 = scmp.ne.s32.totalorder %s414, %s415
      %p424 = scmp.eq.s32.totalorder %s131, 0
      %p425 = por %p423, %p424
      %p426 = scmp.ne.s32.totalorder %s414, %s415
      %p427 = scmp.eq.s32.totalorder %s132, 1
      %p428 = por %p426, %p427
      %p430 = scmp.ne.s32.totalorder %s415, %s429
      %p431 = scmp.eq.s32.totalorder %s132, 0
      %p432 = por %p430, %p431
      %s434 = sadd.s32 %s433, 1
      %p437 = scmp.eq.s32.totalorder %s126, 1
      %p438 = scmp.ne.s32.totalorder %s433, %s435
      %p439 = scmp.eq.s32.totalorder %s126, 0
      %p440 = por %p438, %p439
      %p441 = scmp.ne.s32.totalorder %s433, %s435
      %p442 = scmp.eq.s32.totalorder %s131, 1
      %p443 = por %p441, %p442
      %p444 = scmp.ne.s32.totalorder %s435, %s436
      %p445 = scmp.eq.s32.totalorder %s131, 0
      %p446 = por %p444, %p445
      %p447 = scmp.ne.s32.totalorder %s435, %s436
      %p448 = scmp.eq.s32.totalorder %s132, 1
      %p449 = por %p447, %p448
      %p451 = scmp.ne.s32.totalorder %s436, %s450
      %p452 = scmp.eq.s32.totalorder %s132, 0
      %p453 = por %p451, %p452
      %s455 = sadd.s32 %s454, 1
      %p458 = scmp.eq.s32.totalorder %s126, 1
      %p459 = scmp.ne.s32.totalorder %s454, %s456
      %p460 = scmp.eq.s32.totalorder %s126, 0
      %p461 = por %p459, %p460
      %p462 = scmp.ne.s32.totalorder %s454, %s456
      %p463 = scmp.eq.s32.totalorder %s131, 1
      %p464 = por %p462, %p463
      %p465 = scmp.ne.s32.totalorder %s456, %s457
      %p466 = scmp.eq.s32.totalorder %s131, 0
      %p467 = por %p465, %p466
      %p468 = scmp.ne.s32.totalorder %s456, %s457
      %p469 = scmp.eq.s32.totalorder %s132, 1
      %p470 = por %p468, %p469
      %p472 = scmp.ne.s32.totalorder %s457, %s471
      %p473 = scmp.eq.s32.totalorder %s132, 0
      %p474 = por %p472, %p473
      %s476 = sadd.s32 %s475, 1
      %p479 = scmp.eq.s32.totalorder %s126, 1
      %p480 = scmp.ne.s32.totalorder %s475, %s477
      %p481 = scmp.eq.s32.totalorder %s126, 0
      %p482 = por %p480, %p481
      %p483 = scmp.ne.s32.totalorder %s475, %s477
      %p484 = scmp.eq.s32.totalorder %s131, 1
      %p485 = por %p483, %p484
      %p486 = scmp.ne.s32.totalorder %s477, %s478
      %p487 = scmp.eq.s32.totalorder %s131, 0
      %p488 = por %p486, %p487
      %p489 = scmp.ne.s32.totalorder %s477, %s478
      %p490 = scmp.eq.s32.totalorder %s132, 1
      %p491 = por %p489, %p490
      %p493 = scmp.ne.s32.totalorder %s478, %s492
      %p494 = scmp.eq.s32.totalorder %s132, 0
      %p495 = por %p493, %p494
      %s497 = sadd.s32 %s496, 1
      %p500 = scmp.eq.s32.totalorder %s126, 1
      %p501 = scmp.ne.s32.totalorder %s496, %s498
      %p502 = scmp.eq.s32.totalorder %s126, 0
      %p503 = por %p501, %p502
      %p504 = scmp.ne.s32.totalorder %s496, %s498
      %p505 = scmp.eq.s32.totalorder %s131, 1
      %p506 = por %p504, %p505
      %p507 = scmp.ne.s32.totalorder %s498, %s499
      %p508 = scmp.eq.s32.totalorder %s131, 0
      %p509 = por %p507, %p508
      %p510 = scmp.ne.s32.totalorder %s498, %s499
      %p511 = scmp.eq.s32.totalorder %s132, 1
      %p512 = por %p510, %p511
      %p514 = scmp.ne.s32.totalorder %s499, %s513
      %p515 = scmp.eq.s32.totalorder %s132, 0
      %p516 = por %p514, %p515
      %s518 = sadd.s32 %s517, 1
      %p521 = scmp.eq.s32.totalorder %s126, 1
      %p522 = scmp.ne.s32.totalorder %s517, %s519
      %p523 = scmp.eq.s32.totalorder %s126, 0
      %p524 = por %p522, %p523
      %p525 = scmp.ne.s32.totalorder %s517, %s519
      %p526 = scmp.eq.s32.totalorder %s131, 1
      %p527 = por %p525, %p526
      %p528 = scmp.ne.s32.totalorder %s519, %s520
      %p529 = scmp.eq.s32.totalorder %s131, 0
      %p530 = por %p528, %p529
      %p531 = scmp.ne.s32.totalorder %s519, %s520
      %p532 = scmp.eq.s32.totalorder %s132, 1
      %p533 = por %p531, %p532
      %p535 = scmp.ne.s32.totalorder %s520, %s534
      %p536 = scmp.eq.s32.totalorder %s132, 0
      %p537 = por %p535, %p536
      %s539 = sadd.s32 %s538, 1
      %p542 = scmp.eq.s32.totalorder %s126, 1
      %p543 = scmp.ne.s32.totalorder %s538, %s540
      %p544 = scmp.eq.s32.totalorder %s126, 0
      %p545 = por %p543, %p544
      %p546 = scmp.ne.s32.totalorder %s538, %s540
      %p547 = scmp.eq.s32.totalorder %s131, 1
      %p548 = por %p546, %p547
      %p549 = scmp.ne.s32.totalorder %s540, %s541
      %p550 = scmp.eq.s32.totalorder %s131, 0
      %p551 = por %p549, %p550
      %p552 = scmp.ne.s32.totalorder %s540, %s541
      %p553 = scmp.eq.s32.totalorder %s132, 1
      %p554 = por %p552, %p553
      %p556 = scmp.ne.s32.totalorder %s541, %s555
      %p557 = scmp.eq.s32.totalorder %s132, 0
      %p558 = por %p556, %p557
      %s560 = sadd.s32 %s559, 1
      %p563 = scmp.eq.s32.totalorder %s126, 1
      %p564 = scmp.ne.s32.totalorder %s559, %s561
      %p565 = scmp.eq.s32.totalorder %s126, 0
      %p566 = por %p564, %p565
      %p567 = scmp.ne.s32.totalorder %s559, %s561
      %p568 = scmp.eq.s32.totalorder %s131, 1
      %p569 = por %p567, %p568
      %p570 = scmp.ne.s32.totalorder %s561, %s562
      %p571 = scmp.eq.s32.totalorder %s131, 0
      %p572 = por %p570, %p571
      %p573 = scmp.ne.s32.totalorder %s561, %s562
      %p574 = scmp.eq.s32.totalorder %s132, 1
      %p575 = por %p573, %p574
      %p577 = scmp.ne.s32.totalorder %s562, %s576
      %p578 = scmp.eq.s32.totalorder %s132, 0
      %p579 = por %p577, %p578
      %s581 = sadd.s32 %s580, 1
      %p584 = scmp.eq.s32.totalorder %s126, 1
      %p585 = scmp.ne.s32.totalorder %s580, %s582
      %p586 = scmp.eq.s32.totalorder %s126, 0
      %p587 = por %p585, %p586
      %p588 = scmp.ne.s32.totalorder %s580, %s582
      %p589 = scmp.eq.s32.totalorder %s131, 1
      %p590 = por %p588, %p589
      %p591 = scmp.ne.s32.totalorder %s582, %s583
      %p592 = scmp.eq.s32.totalorder %s131, 0
      %p593 = por %p591, %p592
      %p594 = scmp.ne.s32.totalorder %s582, %s583
      %p595 = scmp.eq.s32.totalorder %s132, 1
      %p596 = por %p594, %p595
      %p598 = scmp.ne.s32.totalorder %s583, %s597
      %p599 = scmp.eq.s32.totalorder %s132, 0
      %p600 = por %p598, %p599
      %s602 = sadd.s32 %s601, 1
      %p605 = scmp.eq.s32.totalorder %s126, 1
      %p606 = scmp.ne.s32.totalorder %s601, %s603
      %p607 = scmp.eq.s32.totalorder %s126, 0
      %p608 = por %p606, %p607
      %p609 = scmp.ne.s32.totalorder %s601, %s603
      %p610 = scmp.eq.s32.totalorder %s131, 1
      %p611 = por %p609, %p610
      %p612 = scmp.ne.s32.totalorder %s603, %s604
      %p613 = scmp.eq.s32.totalorder %s131, 0
      %p614 = por %p612, %p613
      %p615 = scmp.ne.s32.totalorder %s603, %s604
      %p616 = scmp.eq.s32.totalorder %s132, 1
      %p617 = por %p615, %p616
      %p619 = scmp.ne.s32.totalorder %s604, %s618
      %p620 = scmp.eq.s32.totalorder %s132, 0
      %p621 = por %p619, %p620
      %s623 = sadd.s32 %s622, 1
      %p626 = scmp.eq.s32.totalorder %s126, 1
      %p627 = scmp.ne.s32.totalorder %s622, %s624
      %p628 = scmp.eq.s32.totalorder %s126, 0
      %p629 = por %p627, %p628
      %p630 = scmp.ne.s32.totalorder %s622, %s624
      %p631 = scmp.eq.s32.totalorder %s131, 1
      %p632 = por %p630, %p631
      %p633 = scmp.ne.s32.totalorder %s624, %s625
      %p634 = scmp.eq.s32.totalorder %s131, 0
      %p635 = por %p633, %p634
      %p636 = scmp.ne.s32.totalorder %s624, %s625
      %p637 = scmp.eq.s32.totalorder %s132, 1
      %p638 = por %p636, %p637
      %p640 = scmp.ne.s32.totalorder %s625, %s639
      %p641 = scmp.eq.s32.totalorder %s132, 0
      %p642 = por %p640, %p641
      %s644 = sadd.s32 %s643, 1
      %p647 = scmp.eq.s32.totalorder %s126, 1
      %p648 = scmp.ne.s32.totalorder %s643, %s645
      %p649 = scmp.eq.s32.totalorder %s126, 0
      %p650 = por %p648, %p649
      %p651 = scmp.ne.s32.totalorder %s643, %s645
      %p652 = scmp.eq.s32.totalorder %s131, 1
      %p653 = por %p651, %p652
      %p654 = scmp.ne.s32.totalorder %s645, %s646
      %p655 = scmp.eq.s32.totalorder %s131, 0
      %p656 = por %p654, %p655
      %p657 = scmp.ne.s32.totalorder %s645, %s646
      %p658 = scmp.eq.s32.totalorder %s132, 1
      %p659 = por %p657, %p658
      %p661 = scmp.ne.s32.totalorder %s646, %s660
      %p662 = scmp.eq.s32.totalorder %s132, 0
      %p663 = por %p661, %p662
      %s665 = sadd.s32 %s664, 1
      %p668 = scmp.eq.s32.totalorder %s126, 1
      %p669 = scmp.ne.s32.totalorder %s664, %s666
      %p670 = scmp.eq.s32.totalorder %s126, 0
      %p671 = por %p669, %p670
      %p672 = scmp.ne.s32.totalorder %s664, %s666
      %p673 = scmp.eq.s32.totalorder %s131, 1
      %p674 = por %p672, %p673
      %p675 = scmp.ne.s32.totalorder %s666, %s667
      %p676 = scmp.eq.s32.totalorder %s131, 0
      %p677 = por %p675, %p676
      %p678 = scmp.ne.s32.totalorder %s666, %s667
      %p679 = scmp.eq.s32.totalorder %s132, 1
      %p680 = por %p678, %p679
      %p682 = scmp.ne.s32.totalorder %s667, %s681
      %p683 = scmp.eq.s32.totalorder %s132, 0
      %p684 = por %p682, %p683
      %s686 = sadd.s32 %s685, 1
      %p689 = scmp.eq.s32.totalorder %s126, 1
      %p690 = scmp.ne.s32.totalorder %s685, %s687
      %p691 = scmp.eq.s32.totalorder %s126, 0
      %p692 = por %p690, %p691
      %p693 = scmp.ne.s32.totalorder %s685, %s687
      %p694 = scmp.eq.s32.totalorder %s131, 1
      %p695 = por %p693, %p694
      %p696 = scmp.ne.s32.totalorder %s687, %s688
      %p697 = scmp.eq.s32.totalorder %s131, 0
      %p698 = por %p696, %p697
      %p699 = scmp.ne.s32.totalorder %s687, %s688
      %p700 = scmp.eq.s32.totalorder %s132, 1
      %p701 = por %p699, %p700
      %p703 = scmp.ne.s32.totalorder %s688, %s702
      %p704 = scmp.eq.s32.totalorder %s132, 0
      %p705 = por %p703, %p704
      %s707 = sadd.s32 %s706, 1
      %p710 = scmp.eq.s32.totalorder %s126, 1
      %p711 = scmp.ne.s32.totalorder %s706, %s708
      %p712 = scmp.eq.s32.totalorder %s126, 0
      %p713 = por %p711, %p712
      %p714 = scmp.ne.s32.totalorder %s706, %s708
      %p715 = scmp.eq.s32.totalorder %s131, 1
      %p716 = por %p714, %p715
      %p717 = scmp.ne.s32.totalorder %s708, %s709
      %p718 = scmp.eq.s32.totalorder %s131, 0
      %p719 = por %p717, %p718
      %p720 = scmp.ne.s32.totalorder %s708, %s709
      %p721 = scmp.eq.s32.totalorder %s132, 1
      %p722 = por %p720, %p721
      %p724 = scmp.ne.s32.totalorder %s709, %s723
      %p725 = scmp.eq.s32.totalorder %s132, 0
      %p726 = por %p724, %p725
      %s728 = sadd.s32 %s727, 1
      %p731 = scmp.eq.s32.totalorder %s126, 1
      %p732 = scmp.ne.s32.totalorder %s727, %s729
      %p733 = scmp.eq.s32.totalorder %s126, 0
      %p734 = por %p732, %p733
      %p735 = scmp.ne.s32.totalorder %s727, %s729
      %p736 = scmp.eq.s32.totalorder %s131, 1
      %p737 = por %p735, %p736
      %p738 = scmp.ne.s32.totalorder %s729, %s730
      %p739 = scmp.eq.s32.totalorder %s131, 0
      %p740 = por %p738, %p739
      %p741 = scmp.ne.s32.totalorder %s729, %s730
      %p742 = scmp.eq.s32.totalorder %s132, 1
      %p743 = por %p741, %p742
      %p745 = scmp.ne.s32.totalorder %s730, %s744
      %p746 = scmp.eq.s32.totalorder %s132, 0
      %p747 = por %p745, %p746
      %s749 = sadd.s32 %s748, 1
      %p752 = scmp.eq.s32.totalorder %s126, 1
      %p753 = scmp.ne.s32.totalorder %s748, %s750
      %p754 = scmp.eq.s32.totalorder %s126, 0
      %p755 = por %p753, %p754
      %p756 = scmp.ne.s32.totalorder %s748, %s750
      %p757 = scmp.eq.s32.totalorder %s131, 1
      %p758 = por %p756, %p757
      %p759 = scmp.ne.s32.totalorder %s750, %s751
      %p760 = scmp.eq.s32.totalorder %s131, 0
      %p761 = por %p759, %p760
      %p762 = scmp.ne.s32.totalorder %s750, %s751
      %p763 = scmp.eq.s32.totalorder %s132, 1
      %p764 = por %p762, %p763
      %p766 = scmp.ne.s32.totalorder %s751, %s765
      %p767 = scmp.eq.s32.totalorder %s132, 0
      %p768 = por %p766, %p767
      %s770 = sadd.s32 %s769, 1
      %p773 = scmp.eq.s32.totalorder %s126, 1
      %p774 = scmp.ne.s32.totalorder %s769, %s771
      %p775 = scmp.eq.s32.totalorder %s126, 0
      %p776 = por %p774, %p775
      %p777 = scmp.ne.s32.totalorder %s769, %s771
      %p778 = scmp.eq.s32.totalorder %s131, 1
      %p779 = por %p777, %p778
      %p780 = scmp.ne.s32.totalorder %s771, %s772
      %p781 = scmp.eq.s32.totalorder %s131, 0
      %p782 = por %p780, %p781
      %p783 = scmp.ne.s32.totalorder %s771, %s772
      %p784 = scmp.eq.s32.totalorder %s132, 1
      %p785 = por %p783, %p784
      %p787 = scmp.ne.s32.totalorder %s772, %s786
      %p788 = scmp.eq.s32.totalorder %s132, 0
      %p789 = por %p787, %p788
      %s791 = sadd.s32 %s790, 1
      %p794 = scmp.eq.s32.totalorder %s126, 1
      %p795 = scmp.ne.s32.totalorder %s790, %s792
      %p796 = scmp.eq.s32.totalorder %s126, 0
      %p797 = por %p795, %p796
      %p798 = scmp.ne.s32.totalorder %s790, %s792
      %p799 = scmp.eq.s32.totalorder %s131, 1
      %p800 = por %p798, %p799
      %p801 = scmp.ne.s32.totalorder %s792, %s793
      %p802 = scmp.eq.s32.totalorder %s131, 0
      %p803 = por %p801, %p802
      %p804 = scmp.ne.s32.totalorder %s792, %s793
      %p805 = scmp.eq.s32.totalorder %s132, 1
      %p806 = por %p804, %p805
      %p808 = scmp.ne.s32.totalorder %s793, %s807
      %p809 = scmp.eq.s32.totalorder %s132, 0
      %p810 = por %p808, %p809
      %s812 = sadd.s32 %s811, 1
      %p815 = scmp.eq.s32.totalorder %s126, 1
      %p816 = scmp.ne.s32.totalorder %s811, %s813
      %p817 = scmp.eq.s32.totalorder %s126, 0
      %p818 = por %p816, %p817
      %p819 = scmp.ne.s32.totalorder %s811, %s813
      %p820 = scmp.eq.s32.totalorder %s131, 1
      %p821 = por %p819, %p820
      %p822 = scmp.ne.s32.totalorder %s813, %s814
      %p823 = scmp.eq.s32.totalorder %s131, 0
      %p824 = por %p822, %p823
      %p825 = scmp.ne.s32.totalorder %s813, %s814
      %p826 = scmp.eq.s32.totalorder %s132, 1
      %p827 = por %p825, %p826
      %p829 = scmp.ne.s32.totalorder %s814, %s828
      %p830 = scmp.eq.s32.totalorder %s132, 0
      %p831 = por %p829, %p830
      %s833 = sadd.s32 %s832, 1
      %p836 = scmp.eq.s32.totalorder %s126, 1
      %p837 = scmp.ne.s32.totalorder %s832, %s834
      %p838 = scmp.eq.s32.totalorder %s126, 0
      %p839 = por %p837, %p838
      %p840 = scmp.ne.s32.totalorder %s832, %s834
      %p841 = scmp.eq.s32.totalorder %s131, 1
      %p842 = por %p840, %p841
      %p843 = scmp.ne.s32.totalorder %s834, %s835
      %p844 = scmp.eq.s32.totalorder %s131, 0
      %p845 = por %p843, %p844
      %p846 = scmp.ne.s32.totalorder %s834, %s835
      %p847 = scmp.eq.s32.totalorder %s132, 1
      %p848 = por %p846, %p847
      %p850 = scmp.ne.s32.totalorder %s835, %s849
      %p851 = scmp.eq.s32.totalorder %s132, 0
      %p852 = por %p850, %p851
      %s854 = sadd.s32 %s853, 1
      %p857 = scmp.eq.s32.totalorder %s126, 1
      %p858 = scmp.ne.s32.totalorder %s853, %s855
      %p859 = scmp.eq.s32.totalorder %s126, 0
      %p860 = por %p858, %p859
      %p861 = scmp.ne.s32.totalorder %s853, %s855
      %p862 = scmp.eq.s32.totalorder %s131, 1
      %p863 = por %p861, %p862
      %p864 = scmp.ne.s32.totalorder %s855, %s856
      %p865 = scmp.eq.s32.totalorder %s131, 0
      %p866 = por %p864, %p865
      %p867 = scmp.ne.s32.totalorder %s855, %s856
      %p868 = scmp.eq.s32.totalorder %s132, 1
      %p869 = por %p867, %p868
      %p871 = scmp.ne.s32.totalorder %s856, %s870
      %p872 = scmp.eq.s32.totalorder %s132, 0
      %p873 = por %p871, %p872
      %s875 = sadd.s32 %s874, 1
      %p878 = scmp.eq.s32.totalorder %s126, 1
      %p879 = scmp.ne.s32.totalorder %s874, %s876
      %p880 = scmp.eq.s32.totalorder %s126, 0
      %p881 = por %p879, %p880
      %p882 = scmp.ne.s32.totalorder %s874, %s876
      %p883 = scmp.eq.s32.totalorder %s131, 1
      %p884 = por %p882, %p883
      %p885 = scmp.ne.s32.totalorder %s876, %s877
      %p886 = scmp.eq.s32.totalorder %s131, 0
      %p887 = por %p885, %p886
      %p888 = scmp.ne.s32.totalorder %s876, %s877
      %p889 = scmp.eq.s32.totalorder %s132, 1
      %p890 = por %p888, %p889
      %p892 = scmp.ne.s32.totalorder %s877, %s891
      %p893 = scmp.eq.s32.totalorder %s132, 0
      %p894 = por %p892, %p893
      %s896 = sadd.s32 %s895, 1
      %p899 = scmp.eq.s32.totalorder %s126, 1
      %p900 = scmp.ne.s32.totalorder %s895, %s897
      %p901 = scmp.eq.s32.totalorder %s126, 0
      %p902 = por %p900, %p901
      %p903 = scmp.ne.s32.totalorder %s895, %s897
      %p904 = scmp.eq.s32.totalorder %s131, 1
      %p905 = por %p903, %p904
      %p906 = scmp.ne.s32.totalorder %s897, %s898
      %p907 = scmp.eq.s32.totalorder %s131, 0
      %p908 = por %p906, %p907
      %p909 = scmp.ne.s32.totalorder %s897, %s898
      %p910 = scmp.eq.s32.totalorder %s132, 1
      %p911 = por %p909, %p910
      %p913 = scmp.ne.s32.totalorder %s898, %s912
      %p914 = scmp.eq.s32.totalorder %s132, 0
      %p915 = por %p913, %p914
      %s917 = sadd.s32 %s916, 1
      %p920 = scmp.eq.s32.totalorder %s126, 1
      %p921 = scmp.ne.s32.totalorder %s916, %s918
      %p922 = scmp.eq.s32.totalorder %s126, 0
      %p923 = por %p921, %p922
      %p924 = scmp.ne.s32.totalorder %s916, %s918
      %p925 = scmp.eq.s32.totalorder %s131, 1
      %p926 = por %p924, %p925
      %p927 = scmp.ne.s32.totalorder %s918, %s919
      %p928 = scmp.eq.s32.totalorder %s131, 0
      %p929 = por %p927, %p928
      %p930 = scmp.ne.s32.totalorder %s918, %s919
      %p931 = scmp.eq.s32.totalorder %s132, 1
      %p932 = por %p930, %p931
      %p934 = scmp.ne.s32.totalorder %s919, %s933
      %p935 = scmp.eq.s32.totalorder %s132, 0
      %p936 = por %p934, %p935
      %s938 = sadd.s32 %s937, 1
      %p941 = scmp.eq.s32.totalorder %s126, 1
      %p942 = scmp.ne.s32.totalorder %s937, %s939
      %p943 = scmp.eq.s32.totalorder %s126, 0
      %p944 = por %p942, %p943
      %p945 = scmp.ne.s32.totalorder %s937, %s939
      %p946 = scmp.eq.s32.totalorder %s131, 1
      %p947 = por %p945, %p946
      %p948 = scmp.ne.s32.totalorder %s939, %s940
      %p949 = scmp.eq.s32.totalorder %s131, 0
      %p950 = por %p948, %p949
      %p951 = scmp.ne.s32.totalorder %s939, %s940
      %p952 = scmp.eq.s32.totalorder %s132, 1
      %p953 = por %p951, %p952
      %p955 = scmp.ne.s32.totalorder %s940, %s954
      %p956 = scmp.eq.s32.totalorder %s132, 0
      %p957 = por %p955, %p956
      %s959 = sadd.s32 %s958, 1
      %p962 = scmp.eq.s32.totalorder %s126, 1
      %p963 = scmp.ne.s32.totalorder %s958, %s960
      %p964 = scmp.eq.s32.totalorder %s126, 0
      %p965 = por %p963, %p964
      %p966 = scmp.ne.s32.totalorder %s958, %s960
      %p967 = scmp.eq.s32.totalorder %s131, 1
      %p968 = por %p966, %p967
      %p969 = scmp.ne.s32.totalorder %s960, %s961
      %p970 = scmp.eq.s32.totalorder %s131, 0
      %p971 = por %p969, %p970
      %p972 = scmp.ne.s32.totalorder %s960, %s961
      %p973 = scmp.eq.s32.totalorder %s132, 1
      %p974 = por %p972, %p973
      %p976 = scmp.ne.s32.totalorder %s961, %s975
      %p977 = scmp.eq.s32.totalorder %s132, 0
      %p978 = por %p976, %p977
      %s980 = sadd.s32 %s979, 1
      %p983 = scmp.eq.s32.totalorder %s126, 1
      %p984 = scmp.ne.s32.totalorder %s979, %s981
      %p985 = scmp.eq.s32.totalorder %s126, 0
      %p986 = por %p984, %p985
      %p987 = scmp.ne.s32.totalorder %s979, %s981
      %p988 = scmp.eq.s32.totalorder %s131, 1
      %p989 = por %p987, %p988
      %p990 = scmp.ne.s32.totalorder %s981, %s982
      %p991 = scmp.eq.s32.totalorder %s131, 0
      %p992 = por %p990, %p991
      %p993 = scmp.ne.s32.totalorder %s981, %s982
      %p994 = scmp.eq.s32.totalorder %s132, 1
      %p995 = por %p993, %p994
      %p997 = scmp.ne.s32.totalorder %s982, %s996
      %p998 = scmp.eq.s32.totalorder %s132, 0
      %p999 = por %p997, %p998
      %s1001 = sadd.s32 %s1000, 1
      %p1004 = scmp.eq.s32.totalorder %s126, 1
      %p1005 = scmp.ne.s32.totalorder %s1000, %s1002
      %p1006 = scmp.eq.s32.totalorder %s126, 0
      %p1007 = por %p1005, %p1006
      %p1008 = scmp.ne.s32.totalorder %s1000, %s1002
      %p1009 = scmp.eq.s32.totalorder %s131, 1
      %p1010 = por %p1008, %p1009
      %p1011 = scmp.ne.s32.totalorder %s1002, %s1003
      %p1012 = scmp.eq.s32.totalorder %s131, 0
      %p1013 = por %p1011, %p1012
      %p1014 = scmp.ne.s32.totalorder %s1002, %s1003
      %p1015 = scmp.eq.s32.totalorder %s132, 1
      %p1016 = por %p1014, %p1015
      %p1018 = scmp.ne.s32.totalorder %s1003, %s1017
      %p1019 = scmp.eq.s32.totalorder %s132, 0
      %p1020 = por %p1018, %p1019
      %s1022 = sadd.s32 %s1021, 1
      %p1025 = scmp.eq.s32.totalorder %s126, 1
      %p1026 = scmp.ne.s32.totalorder %s1021, %s1023
      %p1027 = scmp.eq.s32.totalorder %s126, 0
      %p1028 = por %p1026, %p1027
      %p1029 = scmp.ne.s32.totalorder %s1021, %s1023
      %p1030 = scmp.eq.s32.totalorder %s131, 1
      %p1031 = por %p1029, %p1030
      %p1032 = scmp.ne.s32.totalorder %s1023, %s1024
      %p1033 = scmp.eq.s32.totalorder %s131, 0
      %p1034 = por %p1032, %p1033
      %p1035 = scmp.ne.s32.totalorder %s1023, %s1024
      %p1036 = scmp.eq.s32.totalorder %s132, 1
      %p1037 = por %p1035, %p1036
      %p1039 = scmp.ne.s32.totalorder %s1024, %s1038
      %p1040 = scmp.eq.s32.totalorder %s132, 0
      %p1041 = por %p1039, %p1040
      %s1043 = sadd.s32 %s1042, 1
      %p1046 = scmp.eq.s32.totalorder %s126, 1
      %p1047 = scmp.ne.s32.totalorder %s1042, %s1044
      %p1048 = scmp.eq.s32.totalorder %s126, 0
      %p1049 = por %p1047, %p1048
      %p1050 = scmp.ne.s32.totalorder %s1042, %s1044
      %p1051 = scmp.eq.s32.totalorder %s131, 1
      %p1052 = por %p1050, %p1051
      %p1053 = scmp.ne.s32.totalorder %s1044, %s1045
      %p1054 = scmp.eq.s32.totalorder %s131, 0
      %p1055 = por %p1053, %p1054
      %p1056 = scmp.ne.s32.totalorder %s1044, %s1045
      %p1057 = scmp.eq.s32.totalorder %s132, 1
      %p1058 = por %p1056, %p1057
      %p1060 = scmp.ne.s32.totalorder %s1045, %s1059
      %p1061 = scmp.eq.s32.totalorder %s132, 0
      %p1062 = por %p1060, %p1061
      %s1064 = sadd.s32 %s1063, 1
      %p1067 = scmp.eq.s32.totalorder %s126, 1
      %p1068 = scmp.ne.s32.totalorder %s1063, %s1065
      %p1069 = scmp.eq.s32.totalorder %s126, 0
      %p1070 = por %p1068, %p1069
      %p1071 = scmp.ne.s32.totalorder %s1063, %s1065
      %p1072 = scmp.eq.s32.totalorder %s131, 1
      %p1073 = por %p1071, %p1072
      %p1074 = scmp.ne.s32.totalorder %s1065, %s1066
      %p1075 = scmp.eq.s32.totalorder %s131, 0
      %p1076 = por %p1074, %p1075
      %p1077 = scmp.ne.s32.totalorder %s1065, %s1066
      %p1078 = scmp.eq.s32.totalorder %s132, 1
      %p1079 = por %p1077, %p1078
      %p1081 = scmp.ne.s32.totalorder %s1066, %s1080
      %p1082 = scmp.eq.s32.totalorder %s132, 0
      %p1083 = por %p1081, %p1082
      %s1085 = sadd.s32 %s1084, 1
      %p1088 = scmp.eq.s32.totalorder %s126, 1
      %p1089 = scmp.ne.s32.totalorder %s1084, %s1086
      %p1090 = scmp.eq.s32.totalorder %s126, 0
      %p1091 = por %p1089, %p1090
      %p1092 = scmp.ne.s32.totalorder %s1084, %s1086
      %p1093 = scmp.eq.s32.totalorder %s131, 1
      %p1094 = por %p1092, %p1093
      %p1095 = scmp.ne.s32.totalorder %s1086, %s1087
      %p1096 = scmp.eq.s32.totalorder %s131, 0
      %p1097 = por %p1095, %p1096
      %p1098 = scmp.ne.s32.totalorder %s1086, %s1087
      %p1099 = scmp.eq.s32.totalorder %s132, 1
      %p1100 = por %p1098, %p1099
      %p1102 = scmp.ne.s32.totalorder %s1087, %s1101
      %p1103 = scmp.eq.s32.totalorder %s132, 0
      %p1104 = por %p1102, %p1103
      %s1106 = sadd.s32 %s1105, 1
      %p1109 = scmp.eq.s32.totalorder %s126, 1
      %p1110 = scmp.ne.s32.totalorder %s1105, %s1107
      %p1111 = scmp.eq.s32.totalorder %s126, 0
      %p1112 = por %p1110, %p1111
      %p1113 = scmp.ne.s32.totalorder %s1105, %s1107
      %p1114 = scmp.eq.s32.totalorder %s131, 1
      %p1115 = por %p1113, %p1114
      %p1116 = scmp.ne.s32.totalorder %s1107, %s1108
      %p1117 = scmp.eq.s32.totalorder %s131, 0
      %p1118 = por %p1116, %p1117
      %p1119 = scmp.ne.s32.totalorder %s1107, %s1108
      %p1120 = scmp.eq.s32.totalorder %s132, 1
      %p1121 = por %p1119, %p1120
      %p1123 = scmp.ne.s32.totalorder %s1108, %s1122
      %p1124 = scmp.eq.s32.totalorder %s132, 0
      %p1125 = por %p1123, %p1124
      %s1127 = sadd.s32 %s1126, 1
      %p1130 = scmp.eq.s32.totalorder %s126, 1
      %p1131 = scmp.ne.s32.totalorder %s1126, %s1128
      %p1132 = scmp.eq.s32.totalorder %s126, 0
      %p1133 = por %p1131, %p1132
      %p1134 = scmp.ne.s32.totalorder %s1126, %s1128
      %p1135 = scmp.eq.s32.totalorder %s131, 1
      %p1136 = por %p1134, %p1135
      %p1137 = scmp.ne.s32.totalorder %s1128, %s1129
      %p1138 = scmp.eq.s32.totalorder %s131, 0
      %p1139 = por %p1137, %p1138
      %p1140 = scmp.ne.s32.totalorder %s1128, %s1129
      %p1141 = scmp.eq.s32.totalorder %s132, 1
      %p1142 = por %p1140, %p1141
      %p1144 = scmp.ne.s32.totalorder %s1129, %s1143
      %p1145 = scmp.eq.s32.totalorder %s132, 0
      %p1146 = por %p1144, %p1145
      %s1148 = sadd.s32 %s1147, 1
      %p1151 = scmp.eq.s32.totalorder %s126, 1
      %p1152 = scmp.ne.s32.totalorder %s1147, %s1149
      %p1153 = scmp.eq.s32.totalorder %s126, 0
      %p1154 = por %p1152, %p1153
      %p1155 = scmp.ne.s32.totalorder %s1147, %s1149
      %p1156 = scmp.eq.s32.totalorder %s131, 1
      %p1157 = por %p1155, %p1156
      %p1158 = scmp.ne.s32.totalorder %s1149, %s1150
      %p1159 = scmp.eq.s32.totalorder %s131, 0
      %p1160 = por %p1158, %p1159
      %p1161 = scmp.ne.s32.totalorder %s1149, %s1150
      %p1162 = scmp.eq.s32.totalorder %s132, 1
      %p1163 = por %p1161, %p1162
      %p1165 = scmp.ne.s32.totalorder %s1150, %s1164
      %p1166 = scmp.eq.s32.totalorder %s132, 0
      %p1167 = por %p1165, %p1166
      %s1168 = ssub.s32 %s126, %s133
      %p1169 = scmp.eq.s32.totalorder %s1168, 0
      %s1171 = sadd.s32 %s1170, 1
      %s1172 = scalar_select %p1169, %s1170, %s1171
      %p1175 = pneg %p1169
      %p1176 = scmp.eq.s32.totalorder %s126, 1
      %p1177 = por %p1175, %p1176
      %p1178 = scmp.ne.s32.totalorder %s1170, %s1173
      %p1179 = scmp.eq.s32.totalorder %s126, 0
      %p1180 = por %p1178, %p1179
      %p1181 = scmp.ne.s32.totalorder %s1170, %s1173
      %p1182 = scmp.eq.s32.totalorder %s131, 1
      %p1183 = por %p1181, %p1182
      %p1184 = scmp.ne.s32.totalorder %s1173, %s1174
      %p1185 = scmp.eq.s32.totalorder %s131, 0
      %p1186 = por %p1184, %p1185
      %p1187 = scmp.ne.s32.totalorder %s1173, %s1174
      %p1188 = scmp.eq.s32.totalorder %s132, 1
      %p1189 = por %p1187, %p1188
      %p1191 = scmp.ne.s32.totalorder %s1174, %s1190
      %p1192 = scmp.eq.s32.totalorder %s132, 0
      %p1193 = por %p1191, %p1192
      %p1194 = scmp.le.s32.totalorder 1, %s126
      %p1195 = scmp.lt.s32.totalorder %s126, 3
      %p1196 = pnand %p1194, %p1195
      %p1197 = pneg %p1196
      // Predicated region
      $region9: #{tpu_custom_call.1} parent=5 // pred_check
        _
      $region10: #{tpu_custom_call.1} parent=5 // pred_check_branch
        %1199 = sbr.rel (%p1196) target = $region12
      $region11: #{tpu_custom_call.1} parent=5 // pred_region
        %s1200 = ssub.s32 %s126, 1
        // Predicated region
        $region13: #{tpu_custom_call.1} parent=11 // pred_check
          %p1201 = pneg %p173
        $region14: #{tpu_custom_call.1} parent=11 // pred_check_branch
          %1203 = sbr.rel (%p1201) target = $region16
        $region15: #{tpu_custom_call.1} parent=11 // pred_region
          %s1205 = ssub.s32 64, 64
          %1206 = vsyncadd [#allocation7], %s1205
          %s1208 = sshll.u32 [#allocation6], 4
          %s1209 = int_to_ptr.vmem [resolvable:$true] %s1208
          %1211 = dma.hbm_to_vmem [thread:$0]  %s3, 64, %s1209, [#allocation7]
        $region16: #{tpu_custom_call.1} parent=11 // pred_fallthru
          _
        // Predicated region
        $region17: #{tpu_custom_call.1} parent=11 // pred_check
          %p1212 = pneg %p194
        $region18: #{tpu_custom_call.1} parent=11 // pred_check_branch
          %1214 = sbr.rel (%p1212) target = $region20
        $region19: #{tpu_custom_call.1} parent=11 // pred_region
          %s1216 = ssub.s32 64, 64
          %1217 = vsyncadd [#allocation7], %s1216
          %s1219 = sshll.u32 [#allocation8], 4
          %s1220 = int_to_ptr.vmem [resolvable:$true] %s1219
          %1222 = dma.hbm_to_vmem [thread:$0]  %s5, 64, %s1220, [#allocation7]
        $region20: #{tpu_custom_call.1} parent=11 // pred_fallthru
          _
        // Predicated region
        $region21: #{tpu_custom_call.1} parent=11 // pred_check
          %p1223 = pneg %p215
        $region22: #{tpu_custom_call.1} parent=11 // pred_check_branch
          %1225 = sbr.rel (%p1223) target = $region24
        $region23: #{tpu_custom_call.1} parent=11 // pred_region
          %s1227 = ssub.s32 8192, 8192
          %1228 = vsyncadd [#allocation10], %s1227
          %s1229 = sshll.u32 [#allocation9], 4
          %s1230 = int_to_ptr.vmem [resolvable:$true] %s1229
          %1235 = dma.hbm_to_vmem [thread:$0]  %s7, 8192, %s1230, [#allocation10], 128, 128, 8
        $region24: #{tpu_custom_call.1} parent=11 // pred_fallthru
          _
        // Predicated region
        $region25: #{tpu_custom_call.1} parent=11 // pred_check
          %p1236 = pneg %p236
        $region26: #{tpu_custom_call.1} parent=11 // pred_check_branch
          %1238 = sbr.rel (%p1236) target = $region28
        $region27: #{tpu_custom_call.1} parent=11 // pred_region
          %s1240 = ssub.s32 16, 16
          %1241 = vsyncadd [#allocation10], %s1240
          %s1243 = sshll.u32 [#allocation11], 4
          %s1244 = int_to_ptr.vmem [resolvable:$true] %s1243
          %1246 = dma.hbm_to_vmem [thread:$0]  %s9, 16, %s1244, [#allocation10]
        $region28: #{tpu_custom_call.1} parent=11 // pred_fallthru
          _
        // Predicated region
        $region29: #{tpu_custom_call.1} parent=11 // pred_check
          %p1247 = pneg %p257
        $region30: #{tpu_custom_call.1} parent=11 // pred_check_branch
          %1249 = sbr.rel (%p1247) target = $region32
        $region31: #{tpu_custom_call.1} parent=11 // pred_region
          %s1251 = ssub.s32 6144, 6144
          %1252 = vsyncadd [#allocation13], %s1251
          %s1253 = sshll.u32 [#allocation12], 4
          %s1254 = int_to_ptr.vmem [resolvable:$true] %s1253
          %1259 = dma.hbm_to_vmem [thread:$0]  %s11, 6144, %s1254, [#allocation13], 128, 128, 8
        $region32: #{tpu_custom_call.1} parent=11 // pred_fallthru
          _
        // Predicated region
        $region33: #{tpu_custom_call.1} parent=11 // pred_check
          %p1260 = pneg %p278
        $region34: #{tpu_custom_call.1} parent=11 // pred_check_branch
          %1262 = sbr.rel (%p1260) target = $region36
        $region35: #{tpu_custom_call.1} parent=11 // pred_region
          %s1264 = ssub.s32 16, 16
          %1265 = vsyncadd [#allocation13], %s1264
          %s1267 = sshll.u32 [#allocation14], 4
          %s1268 = int_to_ptr.vmem [resolvable:$true] %s1267
          %1270 = dma.hbm_to_vmem [thread:$0]  %s13, 16, %s1268, [#allocation13]
        $region36: #{tpu_custom_call.1} parent=11 // pred_fallthru
          _
        // Predicated region
        $region37: #{tpu_custom_call.1} parent=11 // pred_check
          %p1271 = pneg %p299
        $region38: #{tpu_custom_call.1} parent=11 // pred_check_branch
          %1273 = sbr.rel (%p1271) target = $region40
        $region39: #{tpu_custom_call.1} parent=11 // pred_region
          %s1275 = ssub.s32 2048, 2048
          %1276 = vsyncadd [#allocation16], %s1275
          %s1277 = sshll.u32 [#allocation15], 4
          %s1278 = int_to_ptr.vmem [resolvable:$true] %s1277
          %1283 = dma.hbm_to_vmem [thread:$0]  %s15, 2048, %s1278, [#allocation16], 128, 128, 8
        $region40: #{tpu_custom_call.1} parent=11 // pred_fallthru
          _
        // Predicated region
        $region41: #{tpu_custom_call.1} parent=11 // pred_check
          %p1284 = pneg %p320
        $region42: #{tpu_custom_call.1} parent=11 // pred_check_branch
          %1286 = sbr.rel (%p1284) target = $region44
        $region43: #{tpu_custom_call.1} parent=11 // pred_region
          %s1288 = ssub.s32 16, 16
          %1289 = vsyncadd [#allocation16], %s1288
          %s1291 = sshll.u32 [#allocation17], 4
          %s1292 = int_to_ptr.vmem [resolvable:$true] %s1291
          %1294 = dma.hbm_to_vmem [thread:$0]  %s17, 16, %s1292, [#allocation16]
        $region44: #{tpu_custom_call.1} parent=11 // pred_fallthru
          _
        // Predicated region
        $region45: #{tpu_custom_call.1} parent=11 // pred_check
          %p1295 = pneg %p341
        $region46: #{tpu_custom_call.1} parent=11 // pred_check_branch
          %1297 = sbr.rel (%p1295) target = $region48
        $region47: #{tpu_custom_call.1} parent=11 // pred_region
          _
        $region48: #{tpu_custom_call.1} parent=11 // pred_fallthru
          _
        // Predicated region
        $region49: #{tpu_custom_call.1} parent=11 // pred_check
          %p1298 = pneg %p362
        $region50: #{tpu_custom_call.1} parent=11 // pred_check_branch
          %1300 = sbr.rel (%p1298) target = $region52
        $region51: #{tpu_custom_call.1} parent=11 // pred_region
          _
        $region52: #{tpu_custom_call.1} parent=11 // pred_fallthru
          _
        // Predicated region
        $region53: #{tpu_custom_call.1} parent=11 // pred_check
          %p1301 = pneg %p383
        $region54: #{tpu_custom_call.1} parent=11 // pred_check_branch
          %1303 = sbr.rel (%p1301) target = $region56
        $region55: #{tpu_custom_call.1} parent=11 // pred_region
          %s1305 = ssub.s32 8192, 8192
          %1306 = vsyncadd [#allocation19], %s1305
          %s1307 = sshll.u32 [#allocation18], 4
          %s1308 = int_to_ptr.vmem [resolvable:$true] %s1307
          %1313 = dma.hbm_to_vmem [thread:$0]  %s23, 8192, %s1308, [#allocation19], 128, 128, 8
        $region56: #{tpu_custom_call.1} parent=11 // pred_fallthru
          _
        // Predicated region
        $region57: #{tpu_custom_call.1} parent=11 // pred_check
          %p1314 = pneg %p404
        $region58: #{tpu_custom_call.1} parent=11 // pred_check_branch
          %1316 = sbr.rel (%p1314) target = $region60
        $region59: #{tpu_custom_call.1} parent=11 // pred_region
          %s1318 = ssub.s32 16, 16
          %1319 = vsyncadd [#allocation19], %s1318
          %s1321 = sshll.u32 [#allocation20], 4
          %s1322 = int_to_ptr.vmem [resolvable:$true] %s1321
          %1324 = dma.hbm_to_vmem [thread:$0]  %s25, 16, %s1322, [#allocation19]
        $region60: #{tpu_custom_call.1} parent=11 // pred_fallthru
          _
        // Predicated region
        $region61: #{tpu_custom_call.1} parent=11 // pred_check
          %p1325 = pneg %p425
        $region62: #{tpu_custom_call.1} parent=11 // pred_check_branch
          %1327 = sbr.rel (%p1325) target = $region64
        $region63: #{tpu_custom_call.1} parent=11 // pred_region
          %s1329 = ssub.s32 2048, 2048
          %1330 = vsyncadd [#allocation22], %s1329
          %s1331 = sshll.u32 [#allocation21], 4
          %s1332 = int_to_ptr.vmem [resolvable:$true] %s1331
          %1337 = dma.hbm_to_vmem [thread:$0]  %s27, 2048, %s1332, [#allocation22], 128, 128, 8
        $region64: #{tpu_custom_call.1} parent=11 // pred_fallthru
          _
        // Predicated region
        $region65: #{tpu_custom_call.1} parent=11 // pred_check
          %p1338 = pneg %p446
        $region66: #{tpu_custom_call.1} parent=11 // pred_check_branch
          %1340 = sbr.rel (%p1338) target = $region68
        $region67: #{tpu_custom_call.1} parent=11 // pred_region
          %s1342 = ssub.s32 16, 16
          %1343 = vsyncadd [#allocation22], %s1342
          %s1345 = sshll.u32 [#allocation23], 4
          %s1346 = int_to_ptr.vmem [resolvable:$true] %s1345
          %1348 = dma.hbm_to_vmem [thread:$0]  %s29, 16, %s1346, [#allocation22]
        $region68: #{tpu_custom_call.1} parent=11 // pred_fallthru
          _
        // Predicated region
        $region69: #{tpu_custom_call.1} parent=11 // pred_check
          %p1349 = pneg %p467
        $region70: #{tpu_custom_call.1} parent=11 // pred_check_branch
          %1351 = sbr.rel (%p1349) target = $region72
        $region71: #{tpu_custom_call.1} parent=11 // pred_region
          %s1353 = ssub.s32 2048, 2048
          %1354 = vsyncadd [#allocation25], %s1353
          %s1355 = sshll.u32 [#allocation24], 4
          %s1356 = int_to_ptr.vmem [resolvable:$true] %s1355
          %1361 = dma.hbm_to_vmem [thread:$0]  %s31, 2048, %s1356, [#allocation25], 128, 128, 8
        $region72: #{tpu_custom_call.1} parent=11 // pred_fallthru
          _
        // Predicated region
        $region73: #{tpu_custom_call.1} parent=11 // pred_check
          %p1362 = pneg %p488
        $region74: #{tpu_custom_call.1} parent=11 // pred_check_branch
          %1364 = sbr.rel (%p1362) target = $region76
        $region75: #{tpu_custom_call.1} parent=11 // pred_region
          %s1366 = ssub.s32 16, 16
          %1367 = vsyncadd [#allocation25], %s1366
          %s1369 = sshll.u32 [#allocation26], 4
          %s1370 = int_to_ptr.vmem [resolvable:$true] %s1369
          %1372 = dma.hbm_to_vmem [thread:$0]  %s33, 16, %s1370, [#allocation25]
        $region76: #{tpu_custom_call.1} parent=11 // pred_fallthru
          _
        // Predicated region
        $region77: #{tpu_custom_call.1} parent=11 // pred_check
          %p1373 = pneg %p509
        $region78: #{tpu_custom_call.1} parent=11 // pred_check_branch
          %1375 = sbr.rel (%p1373) target = $region80
        $region79: #{tpu_custom_call.1} parent=11 // pred_region
          %s1377 = ssub.s32 6144, 6144
          %1378 = vsyncadd [#allocation28], %s1377
          %s1379 = sshll.u32 [#allocation27], 4
          %s1380 = int_to_ptr.vmem [resolvable:$true] %s1379
          %1385 = dma.hbm_to_vmem [thread:$0]  %s35, 6144, %s1380, [#allocation28], 128, 128, 8
        $region80: #{tpu_custom_call.1} parent=11 // pred_fallthru
          _
        // Predicated region
        $region81: #{tpu_custom_call.1} parent=11 // pred_check
          %p1386 = pneg %p530
        $region82: #{tpu_custom_call.1} parent=11 // pred_check_branch
          %1388 = sbr.rel (%p1386) target = $region84
        $region83: #{tpu_custom_call.1} parent=11 // pred_region
          %s1390 = ssub.s32 16, 16
          %1391 = vsyncadd [#allocation28], %s1390
          %s1393 = sshll.u32 [#allocation29], 4
          %s1394 = int_to_ptr.vmem [resolvable:$true] %s1393
          %1396 = dma.hbm_to_vmem [thread:$0]  %s37, 16, %s1394, [#allocation28]
        $region84: #{tpu_custom_call.1} parent=11 // pred_fallthru
          _
        // Predicated region
        $region85: #{tpu_custom_call.1} parent=11 // pred_check
          %p1397 = pneg %p551
        $region86: #{tpu_custom_call.1} parent=11 // pred_check_branch
          %1399 = sbr.rel (%p1397) target = $region88
        $region87: #{tpu_custom_call.1} parent=11 // pred_region
          %s1401 = ssub.s32 2048, 2048
          %1402 = vsyncadd [#allocation31], %s1401
          %s1403 = sshll.u32 [#allocation30], 4
          %s1404 = int_to_ptr.vmem [resolvable:$true] %s1403
          %1409 = dma.hbm_to_vmem [thread:$0]  %s39, 2048, %s1404, [#allocation31], 128, 128, 8
        $region88: #{tpu_custom_call.1} parent=11 // pred_fallthru
          _
        // Predicated region
        $region89: #{tpu_custom_call.1} parent=11 // pred_check
          %p1410 = pneg %p572
        $region90: #{tpu_custom_call.1} parent=11 // pred_check_branch
          %1412 = sbr.rel (%p1410) target = $region92
        $region91: #{tpu_custom_call.1} parent=11 // pred_region
          %s1414 = ssub.s32 16, 16
          %1415 = vsyncadd [#allocation31], %s1414
          %s1417 = sshll.u32 [#allocation32], 4
          %s1418 = int_to_ptr.vmem [resolvable:$true] %s1417
          %1420 = dma.hbm_to_vmem [thread:$0]  %s41, 16, %s1418, [#allocation31]
        $region92: #{tpu_custom_call.1} parent=11 // pred_fallthru
          _
        // Predicated region
        $region93: #{tpu_custom_call.1} parent=11 // pred_check
          %p1421 = pneg %p593
        $region94: #{tpu_custom_call.1} parent=11 // pred_check_branch
          %1423 = sbr.rel (%p1421) target = $region96
        $region95: #{tpu_custom_call.1} parent=11 // pred_region
          %s1425 = ssub.s32 6144, 6144
          %1426 = vsyncadd [#allocation34], %s1425
          %s1427 = sshll.u32 [#allocation33], 4
          %s1428 = int_to_ptr.vmem [resolvable:$true] %s1427
          %1433 = dma.hbm_to_vmem [thread:$0]  %s43, 6144, %s1428, [#allocation34], 128, 128, 8
        $region96: #{tpu_custom_call.1} parent=11 // pred_fallthru
          _
        // Predicated region
        $region97: #{tpu_custom_call.1} parent=11 // pred_check
          %p1434 = pneg %p614
        $region98: #{tpu_custom_call.1} parent=11 // pred_check_branch
          %1436 = sbr.rel (%p1434) target = $region100
        $region99: #{tpu_custom_call.1} parent=11 // pred_region
          _
        $region100: #{tpu_custom_call.1} parent=11 // pred_fallthru
          _
        // Predicated region
        $region101: #{tpu_custom_call.1} parent=11 // pred_check
          %p1437 = pneg %p635
        $region102: #{tpu_custom_call.1} parent=11 // pred_check_branch
          %1439 = sbr.rel (%p1437) target = $region104
        $region103: #{tpu_custom_call.1} parent=11 // pred_region
          %s1441 = ssub.s32 2048, 2048
          %1442 = vsyncadd [#allocation34], %s1441
          %s1443 = sshll.u32 [#allocation35], 4
          %s1444 = int_to_ptr.vmem [resolvable:$true] %s1443
          %1449 = dma.hbm_to_vmem [thread:$0]  %s47, 2048, %s1444, [#allocation34], 128, 128, 8
        $region104: #{tpu_custom_call.1} parent=11 // pred_fallthru
          _
        // Predicated region
        $region105: #{tpu_custom_call.1} parent=11 // pred_check
          %p1450 = pneg %p656
        $region106: #{tpu_custom_call.1} parent=11 // pred_check_branch
          %1452 = sbr.rel (%p1450) target = $region108
        $region107: #{tpu_custom_call.1} parent=11 // pred_region
          _
        $region108: #{tpu_custom_call.1} parent=11 // pred_fallthru
          _
        // Predicated region
        $region109: #{tpu_custom_call.1} parent=11 // pred_check
          %p1453 = pneg %p677
        $region110: #{tpu_custom_call.1} parent=11 // pred_check_branch
          %1455 = sbr.rel (%p1453) target = $region112
        $region111: #{tpu_custom_call.1} parent=11 // pred_region
          _
        $region112: #{tpu_custom_call.1} parent=11 // pred_fallthru
          _
        // Predicated region
        $region113: #{tpu_custom_call.1} parent=11 // pred_check
          %p1456 = pneg %p698
        $region114: #{tpu_custom_call.1} parent=11 // pred_check_branch
          %1458 = sbr.rel (%p1456) target = $region116
        $region115: #{tpu_custom_call.1} parent=11 // pred_region
          _
        $region116: #{tpu_custom_call.1} parent=11 // pred_fallthru
          _
        // Predicated region
        $region117: #{tpu_custom_call.1} parent=11 // pred_check
          %p1459 = pneg %p719
        $region118: #{tpu_custom_call.1} parent=11 // pred_check_branch
          %1461 = sbr.rel (%p1459) target = $region120
        $region119: #{tpu_custom_call.1} parent=11 // pred_region
          %s1463 = ssub.s32 8192, 8192
          %1464 = vsyncadd [#allocation37], %s1463
          %s1465 = sshll.u32 [#allocation36], 4
          %s1466 = int_to_ptr.vmem [resolvable:$true] %s1465
          %1471 = dma.hbm_to_vmem [thread:$0]  %s55, 8192, %s1466, [#allocation37], 128, 128, 8
        $region120: #{tpu_custom_call.1} parent=11 // pred_fallthru
          _
        // Predicated region
        $region121: #{tpu_custom_call.1} parent=11 // pred_check
          %p1472 = pneg %p740
        $region122: #{tpu_custom_call.1} parent=11 // pred_check_branch
          %1474 = sbr.rel (%p1472) target = $region124
        $region123: #{tpu_custom_call.1} parent=11 // pred_region
          _
        $region124: #{tpu_custom_call.1} parent=11 // pred_fallthru
          _
        // Predicated region
        $region125: #{tpu_custom_call.1} parent=11 // pred_check
          %p1475 = pneg %p761
        $region126: #{tpu_custom_call.1} parent=11 // pred_check_branch
          %1477 = sbr.rel (%p1475) target = $region128
        $region127: #{tpu_custom_call.1} parent=11 // pred_region
          %s1479 = ssub.s32 6144, 6144
          %1480 = vsyncadd [#allocation37], %s1479
          %s1481 = sshll.u32 [#allocation38], 4
          %s1482 = int_to_ptr.vmem [resolvable:$true] %s1481
          %1487 = dma.hbm_to_vmem [thread:$0]  %s59, 6144, %s1482, [#allocation37], 128, 128, 8
        $region128: #{tpu_custom_call.1} parent=11 // pred_fallthru
          _
        // Predicated region
        $region129: #{tpu_custom_call.1} parent=11 // pred_check
          %p1488 = pneg %p782
        $region130: #{tpu_custom_call.1} parent=11 // pred_check_branch
          %1490 = sbr.rel (%p1488) target = $region132
        $region131: #{tpu_custom_call.1} parent=11 // pred_region
          _
        $region132: #{tpu_custom_call.1} parent=11 // pred_fallthru
          _
        // Predicated region
        $region133: #{tpu_custom_call.1} parent=11 // pred_check
          %p1491 = pneg %p803
        $region134: #{tpu_custom_call.1} parent=11 // pred_check_branch
          %1493 = sbr.rel (%p1491) target = $region136
        $region135: #{tpu_custom_call.1} parent=11 // pred_region
          %s1495 = ssub.s32 2048, 2048
          %1496 = vsyncadd [#allocation40], %s1495
          %s1497 = sshll.u32 [#allocation39], 4
          %s1498 = int_to_ptr.vmem [resolvable:$true] %s1497
          %1503 = dma.hbm_to_vmem [thread:$0]  %s63, 2048, %s1498, [#allocation40], 128, 128, 8
        $region136: #{tpu_custom_call.1} parent=11 // pred_fallthru
          _
        // Predicated region
        $region137: #{tpu_custom_call.1} parent=11 // pred_check
          %p1504 = pneg %p824
        $region138: #{tpu_custom_call.1} parent=11 // pred_check_branch
          %1506 = sbr.rel (%p1504) target = $region140
        $region139: #{tpu_custom_call.1} parent=11 // pred_region
          _
        $region140: #{tpu_custom_call.1} parent=11 // pred_fallthru
          _
        // Predicated region
        $region141: #{tpu_custom_call.1} parent=11 // pred_check
          %p1507 = pneg %p845
        $region142: #{tpu_custom_call.1} parent=11 // pred_check_branch
          %1509 = sbr.rel (%p1507) target = $region144
        $region143: #{tpu_custom_call.1} parent=11 // pred_region
          %s1511 = ssub.s32 2048, 2048
          %1512 = vsyncadd [#allocation40], %s1511
          %s1513 = sshll.u32 [#allocation41], 4
          %s1514 = int_to_ptr.vmem [resolvable:$true] %s1513
          %1519 = dma.hbm_to_vmem [thread:$0]  %s67, 2048, %s1514, [#allocation40], 128, 128, 8
        $region144: #{tpu_custom_call.1} parent=11 // pred_fallthru
          _
        // Predicated region
        $region145: #{tpu_custom_call.1} parent=11 // pred_check
          %p1520 = pneg %p866
        $region146: #{tpu_custom_call.1} parent=11 // pred_check_branch
          %1522 = sbr.rel (%p1520) target = $region148
        $region147: #{tpu_custom_call.1} parent=11 // pred_region
          _
        $region148: #{tpu_custom_call.1} parent=11 // pred_fallthru
          _
        // Predicated region
        $region149: #{tpu_custom_call.1} parent=11 // pred_check
          %p1523 = pneg %p887
        $region150: #{tpu_custom_call.1} parent=11 // pred_check_branch
          %1525 = sbr.rel (%p1523) target = $region152
        $region151: #{tpu_custom_call.1} parent=11 // pred_region
          %s1527 = ssub.s32 2048, 2048
          %1528 = vsyncadd [#allocation43], %s1527
          %s1529 = sshll.u32 [#allocation42], 4
          %s1530 = int_to_ptr.vmem [resolvable:$true] %s1529
          %1535 = dma.hbm_to_vmem [thread:$0]  %s71, 2048, %s1530, [#allocation43], 128, 128, 8
        $region152: #{tpu_custom_call.1} parent=11 // pred_fallthru
          _
        // Predicated region
        $region153: #{tpu_custom_call.1} parent=11 // pred_check
          %p1536 = pneg %p908
        $region154: #{tpu_custom_call.1} parent=11 // pred_check_branch
          %1538 = sbr.rel (%p1536) target = $region156
        $region155: #{tpu_custom_call.1} parent=11 // pred_region
          _
        $region156: #{tpu_custom_call.1} parent=11 // pred_fallthru
          _
        // Predicated region
        $region157: #{tpu_custom_call.1} parent=11 // pred_check
          %p1539 = pneg %p929
        $region158: #{tpu_custom_call.1} parent=11 // pred_check_branch
          %1541 = sbr.rel (%p1539) target = $region160
        $region159: #{tpu_custom_call.1} parent=11 // pred_region
          %s1543 = ssub.s32 6144, 6144
          %1544 = vsyncadd [#allocation43], %s1543
          %s1545 = sshll.u32 [#allocation44], 4
          %s1546 = int_to_ptr.vmem [resolvable:$true] %s1545
          %1551 = dma.hbm_to_vmem [thread:$0]  %s75, 6144, %s1546, [#allocation43], 128, 128, 8
        $region160: #{tpu_custom_call.1} parent=11 // pred_fallthru
          _
        // Predicated region
        $region161: #{tpu_custom_call.1} parent=11 // pred_check
          %p1552 = pneg %p950
        $region162: #{tpu_custom_call.1} parent=11 // pred_check_branch
          %1554 = sbr.rel (%p1552) target = $region164
        $region163: #{tpu_custom_call.1} parent=11 // pred_region
          _
        $region164: #{tpu_custom_call.1} parent=11 // pred_fallthru
          _
        // Predicated region
        $region165: #{tpu_custom_call.1} parent=11 // pred_check
          %p1555 = pneg %p971
        $region166: #{tpu_custom_call.1} parent=11 // pred_check_branch
          %1557 = sbr.rel (%p1555) target = $region168
        $region167: #{tpu_custom_call.1} parent=11 // pred_region
          %s1559 = ssub.s32 2048, 2048
          %1560 = vsyncadd [#allocation46], %s1559
          %s1561 = sshll.u32 [#allocation45], 4
          %s1562 = int_to_ptr.vmem [resolvable:$true] %s1561
          %1567 = dma.hbm_to_vmem [thread:$0]  %s79, 2048, %s1562, [#allocation46], 128, 128, 8
        $region168: #{tpu_custom_call.1} parent=11 // pred_fallthru
          _
        // Predicated region
        $region169: #{tpu_custom_call.1} parent=11 // pred_check
          %p1568 = pneg %p992
        $region170: #{tpu_custom_call.1} parent=11 // pred_check_branch
          %1570 = sbr.rel (%p1568) target = $region172
        $region171: #{tpu_custom_call.1} parent=11 // pred_region
          _
        $region172: #{tpu_custom_call.1} parent=11 // pred_fallthru
          _
        // Predicated region
        $region173: #{tpu_custom_call.1} parent=11 // pred_check
          %p1571 = pneg %p1013
        $region174: #{tpu_custom_call.1} parent=11 // pred_check_branch
          %1573 = sbr.rel (%p1571) target = $region176
        $region175: #{tpu_custom_call.1} parent=11 // pred_region
          _
        $region176: #{tpu_custom_call.1} parent=11 // pred_fallthru
          _
        // Predicated region
        $region177: #{tpu_custom_call.1} parent=11 // pred_check
          %p1574 = pneg %p1034
        $region178: #{tpu_custom_call.1} parent=11 // pred_check_branch
          %1576 = sbr.rel (%p1574) target = $region180
        $region179: #{tpu_custom_call.1} parent=11 // pred_region
          _
        $region180: #{tpu_custom_call.1} parent=11 // pred_fallthru
          _
        // Predicated region
        $region181: #{tpu_custom_call.1} parent=11 // pred_check
          %p1577 = pneg %p1055
        $region182: #{tpu_custom_call.1} parent=11 // pred_check_branch
          %1579 = sbr.rel (%p1577) target = $region184
        $region183: #{tpu_custom_call.1} parent=11 // pred_region
          %s1581 = ssub.s32 24576, 24576
          %1582 = vsyncadd [#allocation46], %s1581
          %s1583 = sshll.u32 [#allocation47], 4
          %s1584 = int_to_ptr.vmem [resolvable:$true] %s1583
          %1589 = dma.hbm_to_vmem [thread:$0]  %s87, 24576, %s1584, [#allocation46], 512, 512, 32
        $region184: #{tpu_custom_call.1} parent=11 // pred_fallthru
          _
        // Predicated region
        $region185: #{tpu_custom_call.1} parent=11 // pred_check
          %p1590 = pneg %p1076
        $region186: #{tpu_custom_call.1} parent=11 // pred_check_branch
          %1592 = sbr.rel (%p1590) target = $region188
        $region187: #{tpu_custom_call.1} parent=11 // pred_region
          _
        $region188: #{tpu_custom_call.1} parent=11 // pred_fallthru
          _
        // Predicated region
        $region189: #{tpu_custom_call.1} parent=11 // pred_check
          %p1593 = pneg %p1097
        $region190: #{tpu_custom_call.1} parent=11 // pred_check_branch
          %1595 = sbr.rel (%p1593) target = $region192
        $region191: #{tpu_custom_call.1} parent=11 // pred_region
          _
        $region192: #{tpu_custom_call.1} parent=11 // pred_fallthru
          _
        // Predicated region
        $region193: #{tpu_custom_call.1} parent=11 // pred_check
          %p1596 = pneg %p1118
        $region194: #{tpu_custom_call.1} parent=11 // pred_check_branch
          %1598 = sbr.rel (%p1596) target = $region196
        $region195: #{tpu_custom_call.1} parent=11 // pred_region
          _
        $region196: #{tpu_custom_call.1} parent=11 // pred_fallthru
          _
        // Predicated region
        $region197: #{tpu_custom_call.1} parent=11 // pred_check
          %p1599 = pneg %p1139
        $region198: #{tpu_custom_call.1} parent=11 // pred_check_branch
          %1601 = sbr.rel (%p1599) target = $region200
        $region199: #{tpu_custom_call.1} parent=11 // pred_region
          %s1603 = ssub.s32 32768, 32768
          %1604 = vsyncadd [#allocation49], %s1603
          %s1605 = sshll.u32 [#allocation48], 4
          %s1606 = int_to_ptr.vmem [resolvable:$true] %s1605
          %1611 = dma.hbm_to_vmem [thread:$0]  %s95, 32768, %s1606, [#allocation49], 512, 512, 32
        $region200: #{tpu_custom_call.1} parent=11 // pred_fallthru
          _
        // Predicated region
        $region201: #{tpu_custom_call.1} parent=11 // pred_check
          %p1612 = pneg %p1160
        $region202: #{tpu_custom_call.1} parent=11 // pred_check_branch
          %1614 = sbr.rel (%p1612) target = $region204
        $region203: #{tpu_custom_call.1} parent=11 // pred_region
          _
        $region204: #{tpu_custom_call.1} parent=11 // pred_fallthru
          _
      $region12: #{tpu_custom_call.1} parent=5 // pred_fallthru
        _
      %p1615 = scmp.lt.s32.totalorder %s126, 2
      // Predicated region
      $region205: #{tpu_custom_call.1} parent=5 // pred_check
        %p1616 = pneg %p1615
      $region206: #{tpu_custom_call.1} parent=5 // pred_check_branch
        %1618 = sbr.rel (%p1616) target = $region208
      $region207: #{tpu_custom_call.1} parent=5 // pred_region
        // Predicated region
        $region209: #{tpu_custom_call.1} parent=207 // pred_check
          %p1619 = pneg %p146
        $region210: #{tpu_custom_call.1} parent=207 // pred_check_branch
          %1621 = sbr.rel (%p1619) target = $region212
        $region211: #{tpu_custom_call.1} parent=207 // pred_region
          %s1622 = sand.u32 %s136, 1
          %s1623 = scalar_lea.sflag [#allocation4], %s1622
          %s1624 = sand.u32 %s136, 1
          %s1625 = smul.addr %s1624, 64
          %s1626 = scalar_lea.vmem [#allocation3], %s1625
          %s1628 = ssub.s32 1024, 1024
          %1629 = vsyncadd %s1623, %s1628
          %s1630 = smul.addr %s126, 8
          %s1631 = smul.addr %s1630, 128
          %s1632 = scalar_lea.hbm %s1, %s1631
          %s1633 = sshll.u32 %s1626, 4
          %s1634 = int_to_ptr.vmem [resolvable:$true] %s1633
          %1639 = dma.hbm_to_vmem [thread:$0]  %s1632, 1024, %s1634, %s1623, 512, 512, 32
        $region212: #{tpu_custom_call.1} parent=207 // pred_fallthru
          _
      $region208: #{tpu_custom_call.1} parent=5 // pred_fallthru
        _
      %p1640 = scmp.le.s32.totalorder 1, %s126
      %p1641 = scmp.lt.s32.totalorder %s126, 3
      %p1642 = pnand %p1640, %p1641
      %p1643 = pneg %p1642
      // Predicated region
      $region213: #{tpu_custom_call.1} parent=5 // pred_check
        _
      $region214: #{tpu_custom_call.1} parent=5 // pred_check_branch
        %1645 = sbr.rel (%p1642) target = $region216
      $region215: #{tpu_custom_call.1} parent=5 // pred_region
        %s1646 = ssub.s32 %s126, 1
        %s1647 = sand.u32 %s139, 1
        %s1648 = scalar_lea.sflag [#allocation4], %s1647
        %s1649 = sand.u32 %s139, 1
        %s1650 = smul.addr %s1649, 64
        %s1651 = scalar_lea.vmem [#allocation3], %s1650
        // Predicated region
        $region217: #{tpu_custom_call.1} parent=215 // pred_check
          %p1652 = pneg %p152
        $region218: #{tpu_custom_call.1} parent=215 // pred_check_branch
          %1654 = sbr.rel (%p1652) target = $region220
        $region219: #{tpu_custom_call.1} parent=215 // pred_region
          %1655 = dma.done %s1648, 1024
        $region220: #{tpu_custom_call.1} parent=215 // pred_fallthru
          _
        // Predicated region
        $region221: #{tpu_custom_call.1} parent=215 // pred_check
          %p1656 = pneg %p173
        $region222: #{tpu_custom_call.1} parent=215 // pred_check_branch
          %1658 = sbr.rel (%p1656) target = $region224
        $region223: #{tpu_custom_call.1} parent=215 // pred_region
          %1659 = dma.done [#allocation7], 64
        $region224: #{tpu_custom_call.1} parent=215 // pred_fallthru
          _
        // Predicated region
        $region225: #{tpu_custom_call.1} parent=215 // pred_check
          %p1660 = pneg %p194
        $region226: #{tpu_custom_call.1} parent=215 // pred_check_branch
          %1662 = sbr.rel (%p1660) target = $region228
        $region227: #{tpu_custom_call.1} parent=215 // pred_region
          %1663 = dma.done [#allocation7], 64
        $region228: #{tpu_custom_call.1} parent=215 // pred_fallthru
          _
        // Predicated region
        $region229: #{tpu_custom_call.1} parent=215 // pred_check
          %p1664 = pneg %p215
        $region230: #{tpu_custom_call.1} parent=215 // pred_check_branch
          %1666 = sbr.rel (%p1664) target = $region232
        $region231: #{tpu_custom_call.1} parent=215 // pred_region
          %1667 = dma.done [#allocation10], 8192
        $region232: #{tpu_custom_call.1} parent=215 // pred_fallthru
          _
        // Predicated region
        $region233: #{tpu_custom_call.1} parent=215 // pred_check
          %p1668 = pneg %p236
        $region234: #{tpu_custom_call.1} parent=215 // pred_check_branch
          %1670 = sbr.rel (%p1668) target = $region236
        $region235: #{tpu_custom_call.1} parent=215 // pred_region
          %1671 = dma.done [#allocation10], 16
        $region236: #{tpu_custom_call.1} parent=215 // pred_fallthru
          _
        // Predicated region
        $region237: #{tpu_custom_call.1} parent=215 // pred_check
          %p1672 = pneg %p257
        $region238: #{tpu_custom_call.1} parent=215 // pred_check_branch
          %1674 = sbr.rel (%p1672) target = $region240
        $region239: #{tpu_custom_call.1} parent=215 // pred_region
          %1675 = dma.done [#allocation13], 6144
        $region240: #{tpu_custom_call.1} parent=215 // pred_fallthru
          _
        // Predicated region
        $region241: #{tpu_custom_call.1} parent=215 // pred_check
          %p1676 = pneg %p278
        $region242: #{tpu_custom_call.1} parent=215 // pred_check_branch
          %1678 = sbr.rel (%p1676) target = $region244
        $region243: #{tpu_custom_call.1} parent=215 // pred_region
          %1679 = dma.done [#allocation13], 16
        $region244: #{tpu_custom_call.1} parent=215 // pred_fallthru
          _
        // Predicated region
        $region245: #{tpu_custom_call.1} parent=215 // pred_check
          %p1680 = pneg %p299
        $region246: #{tpu_custom_call.1} parent=215 // pred_check_branch
          %1682 = sbr.rel (%p1680) target = $region248
        $region247: #{tpu_custom_call.1} parent=215 // pred_region
          %1683 = dma.done [#allocation16], 2048
        $region248: #{tpu_custom_call.1} parent=215 // pred_fallthru
          _
        // Predicated region
        $region249: #{tpu_custom_call.1} parent=215 // pred_check
          %p1684 = pneg %p320
        $region250: #{tpu_custom_call.1} parent=215 // pred_check_branch
          %1686 = sbr.rel (%p1684) target = $region252
        $region251: #{tpu_custom_call.1} parent=215 // pred_region
          %1687 = dma.done [#allocation16], 16
        $region252: #{tpu_custom_call.1} parent=215 // pred_fallthru
          _
        // Predicated region
        $region253: #{tpu_custom_call.1} parent=215 // pred_check
          %p1688 = pneg %p383
        $region254: #{tpu_custom_call.1} parent=215 // pred_check_branch
          %1690 = sbr.rel (%p1688) target = $region256
        $region255: #{tpu_custom_call.1} parent=215 // pred_region
          %1691 = dma.done [#allocation19], 8192
        $region256: #{tpu_custom_call.1} parent=215 // pred_fallthru
          _
        // Predicated region
        $region257: #{tpu_custom_call.1} parent=215 // pred_check
          %p1692 = pneg %p404
        $region258: #{tpu_custom_call.1} parent=215 // pred_check_branch
          %1694 = sbr.rel (%p1692) target = $region260
        $region259: #{tpu_custom_call.1} parent=215 // pred_region
          %1695 = dma.done [#allocation19], 16
        $region260: #{tpu_custom_call.1} parent=215 // pred_fallthru
          _
        // Predicated region
        $region261: #{tpu_custom_call.1} parent=215 // pred_check
          %p1696 = pneg %p425
        $region262: #{tpu_custom_call.1} parent=215 // pred_check_branch
          %1698 = sbr.rel (%p1696) target = $region264
        $region263: #{tpu_custom_call.1} parent=215 // pred_region
          %1699 = dma.done [#allocation22], 2048
        $region264: #{tpu_custom_call.1} parent=215 // pred_fallthru
          _
        // Predicated region
        $region265: #{tpu_custom_call.1} parent=215 // pred_check
          %p1700 = pneg %p446
        $region266: #{tpu_custom_call.1} parent=215 // pred_check_branch
          %1702 = sbr.rel (%p1700) target = $region268
        $region267: #{tpu_custom_call.1} parent=215 // pred_region
          %1703 = dma.done [#allocation22], 16
        $region268: #{tpu_custom_call.1} parent=215 // pred_fallthru
          _
        // Predicated region
        $region269: #{tpu_custom_call.1} parent=215 // pred_check
          %p1704 = pneg %p467
        $region270: #{tpu_custom_call.1} parent=215 // pred_check_branch
          %1706 = sbr.rel (%p1704) target = $region272
        $region271: #{tpu_custom_call.1} parent=215 // pred_region
          %1707 = dma.done [#allocation25], 2048
        $region272: #{tpu_custom_call.1} parent=215 // pred_fallthru
          _
        // Predicated region
        $region273: #{tpu_custom_call.1} parent=215 // pred_check
          %p1708 = pneg %p488
        $region274: #{tpu_custom_call.1} parent=215 // pred_check_branch
          %1710 = sbr.rel (%p1708) target = $region276
        $region275: #{tpu_custom_call.1} parent=215 // pred_region
          %1711 = dma.done [#allocation25], 16
        $region276: #{tpu_custom_call.1} parent=215 // pred_fallthru
          _
        // Predicated region
        $region277: #{tpu_custom_call.1} parent=215 // pred_check
          %p1712 = pneg %p509
        $region278: #{tpu_custom_call.1} parent=215 // pred_check_branch
          %1714 = sbr.rel (%p1712) target = $region280
        $region279: #{tpu_custom_call.1} parent=215 // pred_region
          %1715 = dma.done [#allocation28], 6144
        $region280: #{tpu_custom_call.1} parent=215 // pred_fallthru
          _
        // Predicated region
        $region281: #{tpu_custom_call.1} parent=215 // pred_check
          %p1716 = pneg %p530
        $region282: #{tpu_custom_call.1} parent=215 // pred_check_branch
          %1718 = sbr.rel (%p1716) target = $region284
        $region283: #{tpu_custom_call.1} parent=215 // pred_region
          %1719 = dma.done [#allocation28], 16
        $region284: #{tpu_custom_call.1} parent=215 // pred_fallthru
          _
        // Predicated region
        $region285: #{tpu_custom_call.1} parent=215 // pred_check
          %p1720 = pneg %p551
        $region286: #{tpu_custom_call.1} parent=215 // pred_check_branch
          %1722 = sbr.rel (%p1720) target = $region288
        $region287: #{tpu_custom_call.1} parent=215 // pred_region
          %1723 = dma.done [#allocation31], 2048
        $region288: #{tpu_custom_call.1} parent=215 // pred_fallthru
          _
        // Predicated region
        $region289: #{tpu_custom_call.1} parent=215 // pred_check
          %p1724 = pneg %p572
        $region290: #{tpu_custom_call.1} parent=215 // pred_check_branch
          %1726 = sbr.rel (%p1724) target = $region292
        $region291: #{tpu_custom_call.1} parent=215 // pred_region
          %1727 = dma.done [#allocation31], 16
        $region292: #{tpu_custom_call.1} parent=215 // pred_fallthru
          _
        // Predicated region
        $region293: #{tpu_custom_call.1} parent=215 // pred_check
          %p1728 = pneg %p593
        $region294: #{tpu_custom_call.1} parent=215 // pred_check_branch
          %1730 = sbr.rel (%p1728) target = $region296
        $region295: #{tpu_custom_call.1} parent=215 // pred_region
          %1731 = dma.done [#allocation34], 6144
        $region296: #{tpu_custom_call.1} parent=215 // pred_fallthru
          _
        // Predicated region
        $region297: #{tpu_custom_call.1} parent=215 // pred_check
          %p1732 = pneg %p635
        $region298: #{tpu_custom_call.1} parent=215 // pred_check_branch
          %1734 = sbr.rel (%p1732) target = $region300
        $region299: #{tpu_custom_call.1} parent=215 // pred_region
          %1735 = dma.done [#allocation34], 2048
        $region300: #{tpu_custom_call.1} parent=215 // pred_fallthru
          _
        // Predicated region
        $region301: #{tpu_custom_call.1} parent=215 // pred_check
          %p1736 = pneg %p719
        $region302: #{tpu_custom_call.1} parent=215 // pred_check_branch
          %1738 = sbr.rel (%p1736) target = $region304
        $region303: #{tpu_custom_call.1} parent=215 // pred_region
          %1739 = dma.done [#allocation37], 8192
        $region304: #{tpu_custom_call.1} parent=215 // pred_fallthru
          _
        // Predicated region
        $region305: #{tpu_custom_call.1} parent=215 // pred_check
          %p1740 = pneg %p761
        $region306: #{tpu_custom_call.1} parent=215 // pred_check_branch
          %1742 = sbr.rel (%p1740) target = $region308
        $region307: #{tpu_custom_call.1} parent=215 // pred_region
          %1743 = dma.done [#allocation37], 6144
        $region308: #{tpu_custom_call.1} parent=215 // pred_fallthru
          _
        // Predicated region
        $region309: #{tpu_custom_call.1} parent=215 // pred_check
          %p1744 = pneg %p803
        $region310: #{tpu_custom_call.1} parent=215 // pred_check_branch
          %1746 = sbr.rel (%p1744) target = $region312
        $region311: #{tpu_custom_call.1} parent=215 // pred_region
          %1747 = dma.done [#allocation40], 2048
        $region312: #{tpu_custom_call.1} parent=215 // pred_fallthru
          _
        // Predicated region
        $region313: #{tpu_custom_call.1} parent=215 // pred_check
          %p1748 = pneg %p845
        $region314: #{tpu_custom_call.1} parent=215 // pred_check_branch
          %1750 = sbr.rel (%p1748) target = $region316
        $region315: #{tpu_custom_call.1} parent=215 // pred_region
          %1751 = dma.done [#allocation40], 2048
        $region316: #{tpu_custom_call.1} parent=215 // pred_fallthru
          _
        // Predicated region
        $region317: #{tpu_custom_call.1} parent=215 // pred_check
          %p1752 = pneg %p887
        $region318: #{tpu_custom_call.1} parent=215 // pred_check_branch
          %1754 = sbr.rel (%p1752) target = $region320
        $region319: #{tpu_custom_call.1} parent=215 // pred_region
          %1755 = dma.done [#allocation43], 2048
        $region320: #{tpu_custom_call.1} parent=215 // pred_fallthru
          _
        // Predicated region
        $region321: #{tpu_custom_call.1} parent=215 // pred_check
          %p1756 = pneg %p929
        $region322: #{tpu_custom_call.1} parent=215 // pred_check_branch
          %1758 = sbr.rel (%p1756) target = $region324
        $region323: #{tpu_custom_call.1} parent=215 // pred_region
          %1759 = dma.done [#allocation43], 6144
        $region324: #{tpu_custom_call.1} parent=215 // pred_fallthru
          _
        // Predicated region
        $region325: #{tpu_custom_call.1} parent=215 // pred_check
          %p1760 = pneg %p971
        $region326: #{tpu_custom_call.1} parent=215 // pred_check_branch
          %1762 = sbr.rel (%p1760) target = $region328
        $region327: #{tpu_custom_call.1} parent=215 // pred_region
          %1763 = dma.done [#allocation46], 2048
        $region328: #{tpu_custom_call.1} parent=215 // pred_fallthru
          _
        // Predicated region
        $region329: #{tpu_custom_call.1} parent=215 // pred_check
          %p1764 = pneg %p1055
        $region330: #{tpu_custom_call.1} parent=215 // pred_check_branch
          %1766 = sbr.rel (%p1764) target = $region332
        $region331: #{tpu_custom_call.1} parent=215 // pred_region
          %1767 = dma.done [#allocation46], 24576
        $region332: #{tpu_custom_call.1} parent=215 // pred_fallthru
          _
        // Predicated region
        $region333: #{tpu_custom_call.1} parent=215 // pred_check
          %p1768 = pneg %p1139
        $region334: #{tpu_custom_call.1} parent=215 // pred_check_branch
          %1770 = sbr.rel (%p1768) target = $region336
        $region335: #{tpu_custom_call.1} parent=215 // pred_region
          %1771 = dma.done [#allocation49], 32768
        $region336: #{tpu_custom_call.1} parent=215 // pred_fallthru
          _
        %s1772 = sand.u32 %s139, 1
        %s1773 = scalar_lea.sflag [#allocation4], %s1772
        %s1774 = sand.u32 %s139, 1
        %s1775 = smul.addr %s1774, 64
        %s1776 = scalar_lea.vmem [#allocation3], %s1775
        %p1777 = pneg %p152
        %p1778 = pneg %p149
        %p1779 = pneg %p173
        %p1780 = pneg %p170
        %p1781 = pneg %p194
        %p1782 = pneg %p191
        %p1783 = pneg %p215
        %p1784 = pneg %p212
        %p1785 = pneg %p236
        %p1786 = pneg %p233
        %p1787 = pneg %p257
        %p1788 = pneg %p254
        %p1789 = pneg %p278
        %p1790 = pneg %p275
        %p1791 = pneg %p299
        %p1792 = pneg %p296
        %p1793 = pneg %p320
        %p1794 = pneg %p317
        %p1795 = pneg %p341
        %p1796 = pneg %p338
        %p1797 = pneg %p362
        %p1798 = pneg %p359
        %p1799 = pneg %p383
        %p1800 = pneg %p380
        %p1801 = pneg %p404
        %p1802 = pneg %p401
        %p1803 = pneg %p425
        %p1804 = pneg %p422
        %p1805 = pneg %p446
        %p1806 = pneg %p443
        %p1807 = pneg %p467
        %p1808 = pneg %p464
        %p1809 = pneg %p488
        %p1810 = pneg %p485
        %p1811 = pneg %p509
        %p1812 = pneg %p506
        %p1813 = pneg %p530
        %p1814 = pneg %p527
        %p1815 = pneg %p551
        %p1816 = pneg %p548
        %p1817 = pneg %p572
        %p1818 = pneg %p569
        %p1819 = pneg %p593
        %p1820 = pneg %p590
        %p1821 = pneg %p614
        %p1822 = pneg %p611
        %p1823 = pneg %p635
        %p1824 = pneg %p632
        %p1825 = pneg %p656
        %p1826 = pneg %p653
        %p1827 = pneg %p677
        %p1828 = pneg %p674
        %p1829 = pneg %p698
        %p1830 = pneg %p695
        %p1831 = pneg %p719
        %p1832 = pneg %p716
        %p1833 = pneg %p740
        %p1834 = pneg %p737
        %p1835 = pneg %p761
        %p1836 = pneg %p758
        %p1837 = pneg %p782
        %p1838 = pneg %p779
        %p1839 = pneg %p803
        %p1840 = pneg %p800
        %p1841 = pneg %p824
        %p1842 = pneg %p821
        %p1843 = pneg %p845
        %p1844 = pneg %p842
        %p1845 = pneg %p866
        %p1846 = pneg %p863
        %p1847 = pneg %p887
        %p1848 = pneg %p884
        %p1849 = pneg %p908
        %p1850 = pneg %p905
        %p1851 = pneg %p929
        %p1852 = pneg %p926
        %p1853 = pneg %p950
        %p1854 = pneg %p947
        %p1855 = pneg %p971
        %p1856 = pneg %p968
        %p1857 = pneg %p992
        %p1858 = pneg %p989
        %p1859 = pneg %p1013
        %p1860 = pneg %p1010
        %p1861 = pneg %p1034
        %p1862 = pneg %p1031
        %p1863 = pneg %p1055
        %p1864 = pneg %p1052
        %p1865 = pneg %p1076
        %p1866 = pneg %p1073
        %p1867 = pneg %p1097
        %p1868 = pneg %p1094
        %p1869 = pneg %p1118
        %p1870 = pneg %p1115
        %p1871 = pneg %p1139
        %p1872 = pneg %p1136
        %p1873 = pneg %p1160
        %p1874 = pneg %p1157
        %p1875 = pneg %p1186
        %p1876 = pneg %p1183
        %s1877 = sand.u32 %s1173, 1
        %s1878 = scalar_lea.sflag [#allocation5], %s1877
        %s1879 = sand.u32 %s1173, 1
        %s1880 = smul.addr %s1879, 64
        %s1881 = scalar_lea.vmem [#allocation50], %s1880
        %v1882 = vld [vmem:[%s1651] sm:$0xff]
        %v1883 = vld [vmem:[%s1651 + $0x8] sm:$0xff]
        %v1884 = vld [vmem:[%s1651 + $0x10] sm:$0xff]
        %v1885 = vld [vmem:[%s1651 + $0x18] sm:$0xff]
        %v1886 = vld [vmem:[%s1651 + $0x20] sm:$0xff]
        %v1887 = vld [vmem:[%s1651 + $0x28] sm:$0xff]
        %v1888 = vld [vmem:[%s1651 + $0x30] sm:$0xff]
        %v1889 = vld [vmem:[%s1651 + $0x38] sm:$0xff]
        %v1890 = vld [vmem:[#allocation6] sm:$0xf]
        %v1892 = vlaneseq
        %v1893 = vshrl.u32 %v1892, 7
        %v1894 = vsub.s32 0, %v1893
        %v1895 = vrot.slane %v1890, %v1894
        %v1896 = vlaneseq
        %v1897 = vshrl.u32 %v1896, 7
        %v1898 = vsub.s32 1, %v1897
        %v1899 = vrot.slane %v1890, %v1898
        %v1900 = vlaneseq
        %v1901 = vshrl.u32 %v1900, 7
        %v1902 = vsub.s32 2, %v1901
        %v1903 = vrot.slane %v1890, %v1902
        %v1904 = vlaneseq
        %v1905 = vshrl.u32 %v1904, 7
        %v1906 = vsub.s32 3, %v1905
        %v1907 = vrot.slane %v1890, %v1906
        %v1912 = vmul.f32 %v1882, %v1895
        %v1913 = vmul.f32 %v1883, %v1899
        %v1914 = vmul.f32 %v1884, %v1903
        %v1915 = vmul.f32 %v1885, %v1907
        %v1916 = vmul.f32 %v1886, %v1895
        %v1917 = vmul.f32 %v1887, %v1899
        %v1918 = vmul.f32 %v1888, %v1903
        %v1919 = vmul.f32 %v1889, %v1907
        %v1920 = vld [vmem:[#allocation8] sm:$0xf]
        %v1922 = vlaneseq
        %v1923 = vshrl.u32 %v1922, 7
        %v1924 = vsub.s32 0, %v1923
        %v1925 = vrot.slane %v1920, %v1924
        %v1926 = vlaneseq
        %v1927 = vshrl.u32 %v1926, 7
        %v1928 = vsub.s32 1, %v1927
        %v1929 = vrot.slane %v1920, %v1928
        %v1930 = vlaneseq
        %v1931 = vshrl.u32 %v1930, 7
        %v1932 = vsub.s32 2, %v1931
        %v1933 = vrot.slane %v1920, %v1932
        %v1934 = vlaneseq
        %v1935 = vshrl.u32 %v1934, 7
        %v1936 = vsub.s32 3, %v1935
        %v1937 = vrot.slane %v1920, %v1936
        %v1942 = vadd.f32 %v1912, %v1925
        %v1943 = vadd.f32 %v1913, %v1929
        %v1944 = vadd.f32 %v1914, %v1933
        %v1945 = vadd.f32 %v1915, %v1937
        %v1946 = vadd.f32 %v1916, %v1925
        %v1947 = vadd.f32 %v1917, %v1929
        %v1948 = vadd.f32 %v1918, %v1933
        %v1949 = vadd.f32 %v1919, %v1937
        %v1950 = vmax.f32 %v1942, 0.0
        %v1951 = vmax.f32 %v1943, 0.0
        %v1952 = vmax.f32 %v1944, 0.0
        %v1953 = vmax.f32 %v1945, 0.0
        %v1954 = vmax.f32 %v1946, 0.0
        %v1955 = vmax.f32 %v1947, 0.0
        %v1956 = vmax.f32 %v1948, 0.0
        %v1957 = vmax.f32 %v1949, 0.0
        %v1958 = vld [vmem:[#allocation9] sm:$0xff]
        %v1959 = vld [vmem:[#allocation9 + $0x8] sm:$0xff]
        %v1960 = vld [vmem:[#allocation9 + $0x10] sm:$0xff]
        %v1961 = vld [vmem:[#allocation9 + $0x18] sm:$0xff]
        %v1962 = vld [vmem:[#allocation9 + $0x20] sm:$0xff]
        %v1963 = vld [vmem:[#allocation9 + $0x28] sm:$0xff]
        %v1964 = vld [vmem:[#allocation9 + $0x30] sm:$0xff]
        %v1965 = vld [vmem:[#allocation9 + $0x38] sm:$0xff]
        %v1966 = vld [vmem:[#allocation9 + $0x40] sm:$0xff]
        %v1967 = vld [vmem:[#allocation9 + $0x48] sm:$0xff]
        %v1968 = vld [vmem:[#allocation9 + $0x50] sm:$0xff]
        %v1969 = vld [vmem:[#allocation9 + $0x58] sm:$0xff]
        %v1970 = vld [vmem:[#allocation9 + $0x60] sm:$0xff]
        %v1971 = vld [vmem:[#allocation9 + $0x68] sm:$0xff]
        %v1972 = vld [vmem:[#allocation9 + $0x70] sm:$0xff]
        %v1973 = vld [vmem:[#allocation9 + $0x78] sm:$0xff]
        %v1974 = vld [vmem:[#allocation9 + $0x80] sm:$0xff]
        %v1975 = vld [vmem:[#allocation9 + $0x88] sm:$0xff]
        %v1976 = vld [vmem:[#allocation9 + $0x90] sm:$0xff]
        %v1977 = vld [vmem:[#allocation9 + $0x98] sm:$0xff]
        %v1978 = vld [vmem:[#allocation9 + $0xa0] sm:$0xff]
        %v1979 = vld [vmem:[#allocation9 + $0xa8] sm:$0xff]
        %v1980 = vld [vmem:[#allocation9 + $0xb0] sm:$0xff]
        %v1981 = vld [vmem:[#allocation9 + $0xb8] sm:$0xff]
        %v1982 = vld [vmem:[#allocation9 + $0xc0] sm:$0xff]
        %v1983 = vld [vmem:[#allocation9 + $0xc8] sm:$0xff]
        %v1984 = vld [vmem:[#allocation9 + $0xd0] sm:$0xff]
        %v1985 = vld [vmem:[#allocation9 + $0xd8] sm:$0xff]
        %v1986 = vld [vmem:[#allocation9 + $0xe0] sm:$0xff]
        %v1987 = vld [vmem:[#allocation9 + $0xe8] sm:$0xff]
        %v1988 = vld [vmem:[#allocation9 + $0xf0] sm:$0xff]
        %v1989 = vld [vmem:[#allocation9 + $0xf8] sm:$0xff]
        %v1990 = vld [vmem:[#allocation9 + $0x100] sm:$0xff]
        %v1991 = vld [vmem:[#allocation9 + $0x108] sm:$0xff]
        %v1992 = vld [vmem:[#allocation9 + $0x110] sm:$0xff]
        %v1993 = vld [vmem:[#allocation9 + $0x118] sm:$0xff]
        %v1994 = vld [vmem:[#allocation9 + $0x120] sm:$0xff]
        %v1995 = vld [vmem:[#allocation9 + $0x128] sm:$0xff]
        %v1996 = vld [vmem:[#allocation9 + $0x130] sm:$0xff]
        %v1997 = vld [vmem:[#allocation9 + $0x138] sm:$0xff]
        %v1998 = vld [vmem:[#allocation9 + $0x140] sm:$0xff]
        %v1999 = vld [vmem:[#allocation9 + $0x148] sm:$0xff]
        %v2000 = vld [vmem:[#allocation9 + $0x150] sm:$0xff]
        %v2001 = vld [vmem:[#allocation9 + $0x158] sm:$0xff]
        %v2002 = vld [vmem:[#allocation9 + $0x160] sm:$0xff]
        %v2003 = vld [vmem:[#allocation9 + $0x168] sm:$0xff]
        %v2004 = vld [vmem:[#allocation9 + $0x170] sm:$0xff]
        %v2005 = vld [vmem:[#allocation9 + $0x178] sm:$0xff]
        %v2006 = vld [vmem:[#allocation9 + $0x180] sm:$0xff]
        %v2007 = vld [vmem:[#allocation9 + $0x188] sm:$0xff]
        %v2008 = vld [vmem:[#allocation9 + $0x190] sm:$0xff]
        %v2009 = vld [vmem:[#allocation9 + $0x198] sm:$0xff]
        %v2010 = vld [vmem:[#allocation9 + $0x1a0] sm:$0xff]
        %v2011 = vld [vmem:[#allocation9 + $0x1a8] sm:$0xff]
        %v2012 = vld [vmem:[#allocation9 + $0x1b0] sm:$0xff]
        %v2013 = vld [vmem:[#allocation9 + $0x1b8] sm:$0xff]
        %v2014 = vld [vmem:[#allocation9 + $0x1c0] sm:$0xff]
        %v2015 = vld [vmem:[#allocation9 + $0x1c8] sm:$0xff]
        %v2016 = vld [vmem:[#allocation9 + $0x1d0] sm:$0xff]
        %v2017 = vld [vmem:[#allocation9 + $0x1d8] sm:$0xff]
        %v2018 = vld [vmem:[#allocation9 + $0x1e0] sm:$0xff]
        %v2019 = vld [vmem:[#allocation9 + $0x1e8] sm:$0xff]
        %v2020 = vld [vmem:[#allocation9 + $0x1f0] sm:$0xff]
        %v2021 = vld [vmem:[#allocation9 + $0x1f8] sm:$0xff]
        %v2022 = vld [vmem:[#allocation11] sm:$0x1]
        %v2024 = vlaneseq
        %v2025 = vshrl.u32 %v2024, 7
        %v2026 = vsub.s32 0, %v2025
        %v2027 = vrot.slane %v2022, %v2026
        %2029 = vmatprep.subr.mxu0 0.0
        %2030 = vmatpush1.msra.mxu0 %v1973
        %2031 = vmatprep.subr.mxu0 0.0
        %2032 = vmatpush1.msra.mxu0 %v1972
        %2033 = vmatprep.subr.mxu0 0.0
        %2034 = vmatpush1.msra.mxu0 %v1971
        %2035 = vmatprep.subr.mxu0 0.0
        %2036 = vmatpush1.msra.mxu0 %v1970
        %2037 = vmatprep.subr.mxu0 0.0
        %2038 = vmatpush1.msra.mxu0 %v1969
        %2039 = vmatprep.subr.mxu0 0.0
        %2040 = vmatpush1.msra.mxu0 %v1968
        %2041 = vmatprep.subr.mxu0 0.0
        %2042 = vmatpush1.msra.mxu0 %v1967
        %2043 = vmatprep.subr.mxu0 0.0
        %2044 = vmatpush1.msra.mxu0 %v1966
        %2045 = vmatprep.subr.mxu0 0.0
        %2046 = vmatpush1.msra.mxu0 %v1965
        %2047 = vmatprep.subr.mxu0 0.0
        %2048 = vmatpush1.msra.mxu0 %v1964
        %2049 = vmatprep.subr.mxu0 0.0
        %2050 = vmatpush1.msra.mxu0 %v1963
        %2051 = vmatprep.subr.mxu0 0.0
        %2052 = vmatpush1.msra.mxu0 %v1962
        %2053 = vmatprep.subr.mxu0 0.0
        %2054 = vmatpush1.msra.mxu0 %v1961
        %2055 = vmatprep.subr.mxu0 0.0
        %2056 = vmatpush1.msra.mxu0 %v1960
        %2057 = vmatprep.subr.mxu0 0.0
        %2058 = vmatpush1.msra.mxu0 %v1959
        %2059 = vmatprep.subr.mxu0 0.0
        %2060 = vmatpush1.msra.mxu0 %v1958
        %2061 = vmatprep.subr.mxu0 0.0
        %2062 = vmatpush2.msra.mxu0 %v1989
        %2063 = vmatprep.subr.mxu0 0.0
        %2064 = vmatpush2.msra.mxu0 %v1988
        %2065 = vmatprep.subr.mxu0 0.0
        %2066 = vmatpush2.msra.mxu0 %v1987
        %2067 = vmatprep.subr.mxu0 0.0
        %2068 = vmatpush2.msra.mxu0 %v1986
        %2069 = vmatprep.subr.mxu0 0.0
        %2070 = vmatpush2.msra.mxu0 %v1985
        %2071 = vmatprep.subr.mxu0 0.0
        %2072 = vmatpush2.msra.mxu0 %v1984
        %2073 = vmatprep.subr.mxu0 0.0
        %2074 = vmatpush2.msra.mxu0 %v1983
        %2075 = vmatprep.subr.mxu0 0.0
        %2076 = vmatpush2.msra.mxu0 %v1982
        %2077 = vmatprep.subr.mxu0 0.0
        %2078 = vmatpush2.msra.mxu0 %v1981
        %2079 = vmatprep.subr.mxu0 0.0
        %2080 = vmatpush2.msra.mxu0 %v1980
        %2081 = vmatprep.subr.mxu0 0.0
        %2082 = vmatpush2.msra.mxu0 %v1979
        %2083 = vmatprep.subr.mxu0 0.0
        %2084 = vmatpush2.msra.mxu0 %v1978
        %2085 = vmatprep.subr.mxu0 0.0
        %2086 = vmatpush2.msra.mxu0 %v1977
        %2087 = vmatprep.subr.mxu0 0.0
        %2088 = vmatpush2.msra.mxu0 %v1976
        %2089 = vmatprep.subr.mxu0 0.0
        %2090 = vmatpush2.msra.mxu0 %v1975
        %2091 = vmatprep.subr.mxu0 0.0
        %2092 = vmatpush2.msra.mxu0 %v1974
        %2093 = vmatprep.mubr.f32.mxu0 %v1951
        %2094 = vmatmul.mubr.f32.gmra.mxu0 %v1950
        %v2095 = vpop.f32.mrf.mxu0
        %v2096 = vadd.f32 %v2027, %v2095
        %v2097 = vpop.f32.mrf.mxu0
        %2098 = vmatprep.mubr.f32.mxu0 %v1955
        %2099 = vmatmul.mubr.f32.gmra.mxu0 %v1954
        %v2100 = vpop.f32.mrf.mxu0
        %v2101 = vadd.f32 %v2027, %v2100
        %v2102 = vpop.f32.mrf.mxu0
        %2103 = vdwg.mxu0
        %2104 = vmatprep.subr.mxu0 0.0
        %2105 = vmatpush1.msra.mxu0 %v2005
        %2106 = vmatprep.subr.mxu0 0.0
        %2107 = vmatpush1.msra.mxu0 %v2004
        %2108 = vmatprep.subr.mxu0 0.0
        %2109 = vmatpush1.msra.mxu0 %v2003
        %2110 = vmatprep.subr.mxu0 0.0
        %2111 = vmatpush1.msra.mxu0 %v2002
        %2112 = vmatprep.subr.mxu0 0.0
        %2113 = vmatpush1.msra.mxu0 %v2001
        %2114 = vmatprep.subr.mxu0 0.0
        %2115 = vmatpush1.msra.mxu0 %v2000
        %2116 = vmatprep.subr.mxu0 0.0
        %2117 = vmatpush1.msra.mxu0 %v1999
        %2118 = vmatprep.subr.mxu0 0.0
        %2119 = vmatpush1.msra.mxu0 %v1998
        %2120 = vmatprep.subr.mxu0 0.0
        %2121 = vmatpush1.msra.mxu0 %v1997
        %2122 = vmatprep.subr.mxu0 0.0
        %2123 = vmatpush1.msra.mxu0 %v1996
        %2124 = vmatprep.subr.mxu0 0.0
        %2125 = vmatpush1.msra.mxu0 %v1995
        %2126 = vmatprep.subr.mxu0 0.0
        %2127 = vmatpush1.msra.mxu0 %v1994
        %2128 = vmatprep.subr.mxu0 0.0
        %2129 = vmatpush1.msra.mxu0 %v1993
        %2130 = vmatprep.subr.mxu0 0.0
        %2131 = vmatpush1.msra.mxu0 %v1992
        %2132 = vmatprep.subr.mxu0 0.0
        %2133 = vmatpush1.msra.mxu0 %v1991
        %2134 = vmatprep.subr.mxu0 0.0
        %2135 = vmatpush1.msra.mxu0 %v1990
        %2136 = vmatprep.subr.mxu0 0.0
        %2137 = vmatpush2.msra.mxu0 %v2021
        %2138 = vmatprep.subr.mxu0 0.0
        %2139 = vmatpush2.msra.mxu0 %v2020
        %2140 = vmatprep.subr.mxu0 0.0
        %2141 = vmatpush2.msra.mxu0 %v2019
        %2142 = vmatprep.subr.mxu0 0.0
        %2143 = vmatpush2.msra.mxu0 %v2018
        %2144 = vmatprep.subr.mxu0 0.0
        %2145 = vmatpush2.msra.mxu0 %v2017
        %2146 = vmatprep.subr.mxu0 0.0
        %2147 = vmatpush2.msra.mxu0 %v2016
        %2148 = vmatprep.subr.mxu0 0.0
        %2149 = vmatpush2.msra.mxu0 %v2015
        %2150 = vmatprep.subr.mxu0 0.0
        %2151 = vmatpush2.msra.mxu0 %v2014
        %2152 = vmatprep.subr.mxu0 0.0
        %2153 = vmatpush2.msra.mxu0 %v2013
        %2154 = vmatprep.subr.mxu0 0.0
        %2155 = vmatpush2.msra.mxu0 %v2012
        %2156 = vmatprep.subr.mxu0 0.0
        %2157 = vmatpush2.msra.mxu0 %v2011
        %2158 = vmatprep.subr.mxu0 0.0
        %2159 = vmatpush2.msra.mxu0 %v2010
        %2160 = vmatprep.subr.mxu0 0.0
        %2161 = vmatpush2.msra.mxu0 %v2009
        %2162 = vmatprep.subr.mxu0 0.0
        %2163 = vmatpush2.msra.mxu0 %v2008
        %2164 = vmatprep.subr.mxu0 0.0
        %2165 = vmatpush2.msra.mxu0 %v2007
        %2166 = vmatprep.subr.mxu0 0.0
        %2167 = vmatpush2.msra.mxu0 %v2006
        %2168 = vmatprep.mubr.f32.mxu0 %v1953
        %2169 = vmatmul.mubr.f32.gmra.mxu0 %v1952
        %v2170 = vpop.f32.mrf.mxu0
        %v2171 = vadd.f32 %v2096, %v2170
        %v2172 = vpop.f32.mrf.mxu0
        %2173 = vmatprep.mubr.f32.mxu0 %v1957
        %2174 = vmatmul.mubr.f32.gmra.mxu0 %v1956
        %v2175 = vpop.f32.mrf.mxu0
        %v2176 = vadd.f32 %v2101, %v2175
        %v2177 = vpop.f32.mrf.mxu0
        %2178 = vdwg.mxu0
        %v2179 = vmax.f32 %v2171, 0.0
        %v2180 = vmax.f32 %v2176, 0.0
        %2181 = vst [vmem:[#allocation2] sm:$0xff] 0.0
        %2182 = vst [vmem:[#allocation2 + $0x8] sm:$0xff] 0.0
        %v2183 = vld [vmem:[#allocation2 + $0x1] sm:$0xff]
        %v2184 = vld [vmem:[#allocation2 + $0x9] sm:$0x7f]
        %v2185 = vld [vmem:[#allocation12] sm:$0xff]
        %v2186 = vld [vmem:[#allocation12 + $0x8] sm:$0xff]
        %v2187 = vld [vmem:[#allocation12 + $0x10] sm:$0xff]
        %v2188 = vld [vmem:[#allocation12 + $0x18] sm:$0xff]
        %v2189 = vld [vmem:[#allocation12 + $0x20] sm:$0xff]
        %v2190 = vld [vmem:[#allocation12 + $0x28] sm:$0xff]
        %v2191 = vld [vmem:[#allocation12 + $0x30] sm:$0xff]
        %v2192 = vld [vmem:[#allocation12 + $0x38] sm:$0xff]
        %v2193 = vld [vmem:[#allocation12 + $0x40] sm:$0xff]
        %v2194 = vld [vmem:[#allocation12 + $0x48] sm:$0xff]
        %v2195 = vld [vmem:[#allocation12 + $0x50] sm:$0xff]
        %v2196 = vld [vmem:[#allocation12 + $0x58] sm:$0xff]
        %v2197 = vld [vmem:[#allocation12 + $0x60] sm:$0xff]
        %v2198 = vld [vmem:[#allocation12 + $0x68] sm:$0xff]
        %v2199 = vld [vmem:[#allocation12 + $0x70] sm:$0xff]
        %v2200 = vld [vmem:[#allocation12 + $0x78] sm:$0xff]
        %2201 = vmatprep.subr.mxu0 0.0
        %2202 = vmatpush1.msra.mxu0 %v2200
        %2203 = vmatprep.subr.mxu0 0.0
        %2204 = vmatpush1.msra.mxu0 %v2199
        %2205 = vmatprep.subr.mxu0 0.0
        %2206 = vmatpush1.msra.mxu0 %v2198
        %2207 = vmatprep.subr.mxu0 0.0
        %2208 = vmatpush1.msra.mxu0 %v2197
        %2209 = vmatprep.subr.mxu0 0.0
        %2210 = vmatpush1.msra.mxu0 %v2196
        %2211 = vmatprep.subr.mxu0 0.0
        %2212 = vmatpush1.msra.mxu0 %v2195
        %2213 = vmatprep.subr.mxu0 0.0
        %2214 = vmatpush1.msra.mxu0 %v2194
        %2215 = vmatprep.subr.mxu0 0.0
        %2216 = vmatpush1.msra.mxu0 %v2193
        %2217 = vmatprep.subr.mxu0 0.0
        %2218 = vmatpush1.msra.mxu0 %v2192
        %2219 = vmatprep.subr.mxu0 0.0
        %2220 = vmatpush1.msra.mxu0 %v2191
        %2221 = vmatprep.subr.mxu0 0.0
        %2222 = vmatpush1.msra.mxu0 %v2190
        %2223 = vmatprep.subr.mxu0 0.0
        %2224 = vmatpush1.msra.mxu0 %v2189
        %2225 = vmatprep.subr.mxu0 0.0
        %2226 = vmatpush1.msra.mxu0 %v2188
        %2227 = vmatprep.subr.mxu0 0.0
        %2228 = vmatpush1.msra.mxu0 %v2187
        %2229 = vmatprep.subr.mxu0 0.0
        %2230 = vmatpush1.msra.mxu0 %v2186
        %2231 = vmatprep.subr.mxu0 0.0
        %2232 = vmatpush1.msra.mxu0 %v2185
        %2233 = vmatprep.subr.mxu0 0.0
        %2234 = vmatpush2.msra.mxu0 0.0
        %2235 = vmatprep.subr.mxu0 0.0
        %2236 = vmatpush2.msra.mxu0 0.0
        %2237 = vmatprep.subr.mxu0 0.0
        %2238 = vmatpush2.msra.mxu0 0.0
        %2239 = vmatprep.subr.mxu0 0.0
        %2240 = vmatpush2.msra.mxu0 0.0
        %2241 = vmatprep.subr.mxu0 0.0
        %2242 = vmatpush2.msra.mxu0 0.0
        %2243 = vmatprep.subr.mxu0 0.0
        %2244 = vmatpush2.msra.mxu0 0.0
        %2245 = vmatprep.subr.mxu0 0.0
        %2246 = vmatpush2.msra.mxu0 0.0
        %2247 = vmatprep.subr.mxu0 0.0
        %2248 = vmatpush2.msra.mxu0 0.0
        %2249 = vmatprep.subr.mxu0 0.0
        %2250 = vmatpush2.msra.mxu0 0.0
        %2251 = vmatprep.subr.mxu0 0.0
        %2252 = vmatpush2.msra.mxu0 0.0
        %2253 = vmatprep.subr.mxu0 0.0
        %2254 = vmatpush2.msra.mxu0 0.0
        %2255 = vmatprep.subr.mxu0 0.0
        %2256 = vmatpush2.msra.mxu0 0.0
        %2257 = vmatprep.subr.mxu0 0.0
        %2258 = vmatpush2.msra.mxu0 0.0
        %2259 = vmatprep.subr.mxu0 0.0
        %2260 = vmatpush2.msra.mxu0 0.0
        %2261 = vmatprep.subr.mxu0 0.0
        %2262 = vmatpush2.msra.mxu0 0.0
        %2263 = vmatprep.subr.mxu0 0.0
        %2264 = vmatpush2.msra.mxu0 0.0
        %2265 = vmatprep.mubr.f32.mxu0 0.0
        %2266 = vmatmul.mubr.f32.gmra.mxu0 %v2179
        %v2267 = vpop.f32.mrf.mxu0
        %v2268 = vadd.f32 0.0, %v2267
        %v2269 = vpop.f32.mrf.mxu0
        %2270 = vmatprep.mubr.f32.mxu0 0.0
        %2271 = vmatmul.mubr.f32.gmra.mxu0 %v2180
        %v2272 = vpop.f32.mrf.mxu0
        %v2273 = vadd.f32 0.0, %v2272
        %v2274 = vpop.f32.mrf.mxu0
        %2275 = vdwg.mxu0
        %v2276 = vadd.f32 %v2183, %v2268
        %v2277 = vadd.f32 %v2184, %v2273
        %2278 = vst [vmem:[#allocation2 + $0x1] sm:$0xff] %v2276
        %2279 = vst [vmem:[#allocation2 + $0x9] sm:$0x7f] %v2277
        %v2280 = vld [vmem:[#allocation2] sm:$0xff]
        %v2281 = vld [vmem:[#allocation2 + $0x8] sm:$0xff]
        %s2282 = scalar_lea.vmem [#allocation12], 128
        %v2283 = vld [vmem:[%s2282] sm:$0xff]
        %v2284 = vld [vmem:[%s2282 + $0x8] sm:$0xff]
        %v2285 = vld [vmem:[%s2282 + $0x10] sm:$0xff]
        %v2286 = vld [vmem:[%s2282 + $0x18] sm:$0xff]
        %v2287 = vld [vmem:[%s2282 + $0x20] sm:$0xff]
        %v2288 = vld [vmem:[%s2282 + $0x28] sm:$0xff]
        %v2289 = vld [vmem:[%s2282 + $0x30] sm:$0xff]
        %v2290 = vld [vmem:[%s2282 + $0x38] sm:$0xff]
        %v2291 = vld [vmem:[%s2282 + $0x40] sm:$0xff]
        %v2292 = vld [vmem:[%s2282 + $0x48] sm:$0xff]
        %v2293 = vld [vmem:[%s2282 + $0x50] sm:$0xff]
        %v2294 = vld [vmem:[%s2282 + $0x58] sm:$0xff]
        %v2295 = vld [vmem:[%s2282 + $0x60] sm:$0xff]
        %v2296 = vld [vmem:[%s2282 + $0x68] sm:$0xff]
        %v2297 = vld [vmem:[%s2282 + $0x70] sm:$0xff]
        %v2298 = vld [vmem:[%s2282 + $0x78] sm:$0xff]
        %2299 = vmatprep.subr.mxu0 0.0
        %2300 = vmatpush1.msra.mxu0 %v2298
        %2301 = vmatprep.subr.mxu0 0.0
        %2302 = vmatpush1.msra.mxu0 %v2297
        %2303 = vmatprep.subr.mxu0 0.0
        %2304 = vmatpush1.msra.mxu0 %v2296
        %2305 = vmatprep.subr.mxu0 0.0
        %2306 = vmatpush1.msra.mxu0 %v2295
        %2307 = vmatprep.subr.mxu0 0.0
        %2308 = vmatpush1.msra.mxu0 %v2294
        %2309 = vmatprep.subr.mxu0 0.0
        %2310 = vmatpush1.msra.mxu0 %v2293
        %2311 = vmatprep.subr.mxu0 0.0
        %2312 = vmatpush1.msra.mxu0 %v2292
        %2313 = vmatprep.subr.mxu0 0.0
        %2314 = vmatpush1.msra.mxu0 %v2291
        %2315 = vmatprep.subr.mxu0 0.0
        %2316 = vmatpush1.msra.mxu0 %v2290
        %2317 = vmatprep.subr.mxu0 0.0
        %2318 = vmatpush1.msra.mxu0 %v2289
        %2319 = vmatprep.subr.mxu0 0.0
        %2320 = vmatpush1.msra.mxu0 %v2288
        %2321 = vmatprep.subr.mxu0 0.0
        %2322 = vmatpush1.msra.mxu0 %v2287
        %2323 = vmatprep.subr.mxu0 0.0
        %2324 = vmatpush1.msra.mxu0 %v2286
        %2325 = vmatprep.subr.mxu0 0.0
        %2326 = vmatpush1.msra.mxu0 %v2285
        %2327 = vmatprep.subr.mxu0 0.0
        %2328 = vmatpush1.msra.mxu0 %v2284
        %2329 = vmatprep.subr.mxu0 0.0
        %2330 = vmatpush1.msra.mxu0 %v2283
        %2331 = vmatprep.subr.mxu0 0.0
        %2332 = vmatpush2.msra.mxu0 0.0
        %2333 = vmatprep.subr.mxu0 0.0
        %2334 = vmatpush2.msra.mxu0 0.0
        %2335 = vmatprep.subr.mxu0 0.0
        %2336 = vmatpush2.msra.mxu0 0.0
        %2337 = vmatprep.subr.mxu0 0.0
        %2338 = vmatpush2.msra.mxu0 0.0
        %2339 = vmatprep.subr.mxu0 0.0
        %2340 = vmatpush2.msra.mxu0 0.0
        %2341 = vmatprep.subr.mxu0 0.0
        %2342 = vmatpush2.msra.mxu0 0.0
        %2343 = vmatprep.subr.mxu0 0.0
        %2344 = vmatpush2.msra.mxu0 0.0
        %2345 = vmatprep.subr.mxu0 0.0
        %2346 = vmatpush2.msra.mxu0 0.0
        %2347 = vmatprep.subr.mxu0 0.0
        %2348 = vmatpush2.msra.mxu0 0.0
        %2349 = vmatprep.subr.mxu0 0.0
        %2350 = vmatpush2.msra.mxu0 0.0
        %2351 = vmatprep.subr.mxu0 0.0
        %2352 = vmatpush2.msra.mxu0 0.0
        %2353 = vmatprep.subr.mxu0 0.0
        %2354 = vmatpush2.msra.mxu0 0.0
        %2355 = vmatprep.subr.mxu0 0.0
        %2356 = vmatpush2.msra.mxu0 0.0
        %2357 = vmatprep.subr.mxu0 0.0
        %2358 = vmatpush2.msra.mxu0 0.0
        %2359 = vmatprep.subr.mxu0 0.0
        %2360 = vmatpush2.msra.mxu0 0.0
        %2361 = vmatprep.subr.mxu0 0.0
        %2362 = vmatpush2.msra.mxu0 0.0
        %2363 = vmatprep.mubr.f32.mxu0 0.0
        %2364 = vmatmul.mubr.f32.gmra.mxu0 %v2179
        %v2365 = vpop.f32.mrf.mxu0
        %v2366 = vadd.f32 0.0, %v2365
        %v2367 = vpop.f32.mrf.mxu0
        %2368 = vmatprep.mubr.f32.mxu0 0.0
        %2369 = vmatmul.mubr.f32.gmra.mxu0 %v2180
        %v2370 = vpop.f32.mrf.mxu0
        %v2371 = vadd.f32 0.0, %v2370
        %v2372 = vpop.f32.mrf.mxu0
        %2373 = vdwg.mxu0
        %v2374 = vadd.f32 %v2280, %v2366
        %v2375 = vadd.f32 %v2281, %v2371
        %2376 = vst [vmem:[#allocation2] sm:$0xff] %v2374
        %2377 = vst [vmem:[#allocation2 + $0x8] sm:$0xff] %v2375
        %v2378 = vld [vmem:[#allocation2] sm:$0xff]
        %v2379 = vld [vmem:[#allocation2 + $0x8] sm:$0x7f]
        %s2380 = scalar_lea.vmem [#allocation12], 256
        %v2381 = vld [vmem:[%s2380] sm:$0xff]
        %v2382 = vld [vmem:[%s2380 + $0x8] sm:$0xff]
        %v2383 = vld [vmem:[%s2380 + $0x10] sm:$0xff]
        %v2384 = vld [vmem:[%s2380 + $0x18] sm:$0xff]
        %v2385 = vld [vmem:[%s2380 + $0x20] sm:$0xff]
        %v2386 = vld [vmem:[%s2380 + $0x28] sm:$0xff]
        %v2387 = vld [vmem:[%s2380 + $0x30] sm:$0xff]
        %v2388 = vld [vmem:[%s2380 + $0x38] sm:$0xff]
        %v2389 = vld [vmem:[%s2380 + $0x40] sm:$0xff]
        %v2390 = vld [vmem:[%s2380 + $0x48] sm:$0xff]
        %v2391 = vld [vmem:[%s2380 + $0x50] sm:$0xff]
        %v2392 = vld [vmem:[%s2380 + $0x58] sm:$0xff]
        %v2393 = vld [vmem:[%s2380 + $0x60] sm:$0xff]
        %v2394 = vld [vmem:[%s2380 + $0x68] sm:$0xff]
        %v2395 = vld [vmem:[%s2380 + $0x70] sm:$0xff]
        %v2396 = vld [vmem:[%s2380 + $0x78] sm:$0xff]
        %vm2399 = vcmask 1046528
        %v2400 = vrot.slane %v2179, 1
        %v2401 = vrot.slane %v2180, 1
        %v2402 = vsel %vm2399, %v2400, %v2401
        %2405 = vmatprep.subr.mxu0 0.0
        %2406 = vmatpush1.msra.mxu0 %v2396
        %2407 = vmatprep.subr.mxu0 0.0
        %2408 = vmatpush1.msra.mxu0 %v2395
        %2409 = vmatprep.subr.mxu0 0.0
        %2410 = vmatpush1.msra.mxu0 %v2394
        %2411 = vmatprep.subr.mxu0 0.0
        %2412 = vmatpush1.msra.mxu0 %v2393
        %2413 = vmatprep.subr.mxu0 0.0
        %2414 = vmatpush1.msra.mxu0 %v2392
        %2415 = vmatprep.subr.mxu0 0.0
        %2416 = vmatpush1.msra.mxu0 %v2391
        %2417 = vmatprep.subr.mxu0 0.0
        %2418 = vmatpush1.msra.mxu0 %v2390
        %2419 = vmatprep.subr.mxu0 0.0
        %2420 = vmatpush1.msra.mxu0 %v2389
        %2421 = vmatprep.subr.mxu0 0.0
        %2422 = vmatpush1.msra.mxu0 %v2388
        %2423 = vmatprep.subr.mxu0 0.0
        %2424 = vmatpush1.msra.mxu0 %v2387
        %2425 = vmatprep.subr.mxu0 0.0
        %2426 = vmatpush1.msra.mxu0 %v2386
        %2427 = vmatprep.subr.mxu0 0.0
        %2428 = vmatpush1.msra.mxu0 %v2385
        %2429 = vmatprep.subr.mxu0 0.0
        %2430 = vmatpush1.msra.mxu0 %v2384
        %2431 = vmatprep.subr.mxu0 0.0
        %2432 = vmatpush1.msra.mxu0 %v2383
        %2433 = vmatprep.subr.mxu0 0.0
        %2434 = vmatpush1.msra.mxu0 %v2382
        %2435 = vmatprep.subr.mxu0 0.0
        %2436 = vmatpush1.msra.mxu0 %v2381
        %2437 = vmatprep.subr.mxu0 0.0
        %2438 = vmatpush2.msra.mxu0 0.0
        %2439 = vmatprep.subr.mxu0 0.0
        %2440 = vmatpush2.msra.mxu0 0.0
        %2441 = vmatprep.subr.mxu0 0.0
        %2442 = vmatpush2.msra.mxu0 0.0
        %2443 = vmatprep.subr.mxu0 0.0
        %2444 = vmatpush2.msra.mxu0 0.0
        %2445 = vmatprep.subr.mxu0 0.0
        %2446 = vmatpush2.msra.mxu0 0.0
        %2447 = vmatprep.subr.mxu0 0.0
        %2448 = vmatpush2.msra.mxu0 0.0
        %2449 = vmatprep.subr.mxu0 0.0
        %2450 = vmatpush2.msra.mxu0 0.0
        %2451 = vmatprep.subr.mxu0 0.0
        %2452 = vmatpush2.msra.mxu0 0.0
        %2453 = vmatprep.subr.mxu0 0.0
        %2454 = vmatpush2.msra.mxu0 0.0
        %2455 = vmatprep.subr.mxu0 0.0
        %2456 = vmatpush2.msra.mxu0 0.0
        %2457 = vmatprep.subr.mxu0 0.0
        %2458 = vmatpush2.msra.mxu0 0.0
        %2459 = vmatprep.subr.mxu0 0.0
        %2460 = vmatpush2.msra.mxu0 0.0
        %2461 = vmatprep.subr.mxu0 0.0
        %2462 = vmatpush2.msra.mxu0 0.0
        %2463 = vmatprep.subr.mxu0 0.0
        %2464 = vmatpush2.msra.mxu0 0.0
        %2465 = vmatprep.subr.mxu0 0.0
        %2466 = vmatpush2.msra.mxu0 0.0
        %2467 = vmatprep.subr.mxu0 0.0
        %2468 = vmatpush2.msra.mxu0 0.0
        %2469 = vmatprep.mubr.f32.mxu0 0.0
        %2470 = vmatmul.mubr.f32.gmra.mxu0 %v2402
        %v2471 = vpop.f32.mrf.mxu0
        %v2472 = vadd.f32 0.0, %v2471
        %v2473 = vpop.f32.mrf.mxu0
        %2474 = vmatprep.mubr.f32.mxu0 0.0
        %2475 = vmatmul.mubr.f32.gmra.mxu0 %v2401
        %v2476 = vpop.f32.mrf.mxu0
        %v2477 = vadd.f32 0.0, %v2476
        %v2478 = vpop.f32.mrf.mxu0
        %2479 = vdwg.mxu0
        %v2480 = vadd.f32 %v2378, %v2472
        %v2481 = vadd.f32 %v2379, %v2477
        %2482 = vst [vmem:[#allocation2] sm:$0xff] %v2480
        %2483 = vst [vmem:[#allocation2 + $0x8] sm:$0x7f] %v2481
        %v2484 = vld [vmem:[#allocation2] sm:$0xff]
        %v2485 = vld [vmem:[#allocation2 + $0x8] sm:$0xff]
        %v2486 = vld [vmem:[#allocation14] sm:$0x1]
        %v2488 = vlaneseq
        %v2489 = vshrl.u32 %v2488, 7
        %v2490 = vsub.s32 0, %v2489
        %v2491 = vrot.slane %v2486, %v2490
        %v2493 = vadd.f32 %v2484, %v2491
        %v2494 = vadd.f32 %v2485, %v2491
        %v2495 = vmax.f32 %v2493, 0.0
        %v2496 = vmax.f32 %v2494, 0.0
        %v2497 = vld [vmem:[#allocation15] sm:$0xff]
        %v2498 = vld [vmem:[#allocation15 + $0x8] sm:$0xff]
        %v2499 = vld [vmem:[#allocation15 + $0x10] sm:$0xff]
        %v2500 = vld [vmem:[#allocation15 + $0x18] sm:$0xff]
        %v2501 = vld [vmem:[#allocation15 + $0x20] sm:$0xff]
        %v2502 = vld [vmem:[#allocation15 + $0x28] sm:$0xff]
        %v2503 = vld [vmem:[#allocation15 + $0x30] sm:$0xff]
        %v2504 = vld [vmem:[#allocation15 + $0x38] sm:$0xff]
        %v2505 = vld [vmem:[#allocation15 + $0x40] sm:$0xff]
        %v2506 = vld [vmem:[#allocation15 + $0x48] sm:$0xff]
        %v2507 = vld [vmem:[#allocation15 + $0x50] sm:$0xff]
        %v2508 = vld [vmem:[#allocation15 + $0x58] sm:$0xff]
        %v2509 = vld [vmem:[#allocation15 + $0x60] sm:$0xff]
        %v2510 = vld [vmem:[#allocation15 + $0x68] sm:$0xff]
        %v2511 = vld [vmem:[#allocation15 + $0x70] sm:$0xff]
        %v2512 = vld [vmem:[#allocation15 + $0x78] sm:$0xff]
        %v2513 = vld [vmem:[#allocation17] sm:$0x1]
        %v2515 = vlaneseq
        %v2516 = vshrl.u32 %v2515, 7
        %v2517 = vsub.s32 0, %v2516
        %v2518 = vrot.slane %v2513, %v2517
        %2520 = vmatprep.subr.mxu0 0.0
        %2521 = vmatpush1.msra.mxu0 %v2512
        %2522 = vmatprep.subr.mxu0 0.0
        %2523 = vmatpush1.msra.mxu0 %v2511
        %2524 = vmatprep.subr.mxu0 0.0
        %2525 = vmatpush1.msra.mxu0 %v2510
        %2526 = vmatprep.subr.mxu0 0.0
        %2527 = vmatpush1.msra.mxu0 %v2509
        %2528 = vmatprep.subr.mxu0 0.0
        %2529 = vmatpush1.msra.mxu0 %v2508
        %2530 = vmatprep.subr.mxu0 0.0
        %2531 = vmatpush1.msra.mxu0 %v2507
        %2532 = vmatprep.subr.mxu0 0.0
        %2533 = vmatpush1.msra.mxu0 %v2506
        %2534 = vmatprep.subr.mxu0 0.0
        %2535 = vmatpush1.msra.mxu0 %v2505
        %2536 = vmatprep.subr.mxu0 0.0
        %2537 = vmatpush1.msra.mxu0 %v2504
        %2538 = vmatprep.subr.mxu0 0.0
        %2539 = vmatpush1.msra.mxu0 %v2503
        %2540 = vmatprep.subr.mxu0 0.0
        %2541 = vmatpush1.msra.mxu0 %v2502
        %2542 = vmatprep.subr.mxu0 0.0
        %2543 = vmatpush1.msra.mxu0 %v2501
        %2544 = vmatprep.subr.mxu0 0.0
        %2545 = vmatpush1.msra.mxu0 %v2500
        %2546 = vmatprep.subr.mxu0 0.0
        %2547 = vmatpush1.msra.mxu0 %v2499
        %2548 = vmatprep.subr.mxu0 0.0
        %2549 = vmatpush1.msra.mxu0 %v2498
        %2550 = vmatprep.subr.mxu0 0.0
        %2551 = vmatpush1.msra.mxu0 %v2497
        %2552 = vmatprep.subr.mxu0 0.0
        %2553 = vmatpush2.msra.mxu0 0.0
        %2554 = vmatprep.subr.mxu0 0.0
        %2555 = vmatpush2.msra.mxu0 0.0
        %2556 = vmatprep.subr.mxu0 0.0
        %2557 = vmatpush2.msra.mxu0 0.0
        %2558 = vmatprep.subr.mxu0 0.0
        %2559 = vmatpush2.msra.mxu0 0.0
        %2560 = vmatprep.subr.mxu0 0.0
        %2561 = vmatpush2.msra.mxu0 0.0
        %2562 = vmatprep.subr.mxu0 0.0
        %2563 = vmatpush2.msra.mxu0 0.0
        %2564 = vmatprep.subr.mxu0 0.0
        %2565 = vmatpush2.msra.mxu0 0.0
        %2566 = vmatprep.subr.mxu0 0.0
        %2567 = vmatpush2.msra.mxu0 0.0
        %2568 = vmatprep.subr.mxu0 0.0
        %2569 = vmatpush2.msra.mxu0 0.0
        %2570 = vmatprep.subr.mxu0 0.0
        %2571 = vmatpush2.msra.mxu0 0.0
        %2572 = vmatprep.subr.mxu0 0.0
        %2573 = vmatpush2.msra.mxu0 0.0
        %2574 = vmatprep.subr.mxu0 0.0
        %2575 = vmatpush2.msra.mxu0 0.0
        %2576 = vmatprep.subr.mxu0 0.0
        %2577 = vmatpush2.msra.mxu0 0.0
        %2578 = vmatprep.subr.mxu0 0.0
        %2579 = vmatpush2.msra.mxu0 0.0
        %2580 = vmatprep.subr.mxu0 0.0
        %2581 = vmatpush2.msra.mxu0 0.0
        %2582 = vmatprep.subr.mxu0 0.0
        %2583 = vmatpush2.msra.mxu0 0.0
        %2584 = vmatprep.mubr.f32.mxu0 0.0
        %2585 = vmatmul.mubr.f32.gmra.mxu0 %v2495
        %v2586 = vpop.f32.mrf.mxu0
        %v2587 = vadd.f32 %v2518, %v2586
        %v2588 = vpop.f32.mrf.mxu0
        %2589 = vmatprep.mubr.f32.mxu0 0.0
        %2590 = vmatmul.mubr.f32.gmra.mxu0 %v2496
        %v2591 = vpop.f32.mrf.mxu0
        %v2592 = vadd.f32 %v2518, %v2591
        %v2593 = vpop.f32.mrf.mxu0
        %2594 = vdwg.mxu0
        %v2595 = vmax.f32 %v2587, 0.0
        %v2596 = vmax.f32 %v2592, 0.0
        %v2597 = vld [vmem:[%s19] sm:$0xf]
        %v2599 = vlaneseq
        %v2600 = vshrl.u32 %v2599, 7
        %v2601 = vsub.s32 0, %v2600
        %v2602 = vrot.slane %v2597, %v2601
        %v2603 = vlaneseq
        %v2604 = vshrl.u32 %v2603, 7
        %v2605 = vsub.s32 1, %v2604
        %v2606 = vrot.slane %v2597, %v2605
        %v2607 = vlaneseq
        %v2608 = vshrl.u32 %v2607, 7
        %v2609 = vsub.s32 2, %v2608
        %v2610 = vrot.slane %v2597, %v2609
        %v2611 = vlaneseq
        %v2612 = vshrl.u32 %v2611, 7
        %v2613 = vsub.s32 3, %v2612
        %v2614 = vrot.slane %v2597, %v2613
        %v2619 = vmul.f32 %v1882, %v2602
        %v2620 = vmul.f32 %v1883, %v2606
        %v2621 = vmul.f32 %v1884, %v2610
        %v2622 = vmul.f32 %v1885, %v2614
        %v2623 = vmul.f32 %v1886, %v2602
        %v2624 = vmul.f32 %v1887, %v2606
        %v2625 = vmul.f32 %v1888, %v2610
        %v2626 = vmul.f32 %v1889, %v2614
        %v2627 = vld [vmem:[%s21] sm:$0xf]
        %v2629 = vlaneseq
        %v2630 = vshrl.u32 %v2629, 7
        %v2631 = vsub.s32 0, %v2630
        %v2632 = vrot.slane %v2627, %v2631
        %v2633 = vlaneseq
        %v2634 = vshrl.u32 %v2633, 7
        %v2635 = vsub.s32 1, %v2634
        %v2636 = vrot.slane %v2627, %v2635
        %v2637 = vlaneseq
        %v2638 = vshrl.u32 %v2637, 7
        %v2639 = vsub.s32 2, %v2638
        %v2640 = vrot.slane %v2627, %v2639
        %v2641 = vlaneseq
        %v2642 = vshrl.u32 %v2641, 7
        %v2643 = vsub.s32 3, %v2642
        %v2644 = vrot.slane %v2627, %v2643
        %v2649 = vadd.f32 %v2619, %v2632
        %v2650 = vadd.f32 %v2620, %v2636
        %v2651 = vadd.f32 %v2621, %v2640
        %v2652 = vadd.f32 %v2622, %v2644
        %v2653 = vadd.f32 %v2623, %v2632
        %v2654 = vadd.f32 %v2624, %v2636
        %v2655 = vadd.f32 %v2625, %v2640
        %v2656 = vadd.f32 %v2626, %v2644
        %v2657 = vmax.f32 %v2649, 0.0
        %v2658 = vmax.f32 %v2650, 0.0
        %v2659 = vmax.f32 %v2651, 0.0
        %v2660 = vmax.f32 %v2652, 0.0
        %v2661 = vmax.f32 %v2653, 0.0
        %v2662 = vmax.f32 %v2654, 0.0
        %v2663 = vmax.f32 %v2655, 0.0
        %v2664 = vmax.f32 %v2656, 0.0
        %v2665 = vld [vmem:[#allocation18] sm:$0xff]
        %v2666 = vld [vmem:[#allocation18 + $0x8] sm:$0xff]
        %v2667 = vld [vmem:[#allocation18 + $0x10] sm:$0xff]
        %v2668 = vld [vmem:[#allocation18 + $0x18] sm:$0xff]
        %v2669 = vld [vmem:[#allocation18 + $0x20] sm:$0xff]
        %v2670 = vld [vmem:[#allocation18 + $0x28] sm:$0xff]
        %v2671 = vld [vmem:[#allocation18 + $0x30] sm:$0xff]
        %v2672 = vld [vmem:[#allocation18 + $0x38] sm:$0xff]
        %v2673 = vld [vmem:[#allocation18 + $0x40] sm:$0xff]
        %v2674 = vld [vmem:[#allocation18 + $0x48] sm:$0xff]
        %v2675 = vld [vmem:[#allocation18 + $0x50] sm:$0xff]
        %v2676 = vld [vmem:[#allocation18 + $0x58] sm:$0xff]
        %v2677 = vld [vmem:[#allocation18 + $0x60] sm:$0xff]
        %v2678 = vld [vmem:[#allocation18 + $0x68] sm:$0xff]
        %v2679 = vld [vmem:[#allocation18 + $0x70] sm:$0xff]
        %v2680 = vld [vmem:[#allocation18 + $0x78] sm:$0xff]
        %v2681 = vld [vmem:[#allocation18 + $0x80] sm:$0xff]
        %v2682 = vld [vmem:[#allocation18 + $0x88] sm:$0xff]
        %v2683 = vld [vmem:[#allocation18 + $0x90] sm:$0xff]
        %v2684 = vld [vmem:[#allocation18 + $0x98] sm:$0xff]
        %v2685 = vld [vmem:[#allocation18 + $0xa0] sm:$0xff]
        %v2686 = vld [vmem:[#allocation18 + $0xa8] sm:$0xff]
        %v2687 = vld [vmem:[#allocation18 + $0xb0] sm:$0xff]
        %v2688 = vld [vmem:[#allocation18 + $0xb8] sm:$0xff]
        %v2689 = vld [vmem:[#allocation18 + $0xc0] sm:$0xff]
        %v2690 = vld [vmem:[#allocation18 + $0xc8] sm:$0xff]
        %v2691 = vld [vmem:[#allocation18 + $0xd0] sm:$0xff]
        %v2692 = vld [vmem:[#allocation18 + $0xd8] sm:$0xff]
        %v2693 = vld [vmem:[#allocation18 + $0xe0] sm:$0xff]
        %v2694 = vld [vmem:[#allocation18 + $0xe8] sm:$0xff]
        %v2695 = vld [vmem:[#allocation18 + $0xf0] sm:$0xff]
        %v2696 = vld [vmem:[#allocation18 + $0xf8] sm:$0xff]
        %v2697 = vld [vmem:[#allocation18 + $0x100] sm:$0xff]
        %v2698 = vld [vmem:[#allocation18 + $0x108] sm:$0xff]
        %v2699 = vld [vmem:[#allocation18 + $0x110] sm:$0xff]
        %v2700 = vld [vmem:[#allocation18 + $0x118] sm:$0xff]
        %v2701 = vld [vmem:[#allocation18 + $0x120] sm:$0xff]
        %v2702 = vld [vmem:[#allocation18 + $0x128] sm:$0xff]
        %v2703 = vld [vmem:[#allocation18 + $0x130] sm:$0xff]
        %v2704 = vld [vmem:[#allocation18 + $0x138] sm:$0xff]
        %v2705 = vld [vmem:[#allocation18 + $0x140] sm:$0xff]
        %v2706 = vld [vmem:[#allocation18 + $0x148] sm:$0xff]
        %v2707 = vld [vmem:[#allocation18 + $0x150] sm:$0xff]
        %v2708 = vld [vmem:[#allocation18 + $0x158] sm:$0xff]
        %v2709 = vld [vmem:[#allocation18 + $0x160] sm:$0xff]
        %v2710 = vld [vmem:[#allocation18 + $0x168] sm:$0xff]
        %v2711 = vld [vmem:[#allocation18 + $0x170] sm:$0xff]
        %v2712 = vld [vmem:[#allocation18 + $0x178] sm:$0xff]
        %v2713 = vld [vmem:[#allocation18 + $0x180] sm:$0xff]
        %v2714 = vld [vmem:[#allocation18 + $0x188] sm:$0xff]
        %v2715 = vld [vmem:[#allocation18 + $0x190] sm:$0xff]
        %v2716 = vld [vmem:[#allocation18 + $0x198] sm:$0xff]
        %v2717 = vld [vmem:[#allocation18 + $0x1a0] sm:$0xff]
        %v2718 = vld [vmem:[#allocation18 + $0x1a8] sm:$0xff]
        %v2719 = vld [vmem:[#allocation18 + $0x1b0] sm:$0xff]
        %v2720 = vld [vmem:[#allocation18 + $0x1b8] sm:$0xff]
        %v2721 = vld [vmem:[#allocation18 + $0x1c0] sm:$0xff]
        %v2722 = vld [vmem:[#allocation18 + $0x1c8] sm:$0xff]
        %v2723 = vld [vmem:[#allocation18 + $0x1d0] sm:$0xff]
        %v2724 = vld [vmem:[#allocation18 + $0x1d8] sm:$0xff]
        %v2725 = vld [vmem:[#allocation18 + $0x1e0] sm:$0xff]
        %v2726 = vld [vmem:[#allocation18 + $0x1e8] sm:$0xff]
        %v2727 = vld [vmem:[#allocation18 + $0x1f0] sm:$0xff]
        %v2728 = vld [vmem:[#allocation18 + $0x1f8] sm:$0xff]
        %v2729 = vld [vmem:[#allocation20] sm:$0x1]
        %v2731 = vlaneseq
        %v2732 = vshrl.u32 %v2731, 7
        %v2733 = vsub.s32 0, %v2732
        %v2734 = vrot.slane %v2729, %v2733
        %2736 = vmatprep.subr.mxu0 0.0
        %2737 = vmatpush1.msra.mxu0 %v2680
        %2738 = vmatprep.subr.mxu0 0.0
        %2739 = vmatpush1.msra.mxu0 %v2679
        %2740 = vmatprep.subr.mxu0 0.0
        %2741 = vmatpush1.msra.mxu0 %v2678
        %2742 = vmatprep.subr.mxu0 0.0
        %2743 = vmatpush1.msra.mxu0 %v2677
        %2744 = vmatprep.subr.mxu0 0.0
        %2745 = vmatpush1.msra.mxu0 %v2676
        %2746 = vmatprep.subr.mxu0 0.0
        %2747 = vmatpush1.msra.mxu0 %v2675
        %2748 = vmatprep.subr.mxu0 0.0
        %2749 = vmatpush1.msra.mxu0 %v2674
        %2750 = vmatprep.subr.mxu0 0.0
        %2751 = vmatpush1.msra.mxu0 %v2673
        %2752 = vmatprep.subr.mxu0 0.0
        %2753 = vmatpush1.msra.mxu0 %v2672
        %2754 = vmatprep.subr.mxu0 0.0
        %2755 = vmatpush1.msra.mxu0 %v2671
        %2756 = vmatprep.subr.mxu0 0.0
        %2757 = vmatpush1.msra.mxu0 %v2670
        %2758 = vmatprep.subr.mxu0 0.0
        %2759 = vmatpush1.msra.mxu0 %v2669
        %2760 = vmatprep.subr.mxu0 0.0
        %2761 = vmatpush1.msra.mxu0 %v2668
        %2762 = vmatprep.subr.mxu0 0.0
        %2763 = vmatpush1.msra.mxu0 %v2667
        %2764 = vmatprep.subr.mxu0 0.0
        %2765 = vmatpush1.msra.mxu0 %v2666
        %2766 = vmatprep.subr.mxu0 0.0
        %2767 = vmatpush1.msra.mxu0 %v2665
        %2768 = vmatprep.subr.mxu0 0.0
        %2769 = vmatpush2.msra.mxu0 %v2696
        %2770 = vmatprep.subr.mxu0 0.0
        %2771 = vmatpush2.msra.mxu0 %v2695
        %2772 = vmatprep.subr.mxu0 0.0
        %2773 = vmatpush2.msra.mxu0 %v2694
        %2774 = vmatprep.subr.mxu0 0.0
        %2775 = vmatpush2.msra.mxu0 %v2693
        %2776 = vmatprep.subr.mxu0 0.0
        %2777 = vmatpush2.msra.mxu0 %v2692
        %2778 = vmatprep.subr.mxu0 0.0
        %2779 = vmatpush2.msra.mxu0 %v2691
        %2780 = vmatprep.subr.mxu0 0.0
        %2781 = vmatpush2.msra.mxu0 %v2690
        %2782 = vmatprep.subr.mxu0 0.0
        %2783 = vmatpush2.msra.mxu0 %v2689
        %2784 = vmatprep.subr.mxu0 0.0
        %2785 = vmatpush2.msra.mxu0 %v2688
        %2786 = vmatprep.subr.mxu0 0.0
        %2787 = vmatpush2.msra.mxu0 %v2687
        %2788 = vmatprep.subr.mxu0 0.0
        %2789 = vmatpush2.msra.mxu0 %v2686
        %2790 = vmatprep.subr.mxu0 0.0
        %2791 = vmatpush2.msra.mxu0 %v2685
        %2792 = vmatprep.subr.mxu0 0.0
        %2793 = vmatpush2.msra.mxu0 %v2684
        %2794 = vmatprep.subr.mxu0 0.0
        %2795 = vmatpush2.msra.mxu0 %v2683
        %2796 = vmatprep.subr.mxu0 0.0
        %2797 = vmatpush2.msra.mxu0 %v2682
        %2798 = vmatprep.subr.mxu0 0.0
        %2799 = vmatpush2.msra.mxu0 %v2681
        %2800 = vmatprep.mubr.f32.mxu0 %v2658
        %2801 = vmatmul.mubr.f32.gmra.mxu0 %v2657
        %v2802 = vpop.f32.mrf.mxu0
        %v2803 = vadd.f32 %v2734, %v2802
        %v2804 = vpop.f32.mrf.mxu0
        %2805 = vmatprep.mubr.f32.mxu0 %v2662
        %2806 = vmatmul.mubr.f32.gmra.mxu0 %v2661
        %v2807 = vpop.f32.mrf.mxu0
        %v2808 = vadd.f32 %v2734, %v2807
        %v2809 = vpop.f32.mrf.mxu0
        %2810 = vdwg.mxu0
        %2811 = vmatprep.subr.mxu0 0.0
        %2812 = vmatpush1.msra.mxu0 %v2712
        %2813 = vmatprep.subr.mxu0 0.0
        %2814 = vmatpush1.msra.mxu0 %v2711
        %2815 = vmatprep.subr.mxu0 0.0
        %2816 = vmatpush1.msra.mxu0 %v2710
        %2817 = vmatprep.subr.mxu0 0.0
        %2818 = vmatpush1.msra.mxu0 %v2709
        %2819 = vmatprep.subr.mxu0 0.0
        %2820 = vmatpush1.msra.mxu0 %v2708
        %2821 = vmatprep.subr.mxu0 0.0
        %2822 = vmatpush1.msra.mxu0 %v2707
        %2823 = vmatprep.subr.mxu0 0.0
        %2824 = vmatpush1.msra.mxu0 %v2706
        %2825 = vmatprep.subr.mxu0 0.0
        %2826 = vmatpush1.msra.mxu0 %v2705
        %2827 = vmatprep.subr.mxu0 0.0
        %2828 = vmatpush1.msra.mxu0 %v2704
        %2829 = vmatprep.subr.mxu0 0.0
        %2830 = vmatpush1.msra.mxu0 %v2703
        %2831 = vmatprep.subr.mxu0 0.0
        %2832 = vmatpush1.msra.mxu0 %v2702
        %2833 = vmatprep.subr.mxu0 0.0
        %2834 = vmatpush1.msra.mxu0 %v2701
        %2835 = vmatprep.subr.mxu0 0.0
        %2836 = vmatpush1.msra.mxu0 %v2700
        %2837 = vmatprep.subr.mxu0 0.0
        %2838 = vmatpush1.msra.mxu0 %v2699
        %2839 = vmatprep.subr.mxu0 0.0
        %2840 = vmatpush1.msra.mxu0 %v2698
        %2841 = vmatprep.subr.mxu0 0.0
        %2842 = vmatpush1.msra.mxu0 %v2697
        %2843 = vmatprep.subr.mxu0 0.0
        %2844 = vmatpush2.msra.mxu0 %v2728
        %2845 = vmatprep.subr.mxu0 0.0
        %2846 = vmatpush2.msra.mxu0 %v2727
        %2847 = vmatprep.subr.mxu0 0.0
        %2848 = vmatpush2.msra.mxu0 %v2726
        %2849 = vmatprep.subr.mxu0 0.0
        %2850 = vmatpush2.msra.mxu0 %v2725
        %2851 = vmatprep.subr.mxu0 0.0
        %2852 = vmatpush2.msra.mxu0 %v2724
        %2853 = vmatprep.subr.mxu0 0.0
        %2854 = vmatpush2.msra.mxu0 %v2723
        %2855 = vmatprep.subr.mxu0 0.0
        %2856 = vmatpush2.msra.mxu0 %v2722
        %2857 = vmatprep.subr.mxu0 0.0
        %2858 = vmatpush2.msra.mxu0 %v2721
        %2859 = vmatprep.subr.mxu0 0.0
        %2860 = vmatpush2.msra.mxu0 %v2720
        %2861 = vmatprep.subr.mxu0 0.0
        %2862 = vmatpush2.msra.mxu0 %v2719
        %2863 = vmatprep.subr.mxu0 0.0
        %2864 = vmatpush2.msra.mxu0 %v2718
        %2865 = vmatprep.subr.mxu0 0.0
        %2866 = vmatpush2.msra.mxu0 %v2717
        %2867 = vmatprep.subr.mxu0 0.0
        %2868 = vmatpush2.msra.mxu0 %v2716
        %2869 = vmatprep.subr.mxu0 0.0
        %2870 = vmatpush2.msra.mxu0 %v2715
        %2871 = vmatprep.subr.mxu0 0.0
        %2872 = vmatpush2.msra.mxu0 %v2714
        %2873 = vmatprep.subr.mxu0 0.0
        %2874 = vmatpush2.msra.mxu0 %v2713
        %2875 = vmatprep.mubr.f32.mxu0 %v2660
        %2876 = vmatmul.mubr.f32.gmra.mxu0 %v2659
        %v2877 = vpop.f32.mrf.mxu0
        %v2878 = vadd.f32 %v2803, %v2877
        %v2879 = vpop.f32.mrf.mxu0
        %2880 = vmatprep.mubr.f32.mxu0 %v2664
        %2881 = vmatmul.mubr.f32.gmra.mxu0 %v2663
        %v2882 = vpop.f32.mrf.mxu0
        %v2883 = vadd.f32 %v2808, %v2882
        %v2884 = vpop.f32.mrf.mxu0
        %2885 = vdwg.mxu0
        %v2886 = vmax.f32 %v2878, 0.0
        %v2887 = vmax.f32 %v2883, 0.0
        %2888 = vst [vmem:[#allocation2] sm:$0xff] 0.0
        %2889 = vst [vmem:[#allocation2 + $0x8] sm:$0xff] 0.0
        %v2890 = vld [vmem:[#allocation2] sm:$0xff]
        %v2891 = vld [vmem:[#allocation2 + $0x8] sm:$0xff]
        %v2892 = vld [vmem:[#allocation21] sm:$0xff]
        %v2893 = vld [vmem:[#allocation21 + $0x8] sm:$0xff]
        %v2894 = vld [vmem:[#allocation21 + $0x10] sm:$0xff]
        %v2895 = vld [vmem:[#allocation21 + $0x18] sm:$0xff]
        %v2896 = vld [vmem:[#allocation21 + $0x20] sm:$0xff]
        %v2897 = vld [vmem:[#allocation21 + $0x28] sm:$0xff]
        %v2898 = vld [vmem:[#allocation21 + $0x30] sm:$0xff]
        %v2899 = vld [vmem:[#allocation21 + $0x38] sm:$0xff]
        %v2900 = vld [vmem:[#allocation21 + $0x40] sm:$0xff]
        %v2901 = vld [vmem:[#allocation21 + $0x48] sm:$0xff]
        %v2902 = vld [vmem:[#allocation21 + $0x50] sm:$0xff]
        %v2903 = vld [vmem:[#allocation21 + $0x58] sm:$0xff]
        %v2904 = vld [vmem:[#allocation21 + $0x60] sm:$0xff]
        %v2905 = vld [vmem:[#allocation21 + $0x68] sm:$0xff]
        %v2906 = vld [vmem:[#allocation21 + $0x70] sm:$0xff]
        %v2907 = vld [vmem:[#allocation21 + $0x78] sm:$0xff]
        %2908 = vmatprep.subr.mxu0 0.0
        %2909 = vmatpush1.msra.mxu0 %v2907
        %2910 = vmatprep.subr.mxu0 0.0
        %2911 = vmatpush1.msra.mxu0 %v2906
        %2912 = vmatprep.subr.mxu0 0.0
        %2913 = vmatpush1.msra.mxu0 %v2905
        %2914 = vmatprep.subr.mxu0 0.0
        %2915 = vmatpush1.msra.mxu0 %v2904
        %2916 = vmatprep.subr.mxu0 0.0
        %2917 = vmatpush1.msra.mxu0 %v2903
        %2918 = vmatprep.subr.mxu0 0.0
        %2919 = vmatpush1.msra.mxu0 %v2902
        %2920 = vmatprep.subr.mxu0 0.0
        %2921 = vmatpush1.msra.mxu0 %v2901
        %2922 = vmatprep.subr.mxu0 0.0
        %2923 = vmatpush1.msra.mxu0 %v2900
        %2924 = vmatprep.subr.mxu0 0.0
        %2925 = vmatpush1.msra.mxu0 %v2899
        %2926 = vmatprep.subr.mxu0 0.0
        %2927 = vmatpush1.msra.mxu0 %v2898
        %2928 = vmatprep.subr.mxu0 0.0
        %2929 = vmatpush1.msra.mxu0 %v2897
        %2930 = vmatprep.subr.mxu0 0.0
        %2931 = vmatpush1.msra.mxu0 %v2896
        %2932 = vmatprep.subr.mxu0 0.0
        %2933 = vmatpush1.msra.mxu0 %v2895
        %2934 = vmatprep.subr.mxu0 0.0
        %2935 = vmatpush1.msra.mxu0 %v2894
        %2936 = vmatprep.subr.mxu0 0.0
        %2937 = vmatpush1.msra.mxu0 %v2893
        %2938 = vmatprep.subr.mxu0 0.0
        %2939 = vmatpush1.msra.mxu0 %v2892
        %2940 = vmatprep.subr.mxu0 0.0
        %2941 = vmatpush2.msra.mxu0 0.0
        %2942 = vmatprep.subr.mxu0 0.0
        %2943 = vmatpush2.msra.mxu0 0.0
        %2944 = vmatprep.subr.mxu0 0.0
        %2945 = vmatpush2.msra.mxu0 0.0
        %2946 = vmatprep.subr.mxu0 0.0
        %2947 = vmatpush2.msra.mxu0 0.0
        %2948 = vmatprep.subr.mxu0 0.0
        %2949 = vmatpush2.msra.mxu0 0.0
        %2950 = vmatprep.subr.mxu0 0.0
        %2951 = vmatpush2.msra.mxu0 0.0
        %2952 = vmatprep.subr.mxu0 0.0
        %2953 = vmatpush2.msra.mxu0 0.0
        %2954 = vmatprep.subr.mxu0 0.0
        %2955 = vmatpush2.msra.mxu0 0.0
        %2956 = vmatprep.subr.mxu0 0.0
        %2957 = vmatpush2.msra.mxu0 0.0
        %2958 = vmatprep.subr.mxu0 0.0
        %2959 = vmatpush2.msra.mxu0 0.0
        %2960 = vmatprep.subr.mxu0 0.0
        %2961 = vmatpush2.msra.mxu0 0.0
        %2962 = vmatprep.subr.mxu0 0.0
        %2963 = vmatpush2.msra.mxu0 0.0
        %2964 = vmatprep.subr.mxu0 0.0
        %2965 = vmatpush2.msra.mxu0 0.0
        %2966 = vmatprep.subr.mxu0 0.0
        %2967 = vmatpush2.msra.mxu0 0.0
        %2968 = vmatprep.subr.mxu0 0.0
        %2969 = vmatpush2.msra.mxu0 0.0
        %2970 = vmatprep.subr.mxu0 0.0
        %2971 = vmatpush2.msra.mxu0 0.0
        %2972 = vmatprep.mubr.f32.mxu0 0.0
        %2973 = vmatmul.mubr.f32.gmra.mxu0 %v2886
        %v2974 = vpop.f32.mrf.mxu0
        %v2975 = vadd.f32 0.0, %v2974
        %v2976 = vpop.f32.mrf.mxu0
        %2977 = vmatprep.mubr.f32.mxu0 0.0
        %2978 = vmatmul.mubr.f32.gmra.mxu0 %v2887
        %v2979 = vpop.f32.mrf.mxu0
        %v2980 = vadd.f32 0.0, %v2979
        %v2981 = vpop.f32.mrf.mxu0
        %2982 = vdwg.mxu0
        %v2983 = vadd.f32 %v2890, %v2975
        %v2984 = vadd.f32 %v2891, %v2980
        %2985 = vst [vmem:[#allocation2] sm:$0xff] %v2983
        %2986 = vst [vmem:[#allocation2 + $0x8] sm:$0xff] %v2984
        %v2987 = vld [vmem:[#allocation2] sm:$0xff]
        %v2988 = vld [vmem:[#allocation2 + $0x8] sm:$0xff]
        %v2989 = vld [vmem:[#allocation23] sm:$0x1]
        %v2991 = vlaneseq
        %v2992 = vshrl.u32 %v2991, 7
        %v2993 = vsub.s32 0, %v2992
        %v2994 = vrot.slane %v2989, %v2993
        %v2996 = vadd.f32 %v2987, %v2994
        %v2997 = vadd.f32 %v2988, %v2994
        %v2998 = vmax.f32 %v2996, 0.0
        %v2999 = vmax.f32 %v2997, 0.0
        %v3000 = vld [vmem:[#allocation24] sm:$0xff]
        %v3001 = vld [vmem:[#allocation24 + $0x8] sm:$0xff]
        %v3002 = vld [vmem:[#allocation24 + $0x10] sm:$0xff]
        %v3003 = vld [vmem:[#allocation24 + $0x18] sm:$0xff]
        %v3004 = vld [vmem:[#allocation24 + $0x20] sm:$0xff]
        %v3005 = vld [vmem:[#allocation24 + $0x28] sm:$0xff]
        %v3006 = vld [vmem:[#allocation24 + $0x30] sm:$0xff]
        %v3007 = vld [vmem:[#allocation24 + $0x38] sm:$0xff]
        %v3008 = vld [vmem:[#allocation24 + $0x40] sm:$0xff]
        %v3009 = vld [vmem:[#allocation24 + $0x48] sm:$0xff]
        %v3010 = vld [vmem:[#allocation24 + $0x50] sm:$0xff]
        %v3011 = vld [vmem:[#allocation24 + $0x58] sm:$0xff]
        %v3012 = vld [vmem:[#allocation24 + $0x60] sm:$0xff]
        %v3013 = vld [vmem:[#allocation24 + $0x68] sm:$0xff]
        %v3014 = vld [vmem:[#allocation24 + $0x70] sm:$0xff]
        %v3015 = vld [vmem:[#allocation24 + $0x78] sm:$0xff]
        %v3016 = vld [vmem:[#allocation26] sm:$0x1]
        %v3018 = vlaneseq
        %v3019 = vshrl.u32 %v3018, 7
        %v3020 = vsub.s32 0, %v3019
        %v3021 = vrot.slane %v3016, %v3020
        %3023 = vmatprep.subr.mxu0 0.0
        %3024 = vmatpush1.msra.mxu0 %v3015
        %3025 = vmatprep.subr.mxu0 0.0
        %3026 = vmatpush1.msra.mxu0 %v3014
        %3027 = vmatprep.subr.mxu0 0.0
        %3028 = vmatpush1.msra.mxu0 %v3013
        %3029 = vmatprep.subr.mxu0 0.0
        %3030 = vmatpush1.msra.mxu0 %v3012
        %3031 = vmatprep.subr.mxu0 0.0
        %3032 = vmatpush1.msra.mxu0 %v3011
        %3033 = vmatprep.subr.mxu0 0.0
        %3034 = vmatpush1.msra.mxu0 %v3010
        %3035 = vmatprep.subr.mxu0 0.0
        %3036 = vmatpush1.msra.mxu0 %v3009
        %3037 = vmatprep.subr.mxu0 0.0
        %3038 = vmatpush1.msra.mxu0 %v3008
        %3039 = vmatprep.subr.mxu0 0.0
        %3040 = vmatpush1.msra.mxu0 %v3007
        %3041 = vmatprep.subr.mxu0 0.0
        %3042 = vmatpush1.msra.mxu0 %v3006
        %3043 = vmatprep.subr.mxu0 0.0
        %3044 = vmatpush1.msra.mxu0 %v3005
        %3045 = vmatprep.subr.mxu0 0.0
        %3046 = vmatpush1.msra.mxu0 %v3004
        %3047 = vmatprep.subr.mxu0 0.0
        %3048 = vmatpush1.msra.mxu0 %v3003
        %3049 = vmatprep.subr.mxu0 0.0
        %3050 = vmatpush1.msra.mxu0 %v3002
        %3051 = vmatprep.subr.mxu0 0.0
        %3052 = vmatpush1.msra.mxu0 %v3001
        %3053 = vmatprep.subr.mxu0 0.0
        %3054 = vmatpush1.msra.mxu0 %v3000
        %3055 = vmatprep.subr.mxu0 0.0
        %3056 = vmatpush2.msra.mxu0 0.0
        %3057 = vmatprep.subr.mxu0 0.0
        %3058 = vmatpush2.msra.mxu0 0.0
        %3059 = vmatprep.subr.mxu0 0.0
        %3060 = vmatpush2.msra.mxu0 0.0
        %3061 = vmatprep.subr.mxu0 0.0
        %3062 = vmatpush2.msra.mxu0 0.0
        %3063 = vmatprep.subr.mxu0 0.0
        %3064 = vmatpush2.msra.mxu0 0.0
        %3065 = vmatprep.subr.mxu0 0.0
        %3066 = vmatpush2.msra.mxu0 0.0
        %3067 = vmatprep.subr.mxu0 0.0
        %3068 = vmatpush2.msra.mxu0 0.0
        %3069 = vmatprep.subr.mxu0 0.0
        %3070 = vmatpush2.msra.mxu0 0.0
        %3071 = vmatprep.subr.mxu0 0.0
        %3072 = vmatpush2.msra.mxu0 0.0
        %3073 = vmatprep.subr.mxu0 0.0
        %3074 = vmatpush2.msra.mxu0 0.0
        %3075 = vmatprep.subr.mxu0 0.0
        %3076 = vmatpush2.msra.mxu0 0.0
        %3077 = vmatprep.subr.mxu0 0.0
        %3078 = vmatpush2.msra.mxu0 0.0
        %3079 = vmatprep.subr.mxu0 0.0
        %3080 = vmatpush2.msra.mxu0 0.0
        %3081 = vmatprep.subr.mxu0 0.0
        %3082 = vmatpush2.msra.mxu0 0.0
        %3083 = vmatprep.subr.mxu0 0.0
        %3084 = vmatpush2.msra.mxu0 0.0
        %3085 = vmatprep.subr.mxu0 0.0
        %3086 = vmatpush2.msra.mxu0 0.0
        %3087 = vmatprep.mubr.f32.mxu0 0.0
        %3088 = vmatmul.mubr.f32.gmra.mxu0 %v2998
        %v3089 = vpop.f32.mrf.mxu0
        %v3090 = vadd.f32 %v3021, %v3089
        %v3091 = vpop.f32.mrf.mxu0
        %3092 = vmatprep.mubr.f32.mxu0 0.0
        %3093 = vmatmul.mubr.f32.gmra.mxu0 %v2999
        %v3094 = vpop.f32.mrf.mxu0
        %v3095 = vadd.f32 %v3021, %v3094
        %v3096 = vpop.f32.mrf.mxu0
        %3097 = vdwg.mxu0
        %v3098 = vmax.f32 %v3090, 0.0
        %v3099 = vmax.f32 %v3095, 0.0
        %3100 = vst [vmem:[#allocation2] sm:$0xff] 0.0
        %3101 = vst [vmem:[#allocation2 + $0x8] sm:$0xff] 0.0
        %v3102 = vld [vmem:[#allocation2 + $0x1] sm:$0xff]
        %v3103 = vld [vmem:[#allocation2 + $0x9] sm:$0x7f]
        %v3104 = vld [vmem:[#allocation27] sm:$0xff]
        %v3105 = vld [vmem:[#allocation27 + $0x8] sm:$0xff]
        %v3106 = vld [vmem:[#allocation27 + $0x10] sm:$0xff]
        %v3107 = vld [vmem:[#allocation27 + $0x18] sm:$0xff]
        %v3108 = vld [vmem:[#allocation27 + $0x20] sm:$0xff]
        %v3109 = vld [vmem:[#allocation27 + $0x28] sm:$0xff]
        %v3110 = vld [vmem:[#allocation27 + $0x30] sm:$0xff]
        %v3111 = vld [vmem:[#allocation27 + $0x38] sm:$0xff]
        %v3112 = vld [vmem:[#allocation27 + $0x40] sm:$0xff]
        %v3113 = vld [vmem:[#allocation27 + $0x48] sm:$0xff]
        %v3114 = vld [vmem:[#allocation27 + $0x50] sm:$0xff]
        %v3115 = vld [vmem:[#allocation27 + $0x58] sm:$0xff]
        %v3116 = vld [vmem:[#allocation27 + $0x60] sm:$0xff]
        %v3117 = vld [vmem:[#allocation27 + $0x68] sm:$0xff]
        %v3118 = vld [vmem:[#allocation27 + $0x70] sm:$0xff]
        %v3119 = vld [vmem:[#allocation27 + $0x78] sm:$0xff]
        %3120 = vmatprep.subr.mxu0 0.0
        %3121 = vmatpush1.msra.mxu0 %v3119
        %3122 = vmatprep.subr.mxu0 0.0
        %3123 = vmatpush1.msra.mxu0 %v3118
        %3124 = vmatprep.subr.mxu0 0.0
        %3125 = vmatpush1.msra.mxu0 %v3117
        %3126 = vmatprep.subr.mxu0 0.0
        %3127 = vmatpush1.msra.mxu0 %v3116
        %3128 = vmatprep.subr.mxu0 0.0
        %3129 = vmatpush1.msra.mxu0 %v3115
        %3130 = vmatprep.subr.mxu0 0.0
        %3131 = vmatpush1.msra.mxu0 %v3114
        %3132 = vmatprep.subr.mxu0 0.0
        %3133 = vmatpush1.msra.mxu0 %v3113
        %3134 = vmatprep.subr.mxu0 0.0
        %3135 = vmatpush1.msra.mxu0 %v3112
        %3136 = vmatprep.subr.mxu0 0.0
        %3137 = vmatpush1.msra.mxu0 %v3111
        %3138 = vmatprep.subr.mxu0 0.0
        %3139 = vmatpush1.msra.mxu0 %v3110
        %3140 = vmatprep.subr.mxu0 0.0
        %3141 = vmatpush1.msra.mxu0 %v3109
        %3142 = vmatprep.subr.mxu0 0.0
        %3143 = vmatpush1.msra.mxu0 %v3108
        %3144 = vmatprep.subr.mxu0 0.0
        %3145 = vmatpush1.msra.mxu0 %v3107
        %3146 = vmatprep.subr.mxu0 0.0
        %3147 = vmatpush1.msra.mxu0 %v3106
        %3148 = vmatprep.subr.mxu0 0.0
        %3149 = vmatpush1.msra.mxu0 %v3105
        %3150 = vmatprep.subr.mxu0 0.0
        %3151 = vmatpush1.msra.mxu0 %v3104
        %3152 = vmatprep.subr.mxu0 0.0
        %3153 = vmatpush2.msra.mxu0 0.0
        %3154 = vmatprep.subr.mxu0 0.0
        %3155 = vmatpush2.msra.mxu0 0.0
        %3156 = vmatprep.subr.mxu0 0.0
        %3157 = vmatpush2.msra.mxu0 0.0
        %3158 = vmatprep.subr.mxu0 0.0
        %3159 = vmatpush2.msra.mxu0 0.0
        %3160 = vmatprep.subr.mxu0 0.0
        %3161 = vmatpush2.msra.mxu0 0.0
        %3162 = vmatprep.subr.mxu0 0.0
        %3163 = vmatpush2.msra.mxu0 0.0
        %3164 = vmatprep.subr.mxu0 0.0
        %3165 = vmatpush2.msra.mxu0 0.0
        %3166 = vmatprep.subr.mxu0 0.0
        %3167 = vmatpush2.msra.mxu0 0.0
        %3168 = vmatprep.subr.mxu0 0.0
        %3169 = vmatpush2.msra.mxu0 0.0
        %3170 = vmatprep.subr.mxu0 0.0
        %3171 = vmatpush2.msra.mxu0 0.0
        %3172 = vmatprep.subr.mxu0 0.0
        %3173 = vmatpush2.msra.mxu0 0.0
        %3174 = vmatprep.subr.mxu0 0.0
        %3175 = vmatpush2.msra.mxu0 0.0
        %3176 = vmatprep.subr.mxu0 0.0
        %3177 = vmatpush2.msra.mxu0 0.0
        %3178 = vmatprep.subr.mxu0 0.0
        %3179 = vmatpush2.msra.mxu0 0.0
        %3180 = vmatprep.subr.mxu0 0.0
        %3181 = vmatpush2.msra.mxu0 0.0
        %3182 = vmatprep.subr.mxu0 0.0
        %3183 = vmatpush2.msra.mxu0 0.0
        %3184 = vmatprep.mubr.f32.mxu0 0.0
        %3185 = vmatmul.mubr.f32.gmra.mxu0 %v3098
        %v3186 = vpop.f32.mrf.mxu0
        %v3187 = vadd.f32 0.0, %v3186
        %v3188 = vpop.f32.mrf.mxu0
        %3189 = vmatprep.mubr.f32.mxu0 0.0
        %3190 = vmatmul.mubr.f32.gmra.mxu0 %v3099
        %v3191 = vpop.f32.mrf.mxu0
        %v3192 = vadd.f32 0.0, %v3191
        %v3193 = vpop.f32.mrf.mxu0
        %3194 = vdwg.mxu0
        %v3195 = vadd.f32 %v3102, %v3187
        %v3196 = vadd.f32 %v3103, %v3192
        %3197 = vst [vmem:[#allocation2 + $0x1] sm:$0xff] %v3195
        %3198 = vst [vmem:[#allocation2 + $0x9] sm:$0x7f] %v3196
        %v3199 = vld [vmem:[#allocation2] sm:$0xff]
        %v3200 = vld [vmem:[#allocation2 + $0x8] sm:$0xff]
        %s3201 = scalar_lea.vmem [#allocation27], 128
        %v3202 = vld [vmem:[%s3201] sm:$0xff]
        %v3203 = vld [vmem:[%s3201 + $0x8] sm:$0xff]
        %v3204 = vld [vmem:[%s3201 + $0x10] sm:$0xff]
        %v3205 = vld [vmem:[%s3201 + $0x18] sm:$0xff]
        %v3206 = vld [vmem:[%s3201 + $0x20] sm:$0xff]
        %v3207 = vld [vmem:[%s3201 + $0x28] sm:$0xff]
        %v3208 = vld [vmem:[%s3201 + $0x30] sm:$0xff]
        %v3209 = vld [vmem:[%s3201 + $0x38] sm:$0xff]
        %v3210 = vld [vmem:[%s3201 + $0x40] sm:$0xff]
        %v3211 = vld [vmem:[%s3201 + $0x48] sm:$0xff]
        %v3212 = vld [vmem:[%s3201 + $0x50] sm:$0xff]
        %v3213 = vld [vmem:[%s3201 + $0x58] sm:$0xff]
        %v3214 = vld [vmem:[%s3201 + $0x60] sm:$0xff]
        %v3215 = vld [vmem:[%s3201 + $0x68] sm:$0xff]
        %v3216 = vld [vmem:[%s3201 + $0x70] sm:$0xff]
        %v3217 = vld [vmem:[%s3201 + $0x78] sm:$0xff]
        %3218 = vmatprep.subr.mxu0 0.0
        %3219 = vmatpush1.msra.mxu0 %v3217
        %3220 = vmatprep.subr.mxu0 0.0
        %3221 = vmatpush1.msra.mxu0 %v3216
        %3222 = vmatprep.subr.mxu0 0.0
        %3223 = vmatpush1.msra.mxu0 %v3215
        %3224 = vmatprep.subr.mxu0 0.0
        %3225 = vmatpush1.msra.mxu0 %v3214
        %3226 = vmatprep.subr.mxu0 0.0
        %3227 = vmatpush1.msra.mxu0 %v3213
        %3228 = vmatprep.subr.mxu0 0.0
        %3229 = vmatpush1.msra.mxu0 %v3212
        %3230 = vmatprep.subr.mxu0 0.0
        %3231 = vmatpush1.msra.mxu0 %v3211
        %3232 = vmatprep.subr.mxu0 0.0
        %3233 = vmatpush1.msra.mxu0 %v3210
        %3234 = vmatprep.subr.mxu0 0.0
        %3235 = vmatpush1.msra.mxu0 %v3209
        %3236 = vmatprep.subr.mxu0 0.0
        %3237 = vmatpush1.msra.mxu0 %v3208
        %3238 = vmatprep.subr.mxu0 0.0
        %3239 = vmatpush1.msra.mxu0 %v3207
        %3240 = vmatprep.subr.mxu0 0.0
        %3241 = vmatpush1.msra.mxu0 %v3206
        %3242 = vmatprep.subr.mxu0 0.0
        %3243 = vmatpush1.msra.mxu0 %v3205
        %3244 = vmatprep.subr.mxu0 0.0
        %3245 = vmatpush1.msra.mxu0 %v3204
        %3246 = vmatprep.subr.mxu0 0.0
        %3247 = vmatpush1.msra.mxu0 %v3203
        %3248 = vmatprep.subr.mxu0 0.0
        %3249 = vmatpush1.msra.mxu0 %v3202
        %3250 = vmatprep.subr.mxu0 0.0
        %3251 = vmatpush2.msra.mxu0 0.0
        %3252 = vmatprep.subr.mxu0 0.0
        %3253 = vmatpush2.msra.mxu0 0.0
        %3254 = vmatprep.subr.mxu0 0.0
        %3255 = vmatpush2.msra.mxu0 0.0
        %3256 = vmatprep.subr.mxu0 0.0
        %3257 = vmatpush2.msra.mxu0 0.0
        %3258 = vmatprep.subr.mxu0 0.0
        %3259 = vmatpush2.msra.mxu0 0.0
        %3260 = vmatprep.subr.mxu0 0.0
        %3261 = vmatpush2.msra.mxu0 0.0
        %3262 = vmatprep.subr.mxu0 0.0
        %3263 = vmatpush2.msra.mxu0 0.0
        %3264 = vmatprep.subr.mxu0 0.0
        %3265 = vmatpush2.msra.mxu0 0.0
        %3266 = vmatprep.subr.mxu0 0.0
        %3267 = vmatpush2.msra.mxu0 0.0
        %3268 = vmatprep.subr.mxu0 0.0
        %3269 = vmatpush2.msra.mxu0 0.0
        %3270 = vmatprep.subr.mxu0 0.0
        %3271 = vmatpush2.msra.mxu0 0.0
        %3272 = vmatprep.subr.mxu0 0.0
        %3273 = vmatpush2.msra.mxu0 0.0
        %3274 = vmatprep.subr.mxu0 0.0
        %3275 = vmatpush2.msra.mxu0 0.0
        %3276 = vmatprep.subr.mxu0 0.0
        %3277 = vmatpush2.msra.mxu0 0.0
        %3278 = vmatprep.subr.mxu0 0.0
        %3279 = vmatpush2.msra.mxu0 0.0
        %3280 = vmatprep.subr.mxu0 0.0
        %3281 = vmatpush2.msra.mxu0 0.0
        %3282 = vmatprep.mubr.f32.mxu0 0.0
        %3283 = vmatmul.mubr.f32.gmra.mxu0 %v3098
        %v3284 = vpop.f32.mrf.mxu0
        %v3285 = vadd.f32 0.0, %v3284
        %v3286 = vpop.f32.mrf.mxu0
        %3287 = vmatprep.mubr.f32.mxu0 0.0
        %3288 = vmatmul.mubr.f32.gmra.mxu0 %v3099
        %v3289 = vpop.f32.mrf.mxu0
        %v3290 = vadd.f32 0.0, %v3289
        %v3291 = vpop.f32.mrf.mxu0
        %3292 = vdwg.mxu0
        %v3293 = vadd.f32 %v3199, %v3285
        %v3294 = vadd.f32 %v3200, %v3290
        %3295 = vst [vmem:[#allocation2] sm:$0xff] %v3293
        %3296 = vst [vmem:[#allocation2 + $0x8] sm:$0xff] %v3294
        %v3297 = vld [vmem:[#allocation2] sm:$0xff]
        %v3298 = vld [vmem:[#allocation2 + $0x8] sm:$0x7f]
        %s3299 = scalar_lea.vmem [#allocation27], 256
        %v3300 = vld [vmem:[%s3299] sm:$0xff]
        %v3301 = vld [vmem:[%s3299 + $0x8] sm:$0xff]
        %v3302 = vld [vmem:[%s3299 + $0x10] sm:$0xff]
        %v3303 = vld [vmem:[%s3299 + $0x18] sm:$0xff]
        %v3304 = vld [vmem:[%s3299 + $0x20] sm:$0xff]
        %v3305 = vld [vmem:[%s3299 + $0x28] sm:$0xff]
        %v3306 = vld [vmem:[%s3299 + $0x30] sm:$0xff]
        %v3307 = vld [vmem:[%s3299 + $0x38] sm:$0xff]
        %v3308 = vld [vmem:[%s3299 + $0x40] sm:$0xff]
        %v3309 = vld [vmem:[%s3299 + $0x48] sm:$0xff]
        %v3310 = vld [vmem:[%s3299 + $0x50] sm:$0xff]
        %v3311 = vld [vmem:[%s3299 + $0x58] sm:$0xff]
        %v3312 = vld [vmem:[%s3299 + $0x60] sm:$0xff]
        %v3313 = vld [vmem:[%s3299 + $0x68] sm:$0xff]
        %v3314 = vld [vmem:[%s3299 + $0x70] sm:$0xff]
        %v3315 = vld [vmem:[%s3299 + $0x78] sm:$0xff]
        %v3318 = vrot.slane %v3098, 1
        %v3319 = vrot.slane %v3099, 1
        %v3320 = vsel %vm2399, %v3318, %v3319
        %3323 = vmatprep.subr.mxu0 0.0
        %3324 = vmatpush1.msra.mxu0 %v3315
        %3325 = vmatprep.subr.mxu0 0.0
        %3326 = vmatpush1.msra.mxu0 %v3314
        %3327 = vmatprep.subr.mxu0 0.0
        %3328 = vmatpush1.msra.mxu0 %v3313
        %3329 = vmatprep.subr.mxu0 0.0
        %3330 = vmatpush1.msra.mxu0 %v3312
        %3331 = vmatprep.subr.mxu0 0.0
        %3332 = vmatpush1.msra.mxu0 %v3311
        %3333 = vmatprep.subr.mxu0 0.0
        %3334 = vmatpush1.msra.mxu0 %v3310
        %3335 = vmatprep.subr.mxu0 0.0
        %3336 = vmatpush1.msra.mxu0 %v3309
        %3337 = vmatprep.subr.mxu0 0.0
        %3338 = vmatpush1.msra.mxu0 %v3308
        %3339 = vmatprep.subr.mxu0 0.0
        %3340 = vmatpush1.msra.mxu0 %v3307
        %3341 = vmatprep.subr.mxu0 0.0
        %3342 = vmatpush1.msra.mxu0 %v3306
        %3343 = vmatprep.subr.mxu0 0.0
        %3344 = vmatpush1.msra.mxu0 %v3305
        %3345 = vmatprep.subr.mxu0 0.0
        %3346 = vmatpush1.msra.mxu0 %v3304
        %3347 = vmatprep.subr.mxu0 0.0
        %3348 = vmatpush1.msra.mxu0 %v3303
        %3349 = vmatprep.subr.mxu0 0.0
        %3350 = vmatpush1.msra.mxu0 %v3302
        %3351 = vmatprep.subr.mxu0 0.0
        %3352 = vmatpush1.msra.mxu0 %v3301
        %3353 = vmatprep.subr.mxu0 0.0
        %3354 = vmatpush1.msra.mxu0 %v3300
        %3355 = vmatprep.subr.mxu0 0.0
        %3356 = vmatpush2.msra.mxu0 0.0
        %3357 = vmatprep.subr.mxu0 0.0
        %3358 = vmatpush2.msra.mxu0 0.0
        %3359 = vmatprep.subr.mxu0 0.0
        %3360 = vmatpush2.msra.mxu0 0.0
        %3361 = vmatprep.subr.mxu0 0.0
        %3362 = vmatpush2.msra.mxu0 0.0
        %3363 = vmatprep.subr.mxu0 0.0
        %3364 = vmatpush2.msra.mxu0 0.0
        %3365 = vmatprep.subr.mxu0 0.0
        %3366 = vmatpush2.msra.mxu0 0.0
        %3367 = vmatprep.subr.mxu0 0.0
        %3368 = vmatpush2.msra.mxu0 0.0
        %3369 = vmatprep.subr.mxu0 0.0
        %3370 = vmatpush2.msra.mxu0 0.0
        %3371 = vmatprep.subr.mxu0 0.0
        %3372 = vmatpush2.msra.mxu0 0.0
        %3373 = vmatprep.subr.mxu0 0.0
        %3374 = vmatpush2.msra.mxu0 0.0
        %3375 = vmatprep.subr.mxu0 0.0
        %3376 = vmatpush2.msra.mxu0 0.0
        %3377 = vmatprep.subr.mxu0 0.0
        %3378 = vmatpush2.msra.mxu0 0.0
        %3379 = vmatprep.subr.mxu0 0.0
        %3380 = vmatpush2.msra.mxu0 0.0
        %3381 = vmatprep.subr.mxu0 0.0
        %3382 = vmatpush2.msra.mxu0 0.0
        %3383 = vmatprep.subr.mxu0 0.0
        %3384 = vmatpush2.msra.mxu0 0.0
        %3385 = vmatprep.subr.mxu0 0.0
        %3386 = vmatpush2.msra.mxu0 0.0
        %3387 = vmatprep.mubr.f32.mxu0 0.0
        %3388 = vmatmul.mubr.f32.gmra.mxu0 %v3320
        %v3389 = vpop.f32.mrf.mxu0
        %v3390 = vadd.f32 0.0, %v3389
        %v3391 = vpop.f32.mrf.mxu0
        %3392 = vmatprep.mubr.f32.mxu0 0.0
        %3393 = vmatmul.mubr.f32.gmra.mxu0 %v3319
        %v3394 = vpop.f32.mrf.mxu0
        %v3395 = vadd.f32 0.0, %v3394
        %v3396 = vpop.f32.mrf.mxu0
        %3397 = vdwg.mxu0
        %v3398 = vadd.f32 %v3297, %v3390
        %v3399 = vadd.f32 %v3298, %v3395
        %3400 = vst [vmem:[#allocation2] sm:$0xff] %v3398
        %3401 = vst [vmem:[#allocation2 + $0x8] sm:$0x7f] %v3399
        %v3402 = vld [vmem:[#allocation2] sm:$0xff]
        %v3403 = vld [vmem:[#allocation2 + $0x8] sm:$0xff]
        %v3404 = vld [vmem:[#allocation29] sm:$0x1]
        %v3406 = vlaneseq
        %v3407 = vshrl.u32 %v3406, 7
        %v3408 = vsub.s32 0, %v3407
        %v3409 = vrot.slane %v3404, %v3408
        %v3411 = vadd.f32 %v3402, %v3409
        %v3412 = vadd.f32 %v3403, %v3409
        %v3413 = vmax.f32 %v3411, 0.0
        %v3414 = vmax.f32 %v3412, 0.0
        %v3415 = vld [vmem:[#allocation30] sm:$0xff]
        %v3416 = vld [vmem:[#allocation30 + $0x8] sm:$0xff]
        %v3417 = vld [vmem:[#allocation30 + $0x10] sm:$0xff]
        %v3418 = vld [vmem:[#allocation30 + $0x18] sm:$0xff]
        %v3419 = vld [vmem:[#allocation30 + $0x20] sm:$0xff]
        %v3420 = vld [vmem:[#allocation30 + $0x28] sm:$0xff]
        %v3421 = vld [vmem:[#allocation30 + $0x30] sm:$0xff]
        %v3422 = vld [vmem:[#allocation30 + $0x38] sm:$0xff]
        %v3423 = vld [vmem:[#allocation30 + $0x40] sm:$0xff]
        %v3424 = vld [vmem:[#allocation30 + $0x48] sm:$0xff]
        %v3425 = vld [vmem:[#allocation30 + $0x50] sm:$0xff]
        %v3426 = vld [vmem:[#allocation30 + $0x58] sm:$0xff]
        %v3427 = vld [vmem:[#allocation30 + $0x60] sm:$0xff]
        %v3428 = vld [vmem:[#allocation30 + $0x68] sm:$0xff]
        %v3429 = vld [vmem:[#allocation30 + $0x70] sm:$0xff]
        %v3430 = vld [vmem:[#allocation30 + $0x78] sm:$0xff]
        %v3431 = vld [vmem:[#allocation32] sm:$0x1]
        %v3433 = vlaneseq
        %v3434 = vshrl.u32 %v3433, 7
        %v3435 = vsub.s32 0, %v3434
        %v3436 = vrot.slane %v3431, %v3435
        %3438 = vmatprep.subr.mxu0 0.0
        %3439 = vmatpush1.msra.mxu0 %v3430
        %3440 = vmatprep.subr.mxu0 0.0
        %3441 = vmatpush1.msra.mxu0 %v3429
        %3442 = vmatprep.subr.mxu0 0.0
        %3443 = vmatpush1.msra.mxu0 %v3428
        %3444 = vmatprep.subr.mxu0 0.0
        %3445 = vmatpush1.msra.mxu0 %v3427
        %3446 = vmatprep.subr.mxu0 0.0
        %3447 = vmatpush1.msra.mxu0 %v3426
        %3448 = vmatprep.subr.mxu0 0.0
        %3449 = vmatpush1.msra.mxu0 %v3425
        %3450 = vmatprep.subr.mxu0 0.0
        %3451 = vmatpush1.msra.mxu0 %v3424
        %3452 = vmatprep.subr.mxu0 0.0
        %3453 = vmatpush1.msra.mxu0 %v3423
        %3454 = vmatprep.subr.mxu0 0.0
        %3455 = vmatpush1.msra.mxu0 %v3422
        %3456 = vmatprep.subr.mxu0 0.0
        %3457 = vmatpush1.msra.mxu0 %v3421
        %3458 = vmatprep.subr.mxu0 0.0
        %3459 = vmatpush1.msra.mxu0 %v3420
        %3460 = vmatprep.subr.mxu0 0.0
        %3461 = vmatpush1.msra.mxu0 %v3419
        %3462 = vmatprep.subr.mxu0 0.0
        %3463 = vmatpush1.msra.mxu0 %v3418
        %3464 = vmatprep.subr.mxu0 0.0
        %3465 = vmatpush1.msra.mxu0 %v3417
        %3466 = vmatprep.subr.mxu0 0.0
        %3467 = vmatpush1.msra.mxu0 %v3416
        %3468 = vmatprep.subr.mxu0 0.0
        %3469 = vmatpush1.msra.mxu0 %v3415
        %3470 = vmatprep.subr.mxu0 0.0
        %3471 = vmatpush2.msra.mxu0 0.0
        %3472 = vmatprep.subr.mxu0 0.0
        %3473 = vmatpush2.msra.mxu0 0.0
        %3474 = vmatprep.subr.mxu0 0.0
        %3475 = vmatpush2.msra.mxu0 0.0
        %3476 = vmatprep.subr.mxu0 0.0
        %3477 = vmatpush2.msra.mxu0 0.0
        %3478 = vmatprep.subr.mxu0 0.0
        %3479 = vmatpush2.msra.mxu0 0.0
        %3480 = vmatprep.subr.mxu0 0.0
        %3481 = vmatpush2.msra.mxu0 0.0
        %3482 = vmatprep.subr.mxu0 0.0
        %3483 = vmatpush2.msra.mxu0 0.0
        %3484 = vmatprep.subr.mxu0 0.0
        %3485 = vmatpush2.msra.mxu0 0.0
        %3486 = vmatprep.subr.mxu0 0.0
        %3487 = vmatpush2.msra.mxu0 0.0
        %3488 = vmatprep.subr.mxu0 0.0
        %3489 = vmatpush2.msra.mxu0 0.0
        %3490 = vmatprep.subr.mxu0 0.0
        %3491 = vmatpush2.msra.mxu0 0.0
        %3492 = vmatprep.subr.mxu0 0.0
        %3493 = vmatpush2.msra.mxu0 0.0
        %3494 = vmatprep.subr.mxu0 0.0
        %3495 = vmatpush2.msra.mxu0 0.0
        %3496 = vmatprep.subr.mxu0 0.0
        %3497 = vmatpush2.msra.mxu0 0.0
        %3498 = vmatprep.subr.mxu0 0.0
        %3499 = vmatpush2.msra.mxu0 0.0
        %3500 = vmatprep.subr.mxu0 0.0
        %3501 = vmatpush2.msra.mxu0 0.0
        %3502 = vmatprep.mubr.f32.mxu0 0.0
        %3503 = vmatmul.mubr.f32.gmra.mxu0 %v3413
        %v3504 = vpop.f32.mrf.mxu0
        %v3505 = vadd.f32 %v3436, %v3504
        %v3506 = vpop.f32.mrf.mxu0
        %3507 = vmatprep.mubr.f32.mxu0 0.0
        %3508 = vmatmul.mubr.f32.gmra.mxu0 %v3414
        %v3509 = vpop.f32.mrf.mxu0
        %v3510 = vadd.f32 %v3436, %v3509
        %v3511 = vpop.f32.mrf.mxu0
        %3512 = vdwg.mxu0
        %v3513 = vmax.f32 %v3505, 0.0
        %v3514 = vmax.f32 %v3510, 0.0
        %3515 = vst [vmem:[#allocation2] sm:$0xff] 0.0
        %3516 = vst [vmem:[#allocation2 + $0x8] sm:$0xff] 0.0
        %v3517 = vld [vmem:[#allocation2 + $0x5] sm:$0xff]
        %v3518 = vld [vmem:[#allocation2 + $0xd] sm:$0x7]
        %v3519 = vld [vmem:[#allocation33] sm:$0xff]
        %v3520 = vld [vmem:[#allocation33 + $0x8] sm:$0xff]
        %v3521 = vld [vmem:[#allocation33 + $0x10] sm:$0xff]
        %v3522 = vld [vmem:[#allocation33 + $0x18] sm:$0xff]
        %v3523 = vld [vmem:[#allocation33 + $0x20] sm:$0xff]
        %v3524 = vld [vmem:[#allocation33 + $0x28] sm:$0xff]
        %v3525 = vld [vmem:[#allocation33 + $0x30] sm:$0xff]
        %v3526 = vld [vmem:[#allocation33 + $0x38] sm:$0xff]
        %v3527 = vld [vmem:[#allocation33 + $0x40] sm:$0xff]
        %v3528 = vld [vmem:[#allocation33 + $0x48] sm:$0xff]
        %v3529 = vld [vmem:[#allocation33 + $0x50] sm:$0xff]
        %v3530 = vld [vmem:[#allocation33 + $0x58] sm:$0xff]
        %v3531 = vld [vmem:[#allocation33 + $0x60] sm:$0xff]
        %v3532 = vld [vmem:[#allocation33 + $0x68] sm:$0xff]
        %v3533 = vld [vmem:[#allocation33 + $0x70] sm:$0xff]
        %v3534 = vld [vmem:[#allocation33 + $0x78] sm:$0xff]
        %3535 = vmatprep.subr.mxu0 0.0
        %3536 = vmatpush1.msra.mxu0 %v3534
        %3537 = vmatprep.subr.mxu0 0.0
        %3538 = vmatpush1.msra.mxu0 %v3533
        %3539 = vmatprep.subr.mxu0 0.0
        %3540 = vmatpush1.msra.mxu0 %v3532
        %3541 = vmatprep.subr.mxu0 0.0
        %3542 = vmatpush1.msra.mxu0 %v3531
        %3543 = vmatprep.subr.mxu0 0.0
        %3544 = vmatpush1.msra.mxu0 %v3530
        %3545 = vmatprep.subr.mxu0 0.0
        %3546 = vmatpush1.msra.mxu0 %v3529
        %3547 = vmatprep.subr.mxu0 0.0
        %3548 = vmatpush1.msra.mxu0 %v3528
        %3549 = vmatprep.subr.mxu0 0.0
        %3550 = vmatpush1.msra.mxu0 %v3527
        %3551 = vmatprep.subr.mxu0 0.0
        %3552 = vmatpush1.msra.mxu0 %v3526
        %3553 = vmatprep.subr.mxu0 0.0
        %3554 = vmatpush1.msra.mxu0 %v3525
        %3555 = vmatprep.subr.mxu0 0.0
        %3556 = vmatpush1.msra.mxu0 %v3524
        %3557 = vmatprep.subr.mxu0 0.0
        %3558 = vmatpush1.msra.mxu0 %v3523
        %3559 = vmatprep.subr.mxu0 0.0
        %3560 = vmatpush1.msra.mxu0 %v3522
        %3561 = vmatprep.subr.mxu0 0.0
        %3562 = vmatpush1.msra.mxu0 %v3521
        %3563 = vmatprep.subr.mxu0 0.0
        %3564 = vmatpush1.msra.mxu0 %v3520
        %3565 = vmatprep.subr.mxu0 0.0
        %3566 = vmatpush1.msra.mxu0 %v3519
        %3567 = vmatprep.subr.mxu0 0.0
        %3568 = vmatpush2.msra.mxu0 0.0
        %3569 = vmatprep.subr.mxu0 0.0
        %3570 = vmatpush2.msra.mxu0 0.0
        %3571 = vmatprep.subr.mxu0 0.0
        %3572 = vmatpush2.msra.mxu0 0.0
        %3573 = vmatprep.subr.mxu0 0.0
        %3574 = vmatpush2.msra.mxu0 0.0
        %3575 = vmatprep.subr.mxu0 0.0
        %3576 = vmatpush2.msra.mxu0 0.0
        %3577 = vmatprep.subr.mxu0 0.0
        %3578 = vmatpush2.msra.mxu0 0.0
        %3579 = vmatprep.subr.mxu0 0.0
        %3580 = vmatpush2.msra.mxu0 0.0
        %3581 = vmatprep.subr.mxu0 0.0
        %3582 = vmatpush2.msra.mxu0 0.0
        %3583 = vmatprep.subr.mxu0 0.0
        %3584 = vmatpush2.msra.mxu0 0.0
        %3585 = vmatprep.subr.mxu0 0.0
        %3586 = vmatpush2.msra.mxu0 0.0
        %3587 = vmatprep.subr.mxu0 0.0
        %3588 = vmatpush2.msra.mxu0 0.0
        %3589 = vmatprep.subr.mxu0 0.0
        %3590 = vmatpush2.msra.mxu0 0.0
        %3591 = vmatprep.subr.mxu0 0.0
        %3592 = vmatpush2.msra.mxu0 0.0
        %3593 = vmatprep.subr.mxu0 0.0
        %3594 = vmatpush2.msra.mxu0 0.0
        %3595 = vmatprep.subr.mxu0 0.0
        %3596 = vmatpush2.msra.mxu0 0.0
        %3597 = vmatprep.subr.mxu0 0.0
        %3598 = vmatpush2.msra.mxu0 0.0
        %3599 = vmatprep.mubr.f32.mxu0 0.0
        %3600 = vmatmul.mubr.f32.gmra.mxu0 %v3513
        %v3601 = vpop.f32.mrf.mxu0
        %v3602 = vadd.f32 0.0, %v3601
        %v3603 = vpop.f32.mrf.mxu0
        %3604 = vmatprep.mubr.f32.mxu0 0.0
        %3605 = vmatmul.mubr.f32.gmra.mxu0 %v3514
        %v3606 = vpop.f32.mrf.mxu0
        %v3607 = vadd.f32 0.0, %v3606
        %v3608 = vpop.f32.mrf.mxu0
        %3609 = vdwg.mxu0
        %v3610 = vadd.f32 %v3517, %v3602
        %v3611 = vadd.f32 %v3518, %v3607
        %3612 = vst [vmem:[#allocation2 + $0x5] sm:$0xff] %v3610
        %3613 = vst [vmem:[#allocation2 + $0xd] sm:$0x7] %v3611
        %v3614 = vld [vmem:[#allocation2] sm:$0xff]
        %v3615 = vld [vmem:[#allocation2 + $0x8] sm:$0xff]
        %s3616 = scalar_lea.vmem [#allocation33], 128
        %v3617 = vld [vmem:[%s3616] sm:$0xff]
        %v3618 = vld [vmem:[%s3616 + $0x8] sm:$0xff]
        %v3619 = vld [vmem:[%s3616 + $0x10] sm:$0xff]
        %v3620 = vld [vmem:[%s3616 + $0x18] sm:$0xff]
        %v3621 = vld [vmem:[%s3616 + $0x20] sm:$0xff]
        %v3622 = vld [vmem:[%s3616 + $0x28] sm:$0xff]
        %v3623 = vld [vmem:[%s3616 + $0x30] sm:$0xff]
        %v3624 = vld [vmem:[%s3616 + $0x38] sm:$0xff]
        %v3625 = vld [vmem:[%s3616 + $0x40] sm:$0xff]
        %v3626 = vld [vmem:[%s3616 + $0x48] sm:$0xff]
        %v3627 = vld [vmem:[%s3616 + $0x50] sm:$0xff]
        %v3628 = vld [vmem:[%s3616 + $0x58] sm:$0xff]
        %v3629 = vld [vmem:[%s3616 + $0x60] sm:$0xff]
        %v3630 = vld [vmem:[%s3616 + $0x68] sm:$0xff]
        %v3631 = vld [vmem:[%s3616 + $0x70] sm:$0xff]
        %v3632 = vld [vmem:[%s3616 + $0x78] sm:$0xff]
        %3633 = vmatprep.subr.mxu0 0.0
        %3634 = vmatpush1.msra.mxu0 %v3632
        %3635 = vmatprep.subr.mxu0 0.0
        %3636 = vmatpush1.msra.mxu0 %v3631
        %3637 = vmatprep.subr.mxu0 0.0
        %3638 = vmatpush1.msra.mxu0 %v3630
        %3639 = vmatprep.subr.mxu0 0.0
        %3640 = vmatpush1.msra.mxu0 %v3629
        %3641 = vmatprep.subr.mxu0 0.0
        %3642 = vmatpush1.msra.mxu0 %v3628
        %3643 = vmatprep.subr.mxu0 0.0
        %3644 = vmatpush1.msra.mxu0 %v3627
        %3645 = vmatprep.subr.mxu0 0.0
        %3646 = vmatpush1.msra.mxu0 %v3626
        %3647 = vmatprep.subr.mxu0 0.0
        %3648 = vmatpush1.msra.mxu0 %v3625
        %3649 = vmatprep.subr.mxu0 0.0
        %3650 = vmatpush1.msra.mxu0 %v3624
        %3651 = vmatprep.subr.mxu0 0.0
        %3652 = vmatpush1.msra.mxu0 %v3623
        %3653 = vmatprep.subr.mxu0 0.0
        %3654 = vmatpush1.msra.mxu0 %v3622
        %3655 = vmatprep.subr.mxu0 0.0
        %3656 = vmatpush1.msra.mxu0 %v3621
        %3657 = vmatprep.subr.mxu0 0.0
        %3658 = vmatpush1.msra.mxu0 %v3620
        %3659 = vmatprep.subr.mxu0 0.0
        %3660 = vmatpush1.msra.mxu0 %v3619
        %3661 = vmatprep.subr.mxu0 0.0
        %3662 = vmatpush1.msra.mxu0 %v3618
        %3663 = vmatprep.subr.mxu0 0.0
        %3664 = vmatpush1.msra.mxu0 %v3617
        %3665 = vmatprep.subr.mxu0 0.0
        %3666 = vmatpush2.msra.mxu0 0.0
        %3667 = vmatprep.subr.mxu0 0.0
        %3668 = vmatpush2.msra.mxu0 0.0
        %3669 = vmatprep.subr.mxu0 0.0
        %3670 = vmatpush2.msra.mxu0 0.0
        %3671 = vmatprep.subr.mxu0 0.0
        %3672 = vmatpush2.msra.mxu0 0.0
        %3673 = vmatprep.subr.mxu0 0.0
        %3674 = vmatpush2.msra.mxu0 0.0
        %3675 = vmatprep.subr.mxu0 0.0
        %3676 = vmatpush2.msra.mxu0 0.0
        %3677 = vmatprep.subr.mxu0 0.0
        %3678 = vmatpush2.msra.mxu0 0.0
        %3679 = vmatprep.subr.mxu0 0.0
        %3680 = vmatpush2.msra.mxu0 0.0
        %3681 = vmatprep.subr.mxu0 0.0
        %3682 = vmatpush2.msra.mxu0 0.0
        %3683 = vmatprep.subr.mxu0 0.0
        %3684 = vmatpush2.msra.mxu0 0.0
        %3685 = vmatprep.subr.mxu0 0.0
        %3686 = vmatpush2.msra.mxu0 0.0
        %3687 = vmatprep.subr.mxu0 0.0
        %3688 = vmatpush2.msra.mxu0 0.0
        %3689 = vmatprep.subr.mxu0 0.0
        %3690 = vmatpush2.msra.mxu0 0.0
        %3691 = vmatprep.subr.mxu0 0.0
        %3692 = vmatpush2.msra.mxu0 0.0
        %3693 = vmatprep.subr.mxu0 0.0
        %3694 = vmatpush2.msra.mxu0 0.0
        %3695 = vmatprep.subr.mxu0 0.0
        %3696 = vmatpush2.msra.mxu0 0.0
        %3697 = vmatprep.mubr.f32.mxu0 0.0
        %3698 = vmatmul.mubr.f32.gmra.mxu0 %v3513
        %v3699 = vpop.f32.mrf.mxu0
        %v3700 = vadd.f32 0.0, %v3699
        %v3701 = vpop.f32.mrf.mxu0
        %3702 = vmatprep.mubr.f32.mxu0 0.0
        %3703 = vmatmul.mubr.f32.gmra.mxu0 %v3514
        %v3704 = vpop.f32.mrf.mxu0
        %v3705 = vadd.f32 0.0, %v3704
        %v3706 = vpop.f32.mrf.mxu0
        %3707 = vdwg.mxu0
        %v3708 = vadd.f32 %v3614, %v3700
        %v3709 = vadd.f32 %v3615, %v3705
        %3710 = vst [vmem:[#allocation2] sm:$0xff] %v3708
        %3711 = vst [vmem:[#allocation2 + $0x8] sm:$0xff] %v3709
        %v3712 = vld [vmem:[#allocation2] sm:$0xff]
        %v3713 = vld [vmem:[#allocation2 + $0x8] sm:$0x7]
        %s3714 = scalar_lea.vmem [#allocation33], 256
        %v3715 = vld [vmem:[%s3714] sm:$0xff]
        %v3716 = vld [vmem:[%s3714 + $0x8] sm:$0xff]
        %v3717 = vld [vmem:[%s3714 + $0x10] sm:$0xff]
        %v3718 = vld [vmem:[%s3714 + $0x18] sm:$0xff]
        %v3719 = vld [vmem:[%s3714 + $0x20] sm:$0xff]
        %v3720 = vld [vmem:[%s3714 + $0x28] sm:$0xff]
        %v3721 = vld [vmem:[%s3714 + $0x30] sm:$0xff]
        %v3722 = vld [vmem:[%s3714 + $0x38] sm:$0xff]
        %v3723 = vld [vmem:[%s3714 + $0x40] sm:$0xff]
        %v3724 = vld [vmem:[%s3714 + $0x48] sm:$0xff]
        %v3725 = vld [vmem:[%s3714 + $0x50] sm:$0xff]
        %v3726 = vld [vmem:[%s3714 + $0x58] sm:$0xff]
        %v3727 = vld [vmem:[%s3714 + $0x60] sm:$0xff]
        %v3728 = vld [vmem:[%s3714 + $0x68] sm:$0xff]
        %v3729 = vld [vmem:[%s3714 + $0x70] sm:$0xff]
        %v3730 = vld [vmem:[%s3714 + $0x78] sm:$0xff]
        %vm3733 = vcmask 1042432
        %v3734 = vrot.slane %v3513, 5
        %v3735 = vrot.slane %v3514, 5
        %v3736 = vsel %vm3733, %v3734, %v3735
        %3739 = vmatprep.subr.mxu0 0.0
        %3740 = vmatpush1.msra.mxu0 %v3730
        %3741 = vmatprep.subr.mxu0 0.0
        %3742 = vmatpush1.msra.mxu0 %v3729
        %3743 = vmatprep.subr.mxu0 0.0
        %3744 = vmatpush1.msra.mxu0 %v3728
        %3745 = vmatprep.subr.mxu0 0.0
        %3746 = vmatpush1.msra.mxu0 %v3727
        %3747 = vmatprep.subr.mxu0 0.0
        %3748 = vmatpush1.msra.mxu0 %v3726
        %3749 = vmatprep.subr.mxu0 0.0
        %3750 = vmatpush1.msra.mxu0 %v3725
        %3751 = vmatprep.subr.mxu0 0.0
        %3752 = vmatpush1.msra.mxu0 %v3724
        %3753 = vmatprep.subr.mxu0 0.0
        %3754 = vmatpush1.msra.mxu0 %v3723
        %3755 = vmatprep.subr.mxu0 0.0
        %3756 = vmatpush1.msra.mxu0 %v3722
        %3757 = vmatprep.subr.mxu0 0.0
        %3758 = vmatpush1.msra.mxu0 %v3721
        %3759 = vmatprep.subr.mxu0 0.0
        %3760 = vmatpush1.msra.mxu0 %v3720
        %3761 = vmatprep.subr.mxu0 0.0
        %3762 = vmatpush1.msra.mxu0 %v3719
        %3763 = vmatprep.subr.mxu0 0.0
        %3764 = vmatpush1.msra.mxu0 %v3718
        %3765 = vmatprep.subr.mxu0 0.0
        %3766 = vmatpush1.msra.mxu0 %v3717
        %3767 = vmatprep.subr.mxu0 0.0
        %3768 = vmatpush1.msra.mxu0 %v3716
        %3769 = vmatprep.subr.mxu0 0.0
        %3770 = vmatpush1.msra.mxu0 %v3715
        %3771 = vmatprep.subr.mxu0 0.0
        %3772 = vmatpush2.msra.mxu0 0.0
        %3773 = vmatprep.subr.mxu0 0.0
        %3774 = vmatpush2.msra.mxu0 0.0
        %3775 = vmatprep.subr.mxu0 0.0
        %3776 = vmatpush2.msra.mxu0 0.0
        %3777 = vmatprep.subr.mxu0 0.0
        %3778 = vmatpush2.msra.mxu0 0.0
        %3779 = vmatprep.subr.mxu0 0.0
        %3780 = vmatpush2.msra.mxu0 0.0
        %3781 = vmatprep.subr.mxu0 0.0
        %3782 = vmatpush2.msra.mxu0 0.0
        %3783 = vmatprep.subr.mxu0 0.0
        %3784 = vmatpush2.msra.mxu0 0.0
        %3785 = vmatprep.subr.mxu0 0.0
        %3786 = vmatpush2.msra.mxu0 0.0
        %3787 = vmatprep.subr.mxu0 0.0
        %3788 = vmatpush2.msra.mxu0 0.0
        %3789 = vmatprep.subr.mxu0 0.0
        %3790 = vmatpush2.msra.mxu0 0.0
        %3791 = vmatprep.subr.mxu0 0.0
        %3792 = vmatpush2.msra.mxu0 0.0
        %3793 = vmatprep.subr.mxu0 0.0
        %3794 = vmatpush2.msra.mxu0 0.0
        %3795 = vmatprep.subr.mxu0 0.0
        %3796 = vmatpush2.msra.mxu0 0.0
        %3797 = vmatprep.subr.mxu0 0.0
        %3798 = vmatpush2.msra.mxu0 0.0
        %3799 = vmatprep.subr.mxu0 0.0
        %3800 = vmatpush2.msra.mxu0 0.0
        %3801 = vmatprep.subr.mxu0 0.0
        %3802 = vmatpush2.msra.mxu0 0.0
        %3803 = vmatprep.mubr.f32.mxu0 0.0
        %3804 = vmatmul.mubr.f32.gmra.mxu0 %v3736
        %v3805 = vpop.f32.mrf.mxu0
        %v3806 = vadd.f32 0.0, %v3805
        %v3807 = vpop.f32.mrf.mxu0
        %3808 = vmatprep.mubr.f32.mxu0 0.0
        %3809 = vmatmul.mubr.f32.gmra.mxu0 %v3735
        %v3810 = vpop.f32.mrf.mxu0
        %v3811 = vadd.f32 0.0, %v3810
        %v3812 = vpop.f32.mrf.mxu0
        %3813 = vdwg.mxu0
        %v3814 = vadd.f32 %v3712, %v3806
        %v3815 = vadd.f32 %v3713, %v3811
        %3816 = vst [vmem:[#allocation2] sm:$0xff] %v3814
        %3817 = vst [vmem:[#allocation2 + $0x8] sm:$0x7] %v3815
        %v3818 = vld [vmem:[#allocation2] sm:$0xff]
        %v3819 = vld [vmem:[#allocation2 + $0x8] sm:$0xff]
        %v3820 = vld [vmem:[%s45] sm:$0x1]
        %v3822 = vlaneseq
        %v3823 = vshrl.u32 %v3822, 7
        %v3824 = vsub.s32 0, %v3823
        %v3825 = vrot.slane %v3820, %v3824
        %v3827 = vadd.f32 %v3818, %v3825
        %v3828 = vadd.f32 %v3819, %v3825
        %v3829 = vmax.f32 %v3827, 0.0
        %v3830 = vmax.f32 %v3828, 0.0
        %v3831 = vld [vmem:[#allocation35] sm:$0xff]
        %v3832 = vld [vmem:[#allocation35 + $0x8] sm:$0xff]
        %v3833 = vld [vmem:[#allocation35 + $0x10] sm:$0xff]
        %v3834 = vld [vmem:[#allocation35 + $0x18] sm:$0xff]
        %v3835 = vld [vmem:[#allocation35 + $0x20] sm:$0xff]
        %v3836 = vld [vmem:[#allocation35 + $0x28] sm:$0xff]
        %v3837 = vld [vmem:[#allocation35 + $0x30] sm:$0xff]
        %v3838 = vld [vmem:[#allocation35 + $0x38] sm:$0xff]
        %v3839 = vld [vmem:[#allocation35 + $0x40] sm:$0xff]
        %v3840 = vld [vmem:[#allocation35 + $0x48] sm:$0xff]
        %v3841 = vld [vmem:[#allocation35 + $0x50] sm:$0xff]
        %v3842 = vld [vmem:[#allocation35 + $0x58] sm:$0xff]
        %v3843 = vld [vmem:[#allocation35 + $0x60] sm:$0xff]
        %v3844 = vld [vmem:[#allocation35 + $0x68] sm:$0xff]
        %v3845 = vld [vmem:[#allocation35 + $0x70] sm:$0xff]
        %v3846 = vld [vmem:[#allocation35 + $0x78] sm:$0xff]
        %v3847 = vld [vmem:[%s49] sm:$0x1]
        %v3849 = vlaneseq
        %v3850 = vshrl.u32 %v3849, 7
        %v3851 = vsub.s32 0, %v3850
        %v3852 = vrot.slane %v3847, %v3851
        %3854 = vmatprep.subr.mxu0 0.0
        %3855 = vmatpush1.msra.mxu0 %v3846
        %3856 = vmatprep.subr.mxu0 0.0
        %3857 = vmatpush1.msra.mxu0 %v3845
        %3858 = vmatprep.subr.mxu0 0.0
        %3859 = vmatpush1.msra.mxu0 %v3844
        %3860 = vmatprep.subr.mxu0 0.0
        %3861 = vmatpush1.msra.mxu0 %v3843
        %3862 = vmatprep.subr.mxu0 0.0
        %3863 = vmatpush1.msra.mxu0 %v3842
        %3864 = vmatprep.subr.mxu0 0.0
        %3865 = vmatpush1.msra.mxu0 %v3841
        %3866 = vmatprep.subr.mxu0 0.0
        %3867 = vmatpush1.msra.mxu0 %v3840
        %3868 = vmatprep.subr.mxu0 0.0
        %3869 = vmatpush1.msra.mxu0 %v3839
        %3870 = vmatprep.subr.mxu0 0.0
        %3871 = vmatpush1.msra.mxu0 %v3838
        %3872 = vmatprep.subr.mxu0 0.0
        %3873 = vmatpush1.msra.mxu0 %v3837
        %3874 = vmatprep.subr.mxu0 0.0
        %3875 = vmatpush1.msra.mxu0 %v3836
        %3876 = vmatprep.subr.mxu0 0.0
        %3877 = vmatpush1.msra.mxu0 %v3835
        %3878 = vmatprep.subr.mxu0 0.0
        %3879 = vmatpush1.msra.mxu0 %v3834
        %3880 = vmatprep.subr.mxu0 0.0
        %3881 = vmatpush1.msra.mxu0 %v3833
        %3882 = vmatprep.subr.mxu0 0.0
        %3883 = vmatpush1.msra.mxu0 %v3832
        %3884 = vmatprep.subr.mxu0 0.0
        %3885 = vmatpush1.msra.mxu0 %v3831
        %3886 = vmatprep.subr.mxu0 0.0
        %3887 = vmatpush2.msra.mxu0 0.0
        %3888 = vmatprep.subr.mxu0 0.0
        %3889 = vmatpush2.msra.mxu0 0.0
        %3890 = vmatprep.subr.mxu0 0.0
        %3891 = vmatpush2.msra.mxu0 0.0
        %3892 = vmatprep.subr.mxu0 0.0
        %3893 = vmatpush2.msra.mxu0 0.0
        %3894 = vmatprep.subr.mxu0 0.0
        %3895 = vmatpush2.msra.mxu0 0.0
        %3896 = vmatprep.subr.mxu0 0.0
        %3897 = vmatpush2.msra.mxu0 0.0
        %3898 = vmatprep.subr.mxu0 0.0
        %3899 = vmatpush2.msra.mxu0 0.0
        %3900 = vmatprep.subr.mxu0 0.0
        %3901 = vmatpush2.msra.mxu0 0.0
        %3902 = vmatprep.subr.mxu0 0.0
        %3903 = vmatpush2.msra.mxu0 0.0
        %3904 = vmatprep.subr.mxu0 0.0
        %3905 = vmatpush2.msra.mxu0 0.0
        %3906 = vmatprep.subr.mxu0 0.0
        %3907 = vmatpush2.msra.mxu0 0.0
        %3908 = vmatprep.subr.mxu0 0.0
        %3909 = vmatpush2.msra.mxu0 0.0
        %3910 = vmatprep.subr.mxu0 0.0
        %3911 = vmatpush2.msra.mxu0 0.0
        %3912 = vmatprep.subr.mxu0 0.0
        %3913 = vmatpush2.msra.mxu0 0.0
        %3914 = vmatprep.subr.mxu0 0.0
        %3915 = vmatpush2.msra.mxu0 0.0
        %3916 = vmatprep.subr.mxu0 0.0
        %3917 = vmatpush2.msra.mxu0 0.0
        %3918 = vmatprep.mubr.f32.mxu0 0.0
        %3919 = vmatmul.mubr.f32.gmra.mxu0 %v3829
        %v3920 = vpop.f32.mrf.mxu0
        %v3921 = vadd.f32 %v3852, %v3920
        %v3922 = vpop.f32.mrf.mxu0
        %3923 = vmatprep.mubr.f32.mxu0 0.0
        %3924 = vmatmul.mubr.f32.gmra.mxu0 %v3830
        %v3925 = vpop.f32.mrf.mxu0
        %v3926 = vadd.f32 %v3852, %v3925
        %v3927 = vpop.f32.mrf.mxu0
        %3928 = vdwg.mxu0
        %v3929 = vmax.f32 %v3921, 0.0
        %v3930 = vmax.f32 %v3926, 0.0
        %v3931 = vld [vmem:[%s51] sm:$0xf]
        %v3933 = vlaneseq
        %v3934 = vshrl.u32 %v3933, 7
        %v3935 = vsub.s32 0, %v3934
        %v3936 = vrot.slane %v3931, %v3935
        %v3937 = vlaneseq
        %v3938 = vshrl.u32 %v3937, 7
        %v3939 = vsub.s32 1, %v3938
        %v3940 = vrot.slane %v3931, %v3939
        %v3941 = vlaneseq
        %v3942 = vshrl.u32 %v3941, 7
        %v3943 = vsub.s32 2, %v3942
        %v3944 = vrot.slane %v3931, %v3943
        %v3945 = vlaneseq
        %v3946 = vshrl.u32 %v3945, 7
        %v3947 = vsub.s32 3, %v3946
        %v3948 = vrot.slane %v3931, %v3947
        %v3953 = vmul.f32 %v1882, %v3936
        %v3954 = vmul.f32 %v1883, %v3940
        %v3955 = vmul.f32 %v1884, %v3944
        %v3956 = vmul.f32 %v1885, %v3948
        %v3957 = vmul.f32 %v1886, %v3936
        %v3958 = vmul.f32 %v1887, %v3940
        %v3959 = vmul.f32 %v1888, %v3944
        %v3960 = vmul.f32 %v1889, %v3948
        %v3961 = vld [vmem:[%s53] sm:$0xf]
        %v3963 = vlaneseq
        %v3964 = vshrl.u32 %v3963, 7
        %v3965 = vsub.s32 0, %v3964
        %v3966 = vrot.slane %v3961, %v3965
        %v3967 = vlaneseq
        %v3968 = vshrl.u32 %v3967, 7
        %v3969 = vsub.s32 1, %v3968
        %v3970 = vrot.slane %v3961, %v3969
        %v3971 = vlaneseq
        %v3972 = vshrl.u32 %v3971, 7
        %v3973 = vsub.s32 2, %v3972
        %v3974 = vrot.slane %v3961, %v3973
        %v3975 = vlaneseq
        %v3976 = vshrl.u32 %v3975, 7
        %v3977 = vsub.s32 3, %v3976
        %v3978 = vrot.slane %v3961, %v3977
        %v3983 = vadd.f32 %v3953, %v3966
        %v3984 = vadd.f32 %v3954, %v3970
        %v3985 = vadd.f32 %v3955, %v3974
        %v3986 = vadd.f32 %v3956, %v3978
        %v3987 = vadd.f32 %v3957, %v3966
        %v3988 = vadd.f32 %v3958, %v3970
        %v3989 = vadd.f32 %v3959, %v3974
        %v3990 = vadd.f32 %v3960, %v3978
        %v3991 = vmax.f32 %v3983, 0.0
        %v3992 = vmax.f32 %v3984, 0.0
        %v3993 = vmax.f32 %v3985, 0.0
        %v3994 = vmax.f32 %v3986, 0.0
        %v3995 = vmax.f32 %v3987, 0.0
        %v3996 = vmax.f32 %v3988, 0.0
        %v3997 = vmax.f32 %v3989, 0.0
        %v3998 = vmax.f32 %v3990, 0.0
        %v3999 = vld [vmem:[#allocation36] sm:$0xff]
        %v4000 = vld [vmem:[#allocation36 + $0x8] sm:$0xff]
        %v4001 = vld [vmem:[#allocation36 + $0x10] sm:$0xff]
        %v4002 = vld [vmem:[#allocation36 + $0x18] sm:$0xff]
        %v4003 = vld [vmem:[#allocation36 + $0x20] sm:$0xff]
        %v4004 = vld [vmem:[#allocation36 + $0x28] sm:$0xff]
        %v4005 = vld [vmem:[#allocation36 + $0x30] sm:$0xff]
        %v4006 = vld [vmem:[#allocation36 + $0x38] sm:$0xff]
        %v4007 = vld [vmem:[#allocation36 + $0x40] sm:$0xff]
        %v4008 = vld [vmem:[#allocation36 + $0x48] sm:$0xff]
        %v4009 = vld [vmem:[#allocation36 + $0x50] sm:$0xff]
        %v4010 = vld [vmem:[#allocation36 + $0x58] sm:$0xff]
        %v4011 = vld [vmem:[#allocation36 + $0x60] sm:$0xff]
        %v4012 = vld [vmem:[#allocation36 + $0x68] sm:$0xff]
        %v4013 = vld [vmem:[#allocation36 + $0x70] sm:$0xff]
        %v4014 = vld [vmem:[#allocation36 + $0x78] sm:$0xff]
        %v4015 = vld [vmem:[#allocation36 + $0x80] sm:$0xff]
        %v4016 = vld [vmem:[#allocation36 + $0x88] sm:$0xff]
        %v4017 = vld [vmem:[#allocation36 + $0x90] sm:$0xff]
        %v4018 = vld [vmem:[#allocation36 + $0x98] sm:$0xff]
        %v4019 = vld [vmem:[#allocation36 + $0xa0] sm:$0xff]
        %v4020 = vld [vmem:[#allocation36 + $0xa8] sm:$0xff]
        %v4021 = vld [vmem:[#allocation36 + $0xb0] sm:$0xff]
        %v4022 = vld [vmem:[#allocation36 + $0xb8] sm:$0xff]
        %v4023 = vld [vmem:[#allocation36 + $0xc0] sm:$0xff]
        %v4024 = vld [vmem:[#allocation36 + $0xc8] sm:$0xff]
        %v4025 = vld [vmem:[#allocation36 + $0xd0] sm:$0xff]
        %v4026 = vld [vmem:[#allocation36 + $0xd8] sm:$0xff]
        %v4027 = vld [vmem:[#allocation36 + $0xe0] sm:$0xff]
        %v4028 = vld [vmem:[#allocation36 + $0xe8] sm:$0xff]
        %v4029 = vld [vmem:[#allocation36 + $0xf0] sm:$0xff]
        %v4030 = vld [vmem:[#allocation36 + $0xf8] sm:$0xff]
        %v4031 = vld [vmem:[#allocation36 + $0x100] sm:$0xff]
        %v4032 = vld [vmem:[#allocation36 + $0x108] sm:$0xff]
        %v4033 = vld [vmem:[#allocation36 + $0x110] sm:$0xff]
        %v4034 = vld [vmem:[#allocation36 + $0x118] sm:$0xff]
        %v4035 = vld [vmem:[#allocation36 + $0x120] sm:$0xff]
        %v4036 = vld [vmem:[#allocation36 + $0x128] sm:$0xff]
        %v4037 = vld [vmem:[#allocation36 + $0x130] sm:$0xff]
        %v4038 = vld [vmem:[#allocation36 + $0x138] sm:$0xff]
        %v4039 = vld [vmem:[#allocation36 + $0x140] sm:$0xff]
        %v4040 = vld [vmem:[#allocation36 + $0x148] sm:$0xff]
        %v4041 = vld [vmem:[#allocation36 + $0x150] sm:$0xff]
        %v4042 = vld [vmem:[#allocation36 + $0x158] sm:$0xff]
        %v4043 = vld [vmem:[#allocation36 + $0x160] sm:$0xff]
        %v4044 = vld [vmem:[#allocation36 + $0x168] sm:$0xff]
        %v4045 = vld [vmem:[#allocation36 + $0x170] sm:$0xff]
        %v4046 = vld [vmem:[#allocation36 + $0x178] sm:$0xff]
        %v4047 = vld [vmem:[#allocation36 + $0x180] sm:$0xff]
        %v4048 = vld [vmem:[#allocation36 + $0x188] sm:$0xff]
        %v4049 = vld [vmem:[#allocation36 + $0x190] sm:$0xff]
        %v4050 = vld [vmem:[#allocation36 + $0x198] sm:$0xff]
        %v4051 = vld [vmem:[#allocation36 + $0x1a0] sm:$0xff]
        %v4052 = vld [vmem:[#allocation36 + $0x1a8] sm:$0xff]
        %v4053 = vld [vmem:[#allocation36 + $0x1b0] sm:$0xff]
        %v4054 = vld [vmem:[#allocation36 + $0x1b8] sm:$0xff]
        %v4055 = vld [vmem:[#allocation36 + $0x1c0] sm:$0xff]
        %v4056 = vld [vmem:[#allocation36 + $0x1c8] sm:$0xff]
        %v4057 = vld [vmem:[#allocation36 + $0x1d0] sm:$0xff]
        %v4058 = vld [vmem:[#allocation36 + $0x1d8] sm:$0xff]
        %v4059 = vld [vmem:[#allocation36 + $0x1e0] sm:$0xff]
        %v4060 = vld [vmem:[#allocation36 + $0x1e8] sm:$0xff]
        %v4061 = vld [vmem:[#allocation36 + $0x1f0] sm:$0xff]
        %v4062 = vld [vmem:[#allocation36 + $0x1f8] sm:$0xff]
        %v4063 = vld [vmem:[%s57] sm:$0x1]
        %v4065 = vlaneseq
        %v4066 = vshrl.u32 %v4065, 7
        %v4067 = vsub.s32 0, %v4066
        %v4068 = vrot.slane %v4063, %v4067
        %4070 = vmatprep.subr.mxu0 0.0
        %4071 = vmatpush1.msra.mxu0 %v4014
        %4072 = vmatprep.subr.mxu0 0.0
        %4073 = vmatpush1.msra.mxu0 %v4013
        %4074 = vmatprep.subr.mxu0 0.0
        %4075 = vmatpush1.msra.mxu0 %v4012
        %4076 = vmatprep.subr.mxu0 0.0
        %4077 = vmatpush1.msra.mxu0 %v4011
        %4078 = vmatprep.subr.mxu0 0.0
        %4079 = vmatpush1.msra.mxu0 %v4010
        %4080 = vmatprep.subr.mxu0 0.0
        %4081 = vmatpush1.msra.mxu0 %v4009
        %4082 = vmatprep.subr.mxu0 0.0
        %4083 = vmatpush1.msra.mxu0 %v4008
        %4084 = vmatprep.subr.mxu0 0.0
        %4085 = vmatpush1.msra.mxu0 %v4007
        %4086 = vmatprep.subr.mxu0 0.0
        %4087 = vmatpush1.msra.mxu0 %v4006
        %4088 = vmatprep.subr.mxu0 0.0
        %4089 = vmatpush1.msra.mxu0 %v4005
        %4090 = vmatprep.subr.mxu0 0.0
        %4091 = vmatpush1.msra.mxu0 %v4004
        %4092 = vmatprep.subr.mxu0 0.0
        %4093 = vmatpush1.msra.mxu0 %v4003
        %4094 = vmatprep.subr.mxu0 0.0
        %4095 = vmatpush1.msra.mxu0 %v4002
        %4096 = vmatprep.subr.mxu0 0.0
        %4097 = vmatpush1.msra.mxu0 %v4001
        %4098 = vmatprep.subr.mxu0 0.0
        %4099 = vmatpush1.msra.mxu0 %v4000
        %4100 = vmatprep.subr.mxu0 0.0
        %4101 = vmatpush1.msra.mxu0 %v3999
        %4102 = vmatprep.subr.mxu0 0.0
        %4103 = vmatpush2.msra.mxu0 %v4030
        %4104 = vmatprep.subr.mxu0 0.0
        %4105 = vmatpush2.msra.mxu0 %v4029
        %4106 = vmatprep.subr.mxu0 0.0
        %4107 = vmatpush2.msra.mxu0 %v4028
        %4108 = vmatprep.subr.mxu0 0.0
        %4109 = vmatpush2.msra.mxu0 %v4027
        %4110 = vmatprep.subr.mxu0 0.0
        %4111 = vmatpush2.msra.mxu0 %v4026
        %4112 = vmatprep.subr.mxu0 0.0
        %4113 = vmatpush2.msra.mxu0 %v4025
        %4114 = vmatprep.subr.mxu0 0.0
        %4115 = vmatpush2.msra.mxu0 %v4024
        %4116 = vmatprep.subr.mxu0 0.0
        %4117 = vmatpush2.msra.mxu0 %v4023
        %4118 = vmatprep.subr.mxu0 0.0
        %4119 = vmatpush2.msra.mxu0 %v4022
        %4120 = vmatprep.subr.mxu0 0.0
        %4121 = vmatpush2.msra.mxu0 %v4021
        %4122 = vmatprep.subr.mxu0 0.0
        %4123 = vmatpush2.msra.mxu0 %v4020
        %4124 = vmatprep.subr.mxu0 0.0
        %4125 = vmatpush2.msra.mxu0 %v4019
        %4126 = vmatprep.subr.mxu0 0.0
        %4127 = vmatpush2.msra.mxu0 %v4018
        %4128 = vmatprep.subr.mxu0 0.0
        %4129 = vmatpush2.msra.mxu0 %v4017
        %4130 = vmatprep.subr.mxu0 0.0
        %4131 = vmatpush2.msra.mxu0 %v4016
        %4132 = vmatprep.subr.mxu0 0.0
        %4133 = vmatpush2.msra.mxu0 %v4015
        %4134 = vmatprep.mubr.f32.mxu0 %v3992
        %4135 = vmatmul.mubr.f32.gmra.mxu0 %v3991
        %v4136 = vpop.f32.mrf.mxu0
        %v4137 = vadd.f32 %v4068, %v4136
        %v4138 = vpop.f32.mrf.mxu0
        %4139 = vmatprep.mubr.f32.mxu0 %v3996
        %4140 = vmatmul.mubr.f32.gmra.mxu0 %v3995
        %v4141 = vpop.f32.mrf.mxu0
        %v4142 = vadd.f32 %v4068, %v4141
        %v4143 = vpop.f32.mrf.mxu0
        %4144 = vdwg.mxu0
        %4145 = vmatprep.subr.mxu0 0.0
        %4146 = vmatpush1.msra.mxu0 %v4046
        %4147 = vmatprep.subr.mxu0 0.0
        %4148 = vmatpush1.msra.mxu0 %v4045
        %4149 = vmatprep.subr.mxu0 0.0
        %4150 = vmatpush1.msra.mxu0 %v4044
        %4151 = vmatprep.subr.mxu0 0.0
        %4152 = vmatpush1.msra.mxu0 %v4043
        %4153 = vmatprep.subr.mxu0 0.0
        %4154 = vmatpush1.msra.mxu0 %v4042
        %4155 = vmatprep.subr.mxu0 0.0
        %4156 = vmatpush1.msra.mxu0 %v4041
        %4157 = vmatprep.subr.mxu0 0.0
        %4158 = vmatpush1.msra.mxu0 %v4040
        %4159 = vmatprep.subr.mxu0 0.0
        %4160 = vmatpush1.msra.mxu0 %v4039
        %4161 = vmatprep.subr.mxu0 0.0
        %4162 = vmatpush1.msra.mxu0 %v4038
        %4163 = vmatprep.subr.mxu0 0.0
        %4164 = vmatpush1.msra.mxu0 %v4037
        %4165 = vmatprep.subr.mxu0 0.0
        %4166 = vmatpush1.msra.mxu0 %v4036
        %4167 = vmatprep.subr.mxu0 0.0
        %4168 = vmatpush1.msra.mxu0 %v4035
        %4169 = vmatprep.subr.mxu0 0.0
        %4170 = vmatpush1.msra.mxu0 %v4034
        %4171 = vmatprep.subr.mxu0 0.0
        %4172 = vmatpush1.msra.mxu0 %v4033
        %4173 = vmatprep.subr.mxu0 0.0
        %4174 = vmatpush1.msra.mxu0 %v4032
        %4175 = vmatprep.subr.mxu0 0.0
        %4176 = vmatpush1.msra.mxu0 %v4031
        %4177 = vmatprep.subr.mxu0 0.0
        %4178 = vmatpush2.msra.mxu0 %v4062
        %4179 = vmatprep.subr.mxu0 0.0
        %4180 = vmatpush2.msra.mxu0 %v4061
        %4181 = vmatprep.subr.mxu0 0.0
        %4182 = vmatpush2.msra.mxu0 %v4060
        %4183 = vmatprep.subr.mxu0 0.0
        %4184 = vmatpush2.msra.mxu0 %v4059
        %4185 = vmatprep.subr.mxu0 0.0
        %4186 = vmatpush2.msra.mxu0 %v4058
        %4187 = vmatprep.subr.mxu0 0.0
        %4188 = vmatpush2.msra.mxu0 %v4057
        %4189 = vmatprep.subr.mxu0 0.0
        %4190 = vmatpush2.msra.mxu0 %v4056
        %4191 = vmatprep.subr.mxu0 0.0
        %4192 = vmatpush2.msra.mxu0 %v4055
        %4193 = vmatprep.subr.mxu0 0.0
        %4194 = vmatpush2.msra.mxu0 %v4054
        %4195 = vmatprep.subr.mxu0 0.0
        %4196 = vmatpush2.msra.mxu0 %v4053
        %4197 = vmatprep.subr.mxu0 0.0
        %4198 = vmatpush2.msra.mxu0 %v4052
        %4199 = vmatprep.subr.mxu0 0.0
        %4200 = vmatpush2.msra.mxu0 %v4051
        %4201 = vmatprep.subr.mxu0 0.0
        %4202 = vmatpush2.msra.mxu0 %v4050
        %4203 = vmatprep.subr.mxu0 0.0
        %4204 = vmatpush2.msra.mxu0 %v4049
        %4205 = vmatprep.subr.mxu0 0.0
        %4206 = vmatpush2.msra.mxu0 %v4048
        %4207 = vmatprep.subr.mxu0 0.0
        %4208 = vmatpush2.msra.mxu0 %v4047
        %4209 = vmatprep.mubr.f32.mxu0 %v3994
        %4210 = vmatmul.mubr.f32.gmra.mxu0 %v3993
        %v4211 = vpop.f32.mrf.mxu0
        %v4212 = vadd.f32 %v4137, %v4211
        %v4213 = vpop.f32.mrf.mxu0
        %4214 = vmatprep.mubr.f32.mxu0 %v3998
        %4215 = vmatmul.mubr.f32.gmra.mxu0 %v3997
        %v4216 = vpop.f32.mrf.mxu0
        %v4217 = vadd.f32 %v4142, %v4216
        %v4218 = vpop.f32.mrf.mxu0
        %4219 = vdwg.mxu0
        %v4220 = vmax.f32 %v4212, 0.0
        %v4221 = vmax.f32 %v4217, 0.0
        %4222 = vst [vmem:[#allocation2] sm:$0xff] 0.0
        %4223 = vst [vmem:[#allocation2 + $0x8] sm:$0xff] 0.0
        %v4224 = vld [vmem:[#allocation2 + $0x1] sm:$0xff]
        %v4225 = vld [vmem:[#allocation2 + $0x9] sm:$0x7f]
        %v4226 = vld [vmem:[#allocation38] sm:$0xff]
        %v4227 = vld [vmem:[#allocation38 + $0x8] sm:$0xff]
        %v4228 = vld [vmem:[#allocation38 + $0x10] sm:$0xff]
        %v4229 = vld [vmem:[#allocation38 + $0x18] sm:$0xff]
        %v4230 = vld [vmem:[#allocation38 + $0x20] sm:$0xff]
        %v4231 = vld [vmem:[#allocation38 + $0x28] sm:$0xff]
        %v4232 = vld [vmem:[#allocation38 + $0x30] sm:$0xff]
        %v4233 = vld [vmem:[#allocation38 + $0x38] sm:$0xff]
        %v4234 = vld [vmem:[#allocation38 + $0x40] sm:$0xff]
        %v4235 = vld [vmem:[#allocation38 + $0x48] sm:$0xff]
        %v4236 = vld [vmem:[#allocation38 + $0x50] sm:$0xff]
        %v4237 = vld [vmem:[#allocation38 + $0x58] sm:$0xff]
        %v4238 = vld [vmem:[#allocation38 + $0x60] sm:$0xff]
        %v4239 = vld [vmem:[#allocation38 + $0x68] sm:$0xff]
        %v4240 = vld [vmem:[#allocation38 + $0x70] sm:$0xff]
        %v4241 = vld [vmem:[#allocation38 + $0x78] sm:$0xff]
        %4242 = vmatprep.subr.mxu0 0.0
        %4243 = vmatpush1.msra.mxu0 %v4241
        %4244 = vmatprep.subr.mxu0 0.0
        %4245 = vmatpush1.msra.mxu0 %v4240
        %4246 = vmatprep.subr.mxu0 0.0
        %4247 = vmatpush1.msra.mxu0 %v4239
        %4248 = vmatprep.subr.mxu0 0.0
        %4249 = vmatpush1.msra.mxu0 %v4238
        %4250 = vmatprep.subr.mxu0 0.0
        %4251 = vmatpush1.msra.mxu0 %v4237
        %4252 = vmatprep.subr.mxu0 0.0
        %4253 = vmatpush1.msra.mxu0 %v4236
        %4254 = vmatprep.subr.mxu0 0.0
        %4255 = vmatpush1.msra.mxu0 %v4235
        %4256 = vmatprep.subr.mxu0 0.0
        %4257 = vmatpush1.msra.mxu0 %v4234
        %4258 = vmatprep.subr.mxu0 0.0
        %4259 = vmatpush1.msra.mxu0 %v4233
        %4260 = vmatprep.subr.mxu0 0.0
        %4261 = vmatpush1.msra.mxu0 %v4232
        %4262 = vmatprep.subr.mxu0 0.0
        %4263 = vmatpush1.msra.mxu0 %v4231
        %4264 = vmatprep.subr.mxu0 0.0
        %4265 = vmatpush1.msra.mxu0 %v4230
        %4266 = vmatprep.subr.mxu0 0.0
        %4267 = vmatpush1.msra.mxu0 %v4229
        %4268 = vmatprep.subr.mxu0 0.0
        %4269 = vmatpush1.msra.mxu0 %v4228
        %4270 = vmatprep.subr.mxu0 0.0
        %4271 = vmatpush1.msra.mxu0 %v4227
        %4272 = vmatprep.subr.mxu0 0.0
        %4273 = vmatpush1.msra.mxu0 %v4226
        %4274 = vmatprep.subr.mxu0 0.0
        %4275 = vmatpush2.msra.mxu0 0.0
        %4276 = vmatprep.subr.mxu0 0.0
        %4277 = vmatpush2.msra.mxu0 0.0
        %4278 = vmatprep.subr.mxu0 0.0
        %4279 = vmatpush2.msra.mxu0 0.0
        %4280 = vmatprep.subr.mxu0 0.0
        %4281 = vmatpush2.msra.mxu0 0.0
        %4282 = vmatprep.subr.mxu0 0.0
        %4283 = vmatpush2.msra.mxu0 0.0
        %4284 = vmatprep.subr.mxu0 0.0
        %4285 = vmatpush2.msra.mxu0 0.0
        %4286 = vmatprep.subr.mxu0 0.0
        %4287 = vmatpush2.msra.mxu0 0.0
        %4288 = vmatprep.subr.mxu0 0.0
        %4289 = vmatpush2.msra.mxu0 0.0
        %4290 = vmatprep.subr.mxu0 0.0
        %4291 = vmatpush2.msra.mxu0 0.0
        %4292 = vmatprep.subr.mxu0 0.0
        %4293 = vmatpush2.msra.mxu0 0.0
        %4294 = vmatprep.subr.mxu0 0.0
        %4295 = vmatpush2.msra.mxu0 0.0
        %4296 = vmatprep.subr.mxu0 0.0
        %4297 = vmatpush2.msra.mxu0 0.0
        %4298 = vmatprep.subr.mxu0 0.0
        %4299 = vmatpush2.msra.mxu0 0.0
        %4300 = vmatprep.subr.mxu0 0.0
        %4301 = vmatpush2.msra.mxu0 0.0
        %4302 = vmatprep.subr.mxu0 0.0
        %4303 = vmatpush2.msra.mxu0 0.0
        %4304 = vmatprep.subr.mxu0 0.0
        %4305 = vmatpush2.msra.mxu0 0.0
        %4306 = vmatprep.mubr.f32.mxu0 0.0
        %4307 = vmatmul.mubr.f32.gmra.mxu0 %v4220
        %v4308 = vpop.f32.mrf.mxu0
        %v4309 = vadd.f32 0.0, %v4308
        %v4310 = vpop.f32.mrf.mxu0
        %4311 = vmatprep.mubr.f32.mxu0 0.0
        %4312 = vmatmul.mubr.f32.gmra.mxu0 %v4221
        %v4313 = vpop.f32.mrf.mxu0
        %v4314 = vadd.f32 0.0, %v4313
        %v4315 = vpop.f32.mrf.mxu0
        %4316 = vdwg.mxu0
        %v4317 = vadd.f32 %v4224, %v4309
        %v4318 = vadd.f32 %v4225, %v4314
        %4319 = vst [vmem:[#allocation2 + $0x1] sm:$0xff] %v4317
        %4320 = vst [vmem:[#allocation2 + $0x9] sm:$0x7f] %v4318
        %v4321 = vld [vmem:[#allocation2] sm:$0xff]
        %v4322 = vld [vmem:[#allocation2 + $0x8] sm:$0xff]
        %s4323 = scalar_lea.vmem [#allocation38], 128
        %v4324 = vld [vmem:[%s4323] sm:$0xff]
        %v4325 = vld [vmem:[%s4323 + $0x8] sm:$0xff]
        %v4326 = vld [vmem:[%s4323 + $0x10] sm:$0xff]
        %v4327 = vld [vmem:[%s4323 + $0x18] sm:$0xff]
        %v4328 = vld [vmem:[%s4323 + $0x20] sm:$0xff]
        %v4329 = vld [vmem:[%s4323 + $0x28] sm:$0xff]
        %v4330 = vld [vmem:[%s4323 + $0x30] sm:$0xff]
        %v4331 = vld [vmem:[%s4323 + $0x38] sm:$0xff]
        %v4332 = vld [vmem:[%s4323 + $0x40] sm:$0xff]
        %v4333 = vld [vmem:[%s4323 + $0x48] sm:$0xff]
        %v4334 = vld [vmem:[%s4323 + $0x50] sm:$0xff]
        %v4335 = vld [vmem:[%s4323 + $0x58] sm:$0xff]
        %v4336 = vld [vmem:[%s4323 + $0x60] sm:$0xff]
        %v4337 = vld [vmem:[%s4323 + $0x68] sm:$0xff]
        %v4338 = vld [vmem:[%s4323 + $0x70] sm:$0xff]
        %v4339 = vld [vmem:[%s4323 + $0x78] sm:$0xff]
        %4340 = vmatprep.subr.mxu0 0.0
        %4341 = vmatpush1.msra.mxu0 %v4339
        %4342 = vmatprep.subr.mxu0 0.0
        %4343 = vmatpush1.msra.mxu0 %v4338
        %4344 = vmatprep.subr.mxu0 0.0
        %4345 = vmatpush1.msra.mxu0 %v4337
        %4346 = vmatprep.subr.mxu0 0.0
        %4347 = vmatpush1.msra.mxu0 %v4336
        %4348 = vmatprep.subr.mxu0 0.0
        %4349 = vmatpush1.msra.mxu0 %v4335
        %4350 = vmatprep.subr.mxu0 0.0
        %4351 = vmatpush1.msra.mxu0 %v4334
        %4352 = vmatprep.subr.mxu0 0.0
        %4353 = vmatpush1.msra.mxu0 %v4333
        %4354 = vmatprep.subr.mxu0 0.0
        %4355 = vmatpush1.msra.mxu0 %v4332
        %4356 = vmatprep.subr.mxu0 0.0
        %4357 = vmatpush1.msra.mxu0 %v4331
        %4358 = vmatprep.subr.mxu0 0.0
        %4359 = vmatpush1.msra.mxu0 %v4330
        %4360 = vmatprep.subr.mxu0 0.0
        %4361 = vmatpush1.msra.mxu0 %v4329
        %4362 = vmatprep.subr.mxu0 0.0
        %4363 = vmatpush1.msra.mxu0 %v4328
        %4364 = vmatprep.subr.mxu0 0.0
        %4365 = vmatpush1.msra.mxu0 %v4327
        %4366 = vmatprep.subr.mxu0 0.0
        %4367 = vmatpush1.msra.mxu0 %v4326
        %4368 = vmatprep.subr.mxu0 0.0
        %4369 = vmatpush1.msra.mxu0 %v4325
        %4370 = vmatprep.subr.mxu0 0.0
        %4371 = vmatpush1.msra.mxu0 %v4324
        %4372 = vmatprep.subr.mxu0 0.0
        %4373 = vmatpush2.msra.mxu0 0.0
        %4374 = vmatprep.subr.mxu0 0.0
        %4375 = vmatpush2.msra.mxu0 0.0
        %4376 = vmatprep.subr.mxu0 0.0
        %4377 = vmatpush2.msra.mxu0 0.0
        %4378 = vmatprep.subr.mxu0 0.0
        %4379 = vmatpush2.msra.mxu0 0.0
        %4380 = vmatprep.subr.mxu0 0.0
        %4381 = vmatpush2.msra.mxu0 0.0
        %4382 = vmatprep.subr.mxu0 0.0
        %4383 = vmatpush2.msra.mxu0 0.0
        %4384 = vmatprep.subr.mxu0 0.0
        %4385 = vmatpush2.msra.mxu0 0.0
        %4386 = vmatprep.subr.mxu0 0.0
        %4387 = vmatpush2.msra.mxu0 0.0
        %4388 = vmatprep.subr.mxu0 0.0
        %4389 = vmatpush2.msra.mxu0 0.0
        %4390 = vmatprep.subr.mxu0 0.0
        %4391 = vmatpush2.msra.mxu0 0.0
        %4392 = vmatprep.subr.mxu0 0.0
        %4393 = vmatpush2.msra.mxu0 0.0
        %4394 = vmatprep.subr.mxu0 0.0
        %4395 = vmatpush2.msra.mxu0 0.0
        %4396 = vmatprep.subr.mxu0 0.0
        %4397 = vmatpush2.msra.mxu0 0.0
        %4398 = vmatprep.subr.mxu0 0.0
        %4399 = vmatpush2.msra.mxu0 0.0
        %4400 = vmatprep.subr.mxu0 0.0
        %4401 = vmatpush2.msra.mxu0 0.0
        %4402 = vmatprep.subr.mxu0 0.0
        %4403 = vmatpush2.msra.mxu0 0.0
        %4404 = vmatprep.mubr.f32.mxu0 0.0
        %4405 = vmatmul.mubr.f32.gmra.mxu0 %v4220
        %v4406 = vpop.f32.mrf.mxu0
        %v4407 = vadd.f32 0.0, %v4406
        %v4408 = vpop.f32.mrf.mxu0
        %4409 = vmatprep.mubr.f32.mxu0 0.0
        %4410 = vmatmul.mubr.f32.gmra.mxu0 %v4221
        %v4411 = vpop.f32.mrf.mxu0
        %v4412 = vadd.f32 0.0, %v4411
        %v4413 = vpop.f32.mrf.mxu0
        %4414 = vdwg.mxu0
        %v4415 = vadd.f32 %v4321, %v4407
        %v4416 = vadd.f32 %v4322, %v4412
        %4417 = vst [vmem:[#allocation2] sm:$0xff] %v4415
        %4418 = vst [vmem:[#allocation2 + $0x8] sm:$0xff] %v4416
        %v4419 = vld [vmem:[#allocation2] sm:$0xff]
        %v4420 = vld [vmem:[#allocation2 + $0x8] sm:$0x7f]
        %s4421 = scalar_lea.vmem [#allocation38], 256
        %v4422 = vld [vmem:[%s4421] sm:$0xff]
        %v4423 = vld [vmem:[%s4421 + $0x8] sm:$0xff]
        %v4424 = vld [vmem:[%s4421 + $0x10] sm:$0xff]
        %v4425 = vld [vmem:[%s4421 + $0x18] sm:$0xff]
        %v4426 = vld [vmem:[%s4421 + $0x20] sm:$0xff]
        %v4427 = vld [vmem:[%s4421 + $0x28] sm:$0xff]
        %v4428 = vld [vmem:[%s4421 + $0x30] sm:$0xff]
        %v4429 = vld [vmem:[%s4421 + $0x38] sm:$0xff]
        %v4430 = vld [vmem:[%s4421 + $0x40] sm:$0xff]
        %v4431 = vld [vmem:[%s4421 + $0x48] sm:$0xff]
        %v4432 = vld [vmem:[%s4421 + $0x50] sm:$0xff]
        %v4433 = vld [vmem:[%s4421 + $0x58] sm:$0xff]
        %v4434 = vld [vmem:[%s4421 + $0x60] sm:$0xff]
        %v4435 = vld [vmem:[%s4421 + $0x68] sm:$0xff]
        %v4436 = vld [vmem:[%s4421 + $0x70] sm:$0xff]
        %v4437 = vld [vmem:[%s4421 + $0x78] sm:$0xff]
        %v4440 = vrot.slane %v4220, 1
        %v4441 = vrot.slane %v4221, 1
        %v4442 = vsel %vm2399, %v4440, %v4441
        %4445 = vmatprep.subr.mxu0 0.0
        %4446 = vmatpush1.msra.mxu0 %v4437
        %4447 = vmatprep.subr.mxu0 0.0
        %4448 = vmatpush1.msra.mxu0 %v4436
        %4449 = vmatprep.subr.mxu0 0.0
        %4450 = vmatpush1.msra.mxu0 %v4435
        %4451 = vmatprep.subr.mxu0 0.0
        %4452 = vmatpush1.msra.mxu0 %v4434
        %4453 = vmatprep.subr.mxu0 0.0
        %4454 = vmatpush1.msra.mxu0 %v4433
        %4455 = vmatprep.subr.mxu0 0.0
        %4456 = vmatpush1.msra.mxu0 %v4432
        %4457 = vmatprep.subr.mxu0 0.0
        %4458 = vmatpush1.msra.mxu0 %v4431
        %4459 = vmatprep.subr.mxu0 0.0
        %4460 = vmatpush1.msra.mxu0 %v4430
        %4461 = vmatprep.subr.mxu0 0.0
        %4462 = vmatpush1.msra.mxu0 %v4429
        %4463 = vmatprep.subr.mxu0 0.0
        %4464 = vmatpush1.msra.mxu0 %v4428
        %4465 = vmatprep.subr.mxu0 0.0
        %4466 = vmatpush1.msra.mxu0 %v4427
        %4467 = vmatprep.subr.mxu0 0.0
        %4468 = vmatpush1.msra.mxu0 %v4426
        %4469 = vmatprep.subr.mxu0 0.0
        %4470 = vmatpush1.msra.mxu0 %v4425
        %4471 = vmatprep.subr.mxu0 0.0
        %4472 = vmatpush1.msra.mxu0 %v4424
        %4473 = vmatprep.subr.mxu0 0.0
        %4474 = vmatpush1.msra.mxu0 %v4423
        %4475 = vmatprep.subr.mxu0 0.0
        %4476 = vmatpush1.msra.mxu0 %v4422
        %4477 = vmatprep.subr.mxu0 0.0
        %4478 = vmatpush2.msra.mxu0 0.0
        %4479 = vmatprep.subr.mxu0 0.0
        %4480 = vmatpush2.msra.mxu0 0.0
        %4481 = vmatprep.subr.mxu0 0.0
        %4482 = vmatpush2.msra.mxu0 0.0
        %4483 = vmatprep.subr.mxu0 0.0
        %4484 = vmatpush2.msra.mxu0 0.0
        %4485 = vmatprep.subr.mxu0 0.0
        %4486 = vmatpush2.msra.mxu0 0.0
        %4487 = vmatprep.subr.mxu0 0.0
        %4488 = vmatpush2.msra.mxu0 0.0
        %4489 = vmatprep.subr.mxu0 0.0
        %4490 = vmatpush2.msra.mxu0 0.0
        %4491 = vmatprep.subr.mxu0 0.0
        %4492 = vmatpush2.msra.mxu0 0.0
        %4493 = vmatprep.subr.mxu0 0.0
        %4494 = vmatpush2.msra.mxu0 0.0
        %4495 = vmatprep.subr.mxu0 0.0
        %4496 = vmatpush2.msra.mxu0 0.0
        %4497 = vmatprep.subr.mxu0 0.0
        %4498 = vmatpush2.msra.mxu0 0.0
        %4499 = vmatprep.subr.mxu0 0.0
        %4500 = vmatpush2.msra.mxu0 0.0
        %4501 = vmatprep.subr.mxu0 0.0
        %4502 = vmatpush2.msra.mxu0 0.0
        %4503 = vmatprep.subr.mxu0 0.0
        %4504 = vmatpush2.msra.mxu0 0.0
        %4505 = vmatprep.subr.mxu0 0.0
        %4506 = vmatpush2.msra.mxu0 0.0
        %4507 = vmatprep.subr.mxu0 0.0
        %4508 = vmatpush2.msra.mxu0 0.0
        %4509 = vmatprep.mubr.f32.mxu0 0.0
        %4510 = vmatmul.mubr.f32.gmra.mxu0 %v4442
        %v4511 = vpop.f32.mrf.mxu0
        %v4512 = vadd.f32 0.0, %v4511
        %v4513 = vpop.f32.mrf.mxu0
        %4514 = vmatprep.mubr.f32.mxu0 0.0
        %4515 = vmatmul.mubr.f32.gmra.mxu0 %v4441
        %v4516 = vpop.f32.mrf.mxu0
        %v4517 = vadd.f32 0.0, %v4516
        %v4518 = vpop.f32.mrf.mxu0
        %4519 = vdwg.mxu0
        %v4520 = vadd.f32 %v4419, %v4512
        %v4521 = vadd.f32 %v4420, %v4517
        %4522 = vst [vmem:[#allocation2] sm:$0xff] %v4520
        %4523 = vst [vmem:[#allocation2 + $0x8] sm:$0x7f] %v4521
        %v4524 = vld [vmem:[#allocation2] sm:$0xff]
        %v4525 = vld [vmem:[#allocation2 + $0x8] sm:$0xff]
        %v4526 = vld [vmem:[%s61] sm:$0x1]
        %v4528 = vlaneseq
        %v4529 = vshrl.u32 %v4528, 7
        %v4530 = vsub.s32 0, %v4529
        %v4531 = vrot.slane %v4526, %v4530
        %v4533 = vadd.f32 %v4524, %v4531
        %v4534 = vadd.f32 %v4525, %v4531
        %v4535 = vmax.f32 %v4533, 0.0
        %v4536 = vmax.f32 %v4534, 0.0
        %v4537 = vld [vmem:[#allocation39] sm:$0xff]
        %v4538 = vld [vmem:[#allocation39 + $0x8] sm:$0xff]
        %v4539 = vld [vmem:[#allocation39 + $0x10] sm:$0xff]
        %v4540 = vld [vmem:[#allocation39 + $0x18] sm:$0xff]
        %v4541 = vld [vmem:[#allocation39 + $0x20] sm:$0xff]
        %v4542 = vld [vmem:[#allocation39 + $0x28] sm:$0xff]
        %v4543 = vld [vmem:[#allocation39 + $0x30] sm:$0xff]
        %v4544 = vld [vmem:[#allocation39 + $0x38] sm:$0xff]
        %v4545 = vld [vmem:[#allocation39 + $0x40] sm:$0xff]
        %v4546 = vld [vmem:[#allocation39 + $0x48] sm:$0xff]
        %v4547 = vld [vmem:[#allocation39 + $0x50] sm:$0xff]
        %v4548 = vld [vmem:[#allocation39 + $0x58] sm:$0xff]
        %v4549 = vld [vmem:[#allocation39 + $0x60] sm:$0xff]
        %v4550 = vld [vmem:[#allocation39 + $0x68] sm:$0xff]
        %v4551 = vld [vmem:[#allocation39 + $0x70] sm:$0xff]
        %v4552 = vld [vmem:[#allocation39 + $0x78] sm:$0xff]
        %v4553 = vld [vmem:[%s65] sm:$0x1]
        %v4555 = vlaneseq
        %v4556 = vshrl.u32 %v4555, 7
        %v4557 = vsub.s32 0, %v4556
        %v4558 = vrot.slane %v4553, %v4557
        %4560 = vmatprep.subr.mxu0 0.0
        %4561 = vmatpush1.msra.mxu0 %v4552
        %4562 = vmatprep.subr.mxu0 0.0
        %4563 = vmatpush1.msra.mxu0 %v4551
        %4564 = vmatprep.subr.mxu0 0.0
        %4565 = vmatpush1.msra.mxu0 %v4550
        %4566 = vmatprep.subr.mxu0 0.0
        %4567 = vmatpush1.msra.mxu0 %v4549
        %4568 = vmatprep.subr.mxu0 0.0
        %4569 = vmatpush1.msra.mxu0 %v4548
        %4570 = vmatprep.subr.mxu0 0.0
        %4571 = vmatpush1.msra.mxu0 %v4547
        %4572 = vmatprep.subr.mxu0 0.0
        %4573 = vmatpush1.msra.mxu0 %v4546
        %4574 = vmatprep.subr.mxu0 0.0
        %4575 = vmatpush1.msra.mxu0 %v4545
        %4576 = vmatprep.subr.mxu0 0.0
        %4577 = vmatpush1.msra.mxu0 %v4544
        %4578 = vmatprep.subr.mxu0 0.0
        %4579 = vmatpush1.msra.mxu0 %v4543
        %4580 = vmatprep.subr.mxu0 0.0
        %4581 = vmatpush1.msra.mxu0 %v4542
        %4582 = vmatprep.subr.mxu0 0.0
        %4583 = vmatpush1.msra.mxu0 %v4541
        %4584 = vmatprep.subr.mxu0 0.0
        %4585 = vmatpush1.msra.mxu0 %v4540
        %4586 = vmatprep.subr.mxu0 0.0
        %4587 = vmatpush1.msra.mxu0 %v4539
        %4588 = vmatprep.subr.mxu0 0.0
        %4589 = vmatpush1.msra.mxu0 %v4538
        %4590 = vmatprep.subr.mxu0 0.0
        %4591 = vmatpush1.msra.mxu0 %v4537
        %4592 = vmatprep.subr.mxu0 0.0
        %4593 = vmatpush2.msra.mxu0 0.0
        %4594 = vmatprep.subr.mxu0 0.0
        %4595 = vmatpush2.msra.mxu0 0.0
        %4596 = vmatprep.subr.mxu0 0.0
        %4597 = vmatpush2.msra.mxu0 0.0
        %4598 = vmatprep.subr.mxu0 0.0
        %4599 = vmatpush2.msra.mxu0 0.0
        %4600 = vmatprep.subr.mxu0 0.0
        %4601 = vmatpush2.msra.mxu0 0.0
        %4602 = vmatprep.subr.mxu0 0.0
        %4603 = vmatpush2.msra.mxu0 0.0
        %4604 = vmatprep.subr.mxu0 0.0
        %4605 = vmatpush2.msra.mxu0 0.0
        %4606 = vmatprep.subr.mxu0 0.0
        %4607 = vmatpush2.msra.mxu0 0.0
        %4608 = vmatprep.subr.mxu0 0.0
        %4609 = vmatpush2.msra.mxu0 0.0
        %4610 = vmatprep.subr.mxu0 0.0
        %4611 = vmatpush2.msra.mxu0 0.0
        %4612 = vmatprep.subr.mxu0 0.0
        %4613 = vmatpush2.msra.mxu0 0.0
        %4614 = vmatprep.subr.mxu0 0.0
        %4615 = vmatpush2.msra.mxu0 0.0
        %4616 = vmatprep.subr.mxu0 0.0
        %4617 = vmatpush2.msra.mxu0 0.0
        %4618 = vmatprep.subr.mxu0 0.0
        %4619 = vmatpush2.msra.mxu0 0.0
        %4620 = vmatprep.subr.mxu0 0.0
        %4621 = vmatpush2.msra.mxu0 0.0
        %4622 = vmatprep.subr.mxu0 0.0
        %4623 = vmatpush2.msra.mxu0 0.0
        %4624 = vmatprep.mubr.f32.mxu0 0.0
        %4625 = vmatmul.mubr.f32.gmra.mxu0 %v4535
        %v4626 = vpop.f32.mrf.mxu0
        %v4627 = vadd.f32 %v4558, %v4626
        %v4628 = vpop.f32.mrf.mxu0
        %4629 = vmatprep.mubr.f32.mxu0 0.0
        %4630 = vmatmul.mubr.f32.gmra.mxu0 %v4536
        %v4631 = vpop.f32.mrf.mxu0
        %v4632 = vadd.f32 %v4558, %v4631
        %v4633 = vpop.f32.mrf.mxu0
        %4634 = vdwg.mxu0
        %v4635 = vmax.f32 %v4627, 0.0
        %v4636 = vmax.f32 %v4632, 0.0
        %4637 = vst [vmem:[#allocation2] sm:$0xff] 0.0
        %4638 = vst [vmem:[#allocation2 + $0x8] sm:$0xff] 0.0
        %v4639 = vld [vmem:[#allocation2] sm:$0xff]
        %v4640 = vld [vmem:[#allocation2 + $0x8] sm:$0xff]
        %v4641 = vld [vmem:[#allocation41] sm:$0xff]
        %v4642 = vld [vmem:[#allocation41 + $0x8] sm:$0xff]
        %v4643 = vld [vmem:[#allocation41 + $0x10] sm:$0xff]
        %v4644 = vld [vmem:[#allocation41 + $0x18] sm:$0xff]
        %v4645 = vld [vmem:[#allocation41 + $0x20] sm:$0xff]
        %v4646 = vld [vmem:[#allocation41 + $0x28] sm:$0xff]
        %v4647 = vld [vmem:[#allocation41 + $0x30] sm:$0xff]
        %v4648 = vld [vmem:[#allocation41 + $0x38] sm:$0xff]
        %v4649 = vld [vmem:[#allocation41 + $0x40] sm:$0xff]
        %v4650 = vld [vmem:[#allocation41 + $0x48] sm:$0xff]
        %v4651 = vld [vmem:[#allocation41 + $0x50] sm:$0xff]
        %v4652 = vld [vmem:[#allocation41 + $0x58] sm:$0xff]
        %v4653 = vld [vmem:[#allocation41 + $0x60] sm:$0xff]
        %v4654 = vld [vmem:[#allocation41 + $0x68] sm:$0xff]
        %v4655 = vld [vmem:[#allocation41 + $0x70] sm:$0xff]
        %v4656 = vld [vmem:[#allocation41 + $0x78] sm:$0xff]
        %4657 = vmatprep.subr.mxu0 0.0
        %4658 = vmatpush1.msra.mxu0 %v4656
        %4659 = vmatprep.subr.mxu0 0.0
        %4660 = vmatpush1.msra.mxu0 %v4655
        %4661 = vmatprep.subr.mxu0 0.0
        %4662 = vmatpush1.msra.mxu0 %v4654
        %4663 = vmatprep.subr.mxu0 0.0
        %4664 = vmatpush1.msra.mxu0 %v4653
        %4665 = vmatprep.subr.mxu0 0.0
        %4666 = vmatpush1.msra.mxu0 %v4652
        %4667 = vmatprep.subr.mxu0 0.0
        %4668 = vmatpush1.msra.mxu0 %v4651
        %4669 = vmatprep.subr.mxu0 0.0
        %4670 = vmatpush1.msra.mxu0 %v4650
        %4671 = vmatprep.subr.mxu0 0.0
        %4672 = vmatpush1.msra.mxu0 %v4649
        %4673 = vmatprep.subr.mxu0 0.0
        %4674 = vmatpush1.msra.mxu0 %v4648
        %4675 = vmatprep.subr.mxu0 0.0
        %4676 = vmatpush1.msra.mxu0 %v4647
        %4677 = vmatprep.subr.mxu0 0.0
        %4678 = vmatpush1.msra.mxu0 %v4646
        %4679 = vmatprep.subr.mxu0 0.0
        %4680 = vmatpush1.msra.mxu0 %v4645
        %4681 = vmatprep.subr.mxu0 0.0
        %4682 = vmatpush1.msra.mxu0 %v4644
        %4683 = vmatprep.subr.mxu0 0.0
        %4684 = vmatpush1.msra.mxu0 %v4643
        %4685 = vmatprep.subr.mxu0 0.0
        %4686 = vmatpush1.msra.mxu0 %v4642
        %4687 = vmatprep.subr.mxu0 0.0
        %4688 = vmatpush1.msra.mxu0 %v4641
        %4689 = vmatprep.subr.mxu0 0.0
        %4690 = vmatpush2.msra.mxu0 0.0
        %4691 = vmatprep.subr.mxu0 0.0
        %4692 = vmatpush2.msra.mxu0 0.0
        %4693 = vmatprep.subr.mxu0 0.0
        %4694 = vmatpush2.msra.mxu0 0.0
        %4695 = vmatprep.subr.mxu0 0.0
        %4696 = vmatpush2.msra.mxu0 0.0
        %4697 = vmatprep.subr.mxu0 0.0
        %4698 = vmatpush2.msra.mxu0 0.0
        %4699 = vmatprep.subr.mxu0 0.0
        %4700 = vmatpush2.msra.mxu0 0.0
        %4701 = vmatprep.subr.mxu0 0.0
        %4702 = vmatpush2.msra.mxu0 0.0
        %4703 = vmatprep.subr.mxu0 0.0
        %4704 = vmatpush2.msra.mxu0 0.0
        %4705 = vmatprep.subr.mxu0 0.0
        %4706 = vmatpush2.msra.mxu0 0.0
        %4707 = vmatprep.subr.mxu0 0.0
        %4708 = vmatpush2.msra.mxu0 0.0
        %4709 = vmatprep.subr.mxu0 0.0
        %4710 = vmatpush2.msra.mxu0 0.0
        %4711 = vmatprep.subr.mxu0 0.0
        %4712 = vmatpush2.msra.mxu0 0.0
        %4713 = vmatprep.subr.mxu0 0.0
        %4714 = vmatpush2.msra.mxu0 0.0
        %4715 = vmatprep.subr.mxu0 0.0
        %4716 = vmatpush2.msra.mxu0 0.0
        %4717 = vmatprep.subr.mxu0 0.0
        %4718 = vmatpush2.msra.mxu0 0.0
        %4719 = vmatprep.subr.mxu0 0.0
        %4720 = vmatpush2.msra.mxu0 0.0
        %4721 = vmatprep.mubr.f32.mxu0 0.0
        %4722 = vmatmul.mubr.f32.gmra.mxu0 %v4635
        %v4723 = vpop.f32.mrf.mxu0
        %v4724 = vadd.f32 0.0, %v4723
        %v4725 = vpop.f32.mrf.mxu0
        %4726 = vmatprep.mubr.f32.mxu0 0.0
        %4727 = vmatmul.mubr.f32.gmra.mxu0 %v4636
        %v4728 = vpop.f32.mrf.mxu0
        %v4729 = vadd.f32 0.0, %v4728
        %v4730 = vpop.f32.mrf.mxu0
        %4731 = vdwg.mxu0
        %v4732 = vadd.f32 %v4639, %v4724
        %v4733 = vadd.f32 %v4640, %v4729
        %4734 = vst [vmem:[#allocation2] sm:$0xff] %v4732
        %4735 = vst [vmem:[#allocation2 + $0x8] sm:$0xff] %v4733
        %v4736 = vld [vmem:[#allocation2] sm:$0xff]
        %v4737 = vld [vmem:[#allocation2 + $0x8] sm:$0xff]
        %v4738 = vld [vmem:[%s69] sm:$0x1]
        %v4740 = vlaneseq
        %v4741 = vshrl.u32 %v4740, 7
        %v4742 = vsub.s32 0, %v4741
        %v4743 = vrot.slane %v4738, %v4742
        %v4745 = vadd.f32 %v4736, %v4743
        %v4746 = vadd.f32 %v4737, %v4743
        %v4747 = vmax.f32 %v4745, 0.0
        %v4748 = vmax.f32 %v4746, 0.0
        %v4749 = vld [vmem:[#allocation42] sm:$0xff]
        %v4750 = vld [vmem:[#allocation42 + $0x8] sm:$0xff]
        %v4751 = vld [vmem:[#allocation42 + $0x10] sm:$0xff]
        %v4752 = vld [vmem:[#allocation42 + $0x18] sm:$0xff]
        %v4753 = vld [vmem:[#allocation42 + $0x20] sm:$0xff]
        %v4754 = vld [vmem:[#allocation42 + $0x28] sm:$0xff]
        %v4755 = vld [vmem:[#allocation42 + $0x30] sm:$0xff]
        %v4756 = vld [vmem:[#allocation42 + $0x38] sm:$0xff]
        %v4757 = vld [vmem:[#allocation42 + $0x40] sm:$0xff]
        %v4758 = vld [vmem:[#allocation42 + $0x48] sm:$0xff]
        %v4759 = vld [vmem:[#allocation42 + $0x50] sm:$0xff]
        %v4760 = vld [vmem:[#allocation42 + $0x58] sm:$0xff]
        %v4761 = vld [vmem:[#allocation42 + $0x60] sm:$0xff]
        %v4762 = vld [vmem:[#allocation42 + $0x68] sm:$0xff]
        %v4763 = vld [vmem:[#allocation42 + $0x70] sm:$0xff]
        %v4764 = vld [vmem:[#allocation42 + $0x78] sm:$0xff]
        %v4765 = vld [vmem:[%s73] sm:$0x1]
        %v4767 = vlaneseq
        %v4768 = vshrl.u32 %v4767, 7
        %v4769 = vsub.s32 0, %v4768
        %v4770 = vrot.slane %v4765, %v4769
        %4772 = vmatprep.subr.mxu0 0.0
        %4773 = vmatpush1.msra.mxu0 %v4764
        %4774 = vmatprep.subr.mxu0 0.0
        %4775 = vmatpush1.msra.mxu0 %v4763
        %4776 = vmatprep.subr.mxu0 0.0
        %4777 = vmatpush1.msra.mxu0 %v4762
        %4778 = vmatprep.subr.mxu0 0.0
        %4779 = vmatpush1.msra.mxu0 %v4761
        %4780 = vmatprep.subr.mxu0 0.0
        %4781 = vmatpush1.msra.mxu0 %v4760
        %4782 = vmatprep.subr.mxu0 0.0
        %4783 = vmatpush1.msra.mxu0 %v4759
        %4784 = vmatprep.subr.mxu0 0.0
        %4785 = vmatpush1.msra.mxu0 %v4758
        %4786 = vmatprep.subr.mxu0 0.0
        %4787 = vmatpush1.msra.mxu0 %v4757
        %4788 = vmatprep.subr.mxu0 0.0
        %4789 = vmatpush1.msra.mxu0 %v4756
        %4790 = vmatprep.subr.mxu0 0.0
        %4791 = vmatpush1.msra.mxu0 %v4755
        %4792 = vmatprep.subr.mxu0 0.0
        %4793 = vmatpush1.msra.mxu0 %v4754
        %4794 = vmatprep.subr.mxu0 0.0
        %4795 = vmatpush1.msra.mxu0 %v4753
        %4796 = vmatprep.subr.mxu0 0.0
        %4797 = vmatpush1.msra.mxu0 %v4752
        %4798 = vmatprep.subr.mxu0 0.0
        %4799 = vmatpush1.msra.mxu0 %v4751
        %4800 = vmatprep.subr.mxu0 0.0
        %4801 = vmatpush1.msra.mxu0 %v4750
        %4802 = vmatprep.subr.mxu0 0.0
        %4803 = vmatpush1.msra.mxu0 %v4749
        %4804 = vmatprep.subr.mxu0 0.0
        %4805 = vmatpush2.msra.mxu0 0.0
        %4806 = vmatprep.subr.mxu0 0.0
        %4807 = vmatpush2.msra.mxu0 0.0
        %4808 = vmatprep.subr.mxu0 0.0
        %4809 = vmatpush2.msra.mxu0 0.0
        %4810 = vmatprep.subr.mxu0 0.0
        %4811 = vmatpush2.msra.mxu0 0.0
        %4812 = vmatprep.subr.mxu0 0.0
        %4813 = vmatpush2.msra.mxu0 0.0
        %4814 = vmatprep.subr.mxu0 0.0
        %4815 = vmatpush2.msra.mxu0 0.0
        %4816 = vmatprep.subr.mxu0 0.0
        %4817 = vmatpush2.msra.mxu0 0.0
        %4818 = vmatprep.subr.mxu0 0.0
        %4819 = vmatpush2.msra.mxu0 0.0
        %4820 = vmatprep.subr.mxu0 0.0
        %4821 = vmatpush2.msra.mxu0 0.0
        %4822 = vmatprep.subr.mxu0 0.0
        %4823 = vmatpush2.msra.mxu0 0.0
        %4824 = vmatprep.subr.mxu0 0.0
        %4825 = vmatpush2.msra.mxu0 0.0
        %4826 = vmatprep.subr.mxu0 0.0
        %4827 = vmatpush2.msra.mxu0 0.0
        %4828 = vmatprep.subr.mxu0 0.0
        %4829 = vmatpush2.msra.mxu0 0.0
        %4830 = vmatprep.subr.mxu0 0.0
        %4831 = vmatpush2.msra.mxu0 0.0
        %4832 = vmatprep.subr.mxu0 0.0
        %4833 = vmatpush2.msra.mxu0 0.0
        %4834 = vmatprep.subr.mxu0 0.0
        %4835 = vmatpush2.msra.mxu0 0.0
        %4836 = vmatprep.mubr.f32.mxu0 0.0
        %4837 = vmatmul.mubr.f32.gmra.mxu0 %v4747
        %v4838 = vpop.f32.mrf.mxu0
        %v4839 = vadd.f32 %v4770, %v4838
        %v4840 = vpop.f32.mrf.mxu0
        %4841 = vmatprep.mubr.f32.mxu0 0.0
        %4842 = vmatmul.mubr.f32.gmra.mxu0 %v4748
        %v4843 = vpop.f32.mrf.mxu0
        %v4844 = vadd.f32 %v4770, %v4843
        %v4845 = vpop.f32.mrf.mxu0
        %4846 = vdwg.mxu0
        %v4847 = vmax.f32 %v4839, 0.0
        %v4848 = vmax.f32 %v4844, 0.0
        %4849 = vst [vmem:[#allocation2] sm:$0xff] 0.0
        %4850 = vst [vmem:[#allocation2 + $0x8] sm:$0xff] 0.0
        %v4851 = vld [vmem:[#allocation2 + $0x5] sm:$0xff]
        %v4852 = vld [vmem:[#allocation2 + $0xd] sm:$0x7]
        %v4853 = vld [vmem:[#allocation44] sm:$0xff]
        %v4854 = vld [vmem:[#allocation44 + $0x8] sm:$0xff]
        %v4855 = vld [vmem:[#allocation44 + $0x10] sm:$0xff]
        %v4856 = vld [vmem:[#allocation44 + $0x18] sm:$0xff]
        %v4857 = vld [vmem:[#allocation44 + $0x20] sm:$0xff]
        %v4858 = vld [vmem:[#allocation44 + $0x28] sm:$0xff]
        %v4859 = vld [vmem:[#allocation44 + $0x30] sm:$0xff]
        %v4860 = vld [vmem:[#allocation44 + $0x38] sm:$0xff]
        %v4861 = vld [vmem:[#allocation44 + $0x40] sm:$0xff]
        %v4862 = vld [vmem:[#allocation44 + $0x48] sm:$0xff]
        %v4863 = vld [vmem:[#allocation44 + $0x50] sm:$0xff]
        %v4864 = vld [vmem:[#allocation44 + $0x58] sm:$0xff]
        %v4865 = vld [vmem:[#allocation44 + $0x60] sm:$0xff]
        %v4866 = vld [vmem:[#allocation44 + $0x68] sm:$0xff]
        %v4867 = vld [vmem:[#allocation44 + $0x70] sm:$0xff]
        %v4868 = vld [vmem:[#allocation44 + $0x78] sm:$0xff]
        %4869 = vmatprep.subr.mxu0 0.0
        %4870 = vmatpush1.msra.mxu0 %v4868
        %4871 = vmatprep.subr.mxu0 0.0
        %4872 = vmatpush1.msra.mxu0 %v4867
        %4873 = vmatprep.subr.mxu0 0.0
        %4874 = vmatpush1.msra.mxu0 %v4866
        %4875 = vmatprep.subr.mxu0 0.0
        %4876 = vmatpush1.msra.mxu0 %v4865
        %4877 = vmatprep.subr.mxu0 0.0
        %4878 = vmatpush1.msra.mxu0 %v4864
        %4879 = vmatprep.subr.mxu0 0.0
        %4880 = vmatpush1.msra.mxu0 %v4863
        %4881 = vmatprep.subr.mxu0 0.0
        %4882 = vmatpush1.msra.mxu0 %v4862
        %4883 = vmatprep.subr.mxu0 0.0
        %4884 = vmatpush1.msra.mxu0 %v4861
        %4885 = vmatprep.subr.mxu0 0.0
        %4886 = vmatpush1.msra.mxu0 %v4860
        %4887 = vmatprep.subr.mxu0 0.0
        %4888 = vmatpush1.msra.mxu0 %v4859
        %4889 = vmatprep.subr.mxu0 0.0
        %4890 = vmatpush1.msra.mxu0 %v4858
        %4891 = vmatprep.subr.mxu0 0.0
        %4892 = vmatpush1.msra.mxu0 %v4857
        %4893 = vmatprep.subr.mxu0 0.0
        %4894 = vmatpush1.msra.mxu0 %v4856
        %4895 = vmatprep.subr.mxu0 0.0
        %4896 = vmatpush1.msra.mxu0 %v4855
        %4897 = vmatprep.subr.mxu0 0.0
        %4898 = vmatpush1.msra.mxu0 %v4854
        %4899 = vmatprep.subr.mxu0 0.0
        %4900 = vmatpush1.msra.mxu0 %v4853
        %4901 = vmatprep.subr.mxu0 0.0
        %4902 = vmatpush2.msra.mxu0 0.0
        %4903 = vmatprep.subr.mxu0 0.0
        %4904 = vmatpush2.msra.mxu0 0.0
        %4905 = vmatprep.subr.mxu0 0.0
        %4906 = vmatpush2.msra.mxu0 0.0
        %4907 = vmatprep.subr.mxu0 0.0
        %4908 = vmatpush2.msra.mxu0 0.0
        %4909 = vmatprep.subr.mxu0 0.0
        %4910 = vmatpush2.msra.mxu0 0.0
        %4911 = vmatprep.subr.mxu0 0.0
        %4912 = vmatpush2.msra.mxu0 0.0
        %4913 = vmatprep.subr.mxu0 0.0
        %4914 = vmatpush2.msra.mxu0 0.0
        %4915 = vmatprep.subr.mxu0 0.0
        %4916 = vmatpush2.msra.mxu0 0.0
        %4917 = vmatprep.subr.mxu0 0.0
        %4918 = vmatpush2.msra.mxu0 0.0
        %4919 = vmatprep.subr.mxu0 0.0
        %4920 = vmatpush2.msra.mxu0 0.0
        %4921 = vmatprep.subr.mxu0 0.0
        %4922 = vmatpush2.msra.mxu0 0.0
        %4923 = vmatprep.subr.mxu0 0.0
        %4924 = vmatpush2.msra.mxu0 0.0
        %4925 = vmatprep.subr.mxu0 0.0
        %4926 = vmatpush2.msra.mxu0 0.0
        %4927 = vmatprep.subr.mxu0 0.0
        %4928 = vmatpush2.msra.mxu0 0.0
        %4929 = vmatprep.subr.mxu0 0.0
        %4930 = vmatpush2.msra.mxu0 0.0
        %4931 = vmatprep.subr.mxu0 0.0
        %4932 = vmatpush2.msra.mxu0 0.0
        %4933 = vmatprep.mubr.f32.mxu0 0.0
        %4934 = vmatmul.mubr.f32.gmra.mxu0 %v4847
        %v4935 = vpop.f32.mrf.mxu0
        %v4936 = vadd.f32 0.0, %v4935
        %v4937 = vpop.f32.mrf.mxu0
        %4938 = vmatprep.mubr.f32.mxu0 0.0
        %4939 = vmatmul.mubr.f32.gmra.mxu0 %v4848
        %v4940 = vpop.f32.mrf.mxu0
        %v4941 = vadd.f32 0.0, %v4940
        %v4942 = vpop.f32.mrf.mxu0
        %4943 = vdwg.mxu0
        %v4944 = vadd.f32 %v4851, %v4936
        %v4945 = vadd.f32 %v4852, %v4941
        %4946 = vst [vmem:[#allocation2 + $0x5] sm:$0xff] %v4944
        %4947 = vst [vmem:[#allocation2 + $0xd] sm:$0x7] %v4945
        %v4948 = vld [vmem:[#allocation2] sm:$0xff]
        %v4949 = vld [vmem:[#allocation2 + $0x8] sm:$0xff]
        %s4950 = scalar_lea.vmem [#allocation44], 128
        %v4951 = vld [vmem:[%s4950] sm:$0xff]
        %v4952 = vld [vmem:[%s4950 + $0x8] sm:$0xff]
        %v4953 = vld [vmem:[%s4950 + $0x10] sm:$0xff]
        %v4954 = vld [vmem:[%s4950 + $0x18] sm:$0xff]
        %v4955 = vld [vmem:[%s4950 + $0x20] sm:$0xff]
        %v4956 = vld [vmem:[%s4950 + $0x28] sm:$0xff]
        %v4957 = vld [vmem:[%s4950 + $0x30] sm:$0xff]
        %v4958 = vld [vmem:[%s4950 + $0x38] sm:$0xff]
        %v4959 = vld [vmem:[%s4950 + $0x40] sm:$0xff]
        %v4960 = vld [vmem:[%s4950 + $0x48] sm:$0xff]
        %v4961 = vld [vmem:[%s4950 + $0x50] sm:$0xff]
        %v4962 = vld [vmem:[%s4950 + $0x58] sm:$0xff]
        %v4963 = vld [vmem:[%s4950 + $0x60] sm:$0xff]
        %v4964 = vld [vmem:[%s4950 + $0x68] sm:$0xff]
        %v4965 = vld [vmem:[%s4950 + $0x70] sm:$0xff]
        %v4966 = vld [vmem:[%s4950 + $0x78] sm:$0xff]
        %4967 = vmatprep.subr.mxu0 0.0
        %4968 = vmatpush1.msra.mxu0 %v4966
        %4969 = vmatprep.subr.mxu0 0.0
        %4970 = vmatpush1.msra.mxu0 %v4965
        %4971 = vmatprep.subr.mxu0 0.0
        %4972 = vmatpush1.msra.mxu0 %v4964
        %4973 = vmatprep.subr.mxu0 0.0
        %4974 = vmatpush1.msra.mxu0 %v4963
        %4975 = vmatprep.subr.mxu0 0.0
        %4976 = vmatpush1.msra.mxu0 %v4962
        %4977 = vmatprep.subr.mxu0 0.0
        %4978 = vmatpush1.msra.mxu0 %v4961
        %4979 = vmatprep.subr.mxu0 0.0
        %4980 = vmatpush1.msra.mxu0 %v4960
        %4981 = vmatprep.subr.mxu0 0.0
        %4982 = vmatpush1.msra.mxu0 %v4959
        %4983 = vmatprep.subr.mxu0 0.0
        %4984 = vmatpush1.msra.mxu0 %v4958
        %4985 = vmatprep.subr.mxu0 0.0
        %4986 = vmatpush1.msra.mxu0 %v4957
        %4987 = vmatprep.subr.mxu0 0.0
        %4988 = vmatpush1.msra.mxu0 %v4956
        %4989 = vmatprep.subr.mxu0 0.0
        %4990 = vmatpush1.msra.mxu0 %v4955
        %4991 = vmatprep.subr.mxu0 0.0
        %4992 = vmatpush1.msra.mxu0 %v4954
        %4993 = vmatprep.subr.mxu0 0.0
        %4994 = vmatpush1.msra.mxu0 %v4953
        %4995 = vmatprep.subr.mxu0 0.0
        %4996 = vmatpush1.msra.mxu0 %v4952
        %4997 = vmatprep.subr.mxu0 0.0
        %4998 = vmatpush1.msra.mxu0 %v4951
        %4999 = vmatprep.subr.mxu0 0.0
        %5000 = vmatpush2.msra.mxu0 0.0
        %5001 = vmatprep.subr.mxu0 0.0
        %5002 = vmatpush2.msra.mxu0 0.0
        %5003 = vmatprep.subr.mxu0 0.0
        %5004 = vmatpush2.msra.mxu0 0.0
        %5005 = vmatprep.subr.mxu0 0.0
        %5006 = vmatpush2.msra.mxu0 0.0
        %5007 = vmatprep.subr.mxu0 0.0
        %5008 = vmatpush2.msra.mxu0 0.0
        %5009 = vmatprep.subr.mxu0 0.0
        %5010 = vmatpush2.msra.mxu0 0.0
        %5011 = vmatprep.subr.mxu0 0.0
        %5012 = vmatpush2.msra.mxu0 0.0
        %5013 = vmatprep.subr.mxu0 0.0
        %5014 = vmatpush2.msra.mxu0 0.0
        %5015 = vmatprep.subr.mxu0 0.0
        %5016 = vmatpush2.msra.mxu0 0.0
        %5017 = vmatprep.subr.mxu0 0.0
        %5018 = vmatpush2.msra.mxu0 0.0
        %5019 = vmatprep.subr.mxu0 0.0
        %5020 = vmatpush2.msra.mxu0 0.0
        %5021 = vmatprep.subr.mxu0 0.0
        %5022 = vmatpush2.msra.mxu0 0.0
        %5023 = vmatprep.subr.mxu0 0.0
        %5024 = vmatpush2.msra.mxu0 0.0
        %5025 = vmatprep.subr.mxu0 0.0
        %5026 = vmatpush2.msra.mxu0 0.0
        %5027 = vmatprep.subr.mxu0 0.0
        %5028 = vmatpush2.msra.mxu0 0.0
        %5029 = vmatprep.subr.mxu0 0.0
        %5030 = vmatpush2.msra.mxu0 0.0
        %5031 = vmatprep.mubr.f32.mxu0 0.0
        %5032 = vmatmul.mubr.f32.gmra.mxu0 %v4847
        %v5033 = vpop.f32.mrf.mxu0
        %v5034 = vadd.f32 0.0, %v5033
        %v5035 = vpop.f32.mrf.mxu0
        %5036 = vmatprep.mubr.f32.mxu0 0.0
        %5037 = vmatmul.mubr.f32.gmra.mxu0 %v4848
        %v5038 = vpop.f32.mrf.mxu0
        %v5039 = vadd.f32 0.0, %v5038
        %v5040 = vpop.f32.mrf.mxu0
        %5041 = vdwg.mxu0
        %v5042 = vadd.f32 %v4948, %v5034
        %v5043 = vadd.f32 %v4949, %v5039
        %5044 = vst [vmem:[#allocation2] sm:$0xff] %v5042
        %5045 = vst [vmem:[#allocation2 + $0x8] sm:$0xff] %v5043
        %v5046 = vld [vmem:[#allocation2] sm:$0xff]
        %v5047 = vld [vmem:[#allocation2 + $0x8] sm:$0x7]
        %s5048 = scalar_lea.vmem [#allocation44], 256
        %v5049 = vld [vmem:[%s5048] sm:$0xff]
        %v5050 = vld [vmem:[%s5048 + $0x8] sm:$0xff]
        %v5051 = vld [vmem:[%s5048 + $0x10] sm:$0xff]
        %v5052 = vld [vmem:[%s5048 + $0x18] sm:$0xff]
        %v5053 = vld [vmem:[%s5048 + $0x20] sm:$0xff]
        %v5054 = vld [vmem:[%s5048 + $0x28] sm:$0xff]
        %v5055 = vld [vmem:[%s5048 + $0x30] sm:$0xff]
        %v5056 = vld [vmem:[%s5048 + $0x38] sm:$0xff]
        %v5057 = vld [vmem:[%s5048 + $0x40] sm:$0xff]
        %v5058 = vld [vmem:[%s5048 + $0x48] sm:$0xff]
        %v5059 = vld [vmem:[%s5048 + $0x50] sm:$0xff]
        %v5060 = vld [vmem:[%s5048 + $0x58] sm:$0xff]
        %v5061 = vld [vmem:[%s5048 + $0x60] sm:$0xff]
        %v5062 = vld [vmem:[%s5048 + $0x68] sm:$0xff]
        %v5063 = vld [vmem:[%s5048 + $0x70] sm:$0xff]
        %v5064 = vld [vmem:[%s5048 + $0x78] sm:$0xff]
        %v5067 = vrot.slane %v4847, 5
        %v5068 = vrot.slane %v4848, 5
        %v5069 = vsel %vm3733, %v5067, %v5068
        %5072 = vmatprep.subr.mxu0 0.0
        %5073 = vmatpush1.msra.mxu0 %v5064
        %5074 = vmatprep.subr.mxu0 0.0
        %5075 = vmatpush1.msra.mxu0 %v5063
        %5076 = vmatprep.subr.mxu0 0.0
        %5077 = vmatpush1.msra.mxu0 %v5062
        %5078 = vmatprep.subr.mxu0 0.0
        %5079 = vmatpush1.msra.mxu0 %v5061
        %5080 = vmatprep.subr.mxu0 0.0
        %5081 = vmatpush1.msra.mxu0 %v5060
        %5082 = vmatprep.subr.mxu0 0.0
        %5083 = vmatpush1.msra.mxu0 %v5059
        %5084 = vmatprep.subr.mxu0 0.0
        %5085 = vmatpush1.msra.mxu0 %v5058
        %5086 = vmatprep.subr.mxu0 0.0
        %5087 = vmatpush1.msra.mxu0 %v5057
        %5088 = vmatprep.subr.mxu0 0.0
        %5089 = vmatpush1.msra.mxu0 %v5056
        %5090 = vmatprep.subr.mxu0 0.0
        %5091 = vmatpush1.msra.mxu0 %v5055
        %5092 = vmatprep.subr.mxu0 0.0
        %5093 = vmatpush1.msra.mxu0 %v5054
        %5094 = vmatprep.subr.mxu0 0.0
        %5095 = vmatpush1.msra.mxu0 %v5053
        %5096 = vmatprep.subr.mxu0 0.0
        %5097 = vmatpush1.msra.mxu0 %v5052
        %5098 = vmatprep.subr.mxu0 0.0
        %5099 = vmatpush1.msra.mxu0 %v5051
        %5100 = vmatprep.subr.mxu0 0.0
        %5101 = vmatpush1.msra.mxu0 %v5050
        %5102 = vmatprep.subr.mxu0 0.0
        %5103 = vmatpush1.msra.mxu0 %v5049
        %5104 = vmatprep.subr.mxu0 0.0
        %5105 = vmatpush2.msra.mxu0 0.0
        %5106 = vmatprep.subr.mxu0 0.0
        %5107 = vmatpush2.msra.mxu0 0.0
        %5108 = vmatprep.subr.mxu0 0.0
        %5109 = vmatpush2.msra.mxu0 0.0
        %5110 = vmatprep.subr.mxu0 0.0
        %5111 = vmatpush2.msra.mxu0 0.0
        %5112 = vmatprep.subr.mxu0 0.0
        %5113 = vmatpush2.msra.mxu0 0.0
        %5114 = vmatprep.subr.mxu0 0.0
        %5115 = vmatpush2.msra.mxu0 0.0
        %5116 = vmatprep.subr.mxu0 0.0
        %5117 = vmatpush2.msra.mxu0 0.0
        %5118 = vmatprep.subr.mxu0 0.0
        %5119 = vmatpush2.msra.mxu0 0.0
        %5120 = vmatprep.subr.mxu0 0.0
        %5121 = vmatpush2.msra.mxu0 0.0
        %5122 = vmatprep.subr.mxu0 0.0
        %5123 = vmatpush2.msra.mxu0 0.0
        %5124 = vmatprep.subr.mxu0 0.0
        %5125 = vmatpush2.msra.mxu0 0.0
        %5126 = vmatprep.subr.mxu0 0.0
        %5127 = vmatpush2.msra.mxu0 0.0
        %5128 = vmatprep.subr.mxu0 0.0
        %5129 = vmatpush2.msra.mxu0 0.0
        %5130 = vmatprep.subr.mxu0 0.0
        %5131 = vmatpush2.msra.mxu0 0.0
        %5132 = vmatprep.subr.mxu0 0.0
        %5133 = vmatpush2.msra.mxu0 0.0
        %5134 = vmatprep.subr.mxu0 0.0
        %5135 = vmatpush2.msra.mxu0 0.0
        %5136 = vmatprep.mubr.f32.mxu0 0.0
        %5137 = vmatmul.mubr.f32.gmra.mxu0 %v5069
        %v5138 = vpop.f32.mrf.mxu0
        %v5139 = vadd.f32 0.0, %v5138
        %v5140 = vpop.f32.mrf.mxu0
        %5141 = vmatprep.mubr.f32.mxu0 0.0
        %5142 = vmatmul.mubr.f32.gmra.mxu0 %v5068
        %v5143 = vpop.f32.mrf.mxu0
        %v5144 = vadd.f32 0.0, %v5143
        %v5145 = vpop.f32.mrf.mxu0
        %5146 = vdwg.mxu0
        %v5147 = vadd.f32 %v5046, %v5139
        %v5148 = vadd.f32 %v5047, %v5144
        %5149 = vst [vmem:[#allocation2] sm:$0xff] %v5147
        %5150 = vst [vmem:[#allocation2 + $0x8] sm:$0x7] %v5148
        %v5151 = vld [vmem:[#allocation2] sm:$0xff]
        %v5152 = vld [vmem:[#allocation2 + $0x8] sm:$0xff]
        %v5153 = vld [vmem:[%s77] sm:$0x1]
        %v5155 = vlaneseq
        %v5156 = vshrl.u32 %v5155, 7
        %v5157 = vsub.s32 0, %v5156
        %v5158 = vrot.slane %v5153, %v5157
        %v5160 = vadd.f32 %v5151, %v5158
        %v5161 = vadd.f32 %v5152, %v5158
        %v5162 = vmax.f32 %v5160, 0.0
        %v5163 = vmax.f32 %v5161, 0.0
        %v5164 = vld [vmem:[#allocation45] sm:$0xff]
        %v5165 = vld [vmem:[#allocation45 + $0x8] sm:$0xff]
        %v5166 = vld [vmem:[#allocation45 + $0x10] sm:$0xff]
        %v5167 = vld [vmem:[#allocation45 + $0x18] sm:$0xff]
        %v5168 = vld [vmem:[#allocation45 + $0x20] sm:$0xff]
        %v5169 = vld [vmem:[#allocation45 + $0x28] sm:$0xff]
        %v5170 = vld [vmem:[#allocation45 + $0x30] sm:$0xff]
        %v5171 = vld [vmem:[#allocation45 + $0x38] sm:$0xff]
        %v5172 = vld [vmem:[#allocation45 + $0x40] sm:$0xff]
        %v5173 = vld [vmem:[#allocation45 + $0x48] sm:$0xff]
        %v5174 = vld [vmem:[#allocation45 + $0x50] sm:$0xff]
        %v5175 = vld [vmem:[#allocation45 + $0x58] sm:$0xff]
        %v5176 = vld [vmem:[#allocation45 + $0x60] sm:$0xff]
        %v5177 = vld [vmem:[#allocation45 + $0x68] sm:$0xff]
        %v5178 = vld [vmem:[#allocation45 + $0x70] sm:$0xff]
        %v5179 = vld [vmem:[#allocation45 + $0x78] sm:$0xff]
        %v5180 = vld [vmem:[%s81] sm:$0x1]
        %v5182 = vlaneseq
        %v5183 = vshrl.u32 %v5182, 7
        %v5184 = vsub.s32 0, %v5183
        %v5185 = vrot.slane %v5180, %v5184
        %5187 = vmatprep.subr.mxu0 0.0
        %5188 = vmatpush1.msra.mxu0 %v5179
        %5189 = vmatprep.subr.mxu0 0.0
        %5190 = vmatpush1.msra.mxu0 %v5178
        %5191 = vmatprep.subr.mxu0 0.0
        %5192 = vmatpush1.msra.mxu0 %v5177
        %5193 = vmatprep.subr.mxu0 0.0
        %5194 = vmatpush1.msra.mxu0 %v5176
        %5195 = vmatprep.subr.mxu0 0.0
        %5196 = vmatpush1.msra.mxu0 %v5175
        %5197 = vmatprep.subr.mxu0 0.0
        %5198 = vmatpush1.msra.mxu0 %v5174
        %5199 = vmatprep.subr.mxu0 0.0
        %5200 = vmatpush1.msra.mxu0 %v5173
        %5201 = vmatprep.subr.mxu0 0.0
        %5202 = vmatpush1.msra.mxu0 %v5172
        %5203 = vmatprep.subr.mxu0 0.0
        %5204 = vmatpush1.msra.mxu0 %v5171
        %5205 = vmatprep.subr.mxu0 0.0
        %5206 = vmatpush1.msra.mxu0 %v5170
        %5207 = vmatprep.subr.mxu0 0.0
        %5208 = vmatpush1.msra.mxu0 %v5169
        %5209 = vmatprep.subr.mxu0 0.0
        %5210 = vmatpush1.msra.mxu0 %v5168
        %5211 = vmatprep.subr.mxu0 0.0
        %5212 = vmatpush1.msra.mxu0 %v5167
        %5213 = vmatprep.subr.mxu0 0.0
        %5214 = vmatpush1.msra.mxu0 %v5166
        %5215 = vmatprep.subr.mxu0 0.0
        %5216 = vmatpush1.msra.mxu0 %v5165
        %5217 = vmatprep.subr.mxu0 0.0
        %5218 = vmatpush1.msra.mxu0 %v5164
        %5219 = vmatprep.subr.mxu0 0.0
        %5220 = vmatpush2.msra.mxu0 0.0
        %5221 = vmatprep.subr.mxu0 0.0
        %5222 = vmatpush2.msra.mxu0 0.0
        %5223 = vmatprep.subr.mxu0 0.0
        %5224 = vmatpush2.msra.mxu0 0.0
        %5225 = vmatprep.subr.mxu0 0.0
        %5226 = vmatpush2.msra.mxu0 0.0
        %5227 = vmatprep.subr.mxu0 0.0
        %5228 = vmatpush2.msra.mxu0 0.0
        %5229 = vmatprep.subr.mxu0 0.0
        %5230 = vmatpush2.msra.mxu0 0.0
        %5231 = vmatprep.subr.mxu0 0.0
        %5232 = vmatpush2.msra.mxu0 0.0
        %5233 = vmatprep.subr.mxu0 0.0
        %5234 = vmatpush2.msra.mxu0 0.0
        %5235 = vmatprep.subr.mxu0 0.0
        %5236 = vmatpush2.msra.mxu0 0.0
        %5237 = vmatprep.subr.mxu0 0.0
        %5238 = vmatpush2.msra.mxu0 0.0
        %5239 = vmatprep.subr.mxu0 0.0
        %5240 = vmatpush2.msra.mxu0 0.0
        %5241 = vmatprep.subr.mxu0 0.0
        %5242 = vmatpush2.msra.mxu0 0.0
        %5243 = vmatprep.subr.mxu0 0.0
        %5244 = vmatpush2.msra.mxu0 0.0
        %5245 = vmatprep.subr.mxu0 0.0
        %5246 = vmatpush2.msra.mxu0 0.0
        %5247 = vmatprep.subr.mxu0 0.0
        %5248 = vmatpush2.msra.mxu0 0.0
        %5249 = vmatprep.subr.mxu0 0.0
        %5250 = vmatpush2.msra.mxu0 0.0
        %5251 = vmatprep.mubr.f32.mxu0 0.0
        %5252 = vmatmul.mubr.f32.gmra.mxu0 %v5162
        %v5253 = vpop.f32.mrf.mxu0
        %v5254 = vadd.f32 %v5185, %v5253
        %v5255 = vpop.f32.mrf.mxu0
        %5256 = vmatprep.mubr.f32.mxu0 0.0
        %5257 = vmatmul.mubr.f32.gmra.mxu0 %v5163
        %v5258 = vpop.f32.mrf.mxu0
        %v5259 = vadd.f32 %v5185, %v5258
        %v5260 = vpop.f32.mrf.mxu0
        %5261 = vdwg.mxu0
        %v5262 = vmax.f32 %v5254, 0.0
        %v5263 = vmax.f32 %v5259, 0.0
        %v5264 = vld [vmem:[%s83] sm:$0x1]
        %v5266 = vlaneseq
        %v5267 = vshrl.u32 %v5266, 7
        %v5268 = vsub.s32 0, %v5267
        %v5269 = vrot.slane %v5264, %v5268
        %v5271 = vmul.f32 %v2595, %v5269
        %v5272 = vmul.f32 %v2596, %v5269
        %v5273 = vld [vmem:[%s85] sm:$0x1]
        %v5275 = vlaneseq
        %v5276 = vshrl.u32 %v5275, 7
        %v5277 = vsub.s32 0, %v5276
        %v5278 = vrot.slane %v5273, %v5277
        %v5280 = vadd.f32 %v5271, %v5278
        %v5281 = vadd.f32 %v5272, %v5278
        %v5282 = vmax.f32 %v5280, 0.0
        %v5283 = vmax.f32 %v5281, 0.0
        %v5284 = vld [vmem:[#allocation47] sm:$0xff]
        %v5285 = vld [vmem:[#allocation47 + $0x8] sm:$0xff]
        %v5286 = vld [vmem:[#allocation47 + $0x10] sm:$0xff]
        %v5287 = vld [vmem:[#allocation47 + $0x18] sm:$0xff]
        %v5288 = vld [vmem:[#allocation47 + $0x20] sm:$0xff]
        %v5289 = vld [vmem:[#allocation47 + $0x28] sm:$0xff]
        %v5290 = vld [vmem:[#allocation47 + $0x30] sm:$0xff]
        %v5291 = vld [vmem:[#allocation47 + $0x38] sm:$0xff]
        %v5292 = vld [vmem:[#allocation47 + $0x40] sm:$0xff]
        %v5293 = vld [vmem:[#allocation47 + $0x48] sm:$0xff]
        %v5294 = vld [vmem:[#allocation47 + $0x50] sm:$0xff]
        %v5295 = vld [vmem:[#allocation47 + $0x58] sm:$0xff]
        %v5296 = vld [vmem:[#allocation47 + $0x60] sm:$0xff]
        %v5297 = vld [vmem:[#allocation47 + $0x68] sm:$0xff]
        %v5298 = vld [vmem:[#allocation47 + $0x70] sm:$0xff]
        %v5299 = vld [vmem:[#allocation47 + $0x78] sm:$0xff]
        %v5300 = vld [vmem:[#allocation47 + $0x80] sm:$0xff]
        %v5301 = vld [vmem:[#allocation47 + $0x88] sm:$0xff]
        %v5302 = vld [vmem:[#allocation47 + $0x90] sm:$0xff]
        %v5303 = vld [vmem:[#allocation47 + $0x98] sm:$0xff]
        %v5304 = vld [vmem:[#allocation47 + $0xa0] sm:$0xff]
        %v5305 = vld [vmem:[#allocation47 + $0xa8] sm:$0xff]
        %v5306 = vld [vmem:[#allocation47 + $0xb0] sm:$0xff]
        %v5307 = vld [vmem:[#allocation47 + $0xb8] sm:$0xff]
        %v5308 = vld [vmem:[#allocation47 + $0xc0] sm:$0xff]
        %v5309 = vld [vmem:[#allocation47 + $0xc8] sm:$0xff]
        %v5310 = vld [vmem:[#allocation47 + $0xd0] sm:$0xff]
        %v5311 = vld [vmem:[#allocation47 + $0xd8] sm:$0xff]
        %v5312 = vld [vmem:[#allocation47 + $0xe0] sm:$0xff]
        %v5313 = vld [vmem:[#allocation47 + $0xe8] sm:$0xff]
        %v5314 = vld [vmem:[#allocation47 + $0xf0] sm:$0xff]
        %v5315 = vld [vmem:[#allocation47 + $0xf8] sm:$0xff]
        %v5316 = vld [vmem:[#allocation47 + $0x100] sm:$0xff]
        %v5317 = vld [vmem:[#allocation47 + $0x108] sm:$0xff]
        %v5318 = vld [vmem:[#allocation47 + $0x110] sm:$0xff]
        %v5319 = vld [vmem:[#allocation47 + $0x118] sm:$0xff]
        %v5320 = vld [vmem:[#allocation47 + $0x120] sm:$0xff]
        %v5321 = vld [vmem:[#allocation47 + $0x128] sm:$0xff]
        %v5322 = vld [vmem:[#allocation47 + $0x130] sm:$0xff]
        %v5323 = vld [vmem:[#allocation47 + $0x138] sm:$0xff]
        %v5324 = vld [vmem:[#allocation47 + $0x140] sm:$0xff]
        %v5325 = vld [vmem:[#allocation47 + $0x148] sm:$0xff]
        %v5326 = vld [vmem:[#allocation47 + $0x150] sm:$0xff]
        %v5327 = vld [vmem:[#allocation47 + $0x158] sm:$0xff]
        %v5328 = vld [vmem:[#allocation47 + $0x160] sm:$0xff]
        %v5329 = vld [vmem:[#allocation47 + $0x168] sm:$0xff]
        %v5330 = vld [vmem:[#allocation47 + $0x170] sm:$0xff]
        %v5331 = vld [vmem:[#allocation47 + $0x178] sm:$0xff]
        %v5332 = vld [vmem:[#allocation47 + $0x180] sm:$0xff]
        %v5333 = vld [vmem:[#allocation47 + $0x188] sm:$0xff]
        %v5334 = vld [vmem:[#allocation47 + $0x190] sm:$0xff]
        %v5335 = vld [vmem:[#allocation47 + $0x198] sm:$0xff]
        %v5336 = vld [vmem:[#allocation47 + $0x1a0] sm:$0xff]
        %v5337 = vld [vmem:[#allocation47 + $0x1a8] sm:$0xff]
        %v5338 = vld [vmem:[#allocation47 + $0x1b0] sm:$0xff]
        %v5339 = vld [vmem:[#allocation47 + $0x1b8] sm:$0xff]
        %v5340 = vld [vmem:[#allocation47 + $0x1c0] sm:$0xff]
        %v5341 = vld [vmem:[#allocation47 + $0x1c8] sm:$0xff]
        %v5342 = vld [vmem:[#allocation47 + $0x1d0] sm:$0xff]
        %v5343 = vld [vmem:[#allocation47 + $0x1d8] sm:$0xff]
        %v5344 = vld [vmem:[#allocation47 + $0x1e0] sm:$0xff]
        %v5345 = vld [vmem:[#allocation47 + $0x1e8] sm:$0xff]
        %v5346 = vld [vmem:[#allocation47 + $0x1f0] sm:$0xff]
        %v5347 = vld [vmem:[#allocation47 + $0x1f8] sm:$0xff]
        %v5348 = vld [vmem:[%s83 + $0x1] sm:$0x1]
        %v5350 = vlaneseq
        %v5351 = vshrl.u32 %v5350, 7
        %v5352 = vsub.s32 0, %v5351
        %v5353 = vrot.slane %v5348, %v5352
        %v5355 = vmul.f32 %v3929, %v5353
        %v5356 = vmul.f32 %v3930, %v5353
        %v5357 = vld [vmem:[%s85 + $0x1] sm:$0x1]
        %v5359 = vlaneseq
        %v5360 = vshrl.u32 %v5359, 7
        %v5361 = vsub.s32 0, %v5360
        %v5362 = vrot.slane %v5357, %v5361
        %v5364 = vadd.f32 %v5355, %v5362
        %v5365 = vadd.f32 %v5356, %v5362
        %v5366 = vmax.f32 %v5364, 0.0
        %v5367 = vmax.f32 %v5365, 0.0
        %v5368 = vld [vmem:[#allocation47 + $0x200] sm:$0xff]
        %v5369 = vld [vmem:[#allocation47 + $0x208] sm:$0xff]
        %v5370 = vld [vmem:[#allocation47 + $0x210] sm:$0xff]
        %v5371 = vld [vmem:[#allocation47 + $0x218] sm:$0xff]
        %v5372 = vld [vmem:[#allocation47 + $0x220] sm:$0xff]
        %v5373 = vld [vmem:[#allocation47 + $0x228] sm:$0xff]
        %v5374 = vld [vmem:[#allocation47 + $0x230] sm:$0xff]
        %v5375 = vld [vmem:[#allocation47 + $0x238] sm:$0xff]
        %v5376 = vld [vmem:[#allocation47 + $0x240] sm:$0xff]
        %v5377 = vld [vmem:[#allocation47 + $0x248] sm:$0xff]
        %v5378 = vld [vmem:[#allocation47 + $0x250] sm:$0xff]
        %v5379 = vld [vmem:[#allocation47 + $0x258] sm:$0xff]
        %v5380 = vld [vmem:[#allocation47 + $0x260] sm:$0xff]
        %v5381 = vld [vmem:[#allocation47 + $0x268] sm:$0xff]
        %v5382 = vld [vmem:[#allocation47 + $0x270] sm:$0xff]
        %v5383 = vld [vmem:[#allocation47 + $0x278] sm:$0xff]
        %v5384 = vld [vmem:[#allocation47 + $0x280] sm:$0xff]
        %v5385 = vld [vmem:[#allocation47 + $0x288] sm:$0xff]
        %v5386 = vld [vmem:[#allocation47 + $0x290] sm:$0xff]
        %v5387 = vld [vmem:[#allocation47 + $0x298] sm:$0xff]
        %v5388 = vld [vmem:[#allocation47 + $0x2a0] sm:$0xff]
        %v5389 = vld [vmem:[#allocation47 + $0x2a8] sm:$0xff]
        %v5390 = vld [vmem:[#allocation47 + $0x2b0] sm:$0xff]
        %v5391 = vld [vmem:[#allocation47 + $0x2b8] sm:$0xff]
        %v5392 = vld [vmem:[#allocation47 + $0x2c0] sm:$0xff]
        %v5393 = vld [vmem:[#allocation47 + $0x2c8] sm:$0xff]
        %v5394 = vld [vmem:[#allocation47 + $0x2d0] sm:$0xff]
        %v5395 = vld [vmem:[#allocation47 + $0x2d8] sm:$0xff]
        %v5396 = vld [vmem:[#allocation47 + $0x2e0] sm:$0xff]
        %v5397 = vld [vmem:[#allocation47 + $0x2e8] sm:$0xff]
        %v5398 = vld [vmem:[#allocation47 + $0x2f0] sm:$0xff]
        %v5399 = vld [vmem:[#allocation47 + $0x2f8] sm:$0xff]
        %v5400 = vld [vmem:[#allocation47 + $0x300] sm:$0xff]
        %v5401 = vld [vmem:[#allocation47 + $0x308] sm:$0xff]
        %v5402 = vld [vmem:[#allocation47 + $0x310] sm:$0xff]
        %v5403 = vld [vmem:[#allocation47 + $0x318] sm:$0xff]
        %v5404 = vld [vmem:[#allocation47 + $0x320] sm:$0xff]
        %v5405 = vld [vmem:[#allocation47 + $0x328] sm:$0xff]
        %v5406 = vld [vmem:[#allocation47 + $0x330] sm:$0xff]
        %v5407 = vld [vmem:[#allocation47 + $0x338] sm:$0xff]
        %v5408 = vld [vmem:[#allocation47 + $0x340] sm:$0xff]
        %v5409 = vld [vmem:[#allocation47 + $0x348] sm:$0xff]
        %v5410 = vld [vmem:[#allocation47 + $0x350] sm:$0xff]
        %v5411 = vld [vmem:[#allocation47 + $0x358] sm:$0xff]
        %v5412 = vld [vmem:[#allocation47 + $0x360] sm:$0xff]
        %v5413 = vld [vmem:[#allocation47 + $0x368] sm:$0xff]
        %v5414 = vld [vmem:[#allocation47 + $0x370] sm:$0xff]
        %v5415 = vld [vmem:[#allocation47 + $0x378] sm:$0xff]
        %v5416 = vld [vmem:[#allocation47 + $0x380] sm:$0xff]
        %v5417 = vld [vmem:[#allocation47 + $0x388] sm:$0xff]
        %v5418 = vld [vmem:[#allocation47 + $0x390] sm:$0xff]
        %v5419 = vld [vmem:[#allocation47 + $0x398] sm:$0xff]
        %v5420 = vld [vmem:[#allocation47 + $0x3a0] sm:$0xff]
        %v5421 = vld [vmem:[#allocation47 + $0x3a8] sm:$0xff]
        %v5422 = vld [vmem:[#allocation47 + $0x3b0] sm:$0xff]
        %v5423 = vld [vmem:[#allocation47 + $0x3b8] sm:$0xff]
        %v5424 = vld [vmem:[#allocation47 + $0x3c0] sm:$0xff]
        %v5425 = vld [vmem:[#allocation47 + $0x3c8] sm:$0xff]
        %v5426 = vld [vmem:[#allocation47 + $0x3d0] sm:$0xff]
        %v5427 = vld [vmem:[#allocation47 + $0x3d8] sm:$0xff]
        %v5428 = vld [vmem:[#allocation47 + $0x3e0] sm:$0xff]
        %v5429 = vld [vmem:[#allocation47 + $0x3e8] sm:$0xff]
        %v5430 = vld [vmem:[#allocation47 + $0x3f0] sm:$0xff]
        %v5431 = vld [vmem:[#allocation47 + $0x3f8] sm:$0xff]
        %5432 = vmatprep.subr.mxu0 %v5429
        %5433 = vmatpush1.msra.mxu0 %v5428
        %5434 = vmatprep.subr.mxu0 %v5425
        %5435 = vmatpush1.msra.mxu0 %v5424
        %5436 = vmatprep.subr.mxu0 %v5421
        %5437 = vmatpush1.msra.mxu0 %v5420
        %5438 = vmatprep.subr.mxu0 %v5417
        %5439 = vmatpush1.msra.mxu0 %v5416
        %5440 = vmatprep.subr.mxu0 %v5413
        %5441 = vmatpush1.msra.mxu0 %v5412
        %5442 = vmatprep.subr.mxu0 %v5409
        %5443 = vmatpush1.msra.mxu0 %v5408
        %5444 = vmatprep.subr.mxu0 %v5405
        %5445 = vmatpush1.msra.mxu0 %v5404
        %5446 = vmatprep.subr.mxu0 %v5401
        %5447 = vmatpush1.msra.mxu0 %v5400
        %5448 = vmatprep.subr.mxu0 %v5397
        %5449 = vmatpush1.msra.mxu0 %v5396
        %5450 = vmatprep.subr.mxu0 %v5393
        %5451 = vmatpush1.msra.mxu0 %v5392
        %5452 = vmatprep.subr.mxu0 %v5389
        %5453 = vmatpush1.msra.mxu0 %v5388
        %5454 = vmatprep.subr.mxu0 %v5385
        %5455 = vmatpush1.msra.mxu0 %v5384
        %5456 = vmatprep.subr.mxu0 %v5381
        %5457 = vmatpush1.msra.mxu0 %v5380
        %5458 = vmatprep.subr.mxu0 %v5377
        %5459 = vmatpush1.msra.mxu0 %v5376
        %5460 = vmatprep.subr.mxu0 %v5373
        %5461 = vmatpush1.msra.mxu0 %v5372
        %5462 = vmatprep.subr.mxu0 %v5369
        %5463 = vmatpush1.msra.mxu0 %v5368
        %5464 = vmatprep.subr.mxu0 0.0
        %5465 = vmatpush2.msra.mxu0 0.0
        %5466 = vmatprep.subr.mxu0 0.0
        %5467 = vmatpush2.msra.mxu0 0.0
        %5468 = vmatprep.subr.mxu0 0.0
        %5469 = vmatpush2.msra.mxu0 0.0
        %5470 = vmatprep.subr.mxu0 0.0
        %5471 = vmatpush2.msra.mxu0 0.0
        %5472 = vmatprep.subr.mxu0 0.0
        %5473 = vmatpush2.msra.mxu0 0.0
        %5474 = vmatprep.subr.mxu0 0.0
        %5475 = vmatpush2.msra.mxu0 0.0
        %5476 = vmatprep.subr.mxu0 0.0
        %5477 = vmatpush2.msra.mxu0 0.0
        %5478 = vmatprep.subr.mxu0 0.0
        %5479 = vmatpush2.msra.mxu0 0.0
        %5480 = vmatprep.subr.mxu0 0.0
        %5481 = vmatpush2.msra.mxu0 0.0
        %5482 = vmatprep.subr.mxu0 0.0
        %5483 = vmatpush2.msra.mxu0 0.0
        %5484 = vmatprep.subr.mxu0 0.0
        %5485 = vmatpush2.msra.mxu0 0.0
        %5486 = vmatprep.subr.mxu0 0.0
        %5487 = vmatpush2.msra.mxu0 0.0
        %5488 = vmatprep.subr.mxu0 0.0
        %5489 = vmatpush2.msra.mxu0 0.0
        %5490 = vmatprep.subr.mxu0 0.0
        %5491 = vmatpush2.msra.mxu0 0.0
        %5492 = vmatprep.subr.mxu0 0.0
        %5493 = vmatpush2.msra.mxu0 0.0
        %5494 = vmatprep.subr.mxu0 0.0
        %5495 = vmatpush2.msra.mxu0 0.0
        %5496 = vmatprep.mubr.f32.mxu0 0.0
        %5497 = vmatmul.mubr.f32.gmra.mxu0 %v5366
        %v5498 = vpop.f32.mrf.mxu0
        %v5499 = vadd.f32 0.0, %v5498
        %v5500 = vpop.f32.mrf.mxu0
        %v5501 = vadd.f32 0.0, %v5500
        %5502 = vmatprep.mubr.f32.mxu0 0.0
        %5503 = vmatmul.mubr.f32.gmra.mxu0 %v5367
        %v5504 = vpop.f32.mrf.mxu0
        %v5505 = vadd.f32 0.0, %v5504
        %v5506 = vpop.f32.mrf.mxu0
        %v5507 = vadd.f32 0.0, %v5506
        %5508 = vdwg.mxu0
        %5509 = vmatprep.subr.mxu0 %v5431
        %5510 = vmatpush1.msra.mxu0 %v5430
        %5511 = vmatprep.subr.mxu0 %v5427
        %5512 = vmatpush1.msra.mxu0 %v5426
        %5513 = vmatprep.subr.mxu0 %v5423
        %5514 = vmatpush1.msra.mxu0 %v5422
        %5515 = vmatprep.subr.mxu0 %v5419
        %5516 = vmatpush1.msra.mxu0 %v5418
        %5517 = vmatprep.subr.mxu0 %v5415
        %5518 = vmatpush1.msra.mxu0 %v5414
        %5519 = vmatprep.subr.mxu0 %v5411
        %5520 = vmatpush1.msra.mxu0 %v5410
        %5521 = vmatprep.subr.mxu0 %v5407
        %5522 = vmatpush1.msra.mxu0 %v5406
        %5523 = vmatprep.subr.mxu0 %v5403
        %5524 = vmatpush1.msra.mxu0 %v5402
        %5525 = vmatprep.subr.mxu0 %v5399
        %5526 = vmatpush1.msra.mxu0 %v5398
        %5527 = vmatprep.subr.mxu0 %v5395
        %5528 = vmatpush1.msra.mxu0 %v5394
        %5529 = vmatprep.subr.mxu0 %v5391
        %5530 = vmatpush1.msra.mxu0 %v5390
        %5531 = vmatprep.subr.mxu0 %v5387
        %5532 = vmatpush1.msra.mxu0 %v5386
        %5533 = vmatprep.subr.mxu0 %v5383
        %5534 = vmatpush1.msra.mxu0 %v5382
        %5535 = vmatprep.subr.mxu0 %v5379
        %5536 = vmatpush1.msra.mxu0 %v5378
        %5537 = vmatprep.subr.mxu0 %v5375
        %5538 = vmatpush1.msra.mxu0 %v5374
        %5539 = vmatprep.subr.mxu0 %v5371
        %5540 = vmatpush1.msra.mxu0 %v5370
        %5541 = vmatprep.subr.mxu0 0.0
        %5542 = vmatpush2.msra.mxu0 0.0
        %5543 = vmatprep.subr.mxu0 0.0
        %5544 = vmatpush2.msra.mxu0 0.0
        %5545 = vmatprep.subr.mxu0 0.0
        %5546 = vmatpush2.msra.mxu0 0.0
        %5547 = vmatprep.subr.mxu0 0.0
        %5548 = vmatpush2.msra.mxu0 0.0
        %5549 = vmatprep.subr.mxu0 0.0
        %5550 = vmatpush2.msra.mxu0 0.0
        %5551 = vmatprep.subr.mxu0 0.0
        %5552 = vmatpush2.msra.mxu0 0.0
        %5553 = vmatprep.subr.mxu0 0.0
        %5554 = vmatpush2.msra.mxu0 0.0
        %5555 = vmatprep.subr.mxu0 0.0
        %5556 = vmatpush2.msra.mxu0 0.0
        %5557 = vmatprep.subr.mxu0 0.0
        %5558 = vmatpush2.msra.mxu0 0.0
        %5559 = vmatprep.subr.mxu0 0.0
        %5560 = vmatpush2.msra.mxu0 0.0
        %5561 = vmatprep.subr.mxu0 0.0
        %5562 = vmatpush2.msra.mxu0 0.0
        %5563 = vmatprep.subr.mxu0 0.0
        %5564 = vmatpush2.msra.mxu0 0.0
        %5565 = vmatprep.subr.mxu0 0.0
        %5566 = vmatpush2.msra.mxu0 0.0
        %5567 = vmatprep.subr.mxu0 0.0
        %5568 = vmatpush2.msra.mxu0 0.0
        %5569 = vmatprep.subr.mxu0 0.0
        %5570 = vmatpush2.msra.mxu0 0.0
        %5571 = vmatprep.subr.mxu0 0.0
        %5572 = vmatpush2.msra.mxu0 0.0
        %5573 = vmatprep.mubr.f32.mxu0 0.0
        %5574 = vmatmul.mubr.f32.gmra.mxu0 %v5366
        %v5575 = vpop.f32.mrf.mxu0
        %v5576 = vadd.f32 0.0, %v5575
        %v5577 = vpop.f32.mrf.mxu0
        %v5578 = vadd.f32 0.0, %v5577
        %5579 = vmatprep.mubr.f32.mxu0 0.0
        %5580 = vmatmul.mubr.f32.gmra.mxu0 %v5367
        %v5581 = vpop.f32.mrf.mxu0
        %v5582 = vadd.f32 0.0, %v5581
        %v5583 = vpop.f32.mrf.mxu0
        %v5584 = vadd.f32 0.0, %v5583
        %5585 = vdwg.mxu0
        %5586 = vmatprep.subr.mxu0 %v5345
        %5587 = vmatpush1.msra.mxu0 %v5344
        %5588 = vmatprep.subr.mxu0 %v5341
        %5589 = vmatpush1.msra.mxu0 %v5340
        %5590 = vmatprep.subr.mxu0 %v5337
        %5591 = vmatpush1.msra.mxu0 %v5336
        %5592 = vmatprep.subr.mxu0 %v5333
        %5593 = vmatpush1.msra.mxu0 %v5332
        %5594 = vmatprep.subr.mxu0 %v5329
        %5595 = vmatpush1.msra.mxu0 %v5328
        %5596 = vmatprep.subr.mxu0 %v5325
        %5597 = vmatpush1.msra.mxu0 %v5324
        %5598 = vmatprep.subr.mxu0 %v5321
        %5599 = vmatpush1.msra.mxu0 %v5320
        %5600 = vmatprep.subr.mxu0 %v5317
        %5601 = vmatpush1.msra.mxu0 %v5316
        %5602 = vmatprep.subr.mxu0 %v5313
        %5603 = vmatpush1.msra.mxu0 %v5312
        %5604 = vmatprep.subr.mxu0 %v5309
        %5605 = vmatpush1.msra.mxu0 %v5308
        %5606 = vmatprep.subr.mxu0 %v5305
        %5607 = vmatpush1.msra.mxu0 %v5304
        %5608 = vmatprep.subr.mxu0 %v5301
        %5609 = vmatpush1.msra.mxu0 %v5300
        %5610 = vmatprep.subr.mxu0 %v5297
        %5611 = vmatpush1.msra.mxu0 %v5296
        %5612 = vmatprep.subr.mxu0 %v5293
        %5613 = vmatpush1.msra.mxu0 %v5292
        %5614 = vmatprep.subr.mxu0 %v5289
        %5615 = vmatpush1.msra.mxu0 %v5288
        %5616 = vmatprep.subr.mxu0 %v5285
        %5617 = vmatpush1.msra.mxu0 %v5284
        %5618 = vmatprep.subr.mxu0 0.0
        %5619 = vmatpush2.msra.mxu0 0.0
        %5620 = vmatprep.subr.mxu0 0.0
        %5621 = vmatpush2.msra.mxu0 0.0
        %5622 = vmatprep.subr.mxu0 0.0
        %5623 = vmatpush2.msra.mxu0 0.0
        %5624 = vmatprep.subr.mxu0 0.0
        %5625 = vmatpush2.msra.mxu0 0.0
        %5626 = vmatprep.subr.mxu0 0.0
        %5627 = vmatpush2.msra.mxu0 0.0
        %5628 = vmatprep.subr.mxu0 0.0
        %5629 = vmatpush2.msra.mxu0 0.0
        %5630 = vmatprep.subr.mxu0 0.0
        %5631 = vmatpush2.msra.mxu0 0.0
        %5632 = vmatprep.subr.mxu0 0.0
        %5633 = vmatpush2.msra.mxu0 0.0
        %5634 = vmatprep.subr.mxu0 0.0
        %5635 = vmatpush2.msra.mxu0 0.0
        %5636 = vmatprep.subr.mxu0 0.0
        %5637 = vmatpush2.msra.mxu0 0.0
        %5638 = vmatprep.subr.mxu0 0.0
        %5639 = vmatpush2.msra.mxu0 0.0
        %5640 = vmatprep.subr.mxu0 0.0
        %5641 = vmatpush2.msra.mxu0 0.0
        %5642 = vmatprep.subr.mxu0 0.0
        %5643 = vmatpush2.msra.mxu0 0.0
        %5644 = vmatprep.subr.mxu0 0.0
        %5645 = vmatpush2.msra.mxu0 0.0
        %5646 = vmatprep.subr.mxu0 0.0
        %5647 = vmatpush2.msra.mxu0 0.0
        %5648 = vmatprep.subr.mxu0 0.0
        %5649 = vmatpush2.msra.mxu0 0.0
        %5650 = vmatprep.mubr.f32.mxu0 0.0
        %5651 = vmatmul.mubr.f32.gmra.mxu0 %v5282
        %v5652 = vpop.f32.mrf.mxu0
        %v5653 = vadd.f32 %v5499, %v5652
        %v5654 = vpop.f32.mrf.mxu0
        %v5655 = vadd.f32 %v5501, %v5654
        %5656 = vmatprep.mubr.f32.mxu0 0.0
        %5657 = vmatmul.mubr.f32.gmra.mxu0 %v5283
        %v5658 = vpop.f32.mrf.mxu0
        %v5659 = vadd.f32 %v5505, %v5658
        %v5660 = vpop.f32.mrf.mxu0
        %v5661 = vadd.f32 %v5507, %v5660
        %5662 = vdwg.mxu0
        %5663 = vmatprep.subr.mxu0 %v5347
        %5664 = vmatpush1.msra.mxu0 %v5346
        %5665 = vmatprep.subr.mxu0 %v5343
        %5666 = vmatpush1.msra.mxu0 %v5342
        %5667 = vmatprep.subr.mxu0 %v5339
        %5668 = vmatpush1.msra.mxu0 %v5338
        %5669 = vmatprep.subr.mxu0 %v5335
        %5670 = vmatpush1.msra.mxu0 %v5334
        %5671 = vmatprep.subr.mxu0 %v5331
        %5672 = vmatpush1.msra.mxu0 %v5330
        %5673 = vmatprep.subr.mxu0 %v5327
        %5674 = vmatpush1.msra.mxu0 %v5326
        %5675 = vmatprep.subr.mxu0 %v5323
        %5676 = vmatpush1.msra.mxu0 %v5322
        %5677 = vmatprep.subr.mxu0 %v5319
        %5678 = vmatpush1.msra.mxu0 %v5318
        %5679 = vmatprep.subr.mxu0 %v5315
        %5680 = vmatpush1.msra.mxu0 %v5314
        %5681 = vmatprep.subr.mxu0 %v5311
        %5682 = vmatpush1.msra.mxu0 %v5310
        %5683 = vmatprep.subr.mxu0 %v5307
        %5684 = vmatpush1.msra.mxu0 %v5306
        %5685 = vmatprep.subr.mxu0 %v5303
        %5686 = vmatpush1.msra.mxu0 %v5302
        %5687 = vmatprep.subr.mxu0 %v5299
        %5688 = vmatpush1.msra.mxu0 %v5298
        %5689 = vmatprep.subr.mxu0 %v5295
        %5690 = vmatpush1.msra.mxu0 %v5294
        %5691 = vmatprep.subr.mxu0 %v5291
        %5692 = vmatpush1.msra.mxu0 %v5290
        %5693 = vmatprep.subr.mxu0 %v5287
        %5694 = vmatpush1.msra.mxu0 %v5286
        %5695 = vmatprep.subr.mxu0 0.0
        %5696 = vmatpush2.msra.mxu0 0.0
        %5697 = vmatprep.subr.mxu0 0.0
        %5698 = vmatpush2.msra.mxu0 0.0
        %5699 = vmatprep.subr.mxu0 0.0
        %5700 = vmatpush2.msra.mxu0 0.0
        %5701 = vmatprep.subr.mxu0 0.0
        %5702 = vmatpush2.msra.mxu0 0.0
        %5703 = vmatprep.subr.mxu0 0.0
        %5704 = vmatpush2.msra.mxu0 0.0
        %5705 = vmatprep.subr.mxu0 0.0
        %5706 = vmatpush2.msra.mxu0 0.0
        %5707 = vmatprep.subr.mxu0 0.0
        %5708 = vmatpush2.msra.mxu0 0.0
        %5709 = vmatprep.subr.mxu0 0.0
        %5710 = vmatpush2.msra.mxu0 0.0
        %5711 = vmatprep.subr.mxu0 0.0
        %5712 = vmatpush2.msra.mxu0 0.0
        %5713 = vmatprep.subr.mxu0 0.0
        %5714 = vmatpush2.msra.mxu0 0.0
        %5715 = vmatprep.subr.mxu0 0.0
        %5716 = vmatpush2.msra.mxu0 0.0
        %5717 = vmatprep.subr.mxu0 0.0
        %5718 = vmatpush2.msra.mxu0 0.0
        %5719 = vmatprep.subr.mxu0 0.0
        %5720 = vmatpush2.msra.mxu0 0.0
        %5721 = vmatprep.subr.mxu0 0.0
        %5722 = vmatpush2.msra.mxu0 0.0
        %5723 = vmatprep.subr.mxu0 0.0
        %5724 = vmatpush2.msra.mxu0 0.0
        %5725 = vmatprep.subr.mxu0 0.0
        %5726 = vmatpush2.msra.mxu0 0.0
        %5727 = vmatprep.mubr.f32.mxu0 0.0
        %5728 = vmatmul.mubr.f32.gmra.mxu0 %v5282
        %v5729 = vpop.f32.mrf.mxu0
        %v5730 = vadd.f32 %v5576, %v5729
        %v5731 = vpop.f32.mrf.mxu0
        %v5732 = vadd.f32 %v5578, %v5731
        %5733 = vmatprep.mubr.f32.mxu0 0.0
        %5734 = vmatmul.mubr.f32.gmra.mxu0 %v5283
        %v5735 = vpop.f32.mrf.mxu0
        %v5736 = vadd.f32 %v5582, %v5735
        %v5737 = vpop.f32.mrf.mxu0
        %v5738 = vadd.f32 %v5584, %v5737
        %5739 = vdwg.mxu0
        %v5740 = vld [vmem:[%s83 + $0x2] sm:$0x1]
        %v5742 = vlaneseq
        %v5743 = vshrl.u32 %v5742, 7
        %v5744 = vsub.s32 0, %v5743
        %v5745 = vrot.slane %v5740, %v5744
        %v5747 = vmul.f32 %v5262, %v5745
        %v5748 = vmul.f32 %v5263, %v5745
        %v5749 = vld [vmem:[%s85 + $0x2] sm:$0x1]
        %v5751 = vlaneseq
        %v5752 = vshrl.u32 %v5751, 7
        %v5753 = vsub.s32 0, %v5752
        %v5754 = vrot.slane %v5749, %v5753
        %v5756 = vadd.f32 %v5747, %v5754
        %v5757 = vadd.f32 %v5748, %v5754
        %v5758 = vmax.f32 %v5756, 0.0
        %v5759 = vmax.f32 %v5757, 0.0
        %v5760 = vld [vmem:[#allocation47 + $0x400] sm:$0xff]
        %v5761 = vld [vmem:[#allocation47 + $0x408] sm:$0xff]
        %v5762 = vld [vmem:[#allocation47 + $0x410] sm:$0xff]
        %v5763 = vld [vmem:[#allocation47 + $0x418] sm:$0xff]
        %v5764 = vld [vmem:[#allocation47 + $0x420] sm:$0xff]
        %v5765 = vld [vmem:[#allocation47 + $0x428] sm:$0xff]
        %v5766 = vld [vmem:[#allocation47 + $0x430] sm:$0xff]
        %v5767 = vld [vmem:[#allocation47 + $0x438] sm:$0xff]
        %v5768 = vld [vmem:[#allocation47 + $0x440] sm:$0xff]
        %v5769 = vld [vmem:[#allocation47 + $0x448] sm:$0xff]
        %v5770 = vld [vmem:[#allocation47 + $0x450] sm:$0xff]
        %v5771 = vld [vmem:[#allocation47 + $0x458] sm:$0xff]
        %v5772 = vld [vmem:[#allocation47 + $0x460] sm:$0xff]
        %v5773 = vld [vmem:[#allocation47 + $0x468] sm:$0xff]
        %v5774 = vld [vmem:[#allocation47 + $0x470] sm:$0xff]
        %v5775 = vld [vmem:[#allocation47 + $0x478] sm:$0xff]
        %v5776 = vld [vmem:[#allocation47 + $0x480] sm:$0xff]
        %v5777 = vld [vmem:[#allocation47 + $0x488] sm:$0xff]
        %v5778 = vld [vmem:[#allocation47 + $0x490] sm:$0xff]
        %v5779 = vld [vmem:[#allocation47 + $0x498] sm:$0xff]
        %v5780 = vld [vmem:[#allocation47 + $0x4a0] sm:$0xff]
        %v5781 = vld [vmem:[#allocation47 + $0x4a8] sm:$0xff]
        %v5782 = vld [vmem:[#allocation47 + $0x4b0] sm:$0xff]
        %v5783 = vld [vmem:[#allocation47 + $0x4b8] sm:$0xff]
        %v5784 = vld [vmem:[#allocation47 + $0x4c0] sm:$0xff]
        %v5785 = vld [vmem:[#allocation47 + $0x4c8] sm:$0xff]
        %v5786 = vld [vmem:[#allocation47 + $0x4d0] sm:$0xff]
        %v5787 = vld [vmem:[#allocation47 + $0x4d8] sm:$0xff]
        %v5788 = vld [vmem:[#allocation47 + $0x4e0] sm:$0xff]
        %v5789 = vld [vmem:[#allocation47 + $0x4e8] sm:$0xff]
        %v5790 = vld [vmem:[#allocation47 + $0x4f0] sm:$0xff]
        %v5791 = vld [vmem:[#allocation47 + $0x4f8] sm:$0xff]
        %v5792 = vld [vmem:[#allocation47 + $0x500] sm:$0xff]
        %v5793 = vld [vmem:[#allocation47 + $0x508] sm:$0xff]
        %v5794 = vld [vmem:[#allocation47 + $0x510] sm:$0xff]
        %v5795 = vld [vmem:[#allocation47 + $0x518] sm:$0xff]
        %v5796 = vld [vmem:[#allocation47 + $0x520] sm:$0xff]
        %v5797 = vld [vmem:[#allocation47 + $0x528] sm:$0xff]
        %v5798 = vld [vmem:[#allocation47 + $0x530] sm:$0xff]
        %v5799 = vld [vmem:[#allocation47 + $0x538] sm:$0xff]
        %v5800 = vld [vmem:[#allocation47 + $0x540] sm:$0xff]
        %v5801 = vld [vmem:[#allocation47 + $0x548] sm:$0xff]
        %v5802 = vld [vmem:[#allocation47 + $0x550] sm:$0xff]
        %v5803 = vld [vmem:[#allocation47 + $0x558] sm:$0xff]
        %v5804 = vld [vmem:[#allocation47 + $0x560] sm:$0xff]
        %v5805 = vld [vmem:[#allocation47 + $0x568] sm:$0xff]
        %v5806 = vld [vmem:[#allocation47 + $0x570] sm:$0xff]
        %v5807 = vld [vmem:[#allocation47 + $0x578] sm:$0xff]
        %v5808 = vld [vmem:[#allocation47 + $0x580] sm:$0xff]
        %v5809 = vld [vmem:[#allocation47 + $0x588] sm:$0xff]
        %v5810 = vld [vmem:[#allocation47 + $0x590] sm:$0xff]
        %v5811 = vld [vmem:[#allocation47 + $0x598] sm:$0xff]
        %v5812 = vld [vmem:[#allocation47 + $0x5a0] sm:$0xff]
        %v5813 = vld [vmem:[#allocation47 + $0x5a8] sm:$0xff]
        %v5814 = vld [vmem:[#allocation47 + $0x5b0] sm:$0xff]
        %v5815 = vld [vmem:[#allocation47 + $0x5b8] sm:$0xff]
        %v5816 = vld [vmem:[#allocation47 + $0x5c0] sm:$0xff]
        %v5817 = vld [vmem:[#allocation47 + $0x5c8] sm:$0xff]
        %v5818 = vld [vmem:[#allocation47 + $0x5d0] sm:$0xff]
        %v5819 = vld [vmem:[#allocation47 + $0x5d8] sm:$0xff]
        %v5820 = vld [vmem:[#allocation47 + $0x5e0] sm:$0xff]
        %v5821 = vld [vmem:[#allocation47 + $0x5e8] sm:$0xff]
        %v5822 = vld [vmem:[#allocation47 + $0x5f0] sm:$0xff]
        %v5823 = vld [vmem:[#allocation47 + $0x5f8] sm:$0xff]
        %5824 = vmatprep.subr.mxu0 %v5821
        %5825 = vmatpush1.msra.mxu0 %v5820
        %5826 = vmatprep.subr.mxu0 %v5817
        %5827 = vmatpush1.msra.mxu0 %v5816
        %5828 = vmatprep.subr.mxu0 %v5813
        %5829 = vmatpush1.msra.mxu0 %v5812
        %5830 = vmatprep.subr.mxu0 %v5809
        %5831 = vmatpush1.msra.mxu0 %v5808
        %5832 = vmatprep.subr.mxu0 %v5805
        %5833 = vmatpush1.msra.mxu0 %v5804
        %5834 = vmatprep.subr.mxu0 %v5801
        %5835 = vmatpush1.msra.mxu0 %v5800
        %5836 = vmatprep.subr.mxu0 %v5797
        %5837 = vmatpush1.msra.mxu0 %v5796
        %5838 = vmatprep.subr.mxu0 %v5793
        %5839 = vmatpush1.msra.mxu0 %v5792
        %5840 = vmatprep.subr.mxu0 %v5789
        %5841 = vmatpush1.msra.mxu0 %v5788
        %5842 = vmatprep.subr.mxu0 %v5785
        %5843 = vmatpush1.msra.mxu0 %v5784
        %5844 = vmatprep.subr.mxu0 %v5781
        %5845 = vmatpush1.msra.mxu0 %v5780
        %5846 = vmatprep.subr.mxu0 %v5777
        %5847 = vmatpush1.msra.mxu0 %v5776
        %5848 = vmatprep.subr.mxu0 %v5773
        %5849 = vmatpush1.msra.mxu0 %v5772
        %5850 = vmatprep.subr.mxu0 %v5769
        %5851 = vmatpush1.msra.mxu0 %v5768
        %5852 = vmatprep.subr.mxu0 %v5765
        %5853 = vmatpush1.msra.mxu0 %v5764
        %5854 = vmatprep.subr.mxu0 %v5761
        %5855 = vmatpush1.msra.mxu0 %v5760
        %5856 = vmatprep.subr.mxu0 0.0
        %5857 = vmatpush2.msra.mxu0 0.0
        %5858 = vmatprep.subr.mxu0 0.0
        %5859 = vmatpush2.msra.mxu0 0.0
        %5860 = vmatprep.subr.mxu0 0.0
        %5861 = vmatpush2.msra.mxu0 0.0
        %5862 = vmatprep.subr.mxu0 0.0
        %5863 = vmatpush2.msra.mxu0 0.0
        %5864 = vmatprep.subr.mxu0 0.0
        %5865 = vmatpush2.msra.mxu0 0.0
        %5866 = vmatprep.subr.mxu0 0.0
        %5867 = vmatpush2.msra.mxu0 0.0
        %5868 = vmatprep.subr.mxu0 0.0
        %5869 = vmatpush2.msra.mxu0 0.0
        %5870 = vmatprep.subr.mxu0 0.0
        %5871 = vmatpush2.msra.mxu0 0.0
        %5872 = vmatprep.subr.mxu0 0.0
        %5873 = vmatpush2.msra.mxu0 0.0
        %5874 = vmatprep.subr.mxu0 0.0
        %5875 = vmatpush2.msra.mxu0 0.0
        %5876 = vmatprep.subr.mxu0 0.0
        %5877 = vmatpush2.msra.mxu0 0.0
        %5878 = vmatprep.subr.mxu0 0.0
        %5879 = vmatpush2.msra.mxu0 0.0
        %5880 = vmatprep.subr.mxu0 0.0
        %5881 = vmatpush2.msra.mxu0 0.0
        %5882 = vmatprep.subr.mxu0 0.0
        %5883 = vmatpush2.msra.mxu0 0.0
        %5884 = vmatprep.subr.mxu0 0.0
        %5885 = vmatpush2.msra.mxu0 0.0
        %5886 = vmatprep.subr.mxu0 0.0
        %5887 = vmatpush2.msra.mxu0 0.0
        %5888 = vmatprep.mubr.f32.mxu0 0.0
        %5889 = vmatmul.mubr.f32.gmra.mxu0 %v5758
        %v5890 = vpop.f32.mrf.mxu0
        %v5891 = vadd.f32 0.0, %v5890
        %v5892 = vpop.f32.mrf.mxu0
        %v5893 = vadd.f32 0.0, %v5892
        %5894 = vmatprep.mubr.f32.mxu0 0.0
        %5895 = vmatmul.mubr.f32.gmra.mxu0 %v5759
        %v5896 = vpop.f32.mrf.mxu0
        %v5897 = vadd.f32 0.0, %v5896
        %v5898 = vpop.f32.mrf.mxu0
        %v5899 = vadd.f32 0.0, %v5898
        %5900 = vdwg.mxu0
        %5901 = vmatprep.subr.mxu0 %v5823
        %5902 = vmatpush1.msra.mxu0 %v5822
        %5903 = vmatprep.subr.mxu0 %v5819
        %5904 = vmatpush1.msra.mxu0 %v5818
        %5905 = vmatprep.subr.mxu0 %v5815
        %5906 = vmatpush1.msra.mxu0 %v5814
        %5907 = vmatprep.subr.mxu0 %v5811
        %5908 = vmatpush1.msra.mxu0 %v5810
        %5909 = vmatprep.subr.mxu0 %v5807
        %5910 = vmatpush1.msra.mxu0 %v5806
        %5911 = vmatprep.subr.mxu0 %v5803
        %5912 = vmatpush1.msra.mxu0 %v5802
        %5913 = vmatprep.subr.mxu0 %v5799
        %5914 = vmatpush1.msra.mxu0 %v5798
        %5915 = vmatprep.subr.mxu0 %v5795
        %5916 = vmatpush1.msra.mxu0 %v5794
        %5917 = vmatprep.subr.mxu0 %v5791
        %5918 = vmatpush1.msra.mxu0 %v5790
        %5919 = vmatprep.subr.mxu0 %v5787
        %5920 = vmatpush1.msra.mxu0 %v5786
        %5921 = vmatprep.subr.mxu0 %v5783
        %5922 = vmatpush1.msra.mxu0 %v5782
        %5923 = vmatprep.subr.mxu0 %v5779
        %5924 = vmatpush1.msra.mxu0 %v5778
        %5925 = vmatprep.subr.mxu0 %v5775
        %5926 = vmatpush1.msra.mxu0 %v5774
        %5927 = vmatprep.subr.mxu0 %v5771
        %5928 = vmatpush1.msra.mxu0 %v5770
        %5929 = vmatprep.subr.mxu0 %v5767
        %5930 = vmatpush1.msra.mxu0 %v5766
        %5931 = vmatprep.subr.mxu0 %v5763
        %5932 = vmatpush1.msra.mxu0 %v5762
        %5933 = vmatprep.subr.mxu0 0.0
        %5934 = vmatpush2.msra.mxu0 0.0
        %5935 = vmatprep.subr.mxu0 0.0
        %5936 = vmatpush2.msra.mxu0 0.0
        %5937 = vmatprep.subr.mxu0 0.0
        %5938 = vmatpush2.msra.mxu0 0.0
        %5939 = vmatprep.subr.mxu0 0.0
        %5940 = vmatpush2.msra.mxu0 0.0
        %5941 = vmatprep.subr.mxu0 0.0
        %5942 = vmatpush2.msra.mxu0 0.0
        %5943 = vmatprep.subr.mxu0 0.0
        %5944 = vmatpush2.msra.mxu0 0.0
        %5945 = vmatprep.subr.mxu0 0.0
        %5946 = vmatpush2.msra.mxu0 0.0
        %5947 = vmatprep.subr.mxu0 0.0
        %5948 = vmatpush2.msra.mxu0 0.0
        %5949 = vmatprep.subr.mxu0 0.0
        %5950 = vmatpush2.msra.mxu0 0.0
        %5951 = vmatprep.subr.mxu0 0.0
        %5952 = vmatpush2.msra.mxu0 0.0
        %5953 = vmatprep.subr.mxu0 0.0
        %5954 = vmatpush2.msra.mxu0 0.0
        %5955 = vmatprep.subr.mxu0 0.0
        %5956 = vmatpush2.msra.mxu0 0.0
        %5957 = vmatprep.subr.mxu0 0.0
        %5958 = vmatpush2.msra.mxu0 0.0
        %5959 = vmatprep.subr.mxu0 0.0
        %5960 = vmatpush2.msra.mxu0 0.0
        %5961 = vmatprep.subr.mxu0 0.0
        %5962 = vmatpush2.msra.mxu0 0.0
        %5963 = vmatprep.subr.mxu0 0.0
        %5964 = vmatpush2.msra.mxu0 0.0
        %5965 = vmatprep.mubr.f32.mxu0 0.0
        %5966 = vmatmul.mubr.f32.gmra.mxu0 %v5758
        %v5967 = vpop.f32.mrf.mxu0
        %v5968 = vadd.f32 0.0, %v5967
        %v5969 = vpop.f32.mrf.mxu0
        %v5970 = vadd.f32 0.0, %v5969
        %5971 = vmatprep.mubr.f32.mxu0 0.0
        %5972 = vmatmul.mubr.f32.gmra.mxu0 %v5759
        %v5973 = vpop.f32.mrf.mxu0
        %v5974 = vadd.f32 0.0, %v5973
        %v5975 = vpop.f32.mrf.mxu0
        %v5976 = vadd.f32 0.0, %v5975
        %5977 = vdwg.mxu0
        %v5978 = vadd.f32 %v5653, %v5891
        %v5979 = vadd.f32 %v5655, %v5893
        %v5980 = vadd.f32 %v5730, %v5968
        %v5981 = vadd.f32 %v5732, %v5970
        %v5982 = vadd.f32 %v5659, %v5897
        %v5983 = vadd.f32 %v5661, %v5899
        %v5984 = vadd.f32 %v5736, %v5974
        %v5985 = vadd.f32 %v5738, %v5976
        %v5986 = vld [vmem:[%s89] sm:$0xf]
        %v5988 = vlaneseq
        %v5989 = vshrl.u32 %v5988, 7
        %v5990 = vsub.s32 0, %v5989
        %v5991 = vrot.slane %v5986, %v5990
        %v5992 = vlaneseq
        %v5993 = vshrl.u32 %v5992, 7
        %v5994 = vsub.s32 1, %v5993
        %v5995 = vrot.slane %v5986, %v5994
        %v5996 = vlaneseq
        %v5997 = vshrl.u32 %v5996, 7
        %v5998 = vsub.s32 2, %v5997
        %v5999 = vrot.slane %v5986, %v5998
        %v6000 = vlaneseq
        %v6001 = vshrl.u32 %v6000, 7
        %v6002 = vsub.s32 3, %v6001
        %v6003 = vrot.slane %v5986, %v6002
        %v6008 = vadd.f32 %v5978, %v5991
        %v6009 = vadd.f32 %v5979, %v5995
        %v6010 = vadd.f32 %v5980, %v5999
        %v6011 = vadd.f32 %v5981, %v6003
        %v6012 = vadd.f32 %v5982, %v5991
        %v6013 = vadd.f32 %v5983, %v5995
        %v6014 = vadd.f32 %v5984, %v5999
        %v6015 = vadd.f32 %v5985, %v6003
        %v6016 = vmax.f32 %v6008, 0.0
        %v6017 = vmax.f32 %v6009, 0.0
        %v6018 = vmax.f32 %v6010, 0.0
        %v6019 = vmax.f32 %v6011, 0.0
        %v6020 = vmax.f32 %v6012, 0.0
        %v6021 = vmax.f32 %v6013, 0.0
        %v6022 = vmax.f32 %v6014, 0.0
        %v6023 = vmax.f32 %v6015, 0.0
        %v6024 = vld [vmem:[%s91] sm:$0xf]
        %v6026 = vlaneseq
        %v6027 = vshrl.u32 %v6026, 7
        %v6028 = vsub.s32 0, %v6027
        %v6029 = vrot.slane %v6024, %v6028
        %v6030 = vlaneseq
        %v6031 = vshrl.u32 %v6030, 7
        %v6032 = vsub.s32 1, %v6031
        %v6033 = vrot.slane %v6024, %v6032
        %v6034 = vlaneseq
        %v6035 = vshrl.u32 %v6034, 7
        %v6036 = vsub.s32 2, %v6035
        %v6037 = vrot.slane %v6024, %v6036
        %v6038 = vlaneseq
        %v6039 = vshrl.u32 %v6038, 7
        %v6040 = vsub.s32 3, %v6039
        %v6041 = vrot.slane %v6024, %v6040
        %v6046 = vmul.f32 %v1882, %v6029
        %v6047 = vmul.f32 %v1883, %v6033
        %v6048 = vmul.f32 %v1884, %v6037
        %v6049 = vmul.f32 %v1885, %v6041
        %v6050 = vmul.f32 %v1886, %v6029
        %v6051 = vmul.f32 %v1887, %v6033
        %v6052 = vmul.f32 %v1888, %v6037
        %v6053 = vmul.f32 %v1889, %v6041
        %v6054 = vld [vmem:[%s93] sm:$0xf]
        %v6056 = vlaneseq
        %v6057 = vshrl.u32 %v6056, 7
        %v6058 = vsub.s32 0, %v6057
        %v6059 = vrot.slane %v6054, %v6058
        %v6060 = vlaneseq
        %v6061 = vshrl.u32 %v6060, 7
        %v6062 = vsub.s32 1, %v6061
        %v6063 = vrot.slane %v6054, %v6062
        %v6064 = vlaneseq
        %v6065 = vshrl.u32 %v6064, 7
        %v6066 = vsub.s32 2, %v6065
        %v6067 = vrot.slane %v6054, %v6066
        %v6068 = vlaneseq
        %v6069 = vshrl.u32 %v6068, 7
        %v6070 = vsub.s32 3, %v6069
        %v6071 = vrot.slane %v6054, %v6070
        %v6076 = vadd.f32 %v6046, %v6059
        %v6077 = vadd.f32 %v6047, %v6063
        %v6078 = vadd.f32 %v6048, %v6067
        %v6079 = vadd.f32 %v6049, %v6071
        %v6080 = vadd.f32 %v6050, %v6059
        %v6081 = vadd.f32 %v6051, %v6063
        %v6082 = vadd.f32 %v6052, %v6067
        %v6083 = vadd.f32 %v6053, %v6071
        %v6084 = vmax.f32 %v6076, 0.0
        %v6085 = vmax.f32 %v6077, 0.0
        %v6086 = vmax.f32 %v6078, 0.0
        %v6087 = vmax.f32 %v6079, 0.0
        %v6088 = vmax.f32 %v6080, 0.0
        %v6089 = vmax.f32 %v6081, 0.0
        %v6090 = vmax.f32 %v6082, 0.0
        %v6091 = vmax.f32 %v6083, 0.0
        %v6092 = vld [vmem:[#allocation48] sm:$0xff]
        %v6093 = vld [vmem:[#allocation48 + $0x8] sm:$0xff]
        %v6094 = vld [vmem:[#allocation48 + $0x10] sm:$0xff]
        %v6095 = vld [vmem:[#allocation48 + $0x18] sm:$0xff]
        %v6096 = vld [vmem:[#allocation48 + $0x20] sm:$0xff]
        %v6097 = vld [vmem:[#allocation48 + $0x28] sm:$0xff]
        %v6098 = vld [vmem:[#allocation48 + $0x30] sm:$0xff]
        %v6099 = vld [vmem:[#allocation48 + $0x38] sm:$0xff]
        %v6100 = vld [vmem:[#allocation48 + $0x40] sm:$0xff]
        %v6101 = vld [vmem:[#allocation48 + $0x48] sm:$0xff]
        %v6102 = vld [vmem:[#allocation48 + $0x50] sm:$0xff]
        %v6103 = vld [vmem:[#allocation48 + $0x58] sm:$0xff]
        %v6104 = vld [vmem:[#allocation48 + $0x60] sm:$0xff]
        %v6105 = vld [vmem:[#allocation48 + $0x68] sm:$0xff]
        %v6106 = vld [vmem:[#allocation48 + $0x70] sm:$0xff]
        %v6107 = vld [vmem:[#allocation48 + $0x78] sm:$0xff]
        %v6108 = vld [vmem:[#allocation48 + $0x80] sm:$0xff]
        %v6109 = vld [vmem:[#allocation48 + $0x88] sm:$0xff]
        %v6110 = vld [vmem:[#allocation48 + $0x90] sm:$0xff]
        %v6111 = vld [vmem:[#allocation48 + $0x98] sm:$0xff]
        %v6112 = vld [vmem:[#allocation48 + $0xa0] sm:$0xff]
        %v6113 = vld [vmem:[#allocation48 + $0xa8] sm:$0xff]
        %v6114 = vld [vmem:[#allocation48 + $0xb0] sm:$0xff]
        %v6115 = vld [vmem:[#allocation48 + $0xb8] sm:$0xff]
        %v6116 = vld [vmem:[#allocation48 + $0xc0] sm:$0xff]
        %v6117 = vld [vmem:[#allocation48 + $0xc8] sm:$0xff]
        %v6118 = vld [vmem:[#allocation48 + $0xd0] sm:$0xff]
        %v6119 = vld [vmem:[#allocation48 + $0xd8] sm:$0xff]
        %v6120 = vld [vmem:[#allocation48 + $0xe0] sm:$0xff]
        %v6121 = vld [vmem:[#allocation48 + $0xe8] sm:$0xff]
        %v6122 = vld [vmem:[#allocation48 + $0xf0] sm:$0xff]
        %v6123 = vld [vmem:[#allocation48 + $0xf8] sm:$0xff]
        %v6124 = vld [vmem:[#allocation48 + $0x100] sm:$0xff]
        %v6125 = vld [vmem:[#allocation48 + $0x108] sm:$0xff]
        %v6126 = vld [vmem:[#allocation48 + $0x110] sm:$0xff]
        %v6127 = vld [vmem:[#allocation48 + $0x118] sm:$0xff]
        %v6128 = vld [vmem:[#allocation48 + $0x120] sm:$0xff]
        %v6129 = vld [vmem:[#allocation48 + $0x128] sm:$0xff]
        %v6130 = vld [vmem:[#allocation48 + $0x130] sm:$0xff]
        %v6131 = vld [vmem:[#allocation48 + $0x138] sm:$0xff]
        %v6132 = vld [vmem:[#allocation48 + $0x140] sm:$0xff]
        %v6133 = vld [vmem:[#allocation48 + $0x148] sm:$0xff]
        %v6134 = vld [vmem:[#allocation48 + $0x150] sm:$0xff]
        %v6135 = vld [vmem:[#allocation48 + $0x158] sm:$0xff]
        %v6136 = vld [vmem:[#allocation48 + $0x160] sm:$0xff]
        %v6137 = vld [vmem:[#allocation48 + $0x168] sm:$0xff]
        %v6138 = vld [vmem:[#allocation48 + $0x170] sm:$0xff]
        %v6139 = vld [vmem:[#allocation48 + $0x178] sm:$0xff]
        %v6140 = vld [vmem:[#allocation48 + $0x180] sm:$0xff]
        %v6141 = vld [vmem:[#allocation48 + $0x188] sm:$0xff]
        %v6142 = vld [vmem:[#allocation48 + $0x190] sm:$0xff]
        %v6143 = vld [vmem:[#allocation48 + $0x198] sm:$0xff]
        %v6144 = vld [vmem:[#allocation48 + $0x1a0] sm:$0xff]
        %v6145 = vld [vmem:[#allocation48 + $0x1a8] sm:$0xff]
        %v6146 = vld [vmem:[#allocation48 + $0x1b0] sm:$0xff]
        %v6147 = vld [vmem:[#allocation48 + $0x1b8] sm:$0xff]
        %v6148 = vld [vmem:[#allocation48 + $0x1c0] sm:$0xff]
        %v6149 = vld [vmem:[#allocation48 + $0x1c8] sm:$0xff]
        %v6150 = vld [vmem:[#allocation48 + $0x1d0] sm:$0xff]
        %v6151 = vld [vmem:[#allocation48 + $0x1d8] sm:$0xff]
        %v6152 = vld [vmem:[#allocation48 + $0x1e0] sm:$0xff]
        %v6153 = vld [vmem:[#allocation48 + $0x1e8] sm:$0xff]
        %v6154 = vld [vmem:[#allocation48 + $0x1f0] sm:$0xff]
        %v6155 = vld [vmem:[#allocation48 + $0x1f8] sm:$0xff]
        %v6156 = vld [vmem:[#allocation48 + $0x200] sm:$0xff]
        %v6157 = vld [vmem:[#allocation48 + $0x208] sm:$0xff]
        %v6158 = vld [vmem:[#allocation48 + $0x210] sm:$0xff]
        %v6159 = vld [vmem:[#allocation48 + $0x218] sm:$0xff]
        %v6160 = vld [vmem:[#allocation48 + $0x220] sm:$0xff]
        %v6161 = vld [vmem:[#allocation48 + $0x228] sm:$0xff]
        %v6162 = vld [vmem:[#allocation48 + $0x230] sm:$0xff]
        %v6163 = vld [vmem:[#allocation48 + $0x238] sm:$0xff]
        %v6164 = vld [vmem:[#allocation48 + $0x240] sm:$0xff]
        %v6165 = vld [vmem:[#allocation48 + $0x248] sm:$0xff]
        %v6166 = vld [vmem:[#allocation48 + $0x250] sm:$0xff]
        %v6167 = vld [vmem:[#allocation48 + $0x258] sm:$0xff]
        %v6168 = vld [vmem:[#allocation48 + $0x260] sm:$0xff]
        %v6169 = vld [vmem:[#allocation48 + $0x268] sm:$0xff]
        %v6170 = vld [vmem:[#allocation48 + $0x270] sm:$0xff]
        %v6171 = vld [vmem:[#allocation48 + $0x278] sm:$0xff]
        %v6172 = vld [vmem:[#allocation48 + $0x280] sm:$0xff]
        %v6173 = vld [vmem:[#allocation48 + $0x288] sm:$0xff]
        %v6174 = vld [vmem:[#allocation48 + $0x290] sm:$0xff]
        %v6175 = vld [vmem:[#allocation48 + $0x298] sm:$0xff]
        %v6176 = vld [vmem:[#allocation48 + $0x2a0] sm:$0xff]
        %v6177 = vld [vmem:[#allocation48 + $0x2a8] sm:$0xff]
        %v6178 = vld [vmem:[#allocation48 + $0x2b0] sm:$0xff]
        %v6179 = vld [vmem:[#allocation48 + $0x2b8] sm:$0xff]
        %v6180 = vld [vmem:[#allocation48 + $0x2c0] sm:$0xff]
        %v6181 = vld [vmem:[#allocation48 + $0x2c8] sm:$0xff]
        %v6182 = vld [vmem:[#allocation48 + $0x2d0] sm:$0xff]
        %v6183 = vld [vmem:[#allocation48 + $0x2d8] sm:$0xff]
        %v6184 = vld [vmem:[#allocation48 + $0x2e0] sm:$0xff]
        %v6185 = vld [vmem:[#allocation48 + $0x2e8] sm:$0xff]
        %v6186 = vld [vmem:[#allocation48 + $0x2f0] sm:$0xff]
        %v6187 = vld [vmem:[#allocation48 + $0x2f8] sm:$0xff]
        %v6188 = vld [vmem:[#allocation48 + $0x300] sm:$0xff]
        %v6189 = vld [vmem:[#allocation48 + $0x308] sm:$0xff]
        %v6190 = vld [vmem:[#allocation48 + $0x310] sm:$0xff]
        %v6191 = vld [vmem:[#allocation48 + $0x318] sm:$0xff]
        %v6192 = vld [vmem:[#allocation48 + $0x320] sm:$0xff]
        %v6193 = vld [vmem:[#allocation48 + $0x328] sm:$0xff]
        %v6194 = vld [vmem:[#allocation48 + $0x330] sm:$0xff]
        %v6195 = vld [vmem:[#allocation48 + $0x338] sm:$0xff]
        %v6196 = vld [vmem:[#allocation48 + $0x340] sm:$0xff]
        %v6197 = vld [vmem:[#allocation48 + $0x348] sm:$0xff]
        %v6198 = vld [vmem:[#allocation48 + $0x350] sm:$0xff]
        %v6199 = vld [vmem:[#allocation48 + $0x358] sm:$0xff]
        %v6200 = vld [vmem:[#allocation48 + $0x360] sm:$0xff]
        %v6201 = vld [vmem:[#allocation48 + $0x368] sm:$0xff]
        %v6202 = vld [vmem:[#allocation48 + $0x370] sm:$0xff]
        %v6203 = vld [vmem:[#allocation48 + $0x378] sm:$0xff]
        %v6204 = vld [vmem:[#allocation48 + $0x380] sm:$0xff]
        %v6205 = vld [vmem:[#allocation48 + $0x388] sm:$0xff]
        %v6206 = vld [vmem:[#allocation48 + $0x390] sm:$0xff]
        %v6207 = vld [vmem:[#allocation48 + $0x398] sm:$0xff]
        %v6208 = vld [vmem:[#allocation48 + $0x3a0] sm:$0xff]
        %v6209 = vld [vmem:[#allocation48 + $0x3a8] sm:$0xff]
        %v6210 = vld [vmem:[#allocation48 + $0x3b0] sm:$0xff]
        %v6211 = vld [vmem:[#allocation48 + $0x3b8] sm:$0xff]
        %v6212 = vld [vmem:[#allocation48 + $0x3c0] sm:$0xff]
        %v6213 = vld [vmem:[#allocation48 + $0x3c8] sm:$0xff]
        %v6214 = vld [vmem:[#allocation48 + $0x3d0] sm:$0xff]
        %v6215 = vld [vmem:[#allocation48 + $0x3d8] sm:$0xff]
        %v6216 = vld [vmem:[#allocation48 + $0x3e0] sm:$0xff]
        %v6217 = vld [vmem:[#allocation48 + $0x3e8] sm:$0xff]
        %v6218 = vld [vmem:[#allocation48 + $0x3f0] sm:$0xff]
        %v6219 = vld [vmem:[#allocation48 + $0x3f8] sm:$0xff]
        %v6220 = vld [vmem:[#allocation48 + $0x400] sm:$0xff]
        %v6221 = vld [vmem:[#allocation48 + $0x408] sm:$0xff]
        %v6222 = vld [vmem:[#allocation48 + $0x410] sm:$0xff]
        %v6223 = vld [vmem:[#allocation48 + $0x418] sm:$0xff]
        %v6224 = vld [vmem:[#allocation48 + $0x420] sm:$0xff]
        %v6225 = vld [vmem:[#allocation48 + $0x428] sm:$0xff]
        %v6226 = vld [vmem:[#allocation48 + $0x430] sm:$0xff]
        %v6227 = vld [vmem:[#allocation48 + $0x438] sm:$0xff]
        %v6228 = vld [vmem:[#allocation48 + $0x440] sm:$0xff]
        %v6229 = vld [vmem:[#allocation48 + $0x448] sm:$0xff]
        %v6230 = vld [vmem:[#allocation48 + $0x450] sm:$0xff]
        %v6231 = vld [vmem:[#allocation48 + $0x458] sm:$0xff]
        %v6232 = vld [vmem:[#allocation48 + $0x460] sm:$0xff]
        %v6233 = vld [vmem:[#allocation48 + $0x468] sm:$0xff]
        %v6234 = vld [vmem:[#allocation48 + $0x470] sm:$0xff]
        %v6235 = vld [vmem:[#allocation48 + $0x478] sm:$0xff]
        %v6236 = vld [vmem:[#allocation48 + $0x480] sm:$0xff]
        %v6237 = vld [vmem:[#allocation48 + $0x488] sm:$0xff]
        %v6238 = vld [vmem:[#allocation48 + $0x490] sm:$0xff]
        %v6239 = vld [vmem:[#allocation48 + $0x498] sm:$0xff]
        %v6240 = vld [vmem:[#allocation48 + $0x4a0] sm:$0xff]
        %v6241 = vld [vmem:[#allocation48 + $0x4a8] sm:$0xff]
        %v6242 = vld [vmem:[#allocation48 + $0x4b0] sm:$0xff]
        %v6243 = vld [vmem:[#allocation48 + $0x4b8] sm:$0xff]
        %v6244 = vld [vmem:[#allocation48 + $0x4c0] sm:$0xff]
        %v6245 = vld [vmem:[#allocation48 + $0x4c8] sm:$0xff]
        %v6246 = vld [vmem:[#allocation48 + $0x4d0] sm:$0xff]
        %v6247 = vld [vmem:[#allocation48 + $0x4d8] sm:$0xff]
        %v6248 = vld [vmem:[#allocation48 + $0x4e0] sm:$0xff]
        %v6249 = vld [vmem:[#allocation48 + $0x4e8] sm:$0xff]
        %v6250 = vld [vmem:[#allocation48 + $0x4f0] sm:$0xff]
        %v6251 = vld [vmem:[#allocation48 + $0x4f8] sm:$0xff]
        %v6252 = vld [vmem:[#allocation48 + $0x500] sm:$0xff]
        %v6253 = vld [vmem:[#allocation48 + $0x508] sm:$0xff]
        %v6254 = vld [vmem:[#allocation48 + $0x510] sm:$0xff]
        %v6255 = vld [vmem:[#allocation48 + $0x518] sm:$0xff]
        %v6256 = vld [vmem:[#allocation48 + $0x520] sm:$0xff]
        %v6257 = vld [vmem:[#allocation48 + $0x528] sm:$0xff]
        %v6258 = vld [vmem:[#allocation48 + $0x530] sm:$0xff]
        %v6259 = vld [vmem:[#allocation48 + $0x538] sm:$0xff]
        %v6260 = vld [vmem:[#allocation48 + $0x540] sm:$0xff]
        %v6261 = vld [vmem:[#allocation48 + $0x548] sm:$0xff]
        %v6262 = vld [vmem:[#allocation48 + $0x550] sm:$0xff]
        %v6263 = vld [vmem:[#allocation48 + $0x558] sm:$0xff]
        %v6264 = vld [vmem:[#allocation48 + $0x560] sm:$0xff]
        %v6265 = vld [vmem:[#allocation48 + $0x568] sm:$0xff]
        %v6266 = vld [vmem:[#allocation48 + $0x570] sm:$0xff]
        %v6267 = vld [vmem:[#allocation48 + $0x578] sm:$0xff]
        %v6268 = vld [vmem:[#allocation48 + $0x580] sm:$0xff]
        %v6269 = vld [vmem:[#allocation48 + $0x588] sm:$0xff]
        %v6270 = vld [vmem:[#allocation48 + $0x590] sm:$0xff]
        %v6271 = vld [vmem:[#allocation48 + $0x598] sm:$0xff]
        %v6272 = vld [vmem:[#allocation48 + $0x5a0] sm:$0xff]
        %v6273 = vld [vmem:[#allocation48 + $0x5a8] sm:$0xff]
        %v6274 = vld [vmem:[#allocation48 + $0x5b0] sm:$0xff]
        %v6275 = vld [vmem:[#allocation48 + $0x5b8] sm:$0xff]
        %v6276 = vld [vmem:[#allocation48 + $0x5c0] sm:$0xff]
        %v6277 = vld [vmem:[#allocation48 + $0x5c8] sm:$0xff]
        %v6278 = vld [vmem:[#allocation48 + $0x5d0] sm:$0xff]
        %v6279 = vld [vmem:[#allocation48 + $0x5d8] sm:$0xff]
        %v6280 = vld [vmem:[#allocation48 + $0x5e0] sm:$0xff]
        %v6281 = vld [vmem:[#allocation48 + $0x5e8] sm:$0xff]
        %v6282 = vld [vmem:[#allocation48 + $0x5f0] sm:$0xff]
        %v6283 = vld [vmem:[#allocation48 + $0x5f8] sm:$0xff]
        %v6284 = vld [vmem:[#allocation48 + $0x600] sm:$0xff]
        %v6285 = vld [vmem:[#allocation48 + $0x608] sm:$0xff]
        %v6286 = vld [vmem:[#allocation48 + $0x610] sm:$0xff]
        %v6287 = vld [vmem:[#allocation48 + $0x618] sm:$0xff]
        %v6288 = vld [vmem:[#allocation48 + $0x620] sm:$0xff]
        %v6289 = vld [vmem:[#allocation48 + $0x628] sm:$0xff]
        %v6290 = vld [vmem:[#allocation48 + $0x630] sm:$0xff]
        %v6291 = vld [vmem:[#allocation48 + $0x638] sm:$0xff]
        %v6292 = vld [vmem:[#allocation48 + $0x640] sm:$0xff]
        %v6293 = vld [vmem:[#allocation48 + $0x648] sm:$0xff]
        %v6294 = vld [vmem:[#allocation48 + $0x650] sm:$0xff]
        %v6295 = vld [vmem:[#allocation48 + $0x658] sm:$0xff]
        %v6296 = vld [vmem:[#allocation48 + $0x660] sm:$0xff]
        %v6297 = vld [vmem:[#allocation48 + $0x668] sm:$0xff]
        %v6298 = vld [vmem:[#allocation48 + $0x670] sm:$0xff]
        %v6299 = vld [vmem:[#allocation48 + $0x678] sm:$0xff]
        %v6300 = vld [vmem:[#allocation48 + $0x680] sm:$0xff]
        %v6301 = vld [vmem:[#allocation48 + $0x688] sm:$0xff]
        %v6302 = vld [vmem:[#allocation48 + $0x690] sm:$0xff]
        %v6303 = vld [vmem:[#allocation48 + $0x698] sm:$0xff]
        %v6304 = vld [vmem:[#allocation48 + $0x6a0] sm:$0xff]
        %v6305 = vld [vmem:[#allocation48 + $0x6a8] sm:$0xff]
        %v6306 = vld [vmem:[#allocation48 + $0x6b0] sm:$0xff]
        %v6307 = vld [vmem:[#allocation48 + $0x6b8] sm:$0xff]
        %v6308 = vld [vmem:[#allocation48 + $0x6c0] sm:$0xff]
        %v6309 = vld [vmem:[#allocation48 + $0x6c8] sm:$0xff]
        %v6310 = vld [vmem:[#allocation48 + $0x6d0] sm:$0xff]
        %v6311 = vld [vmem:[#allocation48 + $0x6d8] sm:$0xff]
        %v6312 = vld [vmem:[#allocation48 + $0x6e0] sm:$0xff]
        %v6313 = vld [vmem:[#allocation48 + $0x6e8] sm:$0xff]
        %v6314 = vld [vmem:[#allocation48 + $0x6f0] sm:$0xff]
        %v6315 = vld [vmem:[#allocation48 + $0x6f8] sm:$0xff]
        %v6316 = vld [vmem:[#allocation48 + $0x700] sm:$0xff]
        %v6317 = vld [vmem:[#allocation48 + $0x708] sm:$0xff]
        %v6318 = vld [vmem:[#allocation48 + $0x710] sm:$0xff]
        %v6319 = vld [vmem:[#allocation48 + $0x718] sm:$0xff]
        %v6320 = vld [vmem:[#allocation48 + $0x720] sm:$0xff]
        %v6321 = vld [vmem:[#allocation48 + $0x728] sm:$0xff]
        %v6322 = vld [vmem:[#allocation48 + $0x730] sm:$0xff]
        %v6323 = vld [vmem:[#allocation48 + $0x738] sm:$0xff]
        %v6324 = vld [vmem:[#allocation48 + $0x740] sm:$0xff]
        %v6325 = vld [vmem:[#allocation48 + $0x748] sm:$0xff]
        %v6326 = vld [vmem:[#allocation48 + $0x750] sm:$0xff]
        %v6327 = vld [vmem:[#allocation48 + $0x758] sm:$0xff]
        %v6328 = vld [vmem:[#allocation48 + $0x760] sm:$0xff]
        %v6329 = vld [vmem:[#allocation48 + $0x768] sm:$0xff]
        %v6330 = vld [vmem:[#allocation48 + $0x770] sm:$0xff]
        %v6331 = vld [vmem:[#allocation48 + $0x778] sm:$0xff]
        %v6332 = vld [vmem:[#allocation48 + $0x780] sm:$0xff]
        %v6333 = vld [vmem:[#allocation48 + $0x788] sm:$0xff]
        %v6334 = vld [vmem:[#allocation48 + $0x790] sm:$0xff]
        %v6335 = vld [vmem:[#allocation48 + $0x798] sm:$0xff]
        %v6336 = vld [vmem:[#allocation48 + $0x7a0] sm:$0xff]
        %v6337 = vld [vmem:[#allocation48 + $0x7a8] sm:$0xff]
        %v6338 = vld [vmem:[#allocation48 + $0x7b0] sm:$0xff]
        %v6339 = vld [vmem:[#allocation48 + $0x7b8] sm:$0xff]
        %v6340 = vld [vmem:[#allocation48 + $0x7c0] sm:$0xff]
        %v6341 = vld [vmem:[#allocation48 + $0x7c8] sm:$0xff]
        %v6342 = vld [vmem:[#allocation48 + $0x7d0] sm:$0xff]
        %v6343 = vld [vmem:[#allocation48 + $0x7d8] sm:$0xff]
        %v6344 = vld [vmem:[#allocation48 + $0x7e0] sm:$0xff]
        %v6345 = vld [vmem:[#allocation48 + $0x7e8] sm:$0xff]
        %v6346 = vld [vmem:[#allocation48 + $0x7f0] sm:$0xff]
        %v6347 = vld [vmem:[#allocation48 + $0x7f8] sm:$0xff]
        %v6348 = vld [vmem:[%s97] sm:$0xf]
        %v6350 = vlaneseq
        %v6351 = vshrl.u32 %v6350, 7
        %v6352 = vsub.s32 0, %v6351
        %v6353 = vrot.slane %v6348, %v6352
        %v6354 = vlaneseq
        %v6355 = vshrl.u32 %v6354, 7
        %v6356 = vsub.s32 1, %v6355
        %v6357 = vrot.slane %v6348, %v6356
        %v6358 = vlaneseq
        %v6359 = vshrl.u32 %v6358, 7
        %v6360 = vsub.s32 2, %v6359
        %v6361 = vrot.slane %v6348, %v6360
        %v6362 = vlaneseq
        %v6363 = vshrl.u32 %v6362, 7
        %v6364 = vsub.s32 3, %v6363
        %v6365 = vrot.slane %v6348, %v6364
        %6370 = vmatprep.subr.mxu0 %v6153
        %6371 = vmatpush1.msra.mxu0 %v6152
        %6372 = vmatprep.subr.mxu0 %v6149
        %6373 = vmatpush1.msra.mxu0 %v6148
        %6374 = vmatprep.subr.mxu0 %v6145
        %6375 = vmatpush1.msra.mxu0 %v6144
        %6376 = vmatprep.subr.mxu0 %v6141
        %6377 = vmatpush1.msra.mxu0 %v6140
        %6378 = vmatprep.subr.mxu0 %v6137
        %6379 = vmatpush1.msra.mxu0 %v6136
        %6380 = vmatprep.subr.mxu0 %v6133
        %6381 = vmatpush1.msra.mxu0 %v6132
        %6382 = vmatprep.subr.mxu0 %v6129
        %6383 = vmatpush1.msra.mxu0 %v6128
        %6384 = vmatprep.subr.mxu0 %v6125
        %6385 = vmatpush1.msra.mxu0 %v6124
        %6386 = vmatprep.subr.mxu0 %v6121
        %6387 = vmatpush1.msra.mxu0 %v6120
        %6388 = vmatprep.subr.mxu0 %v6117
        %6389 = vmatpush1.msra.mxu0 %v6116
        %6390 = vmatprep.subr.mxu0 %v6113
        %6391 = vmatpush1.msra.mxu0 %v6112
        %6392 = vmatprep.subr.mxu0 %v6109
        %6393 = vmatpush1.msra.mxu0 %v6108
        %6394 = vmatprep.subr.mxu0 %v6105
        %6395 = vmatpush1.msra.mxu0 %v6104
        %6396 = vmatprep.subr.mxu0 %v6101
        %6397 = vmatpush1.msra.mxu0 %v6100
        %6398 = vmatprep.subr.mxu0 %v6097
        %6399 = vmatpush1.msra.mxu0 %v6096
        %6400 = vmatprep.subr.mxu0 %v6093
        %6401 = vmatpush1.msra.mxu0 %v6092
        %6402 = vmatprep.subr.mxu0 %v6217
        %6403 = vmatpush2.msra.mxu0 %v6216
        %6404 = vmatprep.subr.mxu0 %v6213
        %6405 = vmatpush2.msra.mxu0 %v6212
        %6406 = vmatprep.subr.mxu0 %v6209
        %6407 = vmatpush2.msra.mxu0 %v6208
        %6408 = vmatprep.subr.mxu0 %v6205
        %6409 = vmatpush2.msra.mxu0 %v6204
        %6410 = vmatprep.subr.mxu0 %v6201
        %6411 = vmatpush2.msra.mxu0 %v6200
        %6412 = vmatprep.subr.mxu0 %v6197
        %6413 = vmatpush2.msra.mxu0 %v6196
        %6414 = vmatprep.subr.mxu0 %v6193
        %6415 = vmatpush2.msra.mxu0 %v6192
        %6416 = vmatprep.subr.mxu0 %v6189
        %6417 = vmatpush2.msra.mxu0 %v6188
        %6418 = vmatprep.subr.mxu0 %v6185
        %6419 = vmatpush2.msra.mxu0 %v6184
        %6420 = vmatprep.subr.mxu0 %v6181
        %6421 = vmatpush2.msra.mxu0 %v6180
        %6422 = vmatprep.subr.mxu0 %v6177
        %6423 = vmatpush2.msra.mxu0 %v6176
        %6424 = vmatprep.subr.mxu0 %v6173
        %6425 = vmatpush2.msra.mxu0 %v6172
        %6426 = vmatprep.subr.mxu0 %v6169
        %6427 = vmatpush2.msra.mxu0 %v6168
        %6428 = vmatprep.subr.mxu0 %v6165
        %6429 = vmatpush2.msra.mxu0 %v6164
        %6430 = vmatprep.subr.mxu0 %v6161
        %6431 = vmatpush2.msra.mxu0 %v6160
        %6432 = vmatprep.subr.mxu0 %v6157
        %6433 = vmatpush2.msra.mxu0 %v6156
        %6434 = vmatprep.mubr.f32.mxu0 %v6085
        %6435 = vmatmul.mubr.f32.gmra.mxu0 %v6084
        %v6436 = vpop.f32.mrf.mxu0
        %v6437 = vadd.f32 %v6353, %v6436
        %v6438 = vpop.f32.mrf.mxu0
        %v6439 = vadd.f32 %v6357, %v6438
        %6440 = vmatprep.mubr.f32.mxu0 %v6089
        %6441 = vmatmul.mubr.f32.gmra.mxu0 %v6088
        %v6442 = vpop.f32.mrf.mxu0
        %v6443 = vadd.f32 %v6353, %v6442
        %v6444 = vpop.f32.mrf.mxu0
        %v6445 = vadd.f32 %v6357, %v6444
        %6446 = vdwg.mxu0
        %6447 = vmatprep.subr.mxu0 %v6281
        %6448 = vmatpush1.msra.mxu0 %v6280
        %6449 = vmatprep.subr.mxu0 %v6277
        %6450 = vmatpush1.msra.mxu0 %v6276
        %6451 = vmatprep.subr.mxu0 %v6273
        %6452 = vmatpush1.msra.mxu0 %v6272
        %6453 = vmatprep.subr.mxu0 %v6269
        %6454 = vmatpush1.msra.mxu0 %v6268
        %6455 = vmatprep.subr.mxu0 %v6265
        %6456 = vmatpush1.msra.mxu0 %v6264
        %6457 = vmatprep.subr.mxu0 %v6261
        %6458 = vmatpush1.msra.mxu0 %v6260
        %6459 = vmatprep.subr.mxu0 %v6257
        %6460 = vmatpush1.msra.mxu0 %v6256
        %6461 = vmatprep.subr.mxu0 %v6253
        %6462 = vmatpush1.msra.mxu0 %v6252
        %6463 = vmatprep.subr.mxu0 %v6249
        %6464 = vmatpush1.msra.mxu0 %v6248
        %6465 = vmatprep.subr.mxu0 %v6245
        %6466 = vmatpush1.msra.mxu0 %v6244
        %6467 = vmatprep.subr.mxu0 %v6241
        %6468 = vmatpush1.msra.mxu0 %v6240
        %6469 = vmatprep.subr.mxu0 %v6237
        %6470 = vmatpush1.msra.mxu0 %v6236
        %6471 = vmatprep.subr.mxu0 %v6233
        %6472 = vmatpush1.msra.mxu0 %v6232
        %6473 = vmatprep.subr.mxu0 %v6229
        %6474 = vmatpush1.msra.mxu0 %v6228
        %6475 = vmatprep.subr.mxu0 %v6225
        %6476 = vmatpush1.msra.mxu0 %v6224
        %6477 = vmatprep.subr.mxu0 %v6221
        %6478 = vmatpush1.msra.mxu0 %v6220
        %6479 = vmatprep.subr.mxu0 %v6345
        %6480 = vmatpush2.msra.mxu0 %v6344
        %6481 = vmatprep.subr.mxu0 %v6341
        %6482 = vmatpush2.msra.mxu0 %v6340
        %6483 = vmatprep.subr.mxu0 %v6337
        %6484 = vmatpush2.msra.mxu0 %v6336
        %6485 = vmatprep.subr.mxu0 %v6333
        %6486 = vmatpush2.msra.mxu0 %v6332
        %6487 = vmatprep.subr.mxu0 %v6329
        %6488 = vmatpush2.msra.mxu0 %v6328
        %6489 = vmatprep.subr.mxu0 %v6325
        %6490 = vmatpush2.msra.mxu0 %v6324
        %6491 = vmatprep.subr.mxu0 %v6321
        %6492 = vmatpush2.msra.mxu0 %v6320
        %6493 = vmatprep.subr.mxu0 %v6317
        %6494 = vmatpush2.msra.mxu0 %v6316
        %6495 = vmatprep.subr.mxu0 %v6313
        %6496 = vmatpush2.msra.mxu0 %v6312
        %6497 = vmatprep.subr.mxu0 %v6309
        %6498 = vmatpush2.msra.mxu0 %v6308
        %6499 = vmatprep.subr.mxu0 %v6305
        %6500 = vmatpush2.msra.mxu0 %v6304
        %6501 = vmatprep.subr.mxu0 %v6301
        %6502 = vmatpush2.msra.mxu0 %v6300
        %6503 = vmatprep.subr.mxu0 %v6297
        %6504 = vmatpush2.msra.mxu0 %v6296
        %6505 = vmatprep.subr.mxu0 %v6293
        %6506 = vmatpush2.msra.mxu0 %v6292
        %6507 = vmatprep.subr.mxu0 %v6289
        %6508 = vmatpush2.msra.mxu0 %v6288
        %6509 = vmatprep.subr.mxu0 %v6285
        %6510 = vmatpush2.msra.mxu0 %v6284
        %6511 = vmatprep.mubr.f32.mxu0 %v6087
        %6512 = vmatmul.mubr.f32.gmra.mxu0 %v6086
        %v6513 = vpop.f32.mrf.mxu0
        %v6514 = vadd.f32 %v6437, %v6513
        %v6515 = vpop.f32.mrf.mxu0
        %v6516 = vadd.f32 %v6439, %v6515
        %6517 = vmatprep.mubr.f32.mxu0 %v6091
        %6518 = vmatmul.mubr.f32.gmra.mxu0 %v6090
        %v6519 = vpop.f32.mrf.mxu0
        %v6520 = vadd.f32 %v6443, %v6519
        %v6521 = vpop.f32.mrf.mxu0
        %v6522 = vadd.f32 %v6445, %v6521
        %6523 = vdwg.mxu0
        %6524 = vmatprep.subr.mxu0 %v6155
        %6525 = vmatpush1.msra.mxu0 %v6154
        %6526 = vmatprep.subr.mxu0 %v6151
        %6527 = vmatpush1.msra.mxu0 %v6150
        %6528 = vmatprep.subr.mxu0 %v6147
        %6529 = vmatpush1.msra.mxu0 %v6146
        %6530 = vmatprep.subr.mxu0 %v6143
        %6531 = vmatpush1.msra.mxu0 %v6142
        %6532 = vmatprep.subr.mxu0 %v6139
        %6533 = vmatpush1.msra.mxu0 %v6138
        %6534 = vmatprep.subr.mxu0 %v6135
        %6535 = vmatpush1.msra.mxu0 %v6134
        %6536 = vmatprep.subr.mxu0 %v6131
        %6537 = vmatpush1.msra.mxu0 %v6130
        %6538 = vmatprep.subr.mxu0 %v6127
        %6539 = vmatpush1.msra.mxu0 %v6126
        %6540 = vmatprep.subr.mxu0 %v6123
        %6541 = vmatpush1.msra.mxu0 %v6122
        %6542 = vmatprep.subr.mxu0 %v6119
        %6543 = vmatpush1.msra.mxu0 %v6118
        %6544 = vmatprep.subr.mxu0 %v6115
        %6545 = vmatpush1.msra.mxu0 %v6114
        %6546 = vmatprep.subr.mxu0 %v6111
        %6547 = vmatpush1.msra.mxu0 %v6110
        %6548 = vmatprep.subr.mxu0 %v6107
        %6549 = vmatpush1.msra.mxu0 %v6106
        %6550 = vmatprep.subr.mxu0 %v6103
        %6551 = vmatpush1.msra.mxu0 %v6102
        %6552 = vmatprep.subr.mxu0 %v6099
        %6553 = vmatpush1.msra.mxu0 %v6098
        %6554 = vmatprep.subr.mxu0 %v6095
        %6555 = vmatpush1.msra.mxu0 %v6094
        %6556 = vmatprep.subr.mxu0 %v6219
        %6557 = vmatpush2.msra.mxu0 %v6218
        %6558 = vmatprep.subr.mxu0 %v6215
        %6559 = vmatpush2.msra.mxu0 %v6214
        %6560 = vmatprep.subr.mxu0 %v6211
        %6561 = vmatpush2.msra.mxu0 %v6210
        %6562 = vmatprep.subr.mxu0 %v6207
        %6563 = vmatpush2.msra.mxu0 %v6206
        %6564 = vmatprep.subr.mxu0 %v6203
        %6565 = vmatpush2.msra.mxu0 %v6202
        %6566 = vmatprep.subr.mxu0 %v6199
        %6567 = vmatpush2.msra.mxu0 %v6198
        %6568 = vmatprep.subr.mxu0 %v6195
        %6569 = vmatpush2.msra.mxu0 %v6194
        %6570 = vmatprep.subr.mxu0 %v6191
        %6571 = vmatpush2.msra.mxu0 %v6190
        %6572 = vmatprep.subr.mxu0 %v6187
        %6573 = vmatpush2.msra.mxu0 %v6186
        %6574 = vmatprep.subr.mxu0 %v6183
        %6575 = vmatpush2.msra.mxu0 %v6182
        %6576 = vmatprep.subr.mxu0 %v6179
        %6577 = vmatpush2.msra.mxu0 %v6178
        %6578 = vmatprep.subr.mxu0 %v6175
        %6579 = vmatpush2.msra.mxu0 %v6174
        %6580 = vmatprep.subr.mxu0 %v6171
        %6581 = vmatpush2.msra.mxu0 %v6170
        %6582 = vmatprep.subr.mxu0 %v6167
        %6583 = vmatpush2.msra.mxu0 %v6166
        %6584 = vmatprep.subr.mxu0 %v6163
        %6585 = vmatpush2.msra.mxu0 %v6162
        %6586 = vmatprep.subr.mxu0 %v6159
        %6587 = vmatpush2.msra.mxu0 %v6158
        %6588 = vmatprep.mubr.f32.mxu0 %v6085
        %6589 = vmatmul.mubr.f32.gmra.mxu0 %v6084
        %v6590 = vpop.f32.mrf.mxu0
        %v6591 = vadd.f32 %v6361, %v6590
        %v6592 = vpop.f32.mrf.mxu0
        %v6593 = vadd.f32 %v6365, %v6592
        %6594 = vmatprep.mubr.f32.mxu0 %v6089
        %6595 = vmatmul.mubr.f32.gmra.mxu0 %v6088
        %v6596 = vpop.f32.mrf.mxu0
        %v6597 = vadd.f32 %v6361, %v6596
        %v6598 = vpop.f32.mrf.mxu0
        %v6599 = vadd.f32 %v6365, %v6598
        %6600 = vdwg.mxu0
        %6601 = vmatprep.subr.mxu0 %v6283
        %6602 = vmatpush1.msra.mxu0 %v6282
        %6603 = vmatprep.subr.mxu0 %v6279
        %6604 = vmatpush1.msra.mxu0 %v6278
        %6605 = vmatprep.subr.mxu0 %v6275
        %6606 = vmatpush1.msra.mxu0 %v6274
        %6607 = vmatprep.subr.mxu0 %v6271
        %6608 = vmatpush1.msra.mxu0 %v6270
        %6609 = vmatprep.subr.mxu0 %v6267
        %6610 = vmatpush1.msra.mxu0 %v6266
        %6611 = vmatprep.subr.mxu0 %v6263
        %6612 = vmatpush1.msra.mxu0 %v6262
        %6613 = vmatprep.subr.mxu0 %v6259
        %6614 = vmatpush1.msra.mxu0 %v6258
        %6615 = vmatprep.subr.mxu0 %v6255
        %6616 = vmatpush1.msra.mxu0 %v6254
        %6617 = vmatprep.subr.mxu0 %v6251
        %6618 = vmatpush1.msra.mxu0 %v6250
        %6619 = vmatprep.subr.mxu0 %v6247
        %6620 = vmatpush1.msra.mxu0 %v6246
        %6621 = vmatprep.subr.mxu0 %v6243
        %6622 = vmatpush1.msra.mxu0 %v6242
        %6623 = vmatprep.subr.mxu0 %v6239
        %6624 = vmatpush1.msra.mxu0 %v6238
        %6625 = vmatprep.subr.mxu0 %v6235
        %6626 = vmatpush1.msra.mxu0 %v6234
        %6627 = vmatprep.subr.mxu0 %v6231
        %6628 = vmatpush1.msra.mxu0 %v6230
        %6629 = vmatprep.subr.mxu0 %v6227
        %6630 = vmatpush1.msra.mxu0 %v6226
        %6631 = vmatprep.subr.mxu0 %v6223
        %6632 = vmatpush1.msra.mxu0 %v6222
        %6633 = vmatprep.subr.mxu0 %v6347
        %6634 = vmatpush2.msra.mxu0 %v6346
        %6635 = vmatprep.subr.mxu0 %v6343
        %6636 = vmatpush2.msra.mxu0 %v6342
        %6637 = vmatprep.subr.mxu0 %v6339
        %6638 = vmatpush2.msra.mxu0 %v6338
        %6639 = vmatprep.subr.mxu0 %v6335
        %6640 = vmatpush2.msra.mxu0 %v6334
        %6641 = vmatprep.subr.mxu0 %v6331
        %6642 = vmatpush2.msra.mxu0 %v6330
        %6643 = vmatprep.subr.mxu0 %v6327
        %6644 = vmatpush2.msra.mxu0 %v6326
        %6645 = vmatprep.subr.mxu0 %v6323
        %6646 = vmatpush2.msra.mxu0 %v6322
        %6647 = vmatprep.subr.mxu0 %v6319
        %6648 = vmatpush2.msra.mxu0 %v6318
        %6649 = vmatprep.subr.mxu0 %v6315
        %6650 = vmatpush2.msra.mxu0 %v6314
        %6651 = vmatprep.subr.mxu0 %v6311
        %6652 = vmatpush2.msra.mxu0 %v6310
        %6653 = vmatprep.subr.mxu0 %v6307
        %6654 = vmatpush2.msra.mxu0 %v6306
        %6655 = vmatprep.subr.mxu0 %v6303
        %6656 = vmatpush2.msra.mxu0 %v6302
        %6657 = vmatprep.subr.mxu0 %v6299
        %6658 = vmatpush2.msra.mxu0 %v6298
        %6659 = vmatprep.subr.mxu0 %v6295
        %6660 = vmatpush2.msra.mxu0 %v6294
        %6661 = vmatprep.subr.mxu0 %v6291
        %6662 = vmatpush2.msra.mxu0 %v6290
        %6663 = vmatprep.subr.mxu0 %v6287
        %6664 = vmatpush2.msra.mxu0 %v6286
        %6665 = vmatprep.mubr.f32.mxu0 %v6087
        %6666 = vmatmul.mubr.f32.gmra.mxu0 %v6086
        %v6667 = vpop.f32.mrf.mxu0
        %v6668 = vadd.f32 %v6591, %v6667
        %v6669 = vpop.f32.mrf.mxu0
        %v6670 = vadd.f32 %v6593, %v6669
        %6671 = vmatprep.mubr.f32.mxu0 %v6091
        %6672 = vmatmul.mubr.f32.gmra.mxu0 %v6090
        %v6673 = vpop.f32.mrf.mxu0
        %v6674 = vadd.f32 %v6597, %v6673
        %v6675 = vpop.f32.mrf.mxu0
        %v6676 = vadd.f32 %v6599, %v6675
        %6677 = vdwg.mxu0
        %v6678 = vmax.f32 %v6514, 0.0
        %v6679 = vmax.f32 %v6516, 0.0
        %v6680 = vmax.f32 %v6668, 0.0
        %v6681 = vmax.f32 %v6670, 0.0
        %v6682 = vmax.f32 %v6520, 0.0
        %v6683 = vmax.f32 %v6522, 0.0
        %v6684 = vmax.f32 %v6674, 0.0
        %v6685 = vmax.f32 %v6676, 0.0
        %v6686 = vmul.f32 %v6016, 0.1
        %v6687 = vmul.f32 %v6017, 0.1
        %v6688 = vmul.f32 %v6018, 0.1
        %v6689 = vmul.f32 %v6019, 0.1
        %v6690 = vmul.f32 %v6020, 0.1
        %v6691 = vmul.f32 %v6021, 0.1
        %v6692 = vmul.f32 %v6022, 0.1
        %v6693 = vmul.f32 %v6023, 0.1
        %v6694 = vadd.f32 %v6686, %v6678
        %v6695 = vadd.f32 %v6687, %v6679
        %v6696 = vadd.f32 %v6688, %v6680
        %v6697 = vadd.f32 %v6689, %v6681
        %v6698 = vadd.f32 %v6690, %v6682
        %v6699 = vadd.f32 %v6691, %v6683
        %v6700 = vadd.f32 %v6692, %v6684
        %v6701 = vadd.f32 %v6693, %v6685
        %v6702 = vmax.f32 %v6694, 0.0
        %v6703 = vmax.f32 %v6695, 0.0
        %v6704 = vmax.f32 %v6696, 0.0
        %v6705 = vmax.f32 %v6697, 0.0
        %v6706 = vmax.f32 %v6698, 0.0
        %v6707 = vmax.f32 %v6699, 0.0
        %v6708 = vmax.f32 %v6700, 0.0
        %v6709 = vmax.f32 %v6701, 0.0
        %6710 = vst [vmem:[%s1881] sm:$0xff] %v6702
        %6711 = vst [vmem:[%s1881 + $0x8] sm:$0xff] %v6703
        %6712 = vst [vmem:[%s1881 + $0x10] sm:$0xff] %v6704
        %6713 = vst [vmem:[%s1881 + $0x18] sm:$0xff] %v6705
        %6714 = vst [vmem:[%s1881 + $0x20] sm:$0xff] %v6706
        %6715 = vst [vmem:[%s1881 + $0x28] sm:$0xff] %v6707
        %6716 = vst [vmem:[%s1881 + $0x30] sm:$0xff] %v6708
        %6717 = vst [vmem:[%s1881 + $0x38] sm:$0xff] %v6709
        %s6718 = sand.u32 %s1173, 1
        %s6719 = scalar_lea.sflag [#allocation5], %s6718
        %s6720 = sand.u32 %s1173, 1
        %s6721 = smul.addr %s6720, 64
        %s6722 = scalar_lea.vmem [#allocation50], %s6721
        // Predicated region
        $region337: #{tpu_custom_call.1} parent=215 // pred_check
          %p6723 = pneg %p1183
        $region338: #{tpu_custom_call.1} parent=215 // pred_check_branch
          %6725 = sbr.rel (%p6723) target = $region340
        $region339: #{tpu_custom_call.1} parent=215 // pred_region
          %s6727 = ssub.s32 1024, 1024
          %6728 = vsyncadd %s6719, %s6727
          %s6729 = smul.addr %s131, 8
          %s6730 = smul.addr %s6729, 128
          %s6731 = scalar_lea.hbm %s99, %s6730
          %s6732 = sshll.u32 %s6722, 4
          %s6733 = int_to_ptr.vmem [resolvable:$true] %s6732
          %6738 = dma.vmem_to_hbm [thread:$0]  %s6733, 1024, %s6731, %s6719, 512, 512, 32
        $region340: #{tpu_custom_call.1} parent=215 // pred_fallthru
          _
      $region216: #{tpu_custom_call.1} parent=5 // pred_fallthru
        _
      %p6739 = scmp.le.s32.totalorder 2, %s126
      // Predicated region
      $region341: #{tpu_custom_call.1} parent=5 // pred_check
        %p6740 = pneg %p6739
      $region342: #{tpu_custom_call.1} parent=5 // pred_check_branch
        %6742 = sbr.rel (%p6740) target = $region344
      $region343: #{tpu_custom_call.1} parent=5 // pred_region
        %s6743 = ssub.s32 %s126, 2
        // Predicated region
        $region345: #{tpu_custom_call.1} parent=343 // pred_check
          %p6744 = pneg %p1189
        $region346: #{tpu_custom_call.1} parent=343 // pred_check_branch
          %6746 = sbr.rel (%p6744) target = $region348
        $region347: #{tpu_custom_call.1} parent=343 // pred_region
          %s6747 = sand.u32 %s1174, 1
          %s6748 = scalar_lea.sflag [#allocation5], %s6747
          %s6749 = sand.u32 %s1174, 1
          %s6750 = smul.addr %s6749, 64
          %s6751 = scalar_lea.vmem [#allocation50], %s6750
          %6752 = dma.done %s6748, 1024
        $region348: #{tpu_custom_call.1} parent=343 // pred_fallthru
          _
      $region344: #{tpu_custom_call.1} parent=5 // pred_fallthru
        _
    $region6: #{tpu_custom_call.1} parent=1 // loop_footer
      %s130 = sadd.s32 1, %s126
    $region7: #{tpu_custom_call.1} parent=1 // loop_footer_branch
      %125 = sbr.rel target = $region3
    $region8: #{tpu_custom_call.1} parent=1 // loop_exit
      _
    %6753 = vsyncpa [#allocation4], 1
    %s6754 = scalar_lea.sflag [#allocation4], 1
    %6755 = vsyncpa %s6754, 1
    %6756 = vsyncpa [#allocation7], 1
    %6757 = vsyncpa [#allocation10], 1
    %6758 = vsyncpa [#allocation13], 1
    %6759 = vsyncpa [#allocation16], 1
    %6760 = vsyncpa [#allocation19], 1
    %6761 = vsyncpa [#allocation22], 1
    %6762 = vsyncpa [#allocation25], 1
    %6763 = vsyncpa [#allocation28], 1
    %6764 = vsyncpa [#allocation31], 1
    %6765 = vsyncpa [#allocation34], 1
    %6766 = vsyncpa [#allocation37], 1
    %6767 = vsyncpa [#allocation40], 1
    %6768 = vsyncpa [#allocation43], 1
    %6769 = vsyncpa [#allocation46], 1
    %6770 = vsyncpa [#allocation49], 1
    %6771 = vsyncpa [#allocation5], 1
    %s6772 = scalar_lea.sflag [#allocation5], 1
    %6773 = vsyncpa %s6772, 1

</llo_original>
